<compile_context>
chip_gen: v7x
topology: tpu7x:2x2x1
jax: 0.10.0
libtpu: 0.0.40
codegen_flags: <defaults>
</compile_context>

<pallas_src>
import functools

import jax
import jax.numpy as jnp
from jax.experimental import pallas as pl
from jax.experimental.pallas import tpu as pltpu


def _round_up(x, m):
    return (x + m - 1) // m * m


def _conv3d_bn_relu_kernel(xm1_ref, x0_ref, xp1_ref, w_ref, bias_ref, o_ref,
                           ext_ref, patch_ref, *,
                           cin, cin_pad, td, h, w, m_pad, compute_dtype):
    # xm1/xp1 : (1, cin, 1, h, w)  halo depth slabs d0-1 / d0+td (clamped fetches)
    # x0      : (1, cin, td, h, w) the td "own" depth slabs d0 .. d0+td-1
    # w_ref   : (3, cout, 9*cin_pad)  per-kd weights, (kh,kw,cin_pad) on columns,
    #                                  BatchNorm scale already folded in
    # bias    : (cout, 1)            folded BatchNorm bias (f32)
    # o_ref   : (1, cout, 1, td, h*w)  lane-dense output block
    # ext_ref : VMEM (td+2, cin_pad, 2*marg + hp*wp)   padded flat input slabs
    # patch   : VMEM (9*cin_pad, (td+2)*m_pad)         per-slab 9-tap im2col patches
    hp, wp = h + 2, w + 2
    m = hp * wp                      # padded-grid spatial extent per depth slab
    marg = wp + 1                    # flat margin: every (kh,kw) tap slice stays in-bounds
    cout = o_ref.shape[1]

    db = pl.program_id(1)
    ndb = pl.num_programs(1)

    # ---- build the (td+2) padded flat slabs into ext scratch ---------------------
    def build_ext(s, src):
        # src: (cin, h, w).  ext layout (flat, stride wp): [marg zeros | hp*wp grid
        # with zero H-pad rows and circular W-wrap columns | marg zeros].
        src = src.astype(compute_dtype)                                # bf16-early cast
        wrapped = jnp.concatenate([src[:, :, w - 1:w], src, src[:, :, 0:1]],
                                  axis=2)                              # (cin, h, wp)
        flat = wrapped.reshape(cin, h * wp)
        ext_ref[s] = jnp.zeros(ext_ref.shape[1:], compute_dtype)       # pads + cin pad
        ext_ref[s, 0:cin, marg + wp:marg + wp + h * wp] = flat         # interior rows

    build_ext(0, xm1_ref[0, :, 0])                 # input depth d0 - 1
    for t in range(td):
        build_ext(1 + t, x0_ref[0, :, t])          # input depths d0 .. d0+td-1
    build_ext(td + 1, xp1_ref[0, :, 0])            # input depth d0 + td

    # zero D-padding only at the volume borders (interior depth blocks pay nothing)
    @pl.when(db == 0)
    def _():
        ext_ref[0, 0:cin, marg + wp:marg + wp + h * wp] = jnp.zeros(
            (cin, h * wp), compute_dtype)

    @pl.when(db == ndb - 1)
    def _():
        ext_ref[td + 1, 0:cin, marg + wp:marg + wp + h * wp] = jnp.zeros(
            (cin, h * wp), compute_dtype)

    # ---- im2col: per slab, 9 (kh,kw) tap chunks at sublane/lane-aligned offsets ---
    for s in range(td + 2):
        col0 = s * m_pad
        for kh in range(3):
            for kw in range(3):
                tap = kh * 3 + kw
                start = marg + (kh - 1) * wp + (kw - 1)        # static, in-bounds
                patch_ref[tap * cin_pad:(tap + 1) * cin_pad, col0:col0 + m] = (
                    ext_ref[s, :, start:start + m])

    # ---- one matmul per kd over all td output depths (K = 9*cin_pad) --------------
    # output depth t uses slabs t+kd, i.e. RHS_kd = patch columns [kd*m_pad, (kd+td)*m_pad)
    y = jnp.dot(w_ref[0], patch_ref[:, 0:td * m_pad],
                preferred_element_type=jnp.float32)
    for kd in (1, 2):
        y = y + jnp.dot(w_ref[kd],
                        patch_ref[:, kd * m_pad:(kd + td) * m_pad],
                        preferred_element_type=jnp.float32)

    # ---- fused (folded) BatchNorm bias + ReLU epilogue, in f32 --------------------
    y = jnp.maximum(y + bias_ref[...], 0.0)                    # (cout, td*m_pad)

    # ---- drop pad columns + padded border, store lane-dense (td, h*w) -------------
    y = y.reshape(cout, td, m_pad)[:, :, :m]
    y = y.reshape(cout, td, hp, wp)[:, :, 1:h + 1, 1:w + 1]
    o_ref[...] = y.reshape(1, cout, 1, td, h * w).astype(o_ref.dtype)


def conv3d_bn_relu(x_ncdhw, w_dhwio, bn_gamma, bn_beta, bn_mean, bn_var,
                   eps=1e-5, compute_dtype=jnp.bfloat16, td=None, max_td=8):
    """ERP Conv3d(k=3, stride=1, pad=1, circular W) + BatchNorm3d(eval) + ReLU.

    x_ncdhw : (N, Cin, D, H, W) float32 (PyTorch layout, consumed as-is)
    w_dhwio : (3, 3, 3, Cin, Cout)
    returns : (N, Cout, D, H, W) float32
    compute_dtype: jnp.bfloat16 (fast MXU path, f32 accumulation/epilogue) or jnp.float32.
    """
    N, Cin, D, H, W = x_ncdhw.shape
    Cout = w_dhwio.shape[-1]
    Hp, Wp = H + 2, W + 2
    M = Hp * Wp
    M_pad = _round_up(M, 128)
    marg = Wp + 1
    EXT = M + 2 * marg

    itemsize = jnp.dtype(compute_dtype).itemsize
    cin_unit = 8 if itemsize == 4 else 16          # f32: 8 sublanes / vreg, 16-bit: 16
    Cin_pad = _round_up(Cin, cin_unit)

    if td is None:
        # largest divisor of D (capped) whose scratch + input blocks fit comfortably
        budget = 8 * 1024 * 1024
        td = 1
        for cand in range(1, min(D, max_td) + 1):
            if D % cand:
                continue
            patch_bytes = 9 * Cin_pad * (cand + 2) * M_pad * itemsize
            xblk_bytes = 2 * Cin * cand * H * max(W, 128) * x_ncdhw.dtype.itemsize
            if patch_bytes + xblk_bytes <= budget:
                td = cand
    if D % td != 0:
        raise ValueError(f"td={td} must divide D={D}")
    DB = D // td

    # fold BatchNorm (eval-mode running stats): scale into weights, bias separate
    scale = (bn_gamma.astype(jnp.float32) /
             jnp.sqrt(bn_var.astype(jnp.float32) + eps))
    bias = (bn_beta.astype(jnp.float32) -
            bn_mean.astype(jnp.float32) * scale).reshape(Cout, 1)

    w_f = w_dhwio.astype(jnp.float32) * scale                  # broadcast over Cout
    w_f = jnp.transpose(w_f, (0, 4, 1, 2, 3))                  # (3, Cout, 3, 3, Cin)
    w_f = jnp.pad(w_f, ((0, 0), (0, 0), (0, 0), (0, 0), (0, Cin_pad - Cin)))
    w3 = w_f.reshape(3, Cout, 9 * Cin_pad).astype(compute_dtype)

    kernel = functools.partial(
        _conv3d_bn_relu_kernel,
        cin=Cin, cin_pad=Cin_pad, td=td, h=H, w=W, m_pad=M_pad,
        compute_dtype=compute_dtype)

    x_big = (1, Cin, td, H, W)
    x_halo = (1, Cin, 1, H, W)

    out = pl.pallas_call(
        kernel,
        out_shape=jax.ShapeDtypeStruct((N, Cout, DB, td, H * W), jnp.float32),
        grid_spec=pltpu.PrefetchScalarGridSpec(
            num_scalar_prefetch=0,
            grid=(N, DB),
            in_specs=[
                # d0 - 1 halo slab (clamped; zeroed in-kernel at the first block)
                pl.BlockSpec(x_halo,
                             lambda n, db: (n, 0, jnp.maximum(db * td - 1, 0), 0, 0)),
                # td own depth slabs
                pl.BlockSpec(x_big, lambda n, db: (n, 0, db, 0, 0)),
                # d0 + td halo slab (clamped; zeroed in-kernel at the last block)
                pl.BlockSpec(x_halo,
                             lambda n, db: (n, 0, jnp.minimum(db * td + td, D - 1), 0, 0)),
                pl.BlockSpec((3, Cout, 9 * Cin_pad), lambda n, db: (0, 0, 0)),
                pl.BlockSpec((Cout, 1), lambda n, db: (0, 0)),
            ],
            out_specs=pl.BlockSpec((1, Cout, 1, td, H * W),
                                   lambda n, db: (n, 0, db, 0, 0)),
            scratch_shapes=[
                pltpu.VMEM((td + 2, Cin_pad, EXT), compute_dtype),       # padded slabs
                pltpu.VMEM((9 * Cin_pad, (td + 2) * M_pad), compute_dtype),  # im2col
            ]),
        compiler_params=pltpu.CompilerParams(
            dimension_semantics=("parallel", "parallel"),
            vmem_limit_bytes=48 * 1024 * 1024),
    )(x_ncdhw, x_ncdhw, x_ncdhw, w3, bias)

    # free reshape: (N, Cout, DB, td, H*W) -> (N, Cout, D, H, W)
    return out.reshape(N, Cout, D, H, W)


def _reference(x_ncdhw, w_dhwio, bn_gamma, bn_beta, bn_mean, bn_var, eps=1e-5):
    """Pure-JAX reference (same padding convention) for correctness check."""
    x = jnp.transpose(x_ncdhw, (0, 2, 3, 4, 1))                       # NDHWC
    x = jnp.pad(x, ((0, 0), (0, 0), (0, 0), (1, 1), (0, 0)), mode="wrap")
    x = jnp.pad(x, ((0, 0), (1, 1), (1, 1), (0, 0), (0, 0)), mode="constant")
    y = jax.lax.conv_general_dilated(
        x, w_dhwio, window_strides=(1, 1, 1), padding="VALID",
        dimension_numbers=("NDHWC", "DHWIO", "NDHWC"))
    scale = bn_gamma / jnp.sqrt(bn_var + eps)
    y = y * scale + (bn_beta - bn_mean * scale)
    y = jnp.maximum(y, 0.0)
    return jnp.transpose(y, (0, 4, 1, 2, 3))


if __name__ == "__main__":
    # small shapes consistent with the module: in_channels=4, out_channels=8, k=3
    N, Cin, Cout, D, H, W = 2, 4, 8, 10, 10, 16

    key = jax.random.PRNGKey(0)
    kx, kw_, kg, kb, km, kv = jax.random.split(key, 6)

    x = jax.random.normal(kx, (N, Cin, D, H, W), dtype=jnp.float32)
    # deterministic synthetic parameters (not a checkpoint)
    w = 0.1 * jax.random.normal(kw_, (3, 3, 3, Cin, Cout), dtype=jnp.float32)  # DHWIO
    bn_gamma = 1.0 + 0.05 * jax.random.normal(kg, (Cout,), dtype=jnp.float32)
    bn_beta = 0.05 * jax.random.normal(kb, (Cout,), dtype=jnp.float32)
    bn_mean = 0.1 * jax.random.normal(km, (Cout,), dtype=jnp.float32)
    bn_var = 1.0 + 0.2 * jax.random.uniform(kv, (Cout,), dtype=jnp.float32)

    ref = _reference(x, w, bn_gamma, bn_beta, bn_mean, bn_var)

    # exact f32 path
    out_f32 = conv3d_bn_relu(x, w, bn_gamma, bn_beta, bn_mean, bn_var,
                             compute_dtype=jnp.float32)
    out_f32 = jax.block_until_ready(out_f32)
    assert out_f32.shape == (N, Cout, D, H, W)
    assert jnp.allclose(out_f32, ref, atol=1e-3, rtol=1e-3), \
        float(jnp.max(jnp.abs(out_f32 - ref)))

    # default bf16 MXU path (f32 accumulation + f32 BN/ReLU epilogue)
    out_bf16 = conv3d_bn_relu(x, w, bn_gamma, bn_beta, bn_mean, bn_var)
    out_bf16 = jax.block_until_ready(out_bf16)
    assert out_bf16.shape == (N, Cout, D, H, W)
    assert jnp.allclose(out_bf16, ref, atol=6e-2, rtol=6e-2), \
        float(jnp.max(jnp.abs(out_bf16 - ref)))

    print("KERNEL_OK")
</pallas_src>

<mosaic_0001>
module attributes {stable_mosaic.version = 11 : i64} {
  func.func @_conv3d_bn_relu_kernel(%arg0: i32, %arg1: i32, %arg2: memref<1x4x1x10x16xf32, #tpu.memory_space<vmem>>, %arg3: memref<1x4x5x10x16xf32, #tpu.memory_space<vmem>>, %arg4: memref<1x4x1x10x16xf32, #tpu.memory_space<vmem>>, %arg5: memref<3x8x72xf32, #tpu.memory_space<vmem>>, %arg6: memref<8x1xf32, #tpu.memory_space<vmem>>, %arg7: memref<1x8x1x5x160xf32, #tpu.memory_space<vmem>>, %arg8: memref<7x8x254xf32, #tpu.memory_space<vmem>>, %arg9: memref<72x1792xf32, #tpu.memory_space<vmem>>) attributes {dimension_semantics = [#tpu.dimension_semantics<parallel>, #tpu.dimension_semantics<parallel>], iteration_bounds = array<i64: 2, 2>, scalar_prefetch = 0 : i64, scratch_operands = 2 : i64, tpu.core_type = #tpu.core_type<tc>, window_params = [{transform_indices = @transform_0, window_bounds = array<i64: 1, 4, 1, 10, 16>}, {transform_indices = @transform_1, window_bounds = array<i64: 1, 4, 5, 10, 16>}, {transform_indices = @transform_2, window_bounds = array<i64: 1, 4, 1, 10, 16>}, {pipeline_mode = #tpu.pipeline_mode<synchronous>, transform_indices = @transform_3, window_bounds = array<i64: 3, 8, 72>}, {pipeline_mode = #tpu.pipeline_mode<synchronous>, transform_indices = @transform_4, window_bounds = array<i64: 8, 1>}, {transform_indices = @transform_5, window_bounds = array<i64: 1, 8, 1, 5, 160>}]} {
    %c0 = arith.constant 0 : index
    %c0_0 = arith.constant 0 : index
    %c0_1 = arith.constant 0 : index
    %c0_2 = arith.constant 0 : index
    %c0_3 = arith.constant 0 : index
    %0 = vector.load %arg2[%c0, %c0_0, %c0_1, %c0_2, %c0_3] : memref<1x4x1x10x16xf32, #tpu.memory_space<vmem>>, vector<1x4x1x10x16xf32>
    %1 = vector.shape_cast %0 : vector<1x4x1x10x16xf32> to vector<4x10x16xf32>
    %2 = vector.extract_strided_slice %1 {offsets = [0, 0, 15], sizes = [4, 10, 1], strides = [1, 1, 1]} : vector<4x10x16xf32> to vector<4x10x1xf32>
    %3 = vector.extract_strided_slice %1 {offsets = [0, 0, 0], sizes = [4, 10, 1], strides = [1, 1, 1]} : vector<4x10x16xf32> to vector<4x10x1xf32>
    %4 = tpu.concatenate %2, %1, %3 in 2 : vector<4x10x1xf32>, vector<4x10x16xf32>, vector<4x10x1xf32> -> vector<4x10x18xf32>
    %5 = vector.shape_cast %4 : vector<4x10x18xf32> to vector<4x180xf32>
    %cst = arith.constant 0.000000e+00 : f32
    %6 = vector.broadcast %cst : f32 to vector<8x254xf32>
    %c0_4 = arith.constant 0 : index
    %c0_5 = arith.constant 0 : index
    %c0_6 = arith.constant 0 : index
    %7 = vector.load %arg8[%c0_4, %c0_5, %c0_6] : memref<7x8x254xf32, #tpu.memory_space<vmem>>, vector<1x8x254xf32>
    %8 = vector.shape_cast %7 : vector<1x8x254xf32> to vector<8x254xf32>
    %9 = vector.shape_cast %6 : vector<8x254xf32> to vector<1x8x254xf32>
    tpu.vector_store %arg8[%c0_4, %c0_5, %c0_6], %9 {strides = array<i32>} : memref<7x8x254xf32, #tpu.memory_space<vmem>>, vector<1x8x254xf32>,
    %c0_7 = arith.constant 0 : index
    %c0_8 = arith.constant 0 : index
    %c37 = arith.constant 37 : index
    %10 = vector.load %arg8[%c0_7, %c0_8, %c37] : memref<7x8x254xf32, #tpu.memory_space<vmem>>, vector<1x4x180xf32>
    %11 = vector.shape_cast %10 : vector<1x4x180xf32> to vector<4x180xf32>
    %12 = vector.shape_cast %5 : vector<4x180xf32> to vector<1x4x180xf32>
    tpu.vector_store %arg8[%c0_7, %c0_8, %c37], %12 {strides = array<i32>} : memref<7x8x254xf32, #tpu.memory_space<vmem>>, vector<1x4x180xf32>,
    %c0_9 = arith.constant 0 : index
    %c0_10 = arith.constant 0 : index
    %c0_11 = arith.constant 0 : index
    %c0_12 = arith.constant 0 : index
    %c0_13 = arith.constant 0 : index
    %13 = vector.load %arg3[%c0_9, %c0_10, %c0_11, %c0_12, %c0_13] : memref<1x4x5x10x16xf32, #tpu.memory_space<vmem>>, vector<1x4x1x10x16xf32>
    %14 = vector.shape_cast %13 : vector<1x4x1x10x16xf32> to vector<4x10x16xf32>
    %15 = vector.extract_strided_slice %14 {offsets = [0, 0, 15], sizes = [4, 10, 1], strides = [1, 1, 1]} : vector<4x10x16xf32> to vector<4x10x1xf32>
    %16 = vector.extract_strided_slice %14 {offsets = [0, 0, 0], sizes = [4, 10, 1], strides = [1, 1, 1]} : vector<4x10x16xf32> to vector<4x10x1xf32>
    %17 = tpu.concatenate %15, %14, %16 in 2 : vector<4x10x1xf32>, vector<4x10x16xf32>, vector<4x10x1xf32> -> vector<4x10x18xf32>
    %18 = vector.shape_cast %17 : vector<4x10x18xf32> to vector<4x180xf32>
    %cst_14 = arith.constant 0.000000e+00 : f32
    %19 = vector.broadcast %cst_14 : f32 to vector<8x254xf32>
    %c1 = arith.constant 1 : index
    %c0_15 = arith.constant 0 : index
    %c0_16 = arith.constant 0 : index
    %20 = vector.load %arg8[%c1, %c0_15, %c0_16] : memref<7x8x254xf32, #tpu.memory_space<vmem>>, vector<1x8x254xf32>
    %21 = vector.shape_cast %20 : vector<1x8x254xf32> to vector<8x254xf32>
    %22 = vector.shape_cast %19 : vector<8x254xf32> to vector<1x8x254xf32>
    tpu.vector_store %arg8[%c1, %c0_15, %c0_16], %22 {strides = array<i32>} : memref<7x8x254xf32, #tpu.memory_space<vmem>>, vector<1x8x254xf32>,
    %c1_17 = arith.constant 1 : index
    %c0_18 = arith.constant 0 : index
    %c37_19 = arith.constant 37 : index
    %23 = vector.load %arg8[%c1_17, %c0_18, %c37_19] : memref<7x8x254xf32, #tpu.memory_space<vmem>>, vector<1x4x180xf32>
    %24 = vector.shape_cast %23 : vector<1x4x180xf32> to vector<4x180xf32>
    %25 = vector.shape_cast %18 : vector<4x180xf32> to vector<1x4x180xf32>
    tpu.vector_store %arg8[%c1_17, %c0_18, %c37_19], %25 {strides = array<i32>} : memref<7x8x254xf32, #tpu.memory_space<vmem>>, vector<1x4x180xf32>,
    %c0_20 = arith.constant 0 : index
    %c0_21 = arith.constant 0 : index
    %c1_22 = arith.constant 1 : index
    %c0_23 = arith.constant 0 : index
    %c0_24 = arith.constant 0 : index
    %26 = vector.load %arg3[%c0_20, %c0_21, %c1_22, %c0_23, %c0_24] : memref<1x4x5x10x16xf32, #tpu.memory_space<vmem>>, vector<1x4x1x10x16xf32>
    %27 = vector.shape_cast %26 : vector<1x4x1x10x16xf32> to vector<4x10x16xf32>
    %28 = vector.extract_strided_slice %27 {offsets = [0, 0, 15], sizes = [4, 10, 1], strides = [1, 1, 1]} : vector<4x10x16xf32> to vector<4x10x1xf32>
    %29 = vector.extract_strided_slice %27 {offsets = [0, 0, 0], sizes = [4, 10, 1], strides = [1, 1, 1]} : vector<4x10x16xf32> to vector<4x10x1xf32>
    %30 = tpu.concatenate %28, %27, %29 in 2 : vector<4x10x1xf32>, vector<4x10x16xf32>, vector<4x10x1xf32> -> vector<4x10x18xf32>
    %31 = vector.shape_cast %30 : vector<4x10x18xf32> to vector<4x180xf32>
    %cst_25 = arith.constant 0.000000e+00 : f32
    %32 = vector.broadcast %cst_25 : f32 to vector<8x254xf32>
    %c2 = arith.constant 2 : index
    %c0_26 = arith.constant 0 : index
    %c0_27 = arith.constant 0 : index
    %33 = vector.load %arg8[%c2, %c0_26, %c0_27] : memref<7x8x254xf32, #tpu.memory_space<vmem>>, vector<1x8x254xf32>
    %34 = vector.shape_cast %33 : vector<1x8x254xf32> to vector<8x254xf32>
    %35 = vector.shape_cast %32 : vector<8x254xf32> to vector<1x8x254xf32>
    tpu.vector_store %arg8[%c2, %c0_26, %c0_27], %35 {strides = array<i32>} : memref<7x8x254xf32, #tpu.memory_space<vmem>>, vector<1x8x254xf32>,
    %c2_28 = arith.constant 2 : index
    %c0_29 = arith.constant 0 : index
    %c37_30 = arith.constant 37 : index
    %36 = vector.load %arg8[%c2_28, %c0_29, %c37_30] : memref<7x8x254xf32, #tpu.memory_space<vmem>>, vector<1x4x180xf32>
    %37 = vector.shape_cast %36 : vector<1x4x180xf32> to vector<4x180xf32>
    %38 = vector.shape_cast %31 : vector<4x180xf32> to vector<1x4x180xf32>
    tpu.vector_store %arg8[%c2_28, %c0_29, %c37_30], %38 {strides = array<i32>} : memref<7x8x254xf32, #tpu.memory_space<vmem>>, vector<1x4x180xf32>,
    %c0_31 = arith.constant 0 : index
    %c0_32 = arith.constant 0 : index
    %c2_33 = arith.constant 2 : index
    %c0_34 = arith.constant 0 : index
    %c0_35 = arith.constant 0 : index
    %39 = vector.load %arg3[%c0_31, %c0_32, %c2_33, %c0_34, %c0_35] : memref<1x4x5x10x16xf32, #tpu.memory_space<vmem>>, vector<1x4x1x10x16xf32>
    %40 = vector.shape_cast %39 : vector<1x4x1x10x16xf32> to vector<4x10x16xf32>
    %41 = vector.extract_strided_slice %40 {offsets = [0, 0, 15], sizes = [4, 10, 1], strides = [1, 1, 1]} : vector<4x10x16xf32> to vector<4x10x1xf32>
    %42 = vector.extract_strided_slice %40 {offsets = [0, 0, 0], sizes = [4, 10, 1], strides = [1, 1, 1]} : vector<4x10x16xf32> to vector<4x10x1xf32>
    %43 = tpu.concatenate %41, %40, %42 in 2 : vector<4x10x1xf32>, vector<4x10x16xf32>, vector<4x10x1xf32> -> vector<4x10x18xf32>
    %44 = vector.shape_cast %43 : vector<4x10x18xf32> to vector<4x180xf32>
    %cst_36 = arith.constant 0.000000e+00 : f32
    %45 = vector.broadcast %cst_36 : f32 to vector<8x254xf32>
    %c3 = arith.constant 3 : index
    %c0_37 = arith.constant 0 : index
    %c0_38 = arith.constant 0 : index
    %46 = vector.load %arg8[%c3, %c0_37, %c0_38] : memref<7x8x254xf32, #tpu.memory_space<vmem>>, vector<1x8x254xf32>
    %47 = vector.shape_cast %46 : vector<1x8x254xf32> to vector<8x254xf32>
    %48 = vector.shape_cast %45 : vector<8x254xf32> to vector<1x8x254xf32>
    tpu.vector_store %arg8[%c3, %c0_37, %c0_38], %48 {strides = array<i32>} : memref<7x8x254xf32, #tpu.memory_space<vmem>>, vector<1x8x254xf32>,
    %c3_39 = arith.constant 3 : index
    %c0_40 = arith.constant 0 : index
    %c37_41 = arith.constant 37 : index
    %49 = vector.load %arg8[%c3_39, %c0_40, %c37_41] : memref<7x8x254xf32, #tpu.memory_space<vmem>>, vector<1x4x180xf32>
    %50 = vector.shape_cast %49 : vector<1x4x180xf32> to vector<4x180xf32>
    %51 = vector.shape_cast %44 : vector<4x180xf32> to vector<1x4x180xf32>
    tpu.vector_store %arg8[%c3_39, %c0_40, %c37_41], %51 {strides = array<i32>} : memref<7x8x254xf32, #tpu.memory_space<vmem>>, vector<1x4x180xf32>,
    %c0_42 = arith.constant 0 : index
    %c0_43 = arith.constant 0 : index
    %c3_44 = arith.constant 3 : index
    %c0_45 = arith.constant 0 : index
    %c0_46 = arith.constant 0 : index
    %52 = vector.load %arg3[%c0_42, %c0_43, %c3_44, %c0_45, %c0_46] : memref<1x4x5x10x16xf32, #tpu.memory_space<vmem>>, vector<1x4x1x10x16xf32>
    %53 = vector.shape_cast %52 : vector<1x4x1x10x16xf32> to vector<4x10x16xf32>
    %54 = vector.extract_strided_slice %53 {offsets = [0, 0, 15], sizes = [4, 10, 1], strides = [1, 1, 1]} : vector<4x10x16xf32> to vector<4x10x1xf32>
    %55 = vector.extract_strided_slice %53 {offsets = [0, 0, 0], sizes = [4, 10, 1], strides = [1, 1, 1]} : vector<4x10x16xf32> to vector<4x10x1xf32>
    %56 = tpu.concatenate %54, %53, %55 in 2 : vector<4x10x1xf32>, vector<4x10x16xf32>, vector<4x10x1xf32> -> vector<4x10x18xf32>
    %57 = vector.shape_cast %56 : vector<4x10x18xf32> to vector<4x180xf32>
    %cst_47 = arith.constant 0.000000e+00 : f32
    %58 = vector.broadcast %cst_47 : f32 to vector<8x254xf32>
    %c4 = arith.constant 4 : index
    %c0_48 = arith.constant 0 : index
    %c0_49 = arith.constant 0 : index
    %59 = vector.load %arg8[%c4, %c0_48, %c0_49] : memref<7x8x254xf32, #tpu.memory_space<vmem>>, vector<1x8x254xf32>
    %60 = vector.shape_cast %59 : vector<1x8x254xf32> to vector<8x254xf32>
    %61 = vector.shape_cast %58 : vector<8x254xf32> to vector<1x8x254xf32>
    tpu.vector_store %arg8[%c4, %c0_48, %c0_49], %61 {strides = array<i32>} : memref<7x8x254xf32, #tpu.memory_space<vmem>>, vector<1x8x254xf32>,
    %c4_50 = arith.constant 4 : index
    %c0_51 = arith.constant 0 : index
    %c37_52 = arith.constant 37 : index
    %62 = vector.load %arg8[%c4_50, %c0_51, %c37_52] : memref<7x8x254xf32, #tpu.memory_space<vmem>>, vector<1x4x180xf32>
    %63 = vector.shape_cast %62 : vector<1x4x180xf32> to vector<4x180xf32>
    %64 = vector.shape_cast %57 : vector<4x180xf32> to vector<1x4x180xf32>
    tpu.vector_store %arg8[%c4_50, %c0_51, %c37_52], %64 {strides = array<i32>} : memref<7x8x254xf32, #tpu.memory_space<vmem>>, vector<1x4x180xf32>,
    %c0_53 = arith.constant 0 : index
    %c0_54 = arith.constant 0 : index
    %c4_55 = arith.constant 4 : index
    %c0_56 = arith.constant 0 : index
    %c0_57 = arith.constant 0 : index
    %65 = vector.load %arg3[%c0_53, %c0_54, %c4_55, %c0_56, %c0_57] : memref<1x4x5x10x16xf32, #tpu.memory_space<vmem>>, vector<1x4x1x10x16xf32>
    %66 = vector.shape_cast %65 : vector<1x4x1x10x16xf32> to vector<4x10x16xf32>
    %67 = vector.extract_strided_slice %66 {offsets = [0, 0, 15], sizes = [4, 10, 1], strides = [1, 1, 1]} : vector<4x10x16xf32> to vector<4x10x1xf32>
    %68 = vector.extract_strided_slice %66 {offsets = [0, 0, 0], sizes = [4, 10, 1], strides = [1, 1, 1]} : vector<4x10x16xf32> to vector<4x10x1xf32>
    %69 = tpu.concatenate %67, %66, %68 in 2 : vector<4x10x1xf32>, vector<4x10x16xf32>, vector<4x10x1xf32> -> vector<4x10x18xf32>
    %70 = vector.shape_cast %69 : vector<4x10x18xf32> to vector<4x180xf32>
    %cst_58 = arith.constant 0.000000e+00 : f32
    %71 = vector.broadcast %cst_58 : f32 to vector<8x254xf32>
    %c5 = arith.constant 5 : index
    %c0_59 = arith.constant 0 : index
    %c0_60 = arith.constant 0 : index
    %72 = vector.load %arg8[%c5, %c0_59, %c0_60] : memref<7x8x254xf32, #tpu.memory_space<vmem>>, vector<1x8x254xf32>
    %73 = vector.shape_cast %72 : vector<1x8x254xf32> to vector<8x254xf32>
    %74 = vector.shape_cast %71 : vector<8x254xf32> to vector<1x8x254xf32>
    tpu.vector_store %arg8[%c5, %c0_59, %c0_60], %74 {strides = array<i32>} : memref<7x8x254xf32, #tpu.memory_space<vmem>>, vector<1x8x254xf32>,
    %c5_61 = arith.constant 5 : index
    %c0_62 = arith.constant 0 : index
    %c37_63 = arith.constant 37 : index
    %75 = vector.load %arg8[%c5_61, %c0_62, %c37_63] : memref<7x8x254xf32, #tpu.memory_space<vmem>>, vector<1x4x180xf32>
    %76 = vector.shape_cast %75 : vector<1x4x180xf32> to vector<4x180xf32>
    %77 = vector.shape_cast %70 : vector<4x180xf32> to vector<1x4x180xf32>
    tpu.vector_store %arg8[%c5_61, %c0_62, %c37_63], %77 {strides = array<i32>} : memref<7x8x254xf32, #tpu.memory_space<vmem>>, vector<1x4x180xf32>,
    %c0_64 = arith.constant 0 : index
    %c0_65 = arith.constant 0 : index
    %c0_66 = arith.constant 0 : index
    %c0_67 = arith.constant 0 : index
    %c0_68 = arith.constant 0 : index
    %78 = vector.load %arg4[%c0_64, %c0_65, %c0_66, %c0_67, %c0_68] : memref<1x4x1x10x16xf32, #tpu.memory_space<vmem>>, vector<1x4x1x10x16xf32>
    %79 = vector.shape_cast %78 : vector<1x4x1x10x16xf32> to vector<4x10x16xf32>
    %80 = vector.extract_strided_slice %79 {offsets = [0, 0, 15], sizes = [4, 10, 1], strides = [1, 1, 1]} : vector<4x10x16xf32> to vector<4x10x1xf32>
    %81 = vector.extract_strided_slice %79 {offsets = [0, 0, 0], sizes = [4, 10, 1], strides = [1, 1, 1]} : vector<4x10x16xf32> to vector<4x10x1xf32>
    %82 = tpu.concatenate %80, %79, %81 in 2 : vector<4x10x1xf32>, vector<4x10x16xf32>, vector<4x10x1xf32> -> vector<4x10x18xf32>
    %83 = vector.shape_cast %82 : vector<4x10x18xf32> to vector<4x180xf32>
    %cst_69 = arith.constant 0.000000e+00 : f32
    %84 = vector.broadcast %cst_69 : f32 to vector<8x254xf32>
    %c6 = arith.constant 6 : index
    %c0_70 = arith.constant 0 : index
    %c0_71 = arith.constant 0 : index
    %85 = vector.load %arg8[%c6, %c0_70, %c0_71] : memref<7x8x254xf32, #tpu.memory_space<vmem>>, vector<1x8x254xf32>
    %86 = vector.shape_cast %85 : vector<1x8x254xf32> to vector<8x254xf32>
    %87 = vector.shape_cast %84 : vector<8x254xf32> to vector<1x8x254xf32>
    tpu.vector_store %arg8[%c6, %c0_70, %c0_71], %87 {strides = array<i32>} : memref<7x8x254xf32, #tpu.memory_space<vmem>>, vector<1x8x254xf32>,
    %c6_72 = arith.constant 6 : index
    %c0_73 = arith.constant 0 : index
    %c37_74 = arith.constant 37 : index
    %88 = vector.load %arg8[%c6_72, %c0_73, %c37_74] : memref<7x8x254xf32, #tpu.memory_space<vmem>>, vector<1x4x180xf32>
    %89 = vector.shape_cast %88 : vector<1x4x180xf32> to vector<4x180xf32>
    %90 = vector.shape_cast %83 : vector<4x180xf32> to vector<1x4x180xf32>
    tpu.vector_store %arg8[%c6_72, %c0_73, %c37_74], %90 {strides = array<i32>} : memref<7x8x254xf32, #tpu.memory_space<vmem>>, vector<1x4x180xf32>,
    %c0_i32 = arith.constant 0 : i32
    %91 = arith.cmpi eq, %arg1, %c0_i32 : i32
    %92 = arith.extui %91 : i1 to i32
    %c0_i32_75 = arith.constant 0 : i32
    %93 = arith.cmpi ne, %92, %c0_i32_75 : i32
    scf.if %93 {
      %cst_399 = arith.constant 0.000000e+00 : f32
      %311 = vector.broadcast %cst_399 : f32 to vector<4x180xf32>
      %c0_400 = arith.constant 0 : index
      %c0_401 = arith.constant 0 : index
      %c37_402 = arith.constant 37 : index
      %312 = vector.load %arg8[%c0_400, %c0_401, %c37_402] : memref<7x8x254xf32, #tpu.memory_space<vmem>>, vector<1x4x180xf32>
      %313 = vector.shape_cast %312 : vector<1x4x180xf32> to vector<4x180xf32>
      %314 = vector.shape_cast %311 : vector<4x180xf32> to vector<1x4x180xf32>
      tpu.vector_store %arg8[%c0_400, %c0_401, %c37_402], %314 {strides = array<i32>} : memref<7x8x254xf32, #tpu.memory_space<vmem>>, vector<1x4x180xf32>,
    } else {
    }
    %c1_i32 = arith.constant 1 : i32
    %94 = arith.cmpi eq, %arg1, %c1_i32 : i32
    %95 = arith.extui %94 : i1 to i32
    %c0_i32_76 = arith.constant 0 : i32
    %96 = arith.cmpi ne, %95, %c0_i32_76 : i32
    scf.if %96 {
      %cst_399 = arith.constant 0.000000e+00 : f32
      %311 = vector.broadcast %cst_399 : f32 to vector<4x180xf32>
      %c6_400 = arith.constant 6 : index
      %c0_401 = arith.constant 0 : index
      %c37_402 = arith.constant 37 : index
      %312 = vector.load %arg8[%c6_400, %c0_401, %c37_402] : memref<7x8x254xf32, #tpu.memory_space<vmem>>, vector<1x4x180xf32>
      %313 = vector.shape_cast %312 : vector<1x4x180xf32> to vector<4x180xf32>
      %314 = vector.shape_cast %311 : vector<4x180xf32> to vector<1x4x180xf32>
      tpu.vector_store %arg8[%c6_400, %c0_401, %c37_402], %314 {strides = array<i32>} : memref<7x8x254xf32, #tpu.memory_space<vmem>>, vector<1x4x180xf32>,
    } else {
    }
    %c0_77 = arith.constant 0 : index
    %c0_78 = arith.constant 0 : index
    %c0_79 = arith.constant 0 : index
    %97 = vector.load %arg8[%c0_77, %c0_78, %c0_79] : memref<7x8x254xf32, #tpu.memory_space<vmem>>, vector<1x8x216xf32>
    %98 = vector.shape_cast %97 : vector<1x8x216xf32> to vector<8x216xf32>
    %c0_80 = arith.constant 0 : index
    %c0_81 = arith.constant 0 : index
    %99 = vector.load %arg9[%c0_80, %c0_81] : memref<72x1792xf32, #tpu.memory_space<vmem>>, vector<8x216xf32>
    tpu.vector_store %arg9[%c0_80, %c0_81], %98 {strides = array<i32>} : memref<72x1792xf32, #tpu.memory_space<vmem>>, vector<8x216xf32>,
    %c0_82 = arith.constant 0 : index
    %c0_83 = arith.constant 0 : index
    %c1_84 = arith.constant 1 : index
    %100 = vector.load %arg8[%c0_82, %c0_83, %c1_84] : memref<7x8x254xf32, #tpu.memory_space<vmem>>, vector<1x8x216xf32>
    %101 = vector.shape_cast %100 : vector<1x8x216xf32> to vector<8x216xf32>
    %c8 = arith.constant 8 : index
    %c0_85 = arith.constant 0 : index
    %102 = vector.load %arg9[%c8, %c0_85] : memref<72x1792xf32, #tpu.memory_space<vmem>>, vector<8x216xf32>
    tpu.vector_store %arg9[%c8, %c0_85], %101 {strides = array<i32>} : memref<72x1792xf32, #tpu.memory_space<vmem>>, vector<8x216xf32>,
    %c0_86 = arith.constant 0 : index
    %c0_87 = arith.constant 0 : index
    %c2_88 = arith.constant 2 : index
    %103 = vector.load %arg8[%c0_86, %c0_87, %c2_88] : memref<7x8x254xf32, #tpu.memory_space<vmem>>, vector<1x8x216xf32>
    %104 = vector.shape_cast %103 : vector<1x8x216xf32> to vector<8x216xf32>
    %c16 = arith.constant 16 : index
    %c0_89 = arith.constant 0 : index
    %105 = vector.load %arg9[%c16, %c0_89] : memref<72x1792xf32, #tpu.memory_space<vmem>>, vector<8x216xf32>
    tpu.vector_store %arg9[%c16, %c0_89], %104 {strides = array<i32>} : memref<72x1792xf32, #tpu.memory_space<vmem>>, vector<8x216xf32>,
    %c0_90 = arith.constant 0 : index
    %c0_91 = arith.constant 0 : index
    %c18 = arith.constant 18 : index
    %106 = vector.load %arg8[%c0_90, %c0_91, %c18] : memref<7x8x254xf32, #tpu.memory_space<vmem>>, vector<1x8x216xf32>
    %107 = vector.shape_cast %106 : vector<1x8x216xf32> to vector<8x216xf32>
    %c24 = arith.constant 24 : index
    %c0_92 = arith.constant 0 : index
    %108 = vector.load %arg9[%c24, %c0_92] : memref<72x1792xf32, #tpu.memory_space<vmem>>, vector<8x216xf32>
    tpu.vector_store %arg9[%c24, %c0_92], %107 {strides = array<i32>} : memref<72x1792xf32, #tpu.memory_space<vmem>>, vector<8x216xf32>,
    %c0_93 = arith.constant 0 : index
    %c0_94 = arith.constant 0 : index
    %c19 = arith.constant 19 : index
    %109 = vector.load %arg8[%c0_93, %c0_94, %c19] : memref<7x8x254xf32, #tpu.memory_space<vmem>>, vector<1x8x216xf32>
    %110 = vector.shape_cast %109 : vector<1x8x216xf32> to vector<8x216xf32>
    %c32 = arith.constant 32 : index
    %c0_95 = arith.constant 0 : index
    %111 = vector.load %arg9[%c32, %c0_95] : memref<72x1792xf32, #tpu.memory_space<vmem>>, vector<8x216xf32>
    tpu.vector_store %arg9[%c32, %c0_95], %110 {strides = array<i32>} : memref<72x1792xf32, #tpu.memory_space<vmem>>, vector<8x216xf32>,
    %c0_96 = arith.constant 0 : index
    %c0_97 = arith.constant 0 : index
    %c20 = arith.constant 20 : index
    %112 = vector.load %arg8[%c0_96, %c0_97, %c20] : memref<7x8x254xf32, #tpu.memory_space<vmem>>, vector<1x8x216xf32>
    %113 = vector.shape_cast %112 : vector<1x8x216xf32> to vector<8x216xf32>
    %c40 = arith.constant 40 : index
    %c0_98 = arith.constant 0 : index
    %114 = vector.load %arg9[%c40, %c0_98] : memref<72x1792xf32, #tpu.memory_space<vmem>>, vector<8x216xf32>
    tpu.vector_store %arg9[%c40, %c0_98], %113 {strides = array<i32>} : memref<72x1792xf32, #tpu.memory_space<vmem>>, vector<8x216xf32>,
    %c0_99 = arith.constant 0 : index
    %c0_100 = arith.constant 0 : index
    %c36 = arith.constant 36 : index
    %115 = vector.load %arg8[%c0_99, %c0_100, %c36] : memref<7x8x254xf32, #tpu.memory_space<vmem>>, vector<1x8x216xf32>
    %116 = vector.shape_cast %115 : vector<1x8x216xf32> to vector<8x216xf32>
    %c48 = arith.constant 48 : index
    %c0_101 = arith.constant 0 : index
    %117 = vector.load %arg9[%c48, %c0_101] : memref<72x1792xf32, #tpu.memory_space<vmem>>, vector<8x216xf32>
    tpu.vector_store %arg9[%c48, %c0_101], %116 {strides = array<i32>} : memref<72x1792xf32, #tpu.memory_space<vmem>>, vector<8x216xf32>,
    %c0_102 = arith.constant 0 : index
    %c0_103 = arith.constant 0 : index
    %c37_104 = arith.constant 37 : index
    %118 = vector.load %arg8[%c0_102, %c0_103, %c37_104] : memref<7x8x254xf32, #tpu.memory_space<vmem>>, vector<1x8x216xf32>
    %119 = vector.shape_cast %118 : vector<1x8x216xf32> to vector<8x216xf32>
    %c56 = arith.constant 56 : index
    %c0_105 = arith.constant 0 : index
    %120 = vector.load %arg9[%c56, %c0_105] : memref<72x1792xf32, #tpu.memory_space<vmem>>, vector<8x216xf32>
    tpu.vector_store %arg9[%c56, %c0_105], %119 {strides = array<i32>} : memref<72x1792xf32, #tpu.memory_space<vmem>>, vector<8x216xf32>,
    %c0_106 = arith.constant 0 : index
    %c0_107 = arith.constant 0 : index
    %c38 = arith.constant 38 : index
    %121 = vector.load %arg8[%c0_106, %c0_107, %c38] : memref<7x8x254xf32, #tpu.memory_space<vmem>>, vector<1x8x216xf32>
    %122 = vector.shape_cast %121 : vector<1x8x216xf32> to vector<8x216xf32>
    %c64 = arith.constant 64 : index
    %c0_108 = arith.constant 0 : index
    %123 = vector.load %arg9[%c64, %c0_108] : memref<72x1792xf32, #tpu.memory_space<vmem>>, vector<8x216xf32>
    tpu.vector_store %arg9[%c64, %c0_108], %122 {strides = array<i32>} : memref<72x1792xf32, #tpu.memory_space<vmem>>, vector<8x216xf32>,
    %c1_109 = arith.constant 1 : index
    %c0_110 = arith.constant 0 : index
    %c0_111 = arith.constant 0 : index
    %124 = vector.load %arg8[%c1_109, %c0_110, %c0_111] : memref<7x8x254xf32, #tpu.memory_space<vmem>>, vector<1x8x216xf32>
    %125 = vector.shape_cast %124 : vector<1x8x216xf32> to vector<8x216xf32>
    %c0_112 = arith.constant 0 : index
    %c256 = arith.constant 256 : index
    %126 = vector.load %arg9[%c0_112, %c256] : memref<72x1792xf32, #tpu.memory_space<vmem>>, vector<8x216xf32>
    tpu.vector_store %arg9[%c0_112, %c256], %125 {strides = array<i32>} : memref<72x1792xf32, #tpu.memory_space<vmem>>, vector<8x216xf32>,
    %c1_113 = arith.constant 1 : index
    %c0_114 = arith.constant 0 : index
    %c1_115 = arith.constant 1 : index
    %127 = vector.load %arg8[%c1_113, %c0_114, %c1_115] : memref<7x8x254xf32, #tpu.memory_space<vmem>>, vector<1x8x216xf32>
    %128 = vector.shape_cast %127 : vector<1x8x216xf32> to vector<8x216xf32>
    %c8_116 = arith.constant 8 : index
    %c256_117 = arith.constant 256 : index
    %129 = vector.load %arg9[%c8_116, %c256_117] : memref<72x1792xf32, #tpu.memory_space<vmem>>, vector<8x216xf32>
    tpu.vector_store %arg9[%c8_116, %c256_117], %128 {strides = array<i32>} : memref<72x1792xf32, #tpu.memory_space<vmem>>, vector<8x216xf32>,
    %c1_118 = arith.constant 1 : index
    %c0_119 = arith.constant 0 : index
    %c2_120 = arith.constant 2 : index
    %130 = vector.load %arg8[%c1_118, %c0_119, %c2_120] : memref<7x8x254xf32, #tpu.memory_space<vmem>>, vector<1x8x216xf32>
    %131 = vector.shape_cast %130 : vector<1x8x216xf32> to vector<8x216xf32>
    %c16_121 = arith.constant 16 : index
    %c256_122 = arith.constant 256 : index
    %132 = vector.load %arg9[%c16_121, %c256_122] : memref<72x1792xf32, #tpu.memory_space<vmem>>, vector<8x216xf32>
    tpu.vector_store %arg9[%c16_121, %c256_122], %131 {strides = array<i32>} : memref<72x1792xf32, #tpu.memory_space<vmem>>, vector<8x216xf32>,
    %c1_123 = arith.constant 1 : index
    %c0_124 = arith.constant 0 : index
    %c18_125 = arith.constant 18 : index
    %133 = vector.load %arg8[%c1_123, %c0_124, %c18_125] : memref<7x8x254xf32, #tpu.memory_space<vmem>>, vector<1x8x216xf32>
    %134 = vector.shape_cast %133 : vector<1x8x216xf32> to vector<8x216xf32>
    %c24_126 = arith.constant 24 : index
    %c256_127 = arith.constant 256 : index
    %135 = vector.load %arg9[%c24_126, %c256_127] : memref<72x1792xf32, #tpu.memory_space<vmem>>, vector<8x216xf32>
    tpu.vector_store %arg9[%c24_126, %c256_127], %134 {strides = array<i32>} : memref<72x1792xf32, #tpu.memory_space<vmem>>, vector<8x216xf32>,
    %c1_128 = arith.constant 1 : index
    %c0_129 = arith.constant 0 : index
    %c19_130 = arith.constant 19 : index
    %136 = vector.load %arg8[%c1_128, %c0_129, %c19_130] : memref<7x8x254xf32, #tpu.memory_space<vmem>>, vector<1x8x216xf32>
    %137 = vector.shape_cast %136 : vector<1x8x216xf32> to vector<8x216xf32>
    %c32_131 = arith.constant 32 : index
    %c256_132 = arith.constant 256 : index
    %138 = vector.load %arg9[%c32_131, %c256_132] : memref<72x1792xf32, #tpu.memory_space<vmem>>, vector<8x216xf32>
    tpu.vector_store %arg9[%c32_131, %c256_132], %137 {strides = array<i32>} : memref<72x1792xf32, #tpu.memory_space<vmem>>, vector<8x216xf32>,
    %c1_133 = arith.constant 1 : index
    %c0_134 = arith.constant 0 : index
    %c20_135 = arith.constant 20 : index
    %139 = vector.load %arg8[%c1_133, %c0_134, %c20_135] : memref<7x8x254xf32, #tpu.memory_space<vmem>>, vector<1x8x216xf32>
    %140 = vector.shape_cast %139 : vector<1x8x216xf32> to vector<8x216xf32>
    %c40_136 = arith.constant 40 : index
    %c256_137 = arith.constant 256 : index
    %141 = vector.load %arg9[%c40_136, %c256_137] : memref<72x1792xf32, #tpu.memory_space<vmem>>, vector<8x216xf32>
    tpu.vector_store %arg9[%c40_136, %c256_137], %140 {strides = array<i32>} : memref<72x1792xf32, #tpu.memory_space<vmem>>, vector<8x216xf32>,
    %c1_138 = arith.constant 1 : index
    %c0_139 = arith.constant 0 : index
    %c36_140 = arith.constant 36 : index
    %142 = vector.load %arg8[%c1_138, %c0_139, %c36_140] : memref<7x8x254xf32, #tpu.memory_space<vmem>>, vector<1x8x216xf32>
    %143 = vector.shape_cast %142 : vector<1x8x216xf32> to vector<8x216xf32>
    %c48_141 = arith.constant 48 : index
    %c256_142 = arith.constant 256 : index
    %144 = vector.load %arg9[%c48_141, %c256_142] : memref<72x1792xf32, #tpu.memory_space<vmem>>, vector<8x216xf32>
    tpu.vector_store %arg9[%c48_141, %c256_142], %143 {strides = array<i32>} : memref<72x1792xf32, #tpu.memory_space<vmem>>, vector<8x216xf32>,
    %c1_143 = arith.constant 1 : index
    %c0_144 = arith.constant 0 : index
    %c37_145 = arith.constant 37 : index
    %145 = vector.load %arg8[%c1_143, %c0_144, %c37_145] : memref<7x8x254xf32, #tpu.memory_space<vmem>>, vector<1x8x216xf32>
    %146 = vector.shape_cast %145 : vector<1x8x216xf32> to vector<8x216xf32>
    %c56_146 = arith.constant 56 : index
    %c256_147 = arith.constant 256 : index
    %147 = vector.load %arg9[%c56_146, %c256_147] : memref<72x1792xf32, #tpu.memory_space<vmem>>, vector<8x216xf32>
    tpu.vector_store %arg9[%c56_146, %c256_147], %146 {strides = array<i32>} : memref<72x1792xf32, #tpu.memory_space<vmem>>, vector<8x216xf32>,
    %c1_148 = arith.constant 1 : index
    %c0_149 = arith.constant 0 : index
    %c38_150 = arith.constant 38 : index
    %148 = vector.load %arg8[%c1_148, %c0_149, %c38_150] : memref<7x8x254xf32, #tpu.memory_space<vmem>>, vector<1x8x216xf32>
    %149 = vector.shape_cast %148 : vector<1x8x216xf32> to vector<8x216xf32>
    %c64_151 = arith.constant 64 : index
    %c256_152 = arith.constant 256 : index
    %150 = vector.load %arg9[%c64_151, %c256_152] : memref<72x1792xf32, #tpu.memory_space<vmem>>, vector<8x216xf32>
    tpu.vector_store %arg9[%c64_151, %c256_152], %149 {strides = array<i32>} : memref<72x1792xf32, #tpu.memory_space<vmem>>, vector<8x216xf32>,
    %c2_153 = arith.constant 2 : index
    %c0_154 = arith.constant 0 : index
    %c0_155 = arith.constant 0 : index
    %151 = vector.load %arg8[%c2_153, %c0_154, %c0_155] : memref<7x8x254xf32, #tpu.memory_space<vmem>>, vector<1x8x216xf32>
    %152 = vector.shape_cast %151 : vector<1x8x216xf32> to vector<8x216xf32>
    %c0_156 = arith.constant 0 : index
    %c512 = arith.constant 512 : index
    %153 = vector.load %arg9[%c0_156, %c512] : memref<72x1792xf32, #tpu.memory_space<vmem>>, vector<8x216xf32>
    tpu.vector_store %arg9[%c0_156, %c512], %152 {strides = array<i32>} : memref<72x1792xf32, #tpu.memory_space<vmem>>, vector<8x216xf32>,
    %c2_157 = arith.constant 2 : index
    %c0_158 = arith.constant 0 : index
    %c1_159 = arith.constant 1 : index
    %154 = vector.load %arg8[%c2_157, %c0_158, %c1_159] : memref<7x8x254xf32, #tpu.memory_space<vmem>>, vector<1x8x216xf32>
    %155 = vector.shape_cast %154 : vector<1x8x216xf32> to vector<8x216xf32>
    %c8_160 = arith.constant 8 : index
    %c512_161 = arith.constant 512 : index
    %156 = vector.load %arg9[%c8_160, %c512_161] : memref<72x1792xf32, #tpu.memory_space<vmem>>, vector<8x216xf32>
    tpu.vector_store %arg9[%c8_160, %c512_161], %155 {strides = array<i32>} : memref<72x1792xf32, #tpu.memory_space<vmem>>, vector<8x216xf32>,
    %c2_162 = arith.constant 2 : index
    %c0_163 = arith.constant 0 : index
    %c2_164 = arith.constant 2 : index
    %157 = vector.load %arg8[%c2_162, %c0_163, %c2_164] : memref<7x8x254xf32, #tpu.memory_space<vmem>>, vector<1x8x216xf32>
    %158 = vector.shape_cast %157 : vector<1x8x216xf32> to vector<8x216xf32>
    %c16_165 = arith.constant 16 : index
    %c512_166 = arith.constant 512 : index
    %159 = vector.load %arg9[%c16_165, %c512_166] : memref<72x1792xf32, #tpu.memory_space<vmem>>, vector<8x216xf32>
    tpu.vector_store %arg9[%c16_165, %c512_166], %158 {strides = array<i32>} : memref<72x1792xf32, #tpu.memory_space<vmem>>, vector<8x216xf32>,
    %c2_167 = arith.constant 2 : index
    %c0_168 = arith.constant 0 : index
    %c18_169 = arith.constant 18 : index
    %160 = vector.load %arg8[%c2_167, %c0_168, %c18_169] : memref<7x8x254xf32, #tpu.memory_space<vmem>>, vector<1x8x216xf32>
    %161 = vector.shape_cast %160 : vector<1x8x216xf32> to vector<8x216xf32>
    %c24_170 = arith.constant 24 : index
    %c512_171 = arith.constant 512 : index
    %162 = vector.load %arg9[%c24_170, %c512_171] : memref<72x1792xf32, #tpu.memory_space<vmem>>, vector<8x216xf32>
    tpu.vector_store %arg9[%c24_170, %c512_171], %161 {strides = array<i32>} : memref<72x1792xf32, #tpu.memory_space<vmem>>, vector<8x216xf32>,
    %c2_172 = arith.constant 2 : index
    %c0_173 = arith.constant 0 : index
    %c19_174 = arith.constant 19 : index
    %163 = vector.load %arg8[%c2_172, %c0_173, %c19_174] : memref<7x8x254xf32, #tpu.memory_space<vmem>>, vector<1x8x216xf32>
    %164 = vector.shape_cast %163 : vector<1x8x216xf32> to vector<8x216xf32>
    %c32_175 = arith.constant 32 : index
    %c512_176 = arith.constant 512 : index
    %165 = vector.load %arg9[%c32_175, %c512_176] : memref<72x1792xf32, #tpu.memory_space<vmem>>, vector<8x216xf32>
    tpu.vector_store %arg9[%c32_175, %c512_176], %164 {strides = array<i32>} : memref<72x1792xf32, #tpu.memory_space<vmem>>, vector<8x216xf32>,
    %c2_177 = arith.constant 2 : index
    %c0_178 = arith.constant 0 : index
    %c20_179 = arith.constant 20 : index
    %166 = vector.load %arg8[%c2_177, %c0_178, %c20_179] : memref<7x8x254xf32, #tpu.memory_space<vmem>>, vector<1x8x216xf32>
    %167 = vector.shape_cast %166 : vector<1x8x216xf32> to vector<8x216xf32>
    %c40_180 = arith.constant 40 : index
    %c512_181 = arith.constant 512 : index
    %168 = vector.load %arg9[%c40_180, %c512_181] : memref<72x1792xf32, #tpu.memory_space<vmem>>, vector<8x216xf32>
    tpu.vector_store %arg9[%c40_180, %c512_181], %167 {strides = array<i32>} : memref<72x1792xf32, #tpu.memory_space<vmem>>, vector<8x216xf32>,
    %c2_182 = arith.constant 2 : index
    %c0_183 = arith.constant 0 : index
    %c36_184 = arith.constant 36 : index
    %169 = vector.load %arg8[%c2_182, %c0_183, %c36_184] : memref<7x8x254xf32, #tpu.memory_space<vmem>>, vector<1x8x216xf32>
    %170 = vector.shape_cast %169 : vector<1x8x216xf32> to vector<8x216xf32>
    %c48_185 = arith.constant 48 : index
    %c512_186 = arith.constant 512 : index
    %171 = vector.load %arg9[%c48_185, %c512_186] : memref<72x1792xf32, #tpu.memory_space<vmem>>, vector<8x216xf32>
    tpu.vector_store %arg9[%c48_185, %c512_186], %170 {strides = array<i32>} : memref<72x1792xf32, #tpu.memory_space<vmem>>, vector<8x216xf32>,
    %c2_187 = arith.constant 2 : index
    %c0_188 = arith.constant 0 : index
    %c37_189 = arith.constant 37 : index
    %172 = vector.load %arg8[%c2_187, %c0_188, %c37_189] : memref<7x8x254xf32, #tpu.memory_space<vmem>>, vector<1x8x216xf32>
    %173 = vector.shape_cast %172 : vector<1x8x216xf32> to vector<8x216xf32>
    %c56_190 = arith.constant 56 : index
    %c512_191 = arith.constant 512 : index
    %174 = vector.load %arg9[%c56_190, %c512_191] : memref<72x1792xf32, #tpu.memory_space<vmem>>, vector<8x216xf32>
    tpu.vector_store %arg9[%c56_190, %c512_191], %173 {strides = array<i32>} : memref<72x1792xf32, #tpu.memory_space<vmem>>, vector<8x216xf32>,
    %c2_192 = arith.constant 2 : index
    %c0_193 = arith.constant 0 : index
    %c38_194 = arith.constant 38 : index
    %175 = vector.load %arg8[%c2_192, %c0_193, %c38_194] : memref<7x8x254xf32, #tpu.memory_space<vmem>>, vector<1x8x216xf32>
    %176 = vector.shape_cast %175 : vector<1x8x216xf32> to vector<8x216xf32>
    %c64_195 = arith.constant 64 : index
    %c512_196 = arith.constant 512 : index
    %177 = vector.load %arg9[%c64_195, %c512_196] : memref<72x1792xf32, #tpu.memory_space<vmem>>, vector<8x216xf32>
    tpu.vector_store %arg9[%c64_195, %c512_196], %176 {strides = array<i32>} : memref<72x1792xf32, #tpu.memory_space<vmem>>, vector<8x216xf32>,
    %c3_197 = arith.constant 3 : index
    %c0_198 = arith.constant 0 : index
    %c0_199 = arith.constant 0 : index
    %178 = vector.load %arg8[%c3_197, %c0_198, %c0_199] : memref<7x8x254xf32, #tpu.memory_space<vmem>>, vector<1x8x216xf32>
    %179 = vector.shape_cast %178 : vector<1x8x216xf32> to vector<8x216xf32>
    %c0_200 = arith.constant 0 : index
    %c768 = arith.constant 768 : index
    %180 = vector.load %arg9[%c0_200, %c768] : memref<72x1792xf32, #tpu.memory_space<vmem>>, vector<8x216xf32>
    tpu.vector_store %arg9[%c0_200, %c768], %179 {strides = array<i32>} : memref<72x1792xf32, #tpu.memory_space<vmem>>, vector<8x216xf32>,
    %c3_201 = arith.constant 3 : index
    %c0_202 = arith.constant 0 : index
    %c1_203 = arith.constant 1 : index
    %181 = vector.load %arg8[%c3_201, %c0_202, %c1_203] : memref<7x8x254xf32, #tpu.memory_space<vmem>>, vector<1x8x216xf32>
    %182 = vector.shape_cast %181 : vector<1x8x216xf32> to vector<8x216xf32>
    %c8_204 = arith.constant 8 : index
    %c768_205 = arith.constant 768 : index
    %183 = vector.load %arg9[%c8_204, %c768_205] : memref<72x1792xf32, #tpu.memory_space<vmem>>, vector<8x216xf32>
    tpu.vector_store %arg9[%c8_204, %c768_205], %182 {strides = array<i32>} : memref<72x1792xf32, #tpu.memory_space<vmem>>, vector<8x216xf32>,
    %c3_206 = arith.constant 3 : index
    %c0_207 = arith.constant 0 : index
    %c2_208 = arith.constant 2 : index
    %184 = vector.load %arg8[%c3_206, %c0_207, %c2_208] : memref<7x8x254xf32, #tpu.memory_space<vmem>>, vector<1x8x216xf32>
    %185 = vector.shape_cast %184 : vector<1x8x216xf32> to vector<8x216xf32>
    %c16_209 = arith.constant 16 : index
    %c768_210 = arith.constant 768 : index
    %186 = vector.load %arg9[%c16_209, %c768_210] : memref<72x1792xf32, #tpu.memory_space<vmem>>, vector<8x216xf32>
    tpu.vector_store %arg9[%c16_209, %c768_210], %185 {strides = array<i32>} : memref<72x1792xf32, #tpu.memory_space<vmem>>, vector<8x216xf32>,
    %c3_211 = arith.constant 3 : index
    %c0_212 = arith.constant 0 : index
    %c18_213 = arith.constant 18 : index
    %187 = vector.load %arg8[%c3_211, %c0_212, %c18_213] : memref<7x8x254xf32, #tpu.memory_space<vmem>>, vector<1x8x216xf32>
    %188 = vector.shape_cast %187 : vector<1x8x216xf32> to vector<8x216xf32>
    %c24_214 = arith.constant 24 : index
    %c768_215 = arith.constant 768 : index
    %189 = vector.load %arg9[%c24_214, %c768_215] : memref<72x1792xf32, #tpu.memory_space<vmem>>, vector<8x216xf32>
    tpu.vector_store %arg9[%c24_214, %c768_215], %188 {strides = array<i32>} : memref<72x1792xf32, #tpu.memory_space<vmem>>, vector<8x216xf32>,
    %c3_216 = arith.constant 3 : index
    %c0_217 = arith.constant 0 : index
    %c19_218 = arith.constant 19 : index
    %190 = vector.load %arg8[%c3_216, %c0_217, %c19_218] : memref<7x8x254xf32, #tpu.memory_space<vmem>>, vector<1x8x216xf32>
    %191 = vector.shape_cast %190 : vector<1x8x216xf32> to vector<8x216xf32>
    %c32_219 = arith.constant 32 : index
    %c768_220 = arith.constant 768 : index
    %192 = vector.load %arg9[%c32_219, %c768_220] : memref<72x1792xf32, #tpu.memory_space<vmem>>, vector<8x216xf32>
    tpu.vector_store %arg9[%c32_219, %c768_220], %191 {strides = array<i32>} : memref<72x1792xf32, #tpu.memory_space<vmem>>, vector<8x216xf32>,
    %c3_221 = arith.constant 3 : index
    %c0_222 = arith.constant 0 : index
    %c20_223 = arith.constant 20 : index
    %193 = vector.load %arg8[%c3_221, %c0_222, %c20_223] : memref<7x8x254xf32, #tpu.memory_space<vmem>>, vector<1x8x216xf32>
    %194 = vector.shape_cast %193 : vector<1x8x216xf32> to vector<8x216xf32>
    %c40_224 = arith.constant 40 : index
    %c768_225 = arith.constant 768 : index
    %195 = vector.load %arg9[%c40_224, %c768_225] : memref<72x1792xf32, #tpu.memory_space<vmem>>, vector<8x216xf32>
    tpu.vector_store %arg9[%c40_224, %c768_225], %194 {strides = array<i32>} : memref<72x1792xf32, #tpu.memory_space<vmem>>, vector<8x216xf32>,
    %c3_226 = arith.constant 3 : index
    %c0_227 = arith.constant 0 : index
    %c36_228 = arith.constant 36 : index
    %196 = vector.load %arg8[%c3_226, %c0_227, %c36_228] : memref<7x8x254xf32, #tpu.memory_space<vmem>>, vector<1x8x216xf32>
    %197 = vector.shape_cast %196 : vector<1x8x216xf32> to vector<8x216xf32>
    %c48_229 = arith.constant 48 : index
    %c768_230 = arith.constant 768 : index
    %198 = vector.load %arg9[%c48_229, %c768_230] : memref<72x1792xf32, #tpu.memory_space<vmem>>, vector<8x216xf32>
    tpu.vector_store %arg9[%c48_229, %c768_230], %197 {strides = array<i32>} : memref<72x1792xf32, #tpu.memory_space<vmem>>, vector<8x216xf32>,
    %c3_231 = arith.constant 3 : index
    %c0_232 = arith.constant 0 : index
    %c37_233 = arith.constant 37 : index
    %199 = vector.load %arg8[%c3_231, %c0_232, %c37_233] : memref<7x8x254xf32, #tpu.memory_space<vmem>>, vector<1x8x216xf32>
    %200 = vector.shape_cast %199 : vector<1x8x216xf32> to vector<8x216xf32>
    %c56_234 = arith.constant 56 : index
    %c768_235 = arith.constant 768 : index
    %201 = vector.load %arg9[%c56_234, %c768_235] : memref<72x1792xf32, #tpu.memory_space<vmem>>, vector<8x216xf32>
    tpu.vector_store %arg9[%c56_234, %c768_235], %200 {strides = array<i32>} : memref<72x1792xf32, #tpu.memory_space<vmem>>, vector<8x216xf32>,
    %c3_236 = arith.constant 3 : index
    %c0_237 = arith.constant 0 : index
    %c38_238 = arith.constant 38 : index
    %202 = vector.load %arg8[%c3_236, %c0_237, %c38_238] : memref<7x8x254xf32, #tpu.memory_space<vmem>>, vector<1x8x216xf32>
    %203 = vector.shape_cast %202 : vector<1x8x216xf32> to vector<8x216xf32>
    %c64_239 = arith.constant 64 : index
    %c768_240 = arith.constant 768 : index
    %204 = vector.load %arg9[%c64_239, %c768_240] : memref<72x1792xf32, #tpu.memory_space<vmem>>, vector<8x216xf32>
    tpu.vector_store %arg9[%c64_239, %c768_240], %203 {strides = array<i32>} : memref<72x1792xf32, #tpu.memory_space<vmem>>, vector<8x216xf32>,
    %c4_241 = arith.constant 4 : index
    %c0_242 = arith.constant 0 : index
    %c0_243 = arith.constant 0 : index
    %205 = vector.load %arg8[%c4_241, %c0_242, %c0_243] : memref<7x8x254xf32, #tpu.memory_space<vmem>>, vector<1x8x216xf32>
    %206 = vector.shape_cast %205 : vector<1x8x216xf32> to vector<8x216xf32>
    %c0_244 = arith.constant 0 : index
    %c1024 = arith.constant 1024 : index
    %207 = vector.load %arg9[%c0_244, %c1024] : memref<72x1792xf32, #tpu.memory_space<vmem>>, vector<8x216xf32>
    tpu.vector_store %arg9[%c0_244, %c1024], %206 {strides = array<i32>} : memref<72x1792xf32, #tpu.memory_space<vmem>>, vector<8x216xf32>,
    %c4_245 = arith.constant 4 : index
    %c0_246 = arith.constant 0 : index
    %c1_247 = arith.constant 1 : index
    %208 = vector.load %arg8[%c4_245, %c0_246, %c1_247] : memref<7x8x254xf32, #tpu.memory_space<vmem>>, vector<1x8x216xf32>
    %209 = vector.shape_cast %208 : vector<1x8x216xf32> to vector<8x216xf32>
    %c8_248 = arith.constant 8 : index
    %c1024_249 = arith.constant 1024 : index
    %210 = vector.load %arg9[%c8_248, %c1024_249] : memref<72x1792xf32, #tpu.memory_space<vmem>>, vector<8x216xf32>
    tpu.vector_store %arg9[%c8_248, %c1024_249], %209 {strides = array<i32>} : memref<72x1792xf32, #tpu.memory_space<vmem>>, vector<8x216xf32>,
    %c4_250 = arith.constant 4 : index
    %c0_251 = arith.constant 0 : index
    %c2_252 = arith.constant 2 : index
    %211 = vector.load %arg8[%c4_250, %c0_251, %c2_252] : memref<7x8x254xf32, #tpu.memory_space<vmem>>, vector<1x8x216xf32>
    %212 = vector.shape_cast %211 : vector<1x8x216xf32> to vector<8x216xf32>
    %c16_253 = arith.constant 16 : index
    %c1024_254 = arith.constant 1024 : index
    %213 = vector.load %arg9[%c16_253, %c1024_254] : memref<72x1792xf32, #tpu.memory_space<vmem>>, vector<8x216xf32>
    tpu.vector_store %arg9[%c16_253, %c1024_254], %212 {strides = array<i32>} : memref<72x1792xf32, #tpu.memory_space<vmem>>, vector<8x216xf32>,
    %c4_255 = arith.constant 4 : index
    %c0_256 = arith.constant 0 : index
    %c18_257 = arith.constant 18 : index
    %214 = vector.load %arg8[%c4_255, %c0_256, %c18_257] : memref<7x8x254xf32, #tpu.memory_space<vmem>>, vector<1x8x216xf32>
    %215 = vector.shape_cast %214 : vector<1x8x216xf32> to vector<8x216xf32>
    %c24_258 = arith.constant 24 : index
    %c1024_259 = arith.constant 1024 : index
    %216 = vector.load %arg9[%c24_258, %c1024_259] : memref<72x1792xf32, #tpu.memory_space<vmem>>, vector<8x216xf32>
    tpu.vector_store %arg9[%c24_258, %c1024_259], %215 {strides = array<i32>} : memref<72x1792xf32, #tpu.memory_space<vmem>>, vector<8x216xf32>,
    %c4_260 = arith.constant 4 : index
    %c0_261 = arith.constant 0 : index
    %c19_262 = arith.constant 19 : index
    %217 = vector.load %arg8[%c4_260, %c0_261, %c19_262] : memref<7x8x254xf32, #tpu.memory_space<vmem>>, vector<1x8x216xf32>
    %218 = vector.shape_cast %217 : vector<1x8x216xf32> to vector<8x216xf32>
    %c32_263 = arith.constant 32 : index
    %c1024_264 = arith.constant 1024 : index
    %219 = vector.load %arg9[%c32_263, %c1024_264] : memref<72x1792xf32, #tpu.memory_space<vmem>>, vector<8x216xf32>
    tpu.vector_store %arg9[%c32_263, %c1024_264], %218 {strides = array<i32>} : memref<72x1792xf32, #tpu.memory_space<vmem>>, vector<8x216xf32>,
    %c4_265 = arith.constant 4 : index
    %c0_266 = arith.constant 0 : index
    %c20_267 = arith.constant 20 : index
    %220 = vector.load %arg8[%c4_265, %c0_266, %c20_267] : memref<7x8x254xf32, #tpu.memory_space<vmem>>, vector<1x8x216xf32>
    %221 = vector.shape_cast %220 : vector<1x8x216xf32> to vector<8x216xf32>
    %c40_268 = arith.constant 40 : index
    %c1024_269 = arith.constant 1024 : index
    %222 = vector.load %arg9[%c40_268, %c1024_269] : memref<72x1792xf32, #tpu.memory_space<vmem>>, vector<8x216xf32>
    tpu.vector_store %arg9[%c40_268, %c1024_269], %221 {strides = array<i32>} : memref<72x1792xf32, #tpu.memory_space<vmem>>, vector<8x216xf32>,
    %c4_270 = arith.constant 4 : index
    %c0_271 = arith.constant 0 : index
    %c36_272 = arith.constant 36 : index
    %223 = vector.load %arg8[%c4_270, %c0_271, %c36_272] : memref<7x8x254xf32, #tpu.memory_space<vmem>>, vector<1x8x216xf32>
    %224 = vector.shape_cast %223 : vector<1x8x216xf32> to vector<8x216xf32>
    %c48_273 = arith.constant 48 : index
    %c1024_274 = arith.constant 1024 : index
    %225 = vector.load %arg9[%c48_273, %c1024_274] : memref<72x1792xf32, #tpu.memory_space<vmem>>, vector<8x216xf32>
    tpu.vector_store %arg9[%c48_273, %c1024_274], %224 {strides = array<i32>} : memref<72x1792xf32, #tpu.memory_space<vmem>>, vector<8x216xf32>,
    %c4_275 = arith.constant 4 : index
    %c0_276 = arith.constant 0 : index
    %c37_277 = arith.constant 37 : index
    %226 = vector.load %arg8[%c4_275, %c0_276, %c37_277] : memref<7x8x254xf32, #tpu.memory_space<vmem>>, vector<1x8x216xf32>
    %227 = vector.shape_cast %226 : vector<1x8x216xf32> to vector<8x216xf32>
    %c56_278 = arith.constant 56 : index
    %c1024_279 = arith.constant 1024 : index
    %228 = vector.load %arg9[%c56_278, %c1024_279] : memref<72x1792xf32, #tpu.memory_space<vmem>>, vector<8x216xf32>
    tpu.vector_store %arg9[%c56_278, %c1024_279], %227 {strides = array<i32>} : memref<72x1792xf32, #tpu.memory_space<vmem>>, vector<8x216xf32>,
    %c4_280 = arith.constant 4 : index
    %c0_281 = arith.constant 0 : index
    %c38_282 = arith.constant 38 : index
    %229 = vector.load %arg8[%c4_280, %c0_281, %c38_282] : memref<7x8x254xf32, #tpu.memory_space<vmem>>, vector<1x8x216xf32>
    %230 = vector.shape_cast %229 : vector<1x8x216xf32> to vector<8x216xf32>
    %c64_283 = arith.constant 64 : index
    %c1024_284 = arith.constant 1024 : index
    %231 = vector.load %arg9[%c64_283, %c1024_284] : memref<72x1792xf32, #tpu.memory_space<vmem>>, vector<8x216xf32>
    tpu.vector_store %arg9[%c64_283, %c1024_284], %230 {strides = array<i32>} : memref<72x1792xf32, #tpu.memory_space<vmem>>, vector<8x216xf32>,
    %c5_285 = arith.constant 5 : index
    %c0_286 = arith.constant 0 : index
    %c0_287 = arith.constant 0 : index
    %232 = vector.load %arg8[%c5_285, %c0_286, %c0_287] : memref<7x8x254xf32, #tpu.memory_space<vmem>>, vector<1x8x216xf32>
    %233 = vector.shape_cast %232 : vector<1x8x216xf32> to vector<8x216xf32>
    %c0_288 = arith.constant 0 : index
    %c1280 = arith.constant 1280 : index
    %234 = vector.load %arg9[%c0_288, %c1280] : memref<72x1792xf32, #tpu.memory_space<vmem>>, vector<8x216xf32>
    tpu.vector_store %arg9[%c0_288, %c1280], %233 {strides = array<i32>} : memref<72x1792xf32, #tpu.memory_space<vmem>>, vector<8x216xf32>,
    %c5_289 = arith.constant 5 : index
    %c0_290 = arith.constant 0 : index
    %c1_291 = arith.constant 1 : index
    %235 = vector.load %arg8[%c5_289, %c0_290, %c1_291] : memref<7x8x254xf32, #tpu.memory_space<vmem>>, vector<1x8x216xf32>
    %236 = vector.shape_cast %235 : vector<1x8x216xf32> to vector<8x216xf32>
    %c8_292 = arith.constant 8 : index
    %c1280_293 = arith.constant 1280 : index
    %237 = vector.load %arg9[%c8_292, %c1280_293] : memref<72x1792xf32, #tpu.memory_space<vmem>>, vector<8x216xf32>
    tpu.vector_store %arg9[%c8_292, %c1280_293], %236 {strides = array<i32>} : memref<72x1792xf32, #tpu.memory_space<vmem>>, vector<8x216xf32>,
    %c5_294 = arith.constant 5 : index
    %c0_295 = arith.constant 0 : index
    %c2_296 = arith.constant 2 : index
    %238 = vector.load %arg8[%c5_294, %c0_295, %c2_296] : memref<7x8x254xf32, #tpu.memory_space<vmem>>, vector<1x8x216xf32>
    %239 = vector.shape_cast %238 : vector<1x8x216xf32> to vector<8x216xf32>
    %c16_297 = arith.constant 16 : index
    %c1280_298 = arith.constant 1280 : index
    %240 = vector.load %arg9[%c16_297, %c1280_298] : memref<72x1792xf32, #tpu.memory_space<vmem>>, vector<8x216xf32>
    tpu.vector_store %arg9[%c16_297, %c1280_298], %239 {strides = array<i32>} : memref<72x1792xf32, #tpu.memory_space<vmem>>, vector<8x216xf32>,
    %c5_299 = arith.constant 5 : index
    %c0_300 = arith.constant 0 : index
    %c18_301 = arith.constant 18 : index
    %241 = vector.load %arg8[%c5_299, %c0_300, %c18_301] : memref<7x8x254xf32, #tpu.memory_space<vmem>>, vector<1x8x216xf32>
    %242 = vector.shape_cast %241 : vector<1x8x216xf32> to vector<8x216xf32>
    %c24_302 = arith.constant 24 : index
    %c1280_303 = arith.constant 1280 : index
    %243 = vector.load %arg9[%c24_302, %c1280_303] : memref<72x1792xf32, #tpu.memory_space<vmem>>, vector<8x216xf32>
    tpu.vector_store %arg9[%c24_302, %c1280_303], %242 {strides = array<i32>} : memref<72x1792xf32, #tpu.memory_space<vmem>>, vector<8x216xf32>,
    %c5_304 = arith.constant 5 : index
    %c0_305 = arith.constant 0 : index
    %c19_306 = arith.constant 19 : index
    %244 = vector.load %arg8[%c5_304, %c0_305, %c19_306] : memref<7x8x254xf32, #tpu.memory_space<vmem>>, vector<1x8x216xf32>
    %245 = vector.shape_cast %244 : vector<1x8x216xf32> to vector<8x216xf32>
    %c32_307 = arith.constant 32 : index
    %c1280_308 = arith.constant 1280 : index
    %246 = vector.load %arg9[%c32_307, %c1280_308] : memref<72x1792xf32, #tpu.memory_space<vmem>>, vector<8x216xf32>
    tpu.vector_store %arg9[%c32_307, %c1280_308], %245 {strides = array<i32>} : memref<72x1792xf32, #tpu.memory_space<vmem>>, vector<8x216xf32>,
    %c5_309 = arith.constant 5 : index
    %c0_310 = arith.constant 0 : index
    %c20_311 = arith.constant 20 : index
    %247 = vector.load %arg8[%c5_309, %c0_310, %c20_311] : memref<7x8x254xf32, #tpu.memory_space<vmem>>, vector<1x8x216xf32>
    %248 = vector.shape_cast %247 : vector<1x8x216xf32> to vector<8x216xf32>
    %c40_312 = arith.constant 40 : index
    %c1280_313 = arith.constant 1280 : index
    %249 = vector.load %arg9[%c40_312, %c1280_313] : memref<72x1792xf32, #tpu.memory_space<vmem>>, vector<8x216xf32>
    tpu.vector_store %arg9[%c40_312, %c1280_313], %248 {strides = array<i32>} : memref<72x1792xf32, #tpu.memory_space<vmem>>, vector<8x216xf32>,
    %c5_314 = arith.constant 5 : index
    %c0_315 = arith.constant 0 : index
    %c36_316 = arith.constant 36 : index
    %250 = vector.load %arg8[%c5_314, %c0_315, %c36_316] : memref<7x8x254xf32, #tpu.memory_space<vmem>>, vector<1x8x216xf32>
    %251 = vector.shape_cast %250 : vector<1x8x216xf32> to vector<8x216xf32>
    %c48_317 = arith.constant 48 : index
    %c1280_318 = arith.constant 1280 : index
    %252 = vector.load %arg9[%c48_317, %c1280_318] : memref<72x1792xf32, #tpu.memory_space<vmem>>, vector<8x216xf32>
    tpu.vector_store %arg9[%c48_317, %c1280_318], %251 {strides = array<i32>} : memref<72x1792xf32, #tpu.memory_space<vmem>>, vector<8x216xf32>,
    %c5_319 = arith.constant 5 : index
    %c0_320 = arith.constant 0 : index
    %c37_321 = arith.constant 37 : index
    %253 = vector.load %arg8[%c5_319, %c0_320, %c37_321] : memref<7x8x254xf32, #tpu.memory_space<vmem>>, vector<1x8x216xf32>
    %254 = vector.shape_cast %253 : vector<1x8x216xf32> to vector<8x216xf32>
    %c56_322 = arith.constant 56 : index
    %c1280_323 = arith.constant 1280 : index
    %255 = vector.load %arg9[%c56_322, %c1280_323] : memref<72x1792xf32, #tpu.memory_space<vmem>>, vector<8x216xf32>
    tpu.vector_store %arg9[%c56_322, %c1280_323], %254 {strides = array<i32>} : memref<72x1792xf32, #tpu.memory_space<vmem>>, vector<8x216xf32>,
    %c5_324 = arith.constant 5 : index
    %c0_325 = arith.constant 0 : index
    %c38_326 = arith.constant 38 : index
    %256 = vector.load %arg8[%c5_324, %c0_325, %c38_326] : memref<7x8x254xf32, #tpu.memory_space<vmem>>, vector<1x8x216xf32>
    %257 = vector.shape_cast %256 : vector<1x8x216xf32> to vector<8x216xf32>
    %c64_327 = arith.constant 64 : index
    %c1280_328 = arith.constant 1280 : index
    %258 = vector.load %arg9[%c64_327, %c1280_328] : memref<72x1792xf32, #tpu.memory_space<vmem>>, vector<8x216xf32>
    tpu.vector_store %arg9[%c64_327, %c1280_328], %257 {strides = array<i32>} : memref<72x1792xf32, #tpu.memory_space<vmem>>, vector<8x216xf32>,
    %c6_329 = arith.constant 6 : index
    %c0_330 = arith.constant 0 : index
    %c0_331 = arith.constant 0 : index
    %259 = vector.load %arg8[%c6_329, %c0_330, %c0_331] : memref<7x8x254xf32, #tpu.memory_space<vmem>>, vector<1x8x216xf32>
    %260 = vector.shape_cast %259 : vector<1x8x216xf32> to vector<8x216xf32>
    %c0_332 = arith.constant 0 : index
    %c1536 = arith.constant 1536 : index
    %261 = vector.load %arg9[%c0_332, %c1536] : memref<72x1792xf32, #tpu.memory_space<vmem>>, vector<8x216xf32>
    tpu.vector_store %arg9[%c0_332, %c1536], %260 {strides = array<i32>} : memref<72x1792xf32, #tpu.memory_space<vmem>>, vector<8x216xf32>,
    %c6_333 = arith.constant 6 : index
    %c0_334 = arith.constant 0 : index
    %c1_335 = arith.constant 1 : index
    %262 = vector.load %arg8[%c6_333, %c0_334, %c1_335] : memref<7x8x254xf32, #tpu.memory_space<vmem>>, vector<1x8x216xf32>
    %263 = vector.shape_cast %262 : vector<1x8x216xf32> to vector<8x216xf32>
    %c8_336 = arith.constant 8 : index
    %c1536_337 = arith.constant 1536 : index
    %264 = vector.load %arg9[%c8_336, %c1536_337] : memref<72x1792xf32, #tpu.memory_space<vmem>>, vector<8x216xf32>
    tpu.vector_store %arg9[%c8_336, %c1536_337], %263 {strides = array<i32>} : memref<72x1792xf32, #tpu.memory_space<vmem>>, vector<8x216xf32>,
    %c6_338 = arith.constant 6 : index
    %c0_339 = arith.constant 0 : index
    %c2_340 = arith.constant 2 : index
    %265 = vector.load %arg8[%c6_338, %c0_339, %c2_340] : memref<7x8x254xf32, #tpu.memory_space<vmem>>, vector<1x8x216xf32>
    %266 = vector.shape_cast %265 : vector<1x8x216xf32> to vector<8x216xf32>
    %c16_341 = arith.constant 16 : index
    %c1536_342 = arith.constant 1536 : index
    %267 = vector.load %arg9[%c16_341, %c1536_342] : memref<72x1792xf32, #tpu.memory_space<vmem>>, vector<8x216xf32>
    tpu.vector_store %arg9[%c16_341, %c1536_342], %266 {strides = array<i32>} : memref<72x1792xf32, #tpu.memory_space<vmem>>, vector<8x216xf32>,
    %c6_343 = arith.constant 6 : index
    %c0_344 = arith.constant 0 : index
    %c18_345 = arith.constant 18 : index
    %268 = vector.load %arg8[%c6_343, %c0_344, %c18_345] : memref<7x8x254xf32, #tpu.memory_space<vmem>>, vector<1x8x216xf32>
    %269 = vector.shape_cast %268 : vector<1x8x216xf32> to vector<8x216xf32>
    %c24_346 = arith.constant 24 : index
    %c1536_347 = arith.constant 1536 : index
    %270 = vector.load %arg9[%c24_346, %c1536_347] : memref<72x1792xf32, #tpu.memory_space<vmem>>, vector<8x216xf32>
    tpu.vector_store %arg9[%c24_346, %c1536_347], %269 {strides = array<i32>} : memref<72x1792xf32, #tpu.memory_space<vmem>>, vector<8x216xf32>,
    %c6_348 = arith.constant 6 : index
    %c0_349 = arith.constant 0 : index
    %c19_350 = arith.constant 19 : index
    %271 = vector.load %arg8[%c6_348, %c0_349, %c19_350] : memref<7x8x254xf32, #tpu.memory_space<vmem>>, vector<1x8x216xf32>
    %272 = vector.shape_cast %271 : vector<1x8x216xf32> to vector<8x216xf32>
    %c32_351 = arith.constant 32 : index
    %c1536_352 = arith.constant 1536 : index
    %273 = vector.load %arg9[%c32_351, %c1536_352] : memref<72x1792xf32, #tpu.memory_space<vmem>>, vector<8x216xf32>
    tpu.vector_store %arg9[%c32_351, %c1536_352], %272 {strides = array<i32>} : memref<72x1792xf32, #tpu.memory_space<vmem>>, vector<8x216xf32>,
    %c6_353 = arith.constant 6 : index
    %c0_354 = arith.constant 0 : index
    %c20_355 = arith.constant 20 : index
    %274 = vector.load %arg8[%c6_353, %c0_354, %c20_355] : memref<7x8x254xf32, #tpu.memory_space<vmem>>, vector<1x8x216xf32>
    %275 = vector.shape_cast %274 : vector<1x8x216xf32> to vector<8x216xf32>
    %c40_356 = arith.constant 40 : index
    %c1536_357 = arith.constant 1536 : index
    %276 = vector.load %arg9[%c40_356, %c1536_357] : memref<72x1792xf32, #tpu.memory_space<vmem>>, vector<8x216xf32>
    tpu.vector_store %arg9[%c40_356, %c1536_357], %275 {strides = array<i32>} : memref<72x1792xf32, #tpu.memory_space<vmem>>, vector<8x216xf32>,
    %c6_358 = arith.constant 6 : index
    %c0_359 = arith.constant 0 : index
    %c36_360 = arith.constant 36 : index
    %277 = vector.load %arg8[%c6_358, %c0_359, %c36_360] : memref<7x8x254xf32, #tpu.memory_space<vmem>>, vector<1x8x216xf32>
    %278 = vector.shape_cast %277 : vector<1x8x216xf32> to vector<8x216xf32>
    %c48_361 = arith.constant 48 : index
    %c1536_362 = arith.constant 1536 : index
    %279 = vector.load %arg9[%c48_361, %c1536_362] : memref<72x1792xf32, #tpu.memory_space<vmem>>, vector<8x216xf32>
    tpu.vector_store %arg9[%c48_361, %c1536_362], %278 {strides = array<i32>} : memref<72x1792xf32, #tpu.memory_space<vmem>>, vector<8x216xf32>,
    %c6_363 = arith.constant 6 : index
    %c0_364 = arith.constant 0 : index
    %c37_365 = arith.constant 37 : index
    %280 = vector.load %arg8[%c6_363, %c0_364, %c37_365] : memref<7x8x254xf32, #tpu.memory_space<vmem>>, vector<1x8x216xf32>
    %281 = vector.shape_cast %280 : vector<1x8x216xf32> to vector<8x216xf32>
    %c56_366 = arith.constant 56 : index
    %c1536_367 = arith.constant 1536 : index
    %282 = vector.load %arg9[%c56_366, %c1536_367] : memref<72x1792xf32, #tpu.memory_space<vmem>>, vector<8x216xf32>
    tpu.vector_store %arg9[%c56_366, %c1536_367], %281 {strides = array<i32>} : memref<72x1792xf32, #tpu.memory_space<vmem>>, vector<8x216xf32>,
    %c6_368 = arith.constant 6 : index
    %c0_369 = arith.constant 0 : index
    %c38_370 = arith.constant 38 : index
    %283 = vector.load %arg8[%c6_368, %c0_369, %c38_370] : memref<7x8x254xf32, #tpu.memory_space<vmem>>, vector<1x8x216xf32>
    %284 = vector.shape_cast %283 : vector<1x8x216xf32> to vector<8x216xf32>
    %c64_371 = arith.constant 64 : index
    %c1536_372 = arith.constant 1536 : index
    %285 = vector.load %arg9[%c64_371, %c1536_372] : memref<72x1792xf32, #tpu.memory_space<vmem>>, vector<8x216xf32>
    tpu.vector_store %arg9[%c64_371, %c1536_372], %284 {strides = array<i32>} : memref<72x1792xf32, #tpu.memory_space<vmem>>, vector<8x216xf32>,
    %c0_373 = arith.constant 0 : index
    %c0_374 = arith.constant 0 : index
    %c0_375 = arith.constant 0 : index
    %286 = vector.load %arg5[%c0_373, %c0_374, %c0_375] : memref<3x8x72xf32, #tpu.memory_space<vmem>>, vector<1x8x72xf32>
    %287 = vector.shape_cast %286 : vector<1x8x72xf32> to vector<8x72xf32>
    %c0_376 = arith.constant 0 : index
    %c0_377 = arith.constant 0 : index
    %288 = vector.load %arg9[%c0_376, %c0_377] : memref<72x1792xf32, #tpu.memory_space<vmem>>, vector<72x1280xf32>
    %cst_378 = arith.constant dense<0.000000e+00> : vector<8x1280xf32>
    %289 = tpu.matmul %287, %288, %cst_378 {dimension_numbers = #tpu.dot_dimension_numbers<[1], [0], [0], [1], [0, 0, 1, 1], [], []>} : vector<8x72xf32>, vector<72x1280xf32>, vector<8x1280xf32> -> vector<8x1280xf32>
    %c1_379 = arith.constant 1 : index
    %c0_380 = arith.constant 0 : index
    %c0_381 = arith.constant 0 : index
    %290 = vector.load %arg5[%c1_379, %c0_380, %c0_381] : memref<3x8x72xf32, #tpu.memory_space<vmem>>, vector<1x8x72xf32>
    %291 = vector.shape_cast %290 : vector<1x8x72xf32> to vector<8x72xf32>
    %c0_382 = arith.constant 0 : index
    %c256_383 = arith.constant 256 : index
    %292 = vector.load %arg9[%c0_382, %c256_383] : memref<72x1792xf32, #tpu.memory_space<vmem>>, vector<72x1280xf32>
    %cst_384 = arith.constant dense<0.000000e+00> : vector<8x1280xf32>
    %293 = tpu.matmul %291, %292, %cst_384 {dimension_numbers = #tpu.dot_dimension_numbers<[1], [0], [0], [1], [0, 0, 1, 1], [], []>} : vector<8x72xf32>, vector<72x1280xf32>, vector<8x1280xf32> -> vector<8x1280xf32>
    %294 = arith.addf %289, %293 : vector<8x1280xf32>
    %c2_385 = arith.constant 2 : index
    %c0_386 = arith.constant 0 : index
    %c0_387 = arith.constant 0 : index
    %295 = vector.load %arg5[%c2_385, %c0_386, %c0_387] : memref<3x8x72xf32, #tpu.memory_space<vmem>>, vector<1x8x72xf32>
    %296 = vector.shape_cast %295 : vector<1x8x72xf32> to vector<8x72xf32>
    %c0_388 = arith.constant 0 : index
    %c512_389 = arith.constant 512 : index
    %297 = vector.load %arg9[%c0_388, %c512_389] : memref<72x1792xf32, #tpu.memory_space<vmem>>, vector<72x1280xf32>
    %cst_390 = arith.constant dense<0.000000e+00> : vector<8x1280xf32>
    %298 = tpu.matmul %296, %297, %cst_390 {dimension_numbers = #tpu.dot_dimension_numbers<[1], [0], [0], [1], [0, 0, 1, 1], [], []>} : vector<8x72xf32>, vector<72x1280xf32>, vector<8x1280xf32> -> vector<8x1280xf32>
    %299 = arith.addf %294, %298 : vector<8x1280xf32>
    %c0_391 = arith.constant 0 : index
    %c0_392 = arith.constant 0 : index
    %300 = vector.load %arg6[%c0_391, %c0_392] : memref<8x1xf32, #tpu.memory_space<vmem>>, vector<8x1xf32>
    %301 = vector.broadcast %300 : vector<8x1xf32> to vector<8x1280xf32>
    %302 = arith.addf %299, %301 : vector<8x1280xf32>
    %cst_393 = arith.constant 0.000000e+00 : f32
    %303 = vector.broadcast %cst_393 : f32 to vector<8x1280xf32>
    %304 = arith.maximumf %302, %303 : vector<8x1280xf32>
    %305 = vector.shape_cast %304 : vector<8x1280xf32> to vector<8x5x256xf32>
    %306 = vector.extract_strided_slice %305 {offsets = [0, 0, 0], sizes = [8, 5, 216], strides = [1, 1, 1]} : vector<8x5x256xf32> to vector<8x5x216xf32>
    %307 = vector.shape_cast %306 : vector<8x5x216xf32> to vector<8x5x12x18xf32>
    %308 = vector.extract_strided_slice %307 {offsets = [0, 0, 1, 1], sizes = [8, 5, 10, 16], strides = [1, 1, 1, 1]} : vector<8x5x12x18xf32> to vector<8x5x10x16xf32>
    %309 = vector.shape_cast %308 : vector<8x5x10x16xf32> to vector<1x8x1x5x160xf32>
    %c0_394 = arith.constant 0 : index
    %c0_395 = arith.constant 0 : index
    %c0_396 = arith.constant 0 : index
    %c0_397 = arith.constant 0 : index
    %c0_398 = arith.constant 0 : index
    %310 = vector.load %arg7[%c0_394, %c0_395, %c0_396, %c0_397, %c0_398] : memref<1x8x1x5x160xf32, #tpu.memory_space<vmem>>, vector<1x8x1x5x160xf32>
    tpu.vector_store %arg7[%c0_394, %c0_395, %c0_396, %c0_397, %c0_398], %309 {strides = array<i32>} : memref<1x8x1x5x160xf32, #tpu.memory_space<vmem>>, vector<1x8x1x5x160xf32>,
    return
  }
  func.func @transform_0(%arg0: i32, %arg1: i32) -> (i32, i32, i32, i32, i32) {
    %c5_i32 = arith.constant 5 : i32
    %0 = arith.muli %arg1, %c5_i32 : i32
    %c1_i32 = arith.constant 1 : i32
    %1 = arith.subi %0, %c1_i32 : i32
    %c0_i32 = arith.constant 0 : i32
    %2 = arith.maxsi %1, %c0_i32 : i32
    %c0_i32_0 = arith.constant 0 : i32
    %c0_i32_1 = arith.constant 0 : i32
    %c0_i32_2 = arith.constant 0 : i32
    %c0_i32_3 = arith.constant 0 : i32
    return %arg0, %c0_i32_0, %2, %c0_i32_1, %c0_i32_2 : i32, i32, i32, i32, i32
  }
  func.func @transform_1(%arg0: i32, %arg1: i32) -> (i32, i32, i32, i32, i32) {
    %c0_i32 = arith.constant 0 : i32
    %c0_i32_0 = arith.constant 0 : i32
    %c0_i32_1 = arith.constant 0 : i32
    %c0_i32_2 = arith.constant 0 : i32
    return %arg0, %c0_i32, %arg1, %c0_i32_0, %c0_i32_1 : i32, i32, i32, i32, i32
  }
  func.func @transform_2(%arg0: i32, %arg1: i32) -> (i32, i32, i32, i32, i32) {
    %c5_i32 = arith.constant 5 : i32
    %0 = arith.muli %arg1, %c5_i32 : i32
    %c5_i32_0 = arith.constant 5 : i32
    %1 = arith.addi %0, %c5_i32_0 : i32
    %c9_i32 = arith.constant 9 : i32
    %2 = arith.minsi %1, %c9_i32 : i32
    %c0_i32 = arith.constant 0 : i32
    %c0_i32_1 = arith.constant 0 : i32
    %c0_i32_2 = arith.constant 0 : i32
    %c0_i32_3 = arith.constant 0 : i32
    return %arg0, %c0_i32, %2, %c0_i32_1, %c0_i32_2 : i32, i32, i32, i32, i32
  }
  func.func @transform_3(%arg0: i32, %arg1: i32) -> (i32, i32, i32) {
    %c0_i32 = arith.constant 0 : i32
    %c0_i32_0 = arith.constant 0 : i32
    %c0_i32_1 = arith.constant 0 : i32
    %c0_i32_2 = arith.constant 0 : i32
    return %c0_i32, %c0_i32_0, %c0_i32_1 : i32, i32, i32
  }
  func.func @transform_4(%arg0: i32, %arg1: i32) -> (i32, i32) {
    %c0_i32 = arith.constant 0 : i32
    %c0_i32_0 = arith.constant 0 : i32
    %c0_i32_1 = arith.constant 0 : i32
    return %c0_i32, %c0_i32_0 : i32, i32
  }
  func.func @transform_5(%arg0: i32, %arg1: i32) -> (i32, i32, i32, i32, i32) {
    %c0_i32 = arith.constant 0 : i32
    %c0_i32_0 = arith.constant 0 : i32
    %c0_i32_1 = arith.constant 0 : i32
    %c0_i32_2 = arith.constant 0 : i32
    return %arg0, %c0_i32, %arg1, %c0_i32_0, %c0_i32_1 : i32, i32, i32, i32, i32
  }
}

</mosaic_0001>

<llo_original>
// kernel: tpu_custom_call.1
$region0: #{tpu_custom_call.1}
  #allocation0 [shape = 'u32[]', space=smem, size = 0x4, offset = 0x4, fixed_abs, tag = 'smem constant byte address 0x4 - core index']
  #allocation1 [shape = 'u32[144,128]{1,0:T(1,128)}', space=vmem, size = 0x12000, scoped, tag = 'internal scratch']
  #allocation2 [shape = 'f32[7,8,254]{2,1,0:T(8,128)}', space=vmem, size = 0xe000, scoped, tag = 'scratch operand']
  #allocation3 [shape = 'f32[72,1792]{1,0:T(8,128)}', space=vmem, size = 0x7e000, scoped, tag = 'scratch operand']
  %s0 = inlined_call_operand.vmem [shape: f32[2,4,10,10,16], index: 0, kind: input, shape index: {}]
  %s1 = inlined_call_operand.vmem [shape: f32[2,4,10,10,16], index: 1, kind: input, shape index: {}]
  %s2 = inlined_call_operand.vmem [shape: f32[2,4,10,10,16], index: 2, kind: input, shape index: {}]
  %s3 = inlined_call_operand.vmem [shape: f32[3,8,72], index: 3, kind: input, shape index: {}]
  %s4 = inlined_call_operand.vmem [shape: f32[8,1], index: 4, kind: input, shape index: {}]
  %s5 = inlined_call_operand.vmem [shape: f32[2,8,2,5,160], index: 5, kind: output, shape index: {}]
  %s6 = sld [smem:[#allocation0]]
  $region194: #{tpu_custom_call.1} parent=0
    _
  %s8 = ssub.s32 1, %s6
  %s9 = scalar_select 0, %s8, %s6
  $region1: #{tpu_custom_call.1} parent=0
    #allocation4 [shape = 'u8[65536]{0}', space=vmem, size = 0x10000, scoped, tag = 'input window, operand 0']
    #allocation5 [shape = 'u8[327680]{0}', space=vmem, size = 0x50000, scoped, tag = 'input window, operand 1']
    #allocation6 [shape = 'u8[65536]{0}', space=vmem, size = 0x10000, scoped, tag = 'input window, operand 2']
    #allocation7 [shape = 'u8[131072]{0}', space=vmem, size = 0x20000, scoped, tag = 'output window, operand 0']
    loop: start=0, step=1, limit=6
    $region2: #{tpu_custom_call.1} parent=1 // loop_pre_header
      _
    $region3: #{tpu_custom_call.1} parent=1 // loop_header
      %s11 = sphi 0, %s15
      %p12 = scmp.ge.s32.totalorder %s11, 6
      %s18 = sphi 0, %s30
      %s19 = sphi 0, %s26
      %s20 = sphi 0, %s18
      %s21 = sphi 0, %s19
      %s22 = sphi 0, %s20
      %s23 = sphi 0, %s21
      %s43 = sphi 0, %s45
      %s46 = sphi 0, %s43
      %s47 = sphi 0, %s46
      %s63 = sphi 0, %s47
      %s71 = sphi 0, %s73
      %s74 = sphi 0, %s71
      %s75 = sphi 0, %s74
      %s91 = sphi 0, %s75
      %s107 = sphi 0, %s109
      %s110 = sphi 0, %s107
      %s111 = sphi 0, %s110
      %s127 = sphi 0, %s111
      %s131 = sphi 0, %s131
      %s133 = sphi 0, %s131
      %s134 = sphi 0, %s133
      %s148 = sphi 0, %s134
      %s152 = sphi 0, %s152
      %s154 = sphi 0, %s152
      %s155 = sphi 0, %s154
      %s169 = sphi 0, %s155
      %s177 = sphi 0, %s179
      %s180 = sphi 0, %s177
      %s181 = sphi 0, %s180
      %s197 = sphi 0, %s181
    $region4: #{tpu_custom_call.1} parent=1 // loop_header_branch
      %14 = sbr.rel (%p12) target = $region8
    $region5: #{tpu_custom_call.1} parent=1 // loop_body
      %s16 = ssub.s32 %s11, 1
      %s17 = ssub.s32 %s11, 2
      %s24 = sadd.s32 1, %s19
      %p25 = scmp.ge.s32.totalorder %s24, 2
      %s26 = scalar_select %p25, 0, %s24
      %s27 = sadd.s32 1, %s18
      %s28 = scalar_select %p25, %s27, %s18
      %p29 = scmp.ge.s32.totalorder %s28, 2
      %s30 = scalar_select %p29, 0, %s28
      %s31 = smul.u32 %s19, 5
      %s32 = ssub.s32 %s31, 1
      %p33 = scmp.gt.s32.totalorder %s32, 0
      %s34 = scalar_select %p33, %s32, 0
      %s35 = smul.u32 %s26, 5
      %s36 = ssub.s32 %s35, 1
      %p37 = scmp.gt.s32.totalorder %s36, 0
      %s38 = scalar_select %p37, %s36, 0
      %s39 = ssub.s32 %s18, %s30
      %s40 = ssub.s32 %s34, %s38
      %s41 = sor.u32 %s39, %s40
      %p42 = scmp.eq.s32.totalorder %s41, 0
      %s44 = sadd.s32 %s43, 1
      %s45 = scalar_select %p42, %s43, %s44
      %p48 = pneg %p42
      %p49 = scmp.eq.s32.totalorder %s11, 3
      %p50 = por %p48, %p49
      %p51 = scmp.ne.s32.totalorder %s43, %s46
      %p52 = scmp.eq.s32.totalorder %s11, 0
      %p53 = por %p51, %p52
      %p54 = scmp.ne.s32.totalorder %s43, %s46
      %p55 = scmp.eq.s32.totalorder %s16, 3
      %p56 = por %p54, %p55
      %p57 = scmp.ne.s32.totalorder %s46, %s47
      %p58 = scmp.eq.s32.totalorder %s16, 0
      %p59 = por %p57, %p58
      %p60 = scmp.ne.s32.totalorder %s46, %s47
      %p61 = scmp.eq.s32.totalorder %s17, 3
      %p62 = por %p60, %p61
      %p64 = scmp.ne.s32.totalorder %s47, %s63
      %p65 = scmp.eq.s32.totalorder %s17, 0
      %p66 = por %p64, %p65
      %s67 = ssub.s32 %s18, %s30
      %s68 = ssub.s32 %s19, %s26
      %s69 = sor.u32 %s67, %s68
      %p70 = scmp.eq.s32.totalorder %s69, 0
      %s72 = sadd.s32 %s71, 1
      %s73 = scalar_select %p70, %s71, %s72
      %p76 = pneg %p70
      %p77 = scmp.eq.s32.totalorder %s11, 3
      %p78 = por %p76, %p77
      %p79 = scmp.ne.s32.totalorder %s71, %s74
      %p80 = scmp.eq.s32.totalorder %s11, 0
      %p81 = por %p79, %p80
      %p82 = scmp.ne.s32.totalorder %s71, %s74
      %p83 = scmp.eq.s32.totalorder %s16, 3
      %p84 = por %p82, %p83
      %p85 = scmp.ne.s32.totalorder %s74, %s75
      %p86 = scmp.eq.s32.totalorder %s16, 0
      %p87 = por %p85, %p86
      %p88 = scmp.ne.s32.totalorder %s74, %s75
      %p89 = scmp.eq.s32.totalorder %s17, 3
      %p90 = por %p88, %p89
      %p92 = scmp.ne.s32.totalorder %s75, %s91
      %p93 = scmp.eq.s32.totalorder %s17, 0
      %p94 = por %p92, %p93
      %s95 = smul.u32 %s19, 5
      %s96 = sadd.s32 %s95, 5
      %p97 = scmp.lt.s32.totalorder %s96, 9
      %s98 = scalar_select %p97, %s96, 9
      %s99 = smul.u32 %s26, 5
      %s100 = sadd.s32 %s99, 5
      %p101 = scmp.lt.s32.totalorder %s100, 9
      %s102 = scalar_select %p101, %s100, 9
      %s103 = ssub.s32 %s18, %s30
      %s104 = ssub.s32 %s98, %s102
      %s105 = sor.u32 %s103, %s104
      %p106 = scmp.eq.s32.totalorder %s105, 0
      %s108 = sadd.s32 %s107, 1
      %s109 = scalar_select %p106, %s107, %s108
      %p112 = pneg %p106
      %p113 = scmp.eq.s32.totalorder %s11, 3
      %p114 = por %p112, %p113
      %p115 = scmp.ne.s32.totalorder %s107, %s110
      %p116 = scmp.eq.s32.totalorder %s11, 0
      %p117 = por %p115, %p116
      %p118 = scmp.ne.s32.totalorder %s107, %s110
      %p119 = scmp.eq.s32.totalorder %s16, 3
      %p120 = por %p118, %p119
      %p121 = scmp.ne.s32.totalorder %s110, %s111
      %p122 = scmp.eq.s32.totalorder %s16, 0
      %p123 = por %p121, %p122
      %p124 = scmp.ne.s32.totalorder %s110, %s111
      %p125 = scmp.eq.s32.totalorder %s17, 3
      %p126 = por %p124, %p125
      %p128 = scmp.ne.s32.totalorder %s111, %s127
      %p129 = scmp.eq.s32.totalorder %s17, 0
      %p130 = por %p128, %p129
      %s132 = sadd.s32 %s131, 1
      %p135 = scmp.eq.s32.totalorder %s11, 3
      %p136 = scmp.ne.s32.totalorder %s131, %s133
      %p137 = scmp.eq.s32.totalorder %s11, 0
      %p138 = por %p136, %p137
      %p139 = scmp.ne.s32.totalorder %s131, %s133
      %p140 = scmp.eq.s32.totalorder %s16, 3
      %p141 = por %p139, %p140
      %p142 = scmp.ne.s32.totalorder %s133, %s134
      %p143 = scmp.eq.s32.totalorder %s16, 0
      %p144 = por %p142, %p143
      %p145 = scmp.ne.s32.totalorder %s133, %s134
      %p146 = scmp.eq.s32.totalorder %s17, 3
      %p147 = por %p145, %p146
      %p149 = scmp.ne.s32.totalorder %s134, %s148
      %p150 = scmp.eq.s32.totalorder %s17, 0
      %p151 = por %p149, %p150
      %s153 = sadd.s32 %s152, 1
      %p156 = scmp.eq.s32.totalorder %s11, 3
      %p157 = scmp.ne.s32.totalorder %s152, %s154
      %p158 = scmp.eq.s32.totalorder %s11, 0
      %p159 = por %p157, %p158
      %p160 = scmp.ne.s32.totalorder %s152, %s154
      %p161 = scmp.eq.s32.totalorder %s16, 3
      %p162 = por %p160, %p161
      %p163 = scmp.ne.s32.totalorder %s154, %s155
      %p164 = scmp.eq.s32.totalorder %s16, 0
      %p165 = por %p163, %p164
      %p166 = scmp.ne.s32.totalorder %s154, %s155
      %p167 = scmp.eq.s32.totalorder %s17, 3
      %p168 = por %p166, %p167
      %p170 = scmp.ne.s32.totalorder %s155, %s169
      %p171 = scmp.eq.s32.totalorder %s17, 0
      %p172 = por %p170, %p171
      %s173 = ssub.s32 %s18, %s30
      %s174 = ssub.s32 %s19, %s26
      %s175 = sor.u32 %s173, %s174
      %p176 = scmp.eq.s32.totalorder %s175, 0
      %s178 = sadd.s32 %s177, 1
      %s179 = scalar_select %p176, %s177, %s178
      %p182 = pneg %p176
      %p183 = scmp.eq.s32.totalorder %s11, 3
      %p184 = por %p182, %p183
      %p185 = scmp.ne.s32.totalorder %s177, %s180
      %p186 = scmp.eq.s32.totalorder %s11, 0
      %p187 = por %p185, %p186
      %p188 = scmp.ne.s32.totalorder %s177, %s180
      %p189 = scmp.eq.s32.totalorder %s16, 3
      %p190 = por %p188, %p189
      %p191 = scmp.ne.s32.totalorder %s180, %s181
      %p192 = scmp.eq.s32.totalorder %s16, 0
      %p193 = por %p191, %p192
      %p194 = scmp.ne.s32.totalorder %s180, %s181
      %p195 = scmp.eq.s32.totalorder %s17, 3
      %p196 = por %p194, %p195
      %p198 = scmp.ne.s32.totalorder %s181, %s197
      %p199 = scmp.eq.s32.totalorder %s17, 0
      %p200 = por %p198, %p199
      %p201 = scmp.le.s32.totalorder 1, %s11
      %p202 = scmp.lt.s32.totalorder %s11, 5
      %p203 = pnand %p201, %p202
      %p204 = pneg %p203
      // Predicated region
      $region9: #{tpu_custom_call.1} parent=5 // pred_check
        _
      $region10: #{tpu_custom_call.1} parent=5 // pred_check_branch
        %206 = sbr.rel (%p203) target = $region12
      $region11: #{tpu_custom_call.1} parent=5 // pred_region
        %s207 = ssub.s32 %s11, 1
        // Predicated region
        $region13: #{tpu_custom_call.1} parent=11 // pred_check
          %p208 = pneg %p144
        $region14: #{tpu_custom_call.1} parent=11 // pred_check_branch
          %210 = sbr.rel (%p208) target = $region16
        $region15: #{tpu_custom_call.1} parent=11 // pred_region
          _
        $region16: #{tpu_custom_call.1} parent=11 // pred_fallthru
          _
        // Predicated region
        $region17: #{tpu_custom_call.1} parent=11 // pred_check
          %p211 = pneg %p165
        $region18: #{tpu_custom_call.1} parent=11 // pred_check_branch
          %213 = sbr.rel (%p211) target = $region20
        $region19: #{tpu_custom_call.1} parent=11 // pred_region
          _
        $region20: #{tpu_custom_call.1} parent=11 // pred_fallthru
          _
      $region12: #{tpu_custom_call.1} parent=5 // pred_fallthru
        _
      %p214 = scmp.lt.s32.totalorder %s11, 4
      // Predicated region
      $region21: #{tpu_custom_call.1} parent=5 // pred_check
        %p215 = pneg %p214
      $region22: #{tpu_custom_call.1} parent=5 // pred_check_branch
        %217 = sbr.rel (%p215) target = $region24
      $region23: #{tpu_custom_call.1} parent=5 // pred_region
        // Predicated region
        $region25: #{tpu_custom_call.1} parent=23 // pred_check
          %p218 = pneg %p53
        $region26: #{tpu_custom_call.1} parent=23 // pred_check_branch
          %220 = sbr.rel (%p218) target = $region28
        $region27: #{tpu_custom_call.1} parent=23 // pred_region
          %s221 = sand.u32 %s43, 1
          %s222 = sand.u32 %s43, 1
          %s223 = smul.addr %s222, 64
          %s224 = scalar_lea.vmem [#allocation4], %s223
          %s225 = smul.u32 %s19, 5
          %s226 = ssub.s32 %s225, 1
          %p227 = scmp.gt.s32.totalorder %s226, 0
          %s228 = scalar_select %p227, %s226, 0
          %s229 = smul.addr %s228, 2
          %s230 = smul.addr %s18, 80
          %s231 = sadd.s32 %s229, %s230
          %s232 = smul.addr %s231, 8
          %s233 = scalar_lea.vmem %s0, %s232
          // Predicated region
          $region29: #{tpu_custom_call.1} parent=27 // pred_check
            _
          $region30: #{tpu_custom_call.1} parent=27 // pred_check_branch
            %235 = sbr.rel (0) target = $region32
          $region31: #{tpu_custom_call.1} parent=27 // pred_region
            // Predicated region
            $region33: #{tpu_custom_call.1} parent=31 // pred_check
              _
            $region34: #{tpu_custom_call.1} parent=31 // pred_check_branch
              %237 = sbr.rel (0) target = $region36
            $region35: #{tpu_custom_call.1} parent=31 // pred_region
              // Predicated region
              $region48: #{tpu_custom_call.1} parent=35 // pred_check
                _
              $region49: #{tpu_custom_call.1} parent=35 // pred_check_branch
                %266 = sbr.rel (0) target = $region51
              $region50: #{tpu_custom_call.1} parent=35 // pred_region
                loop: start=0, step=1, limit=1
                $region52: #{tpu_custom_call.1} parent=50 // loop_pre_header
                  _
                $region53: #{tpu_custom_call.1} parent=50 // loop_header
                  %s268 = sphi 0, %s272
                  %p269 = scmp.ge.s32.totalorder %s268, 1
                  %s273 = sphi %s233, %s233
                  %s274 = sphi %s224, %s224
                $region54: #{tpu_custom_call.1} parent=50 // loop_header_branch
                  %271 = sbr.rel (%p269) target = $region58
                $region55: #{tpu_custom_call.1} parent=50 // loop_body
                  %v275 = vld [vmem:[%s273] sm:$0xff]
                  %276 = vst [vmem:[%s274] sm:$0xff] %v275
                  %v277 = vld [vmem:[%s273 + $0x8] sm:$0xff]
                  %278 = vst [vmem:[%s274 + $0x8] sm:$0xff] %v277
                  %v279 = vld [vmem:[%s273 + $0xa0] sm:$0xff]
                  %280 = vst [vmem:[%s274 + $0x10] sm:$0xff] %v279
                  %v281 = vld [vmem:[%s273 + $0xa8] sm:$0xff]
                  %282 = vst [vmem:[%s274 + $0x18] sm:$0xff] %v281
                  %v283 = vld [vmem:[%s273 + $0x140] sm:$0xff]
                  %284 = vst [vmem:[%s274 + $0x20] sm:$0xff] %v283
                  %v285 = vld [vmem:[%s273 + $0x148] sm:$0xff]
                  %286 = vst [vmem:[%s274 + $0x28] sm:$0xff] %v285
                  %v287 = vld [vmem:[%s273 + $0x1e0] sm:$0xff]
                  %288 = vst [vmem:[%s274 + $0x30] sm:$0xff] %v287
                  %v289 = vld [vmem:[%s273 + $0x1e8] sm:$0xff]
                  %290 = vst [vmem:[%s274 + $0x38] sm:$0xff] %v289
                $region56: #{tpu_custom_call.1} parent=50 // loop_footer
                  %s272 = sadd.s32 1, %s268
                $region57: #{tpu_custom_call.1} parent=50 // loop_footer_branch
                  %267 = sbr.rel target = $region53
                $region58: #{tpu_custom_call.1} parent=50 // loop_exit
                  _
              $region51: #{tpu_custom_call.1} parent=35 // pred_fallthru
                _
              // Predicated region
              $region59: #{tpu_custom_call.1} parent=35 // pred_check
                _
              $region60: #{tpu_custom_call.1} parent=35 // pred_check_branch
                %292 = sbr.rel target = $region62
              $region61: #{tpu_custom_call.1} parent=35 // pred_region
                _
              $region62: #{tpu_custom_call.1} parent=35 // pred_fallthru
                _
            $region36: #{tpu_custom_call.1} parent=31 // pred_fallthru
              _
            // Predicated region
            $region37: #{tpu_custom_call.1} parent=31 // pred_check
              _
            $region38: #{tpu_custom_call.1} parent=31 // pred_check_branch
              %239 = sbr.rel target = $region40
            $region39: #{tpu_custom_call.1} parent=31 // pred_region
              loop: start=0, step=1, limit=1
              $region41: #{tpu_custom_call.1} parent=39 // loop_pre_header
                _
              $region42: #{tpu_custom_call.1} parent=39 // loop_header
                %s242 = sphi 0, %s246
                %p243 = scmp.ge.s32.totalorder %s242, 1
                %s247 = sphi %s233, %s233
                %s248 = sphi %s224, %s224
              $region43: #{tpu_custom_call.1} parent=39 // loop_header_branch
                %245 = sbr.rel (%p243) target = $region47
              $region44: #{tpu_custom_call.1} parent=39 // loop_body
                %v249 = vld [vmem:[%s247] sm:$0xff]
                %250 = vst [vmem:[%s248] sm:$0xff] %v249
                %v251 = vld [vmem:[%s247 + $0x8] sm:$0xff]
                %252 = vst [vmem:[%s248 + $0x8] sm:$0xff] %v251
                %v253 = vld [vmem:[%s247 + $0xa0] sm:$0xff]
                %254 = vst [vmem:[%s248 + $0x10] sm:$0xff] %v253
                %v255 = vld [vmem:[%s247 + $0xa8] sm:$0xff]
                %256 = vst [vmem:[%s248 + $0x18] sm:$0xff] %v255
                %v257 = vld [vmem:[%s247 + $0x140] sm:$0xff]
                %258 = vst [vmem:[%s248 + $0x20] sm:$0xff] %v257
                %v259 = vld [vmem:[%s247 + $0x148] sm:$0xff]
                %260 = vst [vmem:[%s248 + $0x28] sm:$0xff] %v259
                %v261 = vld [vmem:[%s247 + $0x1e0] sm:$0xff]
                %262 = vst [vmem:[%s248 + $0x30] sm:$0xff] %v261
                %v263 = vld [vmem:[%s247 + $0x1e8] sm:$0xff]
                %264 = vst [vmem:[%s248 + $0x38] sm:$0xff] %v263
              $region45: #{tpu_custom_call.1} parent=39 // loop_footer
                %s246 = sadd.s32 1, %s242
              $region46: #{tpu_custom_call.1} parent=39 // loop_footer_branch
                %241 = sbr.rel target = $region42
              $region47: #{tpu_custom_call.1} parent=39 // loop_exit
                _
            $region40: #{tpu_custom_call.1} parent=31 // pred_fallthru
              _
          $region32: #{tpu_custom_call.1} parent=27 // pred_fallthru
            _
          %293 = vnop
        $region28: #{tpu_custom_call.1} parent=23 // pred_fallthru
          _
        // Predicated region
        $region63: #{tpu_custom_call.1} parent=23 // pred_check
          %p294 = pneg %p81
        $region64: #{tpu_custom_call.1} parent=23 // pred_check_branch
          %296 = sbr.rel (%p294) target = $region66
        $region65: #{tpu_custom_call.1} parent=23 // pred_region
          %s297 = sand.u32 %s71, 1
          %s298 = sand.u32 %s71, 1
          %s299 = smul.addr %s298, 320
          %s300 = scalar_lea.vmem [#allocation5], %s299
          %s301 = smul.u32 5, %s19
          %s302 = smul.addr %s301, 2
          %s303 = smul.addr %s18, 80
          %s304 = sadd.s32 %s302, %s303
          %s305 = smul.addr %s304, 8
          %s306 = scalar_lea.vmem %s1, %s305
          // Predicated region
          $region67: #{tpu_custom_call.1} parent=65 // pred_check
            _
          $region68: #{tpu_custom_call.1} parent=65 // pred_check_branch
            %308 = sbr.rel (0) target = $region70
          $region69: #{tpu_custom_call.1} parent=65 // pred_region
            // Predicated region
            $region71: #{tpu_custom_call.1} parent=69 // pred_check
              _
            $region72: #{tpu_custom_call.1} parent=69 // pred_check_branch
              %310 = sbr.rel (0) target = $region74
            $region73: #{tpu_custom_call.1} parent=69 // pred_region
              // Predicated region
              $region86: #{tpu_custom_call.1} parent=73 // pred_check
                _
              $region87: #{tpu_custom_call.1} parent=73 // pred_check_branch
                %403 = sbr.rel (0) target = $region89
              $region88: #{tpu_custom_call.1} parent=73 // pred_region
                loop: start=0, step=1, limit=1
                $region90: #{tpu_custom_call.1} parent=88 // loop_pre_header
                  _
                $region91: #{tpu_custom_call.1} parent=88 // loop_header
                  %s405 = sphi 0, %s409
                  %p406 = scmp.ge.s32.totalorder %s405, 1
                  %s410 = sphi %s306, %s306
                  %s411 = sphi %s300, %s300
                $region92: #{tpu_custom_call.1} parent=88 // loop_header_branch
                  %408 = sbr.rel (%p406) target = $region96
                $region93: #{tpu_custom_call.1} parent=88 // loop_body
                  %v412 = vld [vmem:[%s410] sm:$0xff]
                  %413 = vst [vmem:[%s411] sm:$0xff] %v412
                  %v414 = vld [vmem:[%s410 + $0x8] sm:$0xff]
                  %415 = vst [vmem:[%s411 + $0x8] sm:$0xff] %v414
                  %v416 = vld [vmem:[%s410 + $0x10] sm:$0xff]
                  %417 = vst [vmem:[%s411 + $0x10] sm:$0xff] %v416
                  %v418 = vld [vmem:[%s410 + $0x18] sm:$0xff]
                  %419 = vst [vmem:[%s411 + $0x18] sm:$0xff] %v418
                  %v420 = vld [vmem:[%s410 + $0x20] sm:$0xff]
                  %421 = vst [vmem:[%s411 + $0x20] sm:$0xff] %v420
                  %v422 = vld [vmem:[%s410 + $0x28] sm:$0xff]
                  %423 = vst [vmem:[%s411 + $0x28] sm:$0xff] %v422
                  %v424 = vld [vmem:[%s410 + $0x30] sm:$0xff]
                  %425 = vst [vmem:[%s411 + $0x30] sm:$0xff] %v424
                  %v426 = vld [vmem:[%s410 + $0x38] sm:$0xff]
                  %427 = vst [vmem:[%s411 + $0x38] sm:$0xff] %v426
                  %v428 = vld [vmem:[%s410 + $0x40] sm:$0xff]
                  %429 = vst [vmem:[%s411 + $0x40] sm:$0xff] %v428
                  %v430 = vld [vmem:[%s410 + $0x48] sm:$0xff]
                  %431 = vst [vmem:[%s411 + $0x48] sm:$0xff] %v430
                  %v432 = vld [vmem:[%s410 + $0xa0] sm:$0xff]
                  %433 = vst [vmem:[%s411 + $0x50] sm:$0xff] %v432
                  %v434 = vld [vmem:[%s410 + $0xa8] sm:$0xff]
                  %435 = vst [vmem:[%s411 + $0x58] sm:$0xff] %v434
                  %v436 = vld [vmem:[%s410 + $0xb0] sm:$0xff]
                  %437 = vst [vmem:[%s411 + $0x60] sm:$0xff] %v436
                  %v438 = vld [vmem:[%s410 + $0xb8] sm:$0xff]
                  %439 = vst [vmem:[%s411 + $0x68] sm:$0xff] %v438
                  %v440 = vld [vmem:[%s410 + $0xc0] sm:$0xff]
                  %441 = vst [vmem:[%s411 + $0x70] sm:$0xff] %v440
                  %v442 = vld [vmem:[%s410 + $0xc8] sm:$0xff]
                  %443 = vst [vmem:[%s411 + $0x78] sm:$0xff] %v442
                  %v444 = vld [vmem:[%s410 + $0xd0] sm:$0xff]
                  %445 = vst [vmem:[%s411 + $0x80] sm:$0xff] %v444
                  %v446 = vld [vmem:[%s410 + $0xd8] sm:$0xff]
                  %447 = vst [vmem:[%s411 + $0x88] sm:$0xff] %v446
                  %v448 = vld [vmem:[%s410 + $0xe0] sm:$0xff]
                  %449 = vst [vmem:[%s411 + $0x90] sm:$0xff] %v448
                  %v450 = vld [vmem:[%s410 + $0xe8] sm:$0xff]
                  %451 = vst [vmem:[%s411 + $0x98] sm:$0xff] %v450
                  %v452 = vld [vmem:[%s410 + $0x140] sm:$0xff]
                  %453 = vst [vmem:[%s411 + $0xa0] sm:$0xff] %v452
                  %v454 = vld [vmem:[%s410 + $0x148] sm:$0xff]
                  %455 = vst [vmem:[%s411 + $0xa8] sm:$0xff] %v454
                  %v456 = vld [vmem:[%s410 + $0x150] sm:$0xff]
                  %457 = vst [vmem:[%s411 + $0xb0] sm:$0xff] %v456
                  %v458 = vld [vmem:[%s410 + $0x158] sm:$0xff]
                  %459 = vst [vmem:[%s411 + $0xb8] sm:$0xff] %v458
                  %v460 = vld [vmem:[%s410 + $0x160] sm:$0xff]
                  %461 = vst [vmem:[%s411 + $0xc0] sm:$0xff] %v460
                  %v462 = vld [vmem:[%s410 + $0x168] sm:$0xff]
                  %463 = vst [vmem:[%s411 + $0xc8] sm:$0xff] %v462
                  %v464 = vld [vmem:[%s410 + $0x170] sm:$0xff]
                  %465 = vst [vmem:[%s411 + $0xd0] sm:$0xff] %v464
                  %v466 = vld [vmem:[%s410 + $0x178] sm:$0xff]
                  %467 = vst [vmem:[%s411 + $0xd8] sm:$0xff] %v466
                  %v468 = vld [vmem:[%s410 + $0x180] sm:$0xff]
                  %469 = vst [vmem:[%s411 + $0xe0] sm:$0xff] %v468
                  %v470 = vld [vmem:[%s410 + $0x188] sm:$0xff]
                  %471 = vst [vmem:[%s411 + $0xe8] sm:$0xff] %v470
                  %v472 = vld [vmem:[%s410 + $0x1e0] sm:$0xff]
                  %473 = vst [vmem:[%s411 + $0xf0] sm:$0xff] %v472
                  %v474 = vld [vmem:[%s410 + $0x1e8] sm:$0xff]
                  %475 = vst [vmem:[%s411 + $0xf8] sm:$0xff] %v474
                  %v476 = vld [vmem:[%s410 + $0x1f0] sm:$0xff]
                  %477 = vst [vmem:[%s411 + $0x100] sm:$0xff] %v476
                  %v478 = vld [vmem:[%s410 + $0x1f8] sm:$0xff]
                  %479 = vst [vmem:[%s411 + $0x108] sm:$0xff] %v478
                  %v480 = vld [vmem:[%s410 + $0x200] sm:$0xff]
                  %481 = vst [vmem:[%s411 + $0x110] sm:$0xff] %v480
                  %v482 = vld [vmem:[%s410 + $0x208] sm:$0xff]
                  %483 = vst [vmem:[%s411 + $0x118] sm:$0xff] %v482
                  %v484 = vld [vmem:[%s410 + $0x210] sm:$0xff]
                  %485 = vst [vmem:[%s411 + $0x120] sm:$0xff] %v484
                  %v486 = vld [vmem:[%s410 + $0x218] sm:$0xff]
                  %487 = vst [vmem:[%s411 + $0x128] sm:$0xff] %v486
                  %v488 = vld [vmem:[%s410 + $0x220] sm:$0xff]
                  %489 = vst [vmem:[%s411 + $0x130] sm:$0xff] %v488
                  %v490 = vld [vmem:[%s410 + $0x228] sm:$0xff]
                  %491 = vst [vmem:[%s411 + $0x138] sm:$0xff] %v490
                $region94: #{tpu_custom_call.1} parent=88 // loop_footer
                  %s409 = sadd.s32 1, %s405
                $region95: #{tpu_custom_call.1} parent=88 // loop_footer_branch
                  %404 = sbr.rel target = $region91
                $region96: #{tpu_custom_call.1} parent=88 // loop_exit
                  _
              $region89: #{tpu_custom_call.1} parent=73 // pred_fallthru
                _
              // Predicated region
              $region97: #{tpu_custom_call.1} parent=73 // pred_check
                _
              $region98: #{tpu_custom_call.1} parent=73 // pred_check_branch
                %493 = sbr.rel target = $region100
              $region99: #{tpu_custom_call.1} parent=73 // pred_region
                _
              $region100: #{tpu_custom_call.1} parent=73 // pred_fallthru
                _
            $region74: #{tpu_custom_call.1} parent=69 // pred_fallthru
              _
            // Predicated region
            $region75: #{tpu_custom_call.1} parent=69 // pred_check
              _
            $region76: #{tpu_custom_call.1} parent=69 // pred_check_branch
              %312 = sbr.rel target = $region78
            $region77: #{tpu_custom_call.1} parent=69 // pred_region
              loop: start=0, step=1, limit=1
              $region79: #{tpu_custom_call.1} parent=77 // loop_pre_header
                _
              $region80: #{tpu_custom_call.1} parent=77 // loop_header
                %s315 = sphi 0, %s319
                %p316 = scmp.ge.s32.totalorder %s315, 1
                %s320 = sphi %s306, %s306
                %s321 = sphi %s300, %s300
              $region81: #{tpu_custom_call.1} parent=77 // loop_header_branch
                %318 = sbr.rel (%p316) target = $region85
              $region82: #{tpu_custom_call.1} parent=77 // loop_body
                %v322 = vld [vmem:[%s320] sm:$0xff]
                %323 = vst [vmem:[%s321] sm:$0xff] %v322
                %v324 = vld [vmem:[%s320 + $0x8] sm:$0xff]
                %325 = vst [vmem:[%s321 + $0x8] sm:$0xff] %v324
                %v326 = vld [vmem:[%s320 + $0x10] sm:$0xff]
                %327 = vst [vmem:[%s321 + $0x10] sm:$0xff] %v326
                %v328 = vld [vmem:[%s320 + $0x18] sm:$0xff]
                %329 = vst [vmem:[%s321 + $0x18] sm:$0xff] %v328
                %v330 = vld [vmem:[%s320 + $0x20] sm:$0xff]
                %331 = vst [vmem:[%s321 + $0x20] sm:$0xff] %v330
                %v332 = vld [vmem:[%s320 + $0x28] sm:$0xff]
                %333 = vst [vmem:[%s321 + $0x28] sm:$0xff] %v332
                %v334 = vld [vmem:[%s320 + $0x30] sm:$0xff]
                %335 = vst [vmem:[%s321 + $0x30] sm:$0xff] %v334
                %v336 = vld [vmem:[%s320 + $0x38] sm:$0xff]
                %337 = vst [vmem:[%s321 + $0x38] sm:$0xff] %v336
                %v338 = vld [vmem:[%s320 + $0x40] sm:$0xff]
                %339 = vst [vmem:[%s321 + $0x40] sm:$0xff] %v338
                %v340 = vld [vmem:[%s320 + $0x48] sm:$0xff]
                %341 = vst [vmem:[%s321 + $0x48] sm:$0xff] %v340
                %v342 = vld [vmem:[%s320 + $0xa0] sm:$0xff]
                %343 = vst [vmem:[%s321 + $0x50] sm:$0xff] %v342
                %v344 = vld [vmem:[%s320 + $0xa8] sm:$0xff]
                %345 = vst [vmem:[%s321 + $0x58] sm:$0xff] %v344
                %v346 = vld [vmem:[%s320 + $0xb0] sm:$0xff]
                %347 = vst [vmem:[%s321 + $0x60] sm:$0xff] %v346
                %v348 = vld [vmem:[%s320 + $0xb8] sm:$0xff]
                %349 = vst [vmem:[%s321 + $0x68] sm:$0xff] %v348
                %v350 = vld [vmem:[%s320 + $0xc0] sm:$0xff]
                %351 = vst [vmem:[%s321 + $0x70] sm:$0xff] %v350
                %v352 = vld [vmem:[%s320 + $0xc8] sm:$0xff]
                %353 = vst [vmem:[%s321 + $0x78] sm:$0xff] %v352
                %v354 = vld [vmem:[%s320 + $0xd0] sm:$0xff]
                %355 = vst [vmem:[%s321 + $0x80] sm:$0xff] %v354
                %v356 = vld [vmem:[%s320 + $0xd8] sm:$0xff]
                %357 = vst [vmem:[%s321 + $0x88] sm:$0xff] %v356
                %v358 = vld [vmem:[%s320 + $0xe0] sm:$0xff]
                %359 = vst [vmem:[%s321 + $0x90] sm:$0xff] %v358
                %v360 = vld [vmem:[%s320 + $0xe8] sm:$0xff]
                %361 = vst [vmem:[%s321 + $0x98] sm:$0xff] %v360
                %v362 = vld [vmem:[%s320 + $0x140] sm:$0xff]
                %363 = vst [vmem:[%s321 + $0xa0] sm:$0xff] %v362
                %v364 = vld [vmem:[%s320 + $0x148] sm:$0xff]
                %365 = vst [vmem:[%s321 + $0xa8] sm:$0xff] %v364
                %v366 = vld [vmem:[%s320 + $0x150] sm:$0xff]
                %367 = vst [vmem:[%s321 + $0xb0] sm:$0xff] %v366
                %v368 = vld [vmem:[%s320 + $0x158] sm:$0xff]
                %369 = vst [vmem:[%s321 + $0xb8] sm:$0xff] %v368
                %v370 = vld [vmem:[%s320 + $0x160] sm:$0xff]
                %371 = vst [vmem:[%s321 + $0xc0] sm:$0xff] %v370
                %v372 = vld [vmem:[%s320 + $0x168] sm:$0xff]
                %373 = vst [vmem:[%s321 + $0xc8] sm:$0xff] %v372
                %v374 = vld [vmem:[%s320 + $0x170] sm:$0xff]
                %375 = vst [vmem:[%s321 + $0xd0] sm:$0xff] %v374
                %v376 = vld [vmem:[%s320 + $0x178] sm:$0xff]
                %377 = vst [vmem:[%s321 + $0xd8] sm:$0xff] %v376
                %v378 = vld [vmem:[%s320 + $0x180] sm:$0xff]
                %379 = vst [vmem:[%s321 + $0xe0] sm:$0xff] %v378
                %v380 = vld [vmem:[%s320 + $0x188] sm:$0xff]
                %381 = vst [vmem:[%s321 + $0xe8] sm:$0xff] %v380
                %v382 = vld [vmem:[%s320 + $0x1e0] sm:$0xff]
                %383 = vst [vmem:[%s321 + $0xf0] sm:$0xff] %v382
                %v384 = vld [vmem:[%s320 + $0x1e8] sm:$0xff]
                %385 = vst [vmem:[%s321 + $0xf8] sm:$0xff] %v384
                %v386 = vld [vmem:[%s320 + $0x1f0] sm:$0xff]
                %387 = vst [vmem:[%s321 + $0x100] sm:$0xff] %v386
                %v388 = vld [vmem:[%s320 + $0x1f8] sm:$0xff]
                %389 = vst [vmem:[%s321 + $0x108] sm:$0xff] %v388
                %v390 = vld [vmem:[%s320 + $0x200] sm:$0xff]
                %391 = vst [vmem:[%s321 + $0x110] sm:$0xff] %v390
                %v392 = vld [vmem:[%s320 + $0x208] sm:$0xff]
                %393 = vst [vmem:[%s321 + $0x118] sm:$0xff] %v392
                %v394 = vld [vmem:[%s320 + $0x210] sm:$0xff]
                %395 = vst [vmem:[%s321 + $0x120] sm:$0xff] %v394
                %v396 = vld [vmem:[%s320 + $0x218] sm:$0xff]
                %397 = vst [vmem:[%s321 + $0x128] sm:$0xff] %v396
                %v398 = vld [vmem:[%s320 + $0x220] sm:$0xff]
                %399 = vst [vmem:[%s321 + $0x130] sm:$0xff] %v398
                %v400 = vld [vmem:[%s320 + $0x228] sm:$0xff]
                %401 = vst [vmem:[%s321 + $0x138] sm:$0xff] %v400
              $region83: #{tpu_custom_call.1} parent=77 // loop_footer
                %s319 = sadd.s32 1, %s315
              $region84: #{tpu_custom_call.1} parent=77 // loop_footer_branch
                %314 = sbr.rel target = $region80
              $region85: #{tpu_custom_call.1} parent=77 // loop_exit
                _
            $region78: #{tpu_custom_call.1} parent=69 // pred_fallthru
              _
          $region70: #{tpu_custom_call.1} parent=65 // pred_fallthru
            _
          %494 = vnop
        $region66: #{tpu_custom_call.1} parent=23 // pred_fallthru
          _
        // Predicated region
        $region101: #{tpu_custom_call.1} parent=23 // pred_check
          %p495 = pneg %p117
        $region102: #{tpu_custom_call.1} parent=23 // pred_check_branch
          %497 = sbr.rel (%p495) target = $region104
        $region103: #{tpu_custom_call.1} parent=23 // pred_region
          %s498 = sand.u32 %s107, 1
          %s499 = sand.u32 %s107, 1
          %s500 = smul.addr %s499, 64
          %s501 = scalar_lea.vmem [#allocation6], %s500
          %s502 = smul.u32 %s19, 5
          %s503 = sadd.s32 %s502, 5
          %p504 = scmp.lt.s32.totalorder %s503, 9
          %s505 = scalar_select %p504, %s503, 9
          %s506 = smul.addr %s505, 2
          %s507 = smul.addr %s18, 80
          %s508 = sadd.s32 %s506, %s507
          %s509 = smul.addr %s508, 8
          %s510 = scalar_lea.vmem %s2, %s509
          // Predicated region
          $region105: #{tpu_custom_call.1} parent=103 // pred_check
            _
          $region106: #{tpu_custom_call.1} parent=103 // pred_check_branch
            %512 = sbr.rel (0) target = $region108
          $region107: #{tpu_custom_call.1} parent=103 // pred_region
            // Predicated region
            $region109: #{tpu_custom_call.1} parent=107 // pred_check
              _
            $region110: #{tpu_custom_call.1} parent=107 // pred_check_branch
              %514 = sbr.rel (0) target = $region112
            $region111: #{tpu_custom_call.1} parent=107 // pred_region
              // Predicated region
              $region124: #{tpu_custom_call.1} parent=111 // pred_check
                _
              $region125: #{tpu_custom_call.1} parent=111 // pred_check_branch
                %543 = sbr.rel (0) target = $region127
              $region126: #{tpu_custom_call.1} parent=111 // pred_region
                loop: start=0, step=1, limit=1
                $region128: #{tpu_custom_call.1} parent=126 // loop_pre_header
                  _
                $region129: #{tpu_custom_call.1} parent=126 // loop_header
                  %s545 = sphi 0, %s549
                  %p546 = scmp.ge.s32.totalorder %s545, 1
                  %s550 = sphi %s510, %s510
                  %s551 = sphi %s501, %s501
                $region130: #{tpu_custom_call.1} parent=126 // loop_header_branch
                  %548 = sbr.rel (%p546) target = $region134
                $region131: #{tpu_custom_call.1} parent=126 // loop_body
                  %v552 = vld [vmem:[%s550] sm:$0xff]
                  %553 = vst [vmem:[%s551] sm:$0xff] %v552
                  %v554 = vld [vmem:[%s550 + $0x8] sm:$0xff]
                  %555 = vst [vmem:[%s551 + $0x8] sm:$0xff] %v554
                  %v556 = vld [vmem:[%s550 + $0xa0] sm:$0xff]
                  %557 = vst [vmem:[%s551 + $0x10] sm:$0xff] %v556
                  %v558 = vld [vmem:[%s550 + $0xa8] sm:$0xff]
                  %559 = vst [vmem:[%s551 + $0x18] sm:$0xff] %v558
                  %v560 = vld [vmem:[%s550 + $0x140] sm:$0xff]
                  %561 = vst [vmem:[%s551 + $0x20] sm:$0xff] %v560
                  %v562 = vld [vmem:[%s550 + $0x148] sm:$0xff]
                  %563 = vst [vmem:[%s551 + $0x28] sm:$0xff] %v562
                  %v564 = vld [vmem:[%s550 + $0x1e0] sm:$0xff]
                  %565 = vst [vmem:[%s551 + $0x30] sm:$0xff] %v564
                  %v566 = vld [vmem:[%s550 + $0x1e8] sm:$0xff]
                  %567 = vst [vmem:[%s551 + $0x38] sm:$0xff] %v566
                $region132: #{tpu_custom_call.1} parent=126 // loop_footer
                  %s549 = sadd.s32 1, %s545
                $region133: #{tpu_custom_call.1} parent=126 // loop_footer_branch
                  %544 = sbr.rel target = $region129
                $region134: #{tpu_custom_call.1} parent=126 // loop_exit
                  _
              $region127: #{tpu_custom_call.1} parent=111 // pred_fallthru
                _
              // Predicated region
              $region135: #{tpu_custom_call.1} parent=111 // pred_check
                _
              $region136: #{tpu_custom_call.1} parent=111 // pred_check_branch
                %569 = sbr.rel target = $region138
              $region137: #{tpu_custom_call.1} parent=111 // pred_region
                _
              $region138: #{tpu_custom_call.1} parent=111 // pred_fallthru
                _
            $region112: #{tpu_custom_call.1} parent=107 // pred_fallthru
              _
            // Predicated region
            $region113: #{tpu_custom_call.1} parent=107 // pred_check
              _
            $region114: #{tpu_custom_call.1} parent=107 // pred_check_branch
              %516 = sbr.rel target = $region116
            $region115: #{tpu_custom_call.1} parent=107 // pred_region
              loop: start=0, step=1, limit=1
              $region117: #{tpu_custom_call.1} parent=115 // loop_pre_header
                _
              $region118: #{tpu_custom_call.1} parent=115 // loop_header
                %s519 = sphi 0, %s523
                %p520 = scmp.ge.s32.totalorder %s519, 1
                %s524 = sphi %s510, %s510
                %s525 = sphi %s501, %s501
              $region119: #{tpu_custom_call.1} parent=115 // loop_header_branch
                %522 = sbr.rel (%p520) target = $region123
              $region120: #{tpu_custom_call.1} parent=115 // loop_body
                %v526 = vld [vmem:[%s524] sm:$0xff]
                %527 = vst [vmem:[%s525] sm:$0xff] %v526
                %v528 = vld [vmem:[%s524 + $0x8] sm:$0xff]
                %529 = vst [vmem:[%s525 + $0x8] sm:$0xff] %v528
                %v530 = vld [vmem:[%s524 + $0xa0] sm:$0xff]
                %531 = vst [vmem:[%s525 + $0x10] sm:$0xff] %v530
                %v532 = vld [vmem:[%s524 + $0xa8] sm:$0xff]
                %533 = vst [vmem:[%s525 + $0x18] sm:$0xff] %v532
                %v534 = vld [vmem:[%s524 + $0x140] sm:$0xff]
                %535 = vst [vmem:[%s525 + $0x20] sm:$0xff] %v534
                %v536 = vld [vmem:[%s524 + $0x148] sm:$0xff]
                %537 = vst [vmem:[%s525 + $0x28] sm:$0xff] %v536
                %v538 = vld [vmem:[%s524 + $0x1e0] sm:$0xff]
                %539 = vst [vmem:[%s525 + $0x30] sm:$0xff] %v538
                %v540 = vld [vmem:[%s524 + $0x1e8] sm:$0xff]
                %541 = vst [vmem:[%s525 + $0x38] sm:$0xff] %v540
              $region121: #{tpu_custom_call.1} parent=115 // loop_footer
                %s523 = sadd.s32 1, %s519
              $region122: #{tpu_custom_call.1} parent=115 // loop_footer_branch
                %518 = sbr.rel target = $region118
              $region123: #{tpu_custom_call.1} parent=115 // loop_exit
                _
            $region116: #{tpu_custom_call.1} parent=107 // pred_fallthru
              _
          $region108: #{tpu_custom_call.1} parent=103 // pred_fallthru
            _
          %570 = vnop
        $region104: #{tpu_custom_call.1} parent=23 // pred_fallthru
          _
      $region24: #{tpu_custom_call.1} parent=5 // pred_fallthru
        _
      %p571 = scmp.le.s32.totalorder 1, %s11
      %p572 = scmp.lt.s32.totalorder %s11, 5
      %p573 = pnand %p571, %p572
      %p574 = pneg %p573
      // Predicated region
      $region139: #{tpu_custom_call.1} parent=5 // pred_check
        _
      $region140: #{tpu_custom_call.1} parent=5 // pred_check_branch
        %576 = sbr.rel (%p573) target = $region142
      $region141: #{tpu_custom_call.1} parent=5 // pred_region
        %s577 = ssub.s32 %s11, 1
        %s578 = sand.u32 %s46, 1
        %s579 = sand.u32 %s46, 1
        %s580 = smul.addr %s579, 64
        %s581 = scalar_lea.vmem [#allocation4], %s580
        // Predicated region
        $region143: #{tpu_custom_call.1} parent=141 // pred_check
          %p582 = pneg %p59
        $region144: #{tpu_custom_call.1} parent=141 // pred_check_branch
          %584 = sbr.rel (%p582) target = $region146
        $region145: #{tpu_custom_call.1} parent=141 // pred_region
          _
        $region146: #{tpu_custom_call.1} parent=141 // pred_fallthru
          _
        %s585 = sand.u32 %s74, 1
        %s586 = sand.u32 %s74, 1
        %s587 = smul.addr %s586, 320
        %s588 = scalar_lea.vmem [#allocation5], %s587
        // Predicated region
        $region147: #{tpu_custom_call.1} parent=141 // pred_check
          %p589 = pneg %p87
        $region148: #{tpu_custom_call.1} parent=141 // pred_check_branch
          %591 = sbr.rel (%p589) target = $region150
        $region149: #{tpu_custom_call.1} parent=141 // pred_region
          _
        $region150: #{tpu_custom_call.1} parent=141 // pred_fallthru
          _
        %s592 = sand.u32 %s110, 1
        %s593 = sand.u32 %s110, 1
        %s594 = smul.addr %s593, 64
        %s595 = scalar_lea.vmem [#allocation6], %s594
        // Predicated region
        $region151: #{tpu_custom_call.1} parent=141 // pred_check
          %p596 = pneg %p123
        $region152: #{tpu_custom_call.1} parent=141 // pred_check_branch
          %598 = sbr.rel (%p596) target = $region154
        $region153: #{tpu_custom_call.1} parent=141 // pred_region
          _
        $region154: #{tpu_custom_call.1} parent=141 // pred_fallthru
          _
        %s599 = sand.u32 %s46, 1
        %s600 = sand.u32 %s46, 1
        %s601 = smul.addr %s600, 64
        %s602 = scalar_lea.vmem [#allocation4], %s601
        %p603 = pneg %p59
        %p604 = pneg %p56
        %s605 = sand.u32 %s74, 1
        %s606 = sand.u32 %s74, 1
        %s607 = smul.addr %s606, 320
        %s608 = scalar_lea.vmem [#allocation5], %s607
        %p609 = pneg %p87
        %p610 = pneg %p84
        %s611 = sand.u32 %s110, 1
        %s612 = sand.u32 %s110, 1
        %s613 = smul.addr %s612, 64
        %s614 = scalar_lea.vmem [#allocation6], %s613
        %p615 = pneg %p123
        %p616 = pneg %p120
        %p617 = pneg %p144
        %p618 = pneg %p141
        %p619 = pneg %p165
        %p620 = pneg %p162
        %p621 = pneg %p193
        %p622 = pneg %p190
        %s623 = sand.u32 %s180, 1
        %s624 = sand.u32 %s180, 1
        %s625 = smul.addr %s624, 128
        %s626 = scalar_lea.vmem [#allocation7], %s625
        %s627 = smul.u32 %s21, 5
        %s628 = ssub.s32 %s627, 1
        %p629 = scmp.gt.s32.totalorder %s628, 0
        %s630 = scalar_select %p629, %s628, 0
        %s631 = smul.u32 5, %s21
        %s632 = smul.u32 %s21, 5
        %s633 = sadd.s32 %s632, 5
        %p634 = scmp.lt.s32.totalorder %s633, 9
        %s635 = scalar_select %p634, %s633, 9
        %v636 = vld [vmem:[%s581] sm:$0xff]
        %v637 = vld [vmem:[%s581 + $0x8] sm:$0x3]
        %v638 = vld [vmem:[%s581 + $0x10] sm:$0xff]
        %v639 = vld [vmem:[%s581 + $0x18] sm:$0x3]
        %v640 = vld [vmem:[%s581 + $0x20] sm:$0xff]
        %v641 = vld [vmem:[%s581 + $0x28] sm:$0x3]
        %v642 = vld [vmem:[%s581 + $0x30] sm:$0xff]
        %v643 = vld [vmem:[%s581 + $0x38] sm:$0x3]
        %652 = vrot.lane.b32.xlu0 %v636, 113
        %v653 = vpop.permute.xlu0 %652
        %654 = vrot.lane.b32.xlu0 %v637, 113
        %v655 = vpop.permute.xlu0 %654
        %656 = vrot.lane.b32.xlu0 %v638, 113
        %v657 = vpop.permute.xlu0 %656
        %658 = vrot.lane.b32.xlu0 %v639, 113
        %v659 = vpop.permute.xlu0 %658
        %660 = vrot.lane.b32.xlu0 %v640, 113
        %v661 = vpop.permute.xlu0 %660
        %662 = vrot.lane.b32.xlu0 %v641, 113
        %v663 = vpop.permute.xlu0 %662
        %664 = vrot.lane.b32.xlu0 %v642, 113
        %v665 = vpop.permute.xlu0 %664
        %666 = vrot.lane.b32.xlu0 %v643, 113
        %v667 = vpop.permute.xlu0 %666
        %676 = vrot.lane.b32.xlu0 %v636, 1
        %v677 = vpop.permute.xlu0 %676
        %678 = vrot.lane.b32.xlu0 %v637, 1
        %v679 = vpop.permute.xlu0 %678
        %680 = vrot.lane.b32.xlu0 %v638, 1
        %v681 = vpop.permute.xlu0 %680
        %682 = vrot.lane.b32.xlu0 %v639, 1
        %v683 = vpop.permute.xlu0 %682
        %684 = vrot.lane.b32.xlu0 %v640, 1
        %v685 = vpop.permute.xlu0 %684
        %686 = vrot.lane.b32.xlu0 %v641, 1
        %v687 = vpop.permute.xlu0 %686
        %688 = vrot.lane.b32.xlu0 %v642, 1
        %v689 = vpop.permute.xlu0 %688
        %690 = vrot.lane.b32.xlu0 %v643, 1
        %v691 = vpop.permute.xlu0 %690
        %700 = vrot.lane.b32.xlu0 %v636, 17
        %v701 = vpop.permute.xlu0 %700
        %702 = vrot.lane.b32.xlu0 %v637, 17
        %v703 = vpop.permute.xlu0 %702
        %704 = vrot.lane.b32.xlu0 %v638, 17
        %v705 = vpop.permute.xlu0 %704
        %706 = vrot.lane.b32.xlu0 %v639, 17
        %v707 = vpop.permute.xlu0 %706
        %708 = vrot.lane.b32.xlu0 %v640, 17
        %v709 = vpop.permute.xlu0 %708
        %710 = vrot.lane.b32.xlu0 %v641, 17
        %v711 = vpop.permute.xlu0 %710
        %712 = vrot.lane.b32.xlu0 %v642, 17
        %v713 = vpop.permute.xlu0 %712
        %714 = vrot.lane.b32.xlu0 %v643, 17
        %v715 = vpop.permute.xlu0 %714
        %vm724 = vcmask 7168
        %v725 = vsel %vm724, %v653, %v677
        %v726 = vsel %vm724, %v655, %v679
        %v727 = vsel %vm724, %v657, %v681
        %v728 = vsel %vm724, %v659, %v683
        %v729 = vsel %vm724, %v661, %v685
        %v730 = vsel %vm724, %v663, %v687
        %v731 = vsel %vm724, %v665, %v689
        %v732 = vsel %vm724, %v667, %v691
        %vm733 = vcmask 138240
        %v734 = vsel %vm733, %v725, %v701
        %v735 = vsel %vm733, %v726, %v703
        %v736 = vsel %vm733, %v727, %v705
        %v737 = vsel %vm733, %v728, %v707
        %v738 = vsel %vm733, %v729, %v709
        %v739 = vsel %vm733, %v730, %v711
        %v740 = vsel %vm733, %v731, %v713
        %v741 = vsel %vm733, %v732, %v715
        %742 = vst [vmem:[#allocation2] sm:$0xff] 0.0
        %vm743 = vcmask 1031168
        %744 = vst.msk [vmem:[#allocation2 + $0x8] sm:$0xff] %vm743, 0.0
        %v745 = vcombine.low %v734, %v738
        %v746 = vcombine.high %v734, %v738
        %v748 = vunpack.c.l.s4 1983009808
        %v749 = vunpack.c.0.s8 %v748
        %v750 = vlaneseq
        %v751 = vshrl.u32 %v750, 7
        %v752 = vsub.s32 %v749, %v751
        %v753 = vrot.slane %v745, %v752
        %v755 = vunpack.c.l.s4 1983009808
        %v756 = vunpack.c.0.s8 %v755
        %v757 = vlaneseq
        %v758 = vshrl.u32 %v757, 7
        %v759 = vsub.s32 %v756, %v758
        %v760 = vrot.slane %v746, %v759
        %v761 = vcombine.low %v736, %v740
        %v762 = vcombine.high %v736, %v740
        %v764 = vunpack.c.l.s4 1983009808
        %v765 = vunpack.c.0.s8 %v764
        %v766 = vlaneseq
        %v767 = vshrl.u32 %v766, 7
        %v768 = vsub.s32 %v765, %v767
        %v769 = vrot.slane %v761, %v768
        %v771 = vunpack.c.l.s4 1983009808
        %v772 = vunpack.c.0.s8 %v771
        %v773 = vlaneseq
        %v774 = vshrl.u32 %v773, 7
        %v775 = vsub.s32 %v772, %v774
        %v776 = vrot.slane %v762, %v775
        %v777 = vcombine.low %v753, %v769
        %v778 = vcombine.high %v753, %v769
        %v780 = vunpack.c.l.s4 1934713408
        %v781 = vunpack.c.0.s8 %v780
        %v782 = vlaneseq
        %v783 = vshrl.u32 %v782, 7
        %v784 = vsub.s32 %v781, %v783
        %v785 = vrot.slane %v777, %v784
        %v787 = vunpack.c.l.s4 1934713408
        %v788 = vunpack.c.0.s8 %v787
        %v789 = vlaneseq
        %v790 = vshrl.u32 %v789, 7
        %v791 = vsub.s32 %v788, %v790
        %v792 = vrot.slane %v778, %v791
        %v793 = vcombine.low %v760, %v776
        %v794 = vcombine.high %v760, %v776
        %v796 = vunpack.c.l.s4 1934713408
        %v797 = vunpack.c.0.s8 %v796
        %v798 = vlaneseq
        %v799 = vshrl.u32 %v798, 7
        %v800 = vsub.s32 %v797, %v799
        %v801 = vrot.slane %v793, %v800
        %v803 = vunpack.c.l.s4 1934713408
        %v804 = vunpack.c.0.s8 %v803
        %v805 = vlaneseq
        %v806 = vshrl.u32 %v805, 7
        %v807 = vsub.s32 %v804, %v806
        %v808 = vrot.slane %v794, %v807
        %v809 = vcombine.high %v785, 0.0
        %v810 = vcombine.high %v792, 0.0
        %v811 = vcombine.high %v801, 0.0
        %v812 = vcombine.high %v808, 0.0
        %v813 = vcombine.low %v735, %v739
        %v815 = vunpack.c.l.s4 1983009808
        %v816 = vunpack.c.0.s8 %v815
        %v817 = vlaneseq
        %v818 = vshrl.u32 %v817, 7
        %v819 = vsub.s32 %v816, %v818
        %v820 = vrot.slane %v813, %v819
        %v821 = vcombine.low %v737, %v741
        %v823 = vunpack.c.l.s4 1983009808
        %v824 = vunpack.c.0.s8 %v823
        %v825 = vlaneseq
        %v826 = vshrl.u32 %v825, 7
        %v827 = vsub.s32 %v824, %v826
        %v828 = vrot.slane %v821, %v827
        %v829 = vcombine.low %v820, %v828
        %v831 = vunpack.c.l.s4 1934713408
        %v832 = vunpack.c.0.s8 %v831
        %v833 = vlaneseq
        %v834 = vshrl.u32 %v833, 7
        %v835 = vsub.s32 %v832, %v834
        %v836 = vrot.slane %v829, %v835
        %v837 = vcombine.high %v836, 0.0
        %839 = vrot.lane.b32.xlu0 %v809, 18
        %v840 = vpop.permute.xlu0 %839
        %843 = vrot.lane.b32.xlu0 %v792, 36
        %v844 = vpop.permute.xlu0 %843
        %847 = vrot.lane.b32.xlu0 %v810, 54
        %v848 = vpop.permute.xlu0 %847
        %851 = vrot.lane.b32.xlu0 %v801, 72
        %v852 = vpop.permute.xlu0 %851
        %855 = vrot.lane.b32.xlu0 %v811, 90
        %v856 = vpop.permute.xlu0 %855
        %859 = vrot.lane.b32.xlu0 %v808, 108
        %v860 = vpop.permute.xlu0 %859
        %863 = vrot.lane.b32.xlu0 %v812, 126
        %v864 = vpop.permute.xlu0 %863
        %867 = vrot.lane.b32.xlu0 %v836, 16
        %v868 = vpop.permute.xlu0 %867
        %871 = vrot.lane.b32.xlu0 %v837, 34
        %v872 = vpop.permute.xlu0 %871
        %vm874 = vcmask 146432
        %v875 = vsel %vm874, %v785, %v840
        %vm876 = vcmask 293888
        %v877 = vsel %vm876, %v875, %v844
        %vm878 = vcmask 441344
        %v879 = vsel %vm878, %v877, %v848
        %vm880 = vcmask 588800
        %v881 = vsel %vm880, %v879, %v852
        %vm882 = vcmask 736256
        %v883 = vsel %vm882, %v881, %v856
        %vm884 = vcmask 883712
        %v885 = vsel %vm884, %v883, %v860
        %v886 = vsel %vm743, %v885, %v864
        %vm887 = vcmask 130048
        %v888 = vsel %vm887, %v864, %v868
        %vm889 = vcmask 277504
        %v890 = vsel %vm889, %v888, %v872
        %893 = vrot.lane.b32.xlu0 %v886, 37
        %v894 = vpop.permute.xlu0 %893
        %895 = vrot.lane.b32.xlu0 %v890, 37
        %v896 = vpop.permute.xlu0 %895
        %vm897 = vcmask 302080
        %v898 = vsel %vm897, %v894, %v896
        %vm901 = vcmask 1043752
        %902 = vst.msk [vmem:[#allocation2] sm:$0xf] %vm901, %v894
        %vm903 = vcmask 723968
        %904 = vst.msk [vmem:[#allocation2 + $0x8] sm:$0xf] %vm903, %v898
        %v905 = vld [vmem:[%s588] sm:$0xff]
        %v906 = vld [vmem:[%s588 + $0x8] sm:$0x3]
        %v907 = vld [vmem:[%s588 + $0x50] sm:$0xff]
        %v908 = vld [vmem:[%s588 + $0x58] sm:$0x3]
        %v909 = vld [vmem:[%s588 + $0xa0] sm:$0xff]
        %v910 = vld [vmem:[%s588 + $0xa8] sm:$0x3]
        %v911 = vld [vmem:[%s588 + $0xf0] sm:$0xff]
        %v912 = vld [vmem:[%s588 + $0xf8] sm:$0x3]
        %921 = vrot.lane.b32.xlu0 %v905, 113
        %v922 = vpop.permute.xlu0 %921
        %923 = vrot.lane.b32.xlu0 %v906, 113
        %v924 = vpop.permute.xlu0 %923
        %925 = vrot.lane.b32.xlu0 %v907, 113
        %v926 = vpop.permute.xlu0 %925
        %927 = vrot.lane.b32.xlu0 %v908, 113
        %v928 = vpop.permute.xlu0 %927
        %929 = vrot.lane.b32.xlu0 %v909, 113
        %v930 = vpop.permute.xlu0 %929
        %931 = vrot.lane.b32.xlu0 %v910, 113
        %v932 = vpop.permute.xlu0 %931
        %933 = vrot.lane.b32.xlu0 %v911, 113
        %v934 = vpop.permute.xlu0 %933
        %935 = vrot.lane.b32.xlu0 %v912, 113
        %v936 = vpop.permute.xlu0 %935
        %945 = vrot.lane.b32.xlu0 %v905, 1
        %v946 = vpop.permute.xlu0 %945
        %947 = vrot.lane.b32.xlu0 %v906, 1
        %v948 = vpop.permute.xlu0 %947
        %949 = vrot.lane.b32.xlu0 %v907, 1
        %v950 = vpop.permute.xlu0 %949
        %951 = vrot.lane.b32.xlu0 %v908, 1
        %v952 = vpop.permute.xlu0 %951
        %953 = vrot.lane.b32.xlu0 %v909, 1
        %v954 = vpop.permute.xlu0 %953
        %955 = vrot.lane.b32.xlu0 %v910, 1
        %v956 = vpop.permute.xlu0 %955
        %957 = vrot.lane.b32.xlu0 %v911, 1
        %v958 = vpop.permute.xlu0 %957
        %959 = vrot.lane.b32.xlu0 %v912, 1
        %v960 = vpop.permute.xlu0 %959
        %969 = vrot.lane.b32.xlu0 %v905, 17
        %v970 = vpop.permute.xlu0 %969
        %971 = vrot.lane.b32.xlu0 %v906, 17
        %v972 = vpop.permute.xlu0 %971
        %973 = vrot.lane.b32.xlu0 %v907, 17
        %v974 = vpop.permute.xlu0 %973
        %975 = vrot.lane.b32.xlu0 %v908, 17
        %v976 = vpop.permute.xlu0 %975
        %977 = vrot.lane.b32.xlu0 %v909, 17
        %v978 = vpop.permute.xlu0 %977
        %979 = vrot.lane.b32.xlu0 %v910, 17
        %v980 = vpop.permute.xlu0 %979
        %981 = vrot.lane.b32.xlu0 %v911, 17
        %v982 = vpop.permute.xlu0 %981
        %983 = vrot.lane.b32.xlu0 %v912, 17
        %v984 = vpop.permute.xlu0 %983
        %v993 = vsel %vm724, %v922, %v946
        %v994 = vsel %vm724, %v924, %v948
        %v995 = vsel %vm724, %v926, %v950
        %v996 = vsel %vm724, %v928, %v952
        %v997 = vsel %vm724, %v930, %v954
        %v998 = vsel %vm724, %v932, %v956
        %v999 = vsel %vm724, %v934, %v958
        %v1000 = vsel %vm724, %v936, %v960
        %v1001 = vsel %vm733, %v993, %v970
        %v1002 = vsel %vm733, %v994, %v972
        %v1003 = vsel %vm733, %v995, %v974
        %v1004 = vsel %vm733, %v996, %v976
        %v1005 = vsel %vm733, %v997, %v978
        %v1006 = vsel %vm733, %v998, %v980
        %v1007 = vsel %vm733, %v999, %v982
        %v1008 = vsel %vm733, %v1000, %v984
        %s1009 = scalar_lea.vmem [#allocation2], 16
        %1010 = vst [vmem:[%s1009] sm:$0xff] 0.0
        %1011 = vst.msk [vmem:[%s1009 + $0x8] sm:$0xff] %vm743, 0.0
        %v1012 = vcombine.low %v1001, %v1005
        %v1013 = vcombine.high %v1001, %v1005
        %v1015 = vunpack.c.l.s4 1983009808
        %v1016 = vunpack.c.0.s8 %v1015
        %v1017 = vlaneseq
        %v1018 = vshrl.u32 %v1017, 7
        %v1019 = vsub.s32 %v1016, %v1018
        %v1020 = vrot.slane %v1012, %v1019
        %v1022 = vunpack.c.l.s4 1983009808
        %v1023 = vunpack.c.0.s8 %v1022
        %v1024 = vlaneseq
        %v1025 = vshrl.u32 %v1024, 7
        %v1026 = vsub.s32 %v1023, %v1025
        %v1027 = vrot.slane %v1013, %v1026
        %v1028 = vcombine.low %v1003, %v1007
        %v1029 = vcombine.high %v1003, %v1007
        %v1031 = vunpack.c.l.s4 1983009808
        %v1032 = vunpack.c.0.s8 %v1031
        %v1033 = vlaneseq
        %v1034 = vshrl.u32 %v1033, 7
        %v1035 = vsub.s32 %v1032, %v1034
        %v1036 = vrot.slane %v1028, %v1035
        %v1038 = vunpack.c.l.s4 1983009808
        %v1039 = vunpack.c.0.s8 %v1038
        %v1040 = vlaneseq
        %v1041 = vshrl.u32 %v1040, 7
        %v1042 = vsub.s32 %v1039, %v1041
        %v1043 = vrot.slane %v1029, %v1042
        %v1044 = vcombine.low %v1020, %v1036
        %v1045 = vcombine.high %v1020, %v1036
        %v1047 = vunpack.c.l.s4 1934713408
        %v1048 = vunpack.c.0.s8 %v1047
        %v1049 = vlaneseq
        %v1050 = vshrl.u32 %v1049, 7
        %v1051 = vsub.s32 %v1048, %v1050
        %v1052 = vrot.slane %v1044, %v1051
        %v1054 = vunpack.c.l.s4 1934713408
        %v1055 = vunpack.c.0.s8 %v1054
        %v1056 = vlaneseq
        %v1057 = vshrl.u32 %v1056, 7
        %v1058 = vsub.s32 %v1055, %v1057
        %v1059 = vrot.slane %v1045, %v1058
        %v1060 = vcombine.low %v1027, %v1043
        %v1061 = vcombine.high %v1027, %v1043
        %v1063 = vunpack.c.l.s4 1934713408
        %v1064 = vunpack.c.0.s8 %v1063
        %v1065 = vlaneseq
        %v1066 = vshrl.u32 %v1065, 7
        %v1067 = vsub.s32 %v1064, %v1066
        %v1068 = vrot.slane %v1060, %v1067
        %v1070 = vunpack.c.l.s4 1934713408
        %v1071 = vunpack.c.0.s8 %v1070
        %v1072 = vlaneseq
        %v1073 = vshrl.u32 %v1072, 7
        %v1074 = vsub.s32 %v1071, %v1073
        %v1075 = vrot.slane %v1061, %v1074
        %v1076 = vcombine.high %v1052, 0.0
        %v1077 = vcombine.high %v1059, 0.0
        %v1078 = vcombine.high %v1068, 0.0
        %v1079 = vcombine.high %v1075, 0.0
        %v1080 = vcombine.low %v1002, %v1006
        %v1082 = vunpack.c.l.s4 1983009808
        %v1083 = vunpack.c.0.s8 %v1082
        %v1084 = vlaneseq
        %v1085 = vshrl.u32 %v1084, 7
        %v1086 = vsub.s32 %v1083, %v1085
        %v1087 = vrot.slane %v1080, %v1086
        %v1088 = vcombine.low %v1004, %v1008
        %v1090 = vunpack.c.l.s4 1983009808
        %v1091 = vunpack.c.0.s8 %v1090
        %v1092 = vlaneseq
        %v1093 = vshrl.u32 %v1092, 7
        %v1094 = vsub.s32 %v1091, %v1093
        %v1095 = vrot.slane %v1088, %v1094
        %v1096 = vcombine.low %v1087, %v1095
        %v1098 = vunpack.c.l.s4 1934713408
        %v1099 = vunpack.c.0.s8 %v1098
        %v1100 = vlaneseq
        %v1101 = vshrl.u32 %v1100, 7
        %v1102 = vsub.s32 %v1099, %v1101
        %v1103 = vrot.slane %v1096, %v1102
        %v1104 = vcombine.high %v1103, 0.0
        %1106 = vrot.lane.b32.xlu0 %v1076, 18
        %v1107 = vpop.permute.xlu0 %1106
        %1110 = vrot.lane.b32.xlu0 %v1059, 36
        %v1111 = vpop.permute.xlu0 %1110
        %1114 = vrot.lane.b32.xlu0 %v1077, 54
        %v1115 = vpop.permute.xlu0 %1114
        %1118 = vrot.lane.b32.xlu0 %v1068, 72
        %v1119 = vpop.permute.xlu0 %1118
        %1122 = vrot.lane.b32.xlu0 %v1078, 90
        %v1123 = vpop.permute.xlu0 %1122
        %1126 = vrot.lane.b32.xlu0 %v1075, 108
        %v1127 = vpop.permute.xlu0 %1126
        %1130 = vrot.lane.b32.xlu0 %v1079, 126
        %v1131 = vpop.permute.xlu0 %1130
        %1134 = vrot.lane.b32.xlu0 %v1103, 16
        %v1135 = vpop.permute.xlu0 %1134
        %1138 = vrot.lane.b32.xlu0 %v1104, 34
        %v1139 = vpop.permute.xlu0 %1138
        %v1141 = vsel %vm874, %v1052, %v1107
        %v1142 = vsel %vm876, %v1141, %v1111
        %v1143 = vsel %vm878, %v1142, %v1115
        %v1144 = vsel %vm880, %v1143, %v1119
        %v1145 = vsel %vm882, %v1144, %v1123
        %v1146 = vsel %vm884, %v1145, %v1127
        %v1147 = vsel %vm743, %v1146, %v1131
        %v1148 = vsel %vm887, %v1131, %v1135
        %v1149 = vsel %vm889, %v1148, %v1139
        %1152 = vrot.lane.b32.xlu0 %v1147, 37
        %v1153 = vpop.permute.xlu0 %1152
        %1154 = vrot.lane.b32.xlu0 %v1149, 37
        %v1155 = vpop.permute.xlu0 %1154
        %v1156 = vsel %vm897, %v1153, %v1155
        %1159 = vst.msk [vmem:[%s1009] sm:$0xf] %vm901, %v1153
        %1160 = vst.msk [vmem:[%s1009 + $0x8] sm:$0xf] %vm903, %v1156
        %s1161 = scalar_lea.vmem %s588, 16 [#allocation5]
        %v1162 = vld [vmem:[%s1161] sm:$0xff]
        %v1163 = vld [vmem:[%s1161 + $0x8] sm:$0x3]
        %v1164 = vld [vmem:[%s1161 + $0x50] sm:$0xff]
        %v1165 = vld [vmem:[%s1161 + $0x58] sm:$0x3]
        %v1166 = vld [vmem:[%s1161 + $0xa0] sm:$0xff]
        %v1167 = vld [vmem:[%s1161 + $0xa8] sm:$0x3]
        %v1168 = vld [vmem:[%s1161 + $0xf0] sm:$0xff]
        %v1169 = vld [vmem:[%s1161 + $0xf8] sm:$0x3]
        %1178 = vrot.lane.b32.xlu0 %v1162, 113
        %v1179 = vpop.permute.xlu0 %1178
        %1180 = vrot.lane.b32.xlu0 %v1163, 113
        %v1181 = vpop.permute.xlu0 %1180
        %1182 = vrot.lane.b32.xlu0 %v1164, 113
        %v1183 = vpop.permute.xlu0 %1182
        %1184 = vrot.lane.b32.xlu0 %v1165, 113
        %v1185 = vpop.permute.xlu0 %1184
        %1186 = vrot.lane.b32.xlu0 %v1166, 113
        %v1187 = vpop.permute.xlu0 %1186
        %1188 = vrot.lane.b32.xlu0 %v1167, 113
        %v1189 = vpop.permute.xlu0 %1188
        %1190 = vrot.lane.b32.xlu0 %v1168, 113
        %v1191 = vpop.permute.xlu0 %1190
        %1192 = vrot.lane.b32.xlu0 %v1169, 113
        %v1193 = vpop.permute.xlu0 %1192
        %1202 = vrot.lane.b32.xlu0 %v1162, 1
        %v1203 = vpop.permute.xlu0 %1202
        %1204 = vrot.lane.b32.xlu0 %v1163, 1
        %v1205 = vpop.permute.xlu0 %1204
        %1206 = vrot.lane.b32.xlu0 %v1164, 1
        %v1207 = vpop.permute.xlu0 %1206
        %1208 = vrot.lane.b32.xlu0 %v1165, 1
        %v1209 = vpop.permute.xlu0 %1208
        %1210 = vrot.lane.b32.xlu0 %v1166, 1
        %v1211 = vpop.permute.xlu0 %1210
        %1212 = vrot.lane.b32.xlu0 %v1167, 1
        %v1213 = vpop.permute.xlu0 %1212
        %1214 = vrot.lane.b32.xlu0 %v1168, 1
        %v1215 = vpop.permute.xlu0 %1214
        %1216 = vrot.lane.b32.xlu0 %v1169, 1
        %v1217 = vpop.permute.xlu0 %1216
        %1226 = vrot.lane.b32.xlu0 %v1162, 17
        %v1227 = vpop.permute.xlu0 %1226
        %1228 = vrot.lane.b32.xlu0 %v1163, 17
        %v1229 = vpop.permute.xlu0 %1228
        %1230 = vrot.lane.b32.xlu0 %v1164, 17
        %v1231 = vpop.permute.xlu0 %1230
        %1232 = vrot.lane.b32.xlu0 %v1165, 17
        %v1233 = vpop.permute.xlu0 %1232
        %1234 = vrot.lane.b32.xlu0 %v1166, 17
        %v1235 = vpop.permute.xlu0 %1234
        %1236 = vrot.lane.b32.xlu0 %v1167, 17
        %v1237 = vpop.permute.xlu0 %1236
        %1238 = vrot.lane.b32.xlu0 %v1168, 17
        %v1239 = vpop.permute.xlu0 %1238
        %1240 = vrot.lane.b32.xlu0 %v1169, 17
        %v1241 = vpop.permute.xlu0 %1240
        %v1250 = vsel %vm724, %v1179, %v1203
        %v1251 = vsel %vm724, %v1181, %v1205
        %v1252 = vsel %vm724, %v1183, %v1207
        %v1253 = vsel %vm724, %v1185, %v1209
        %v1254 = vsel %vm724, %v1187, %v1211
        %v1255 = vsel %vm724, %v1189, %v1213
        %v1256 = vsel %vm724, %v1191, %v1215
        %v1257 = vsel %vm724, %v1193, %v1217
        %v1258 = vsel %vm733, %v1250, %v1227
        %v1259 = vsel %vm733, %v1251, %v1229
        %v1260 = vsel %vm733, %v1252, %v1231
        %v1261 = vsel %vm733, %v1253, %v1233
        %v1262 = vsel %vm733, %v1254, %v1235
        %v1263 = vsel %vm733, %v1255, %v1237
        %v1264 = vsel %vm733, %v1256, %v1239
        %v1265 = vsel %vm733, %v1257, %v1241
        %s1266 = scalar_lea.vmem [#allocation2], 32
        %1267 = vst [vmem:[%s1266] sm:$0xff] 0.0
        %1268 = vst.msk [vmem:[%s1266 + $0x8] sm:$0xff] %vm743, 0.0
        %v1269 = vcombine.low %v1258, %v1262
        %v1270 = vcombine.high %v1258, %v1262
        %v1272 = vunpack.c.l.s4 1983009808
        %v1273 = vunpack.c.0.s8 %v1272
        %v1274 = vlaneseq
        %v1275 = vshrl.u32 %v1274, 7
        %v1276 = vsub.s32 %v1273, %v1275
        %v1277 = vrot.slane %v1269, %v1276
        %v1279 = vunpack.c.l.s4 1983009808
        %v1280 = vunpack.c.0.s8 %v1279
        %v1281 = vlaneseq
        %v1282 = vshrl.u32 %v1281, 7
        %v1283 = vsub.s32 %v1280, %v1282
        %v1284 = vrot.slane %v1270, %v1283
        %v1285 = vcombine.low %v1260, %v1264
        %v1286 = vcombine.high %v1260, %v1264
        %v1288 = vunpack.c.l.s4 1983009808
        %v1289 = vunpack.c.0.s8 %v1288
        %v1290 = vlaneseq
        %v1291 = vshrl.u32 %v1290, 7
        %v1292 = vsub.s32 %v1289, %v1291
        %v1293 = vrot.slane %v1285, %v1292
        %v1295 = vunpack.c.l.s4 1983009808
        %v1296 = vunpack.c.0.s8 %v1295
        %v1297 = vlaneseq
        %v1298 = vshrl.u32 %v1297, 7
        %v1299 = vsub.s32 %v1296, %v1298
        %v1300 = vrot.slane %v1286, %v1299
        %v1301 = vcombine.low %v1277, %v1293
        %v1302 = vcombine.high %v1277, %v1293
        %v1304 = vunpack.c.l.s4 1934713408
        %v1305 = vunpack.c.0.s8 %v1304
        %v1306 = vlaneseq
        %v1307 = vshrl.u32 %v1306, 7
        %v1308 = vsub.s32 %v1305, %v1307
        %v1309 = vrot.slane %v1301, %v1308
        %v1311 = vunpack.c.l.s4 1934713408
        %v1312 = vunpack.c.0.s8 %v1311
        %v1313 = vlaneseq
        %v1314 = vshrl.u32 %v1313, 7
        %v1315 = vsub.s32 %v1312, %v1314
        %v1316 = vrot.slane %v1302, %v1315
        %v1317 = vcombine.low %v1284, %v1300
        %v1318 = vcombine.high %v1284, %v1300
        %v1320 = vunpack.c.l.s4 1934713408
        %v1321 = vunpack.c.0.s8 %v1320
        %v1322 = vlaneseq
        %v1323 = vshrl.u32 %v1322, 7
        %v1324 = vsub.s32 %v1321, %v1323
        %v1325 = vrot.slane %v1317, %v1324
        %v1327 = vunpack.c.l.s4 1934713408
        %v1328 = vunpack.c.0.s8 %v1327
        %v1329 = vlaneseq
        %v1330 = vshrl.u32 %v1329, 7
        %v1331 = vsub.s32 %v1328, %v1330
        %v1332 = vrot.slane %v1318, %v1331
        %v1333 = vcombine.high %v1309, 0.0
        %v1334 = vcombine.high %v1316, 0.0
        %v1335 = vcombine.high %v1325, 0.0
        %v1336 = vcombine.high %v1332, 0.0
        %v1337 = vcombine.low %v1259, %v1263
        %v1339 = vunpack.c.l.s4 1983009808
        %v1340 = vunpack.c.0.s8 %v1339
        %v1341 = vlaneseq
        %v1342 = vshrl.u32 %v1341, 7
        %v1343 = vsub.s32 %v1340, %v1342
        %v1344 = vrot.slane %v1337, %v1343
        %v1345 = vcombine.low %v1261, %v1265
        %v1347 = vunpack.c.l.s4 1983009808
        %v1348 = vunpack.c.0.s8 %v1347
        %v1349 = vlaneseq
        %v1350 = vshrl.u32 %v1349, 7
        %v1351 = vsub.s32 %v1348, %v1350
        %v1352 = vrot.slane %v1345, %v1351
        %v1353 = vcombine.low %v1344, %v1352
        %v1355 = vunpack.c.l.s4 1934713408
        %v1356 = vunpack.c.0.s8 %v1355
        %v1357 = vlaneseq
        %v1358 = vshrl.u32 %v1357, 7
        %v1359 = vsub.s32 %v1356, %v1358
        %v1360 = vrot.slane %v1353, %v1359
        %v1361 = vcombine.high %v1360, 0.0
        %1363 = vrot.lane.b32.xlu0 %v1333, 18
        %v1364 = vpop.permute.xlu0 %1363
        %1367 = vrot.lane.b32.xlu0 %v1316, 36
        %v1368 = vpop.permute.xlu0 %1367
        %1371 = vrot.lane.b32.xlu0 %v1334, 54
        %v1372 = vpop.permute.xlu0 %1371
        %1375 = vrot.lane.b32.xlu0 %v1325, 72
        %v1376 = vpop.permute.xlu0 %1375
        %1379 = vrot.lane.b32.xlu0 %v1335, 90
        %v1380 = vpop.permute.xlu0 %1379
        %1383 = vrot.lane.b32.xlu0 %v1332, 108
        %v1384 = vpop.permute.xlu0 %1383
        %1387 = vrot.lane.b32.xlu0 %v1336, 126
        %v1388 = vpop.permute.xlu0 %1387
        %1391 = vrot.lane.b32.xlu0 %v1360, 16
        %v1392 = vpop.permute.xlu0 %1391
        %1395 = vrot.lane.b32.xlu0 %v1361, 34
        %v1396 = vpop.permute.xlu0 %1395
        %v1398 = vsel %vm874, %v1309, %v1364
        %v1399 = vsel %vm876, %v1398, %v1368
        %v1400 = vsel %vm878, %v1399, %v1372
        %v1401 = vsel %vm880, %v1400, %v1376
        %v1402 = vsel %vm882, %v1401, %v1380
        %v1403 = vsel %vm884, %v1402, %v1384
        %v1404 = vsel %vm743, %v1403, %v1388
        %v1405 = vsel %vm887, %v1388, %v1392
        %v1406 = vsel %vm889, %v1405, %v1396
        %1409 = vrot.lane.b32.xlu0 %v1404, 37
        %v1410 = vpop.permute.xlu0 %1409
        %1411 = vrot.lane.b32.xlu0 %v1406, 37
        %v1412 = vpop.permute.xlu0 %1411
        %v1413 = vsel %vm897, %v1410, %v1412
        %1416 = vst.msk [vmem:[%s1266] sm:$0xf] %vm901, %v1410
        %1417 = vst.msk [vmem:[%s1266 + $0x8] sm:$0xf] %vm903, %v1413
        %s1418 = scalar_lea.vmem %s588, 32 [#allocation5]
        %v1419 = vld [vmem:[%s1418] sm:$0xff]
        %v1420 = vld [vmem:[%s1418 + $0x8] sm:$0x3]
        %v1421 = vld [vmem:[%s1418 + $0x50] sm:$0xff]
        %v1422 = vld [vmem:[%s1418 + $0x58] sm:$0x3]
        %v1423 = vld [vmem:[%s1418 + $0xa0] sm:$0xff]
        %v1424 = vld [vmem:[%s1418 + $0xa8] sm:$0x3]
        %v1425 = vld [vmem:[%s1418 + $0xf0] sm:$0xff]
        %v1426 = vld [vmem:[%s1418 + $0xf8] sm:$0x3]
        %1435 = vrot.lane.b32.xlu0 %v1419, 113
        %v1436 = vpop.permute.xlu0 %1435
        %1437 = vrot.lane.b32.xlu0 %v1420, 113
        %v1438 = vpop.permute.xlu0 %1437
        %1439 = vrot.lane.b32.xlu0 %v1421, 113
        %v1440 = vpop.permute.xlu0 %1439
        %1441 = vrot.lane.b32.xlu0 %v1422, 113
        %v1442 = vpop.permute.xlu0 %1441
        %1443 = vrot.lane.b32.xlu0 %v1423, 113
        %v1444 = vpop.permute.xlu0 %1443
        %1445 = vrot.lane.b32.xlu0 %v1424, 113
        %v1446 = vpop.permute.xlu0 %1445
        %1447 = vrot.lane.b32.xlu0 %v1425, 113
        %v1448 = vpop.permute.xlu0 %1447
        %1449 = vrot.lane.b32.xlu0 %v1426, 113
        %v1450 = vpop.permute.xlu0 %1449
        %1459 = vrot.lane.b32.xlu0 %v1419, 1
        %v1460 = vpop.permute.xlu0 %1459
        %1461 = vrot.lane.b32.xlu0 %v1420, 1
        %v1462 = vpop.permute.xlu0 %1461
        %1463 = vrot.lane.b32.xlu0 %v1421, 1
        %v1464 = vpop.permute.xlu0 %1463
        %1465 = vrot.lane.b32.xlu0 %v1422, 1
        %v1466 = vpop.permute.xlu0 %1465
        %1467 = vrot.lane.b32.xlu0 %v1423, 1
        %v1468 = vpop.permute.xlu0 %1467
        %1469 = vrot.lane.b32.xlu0 %v1424, 1
        %v1470 = vpop.permute.xlu0 %1469
        %1471 = vrot.lane.b32.xlu0 %v1425, 1
        %v1472 = vpop.permute.xlu0 %1471
        %1473 = vrot.lane.b32.xlu0 %v1426, 1
        %v1474 = vpop.permute.xlu0 %1473
        %1483 = vrot.lane.b32.xlu0 %v1419, 17
        %v1484 = vpop.permute.xlu0 %1483
        %1485 = vrot.lane.b32.xlu0 %v1420, 17
        %v1486 = vpop.permute.xlu0 %1485
        %1487 = vrot.lane.b32.xlu0 %v1421, 17
        %v1488 = vpop.permute.xlu0 %1487
        %1489 = vrot.lane.b32.xlu0 %v1422, 17
        %v1490 = vpop.permute.xlu0 %1489
        %1491 = vrot.lane.b32.xlu0 %v1423, 17
        %v1492 = vpop.permute.xlu0 %1491
        %1493 = vrot.lane.b32.xlu0 %v1424, 17
        %v1494 = vpop.permute.xlu0 %1493
        %1495 = vrot.lane.b32.xlu0 %v1425, 17
        %v1496 = vpop.permute.xlu0 %1495
        %1497 = vrot.lane.b32.xlu0 %v1426, 17
        %v1498 = vpop.permute.xlu0 %1497
        %v1507 = vsel %vm724, %v1436, %v1460
        %v1508 = vsel %vm724, %v1438, %v1462
        %v1509 = vsel %vm724, %v1440, %v1464
        %v1510 = vsel %vm724, %v1442, %v1466
        %v1511 = vsel %vm724, %v1444, %v1468
        %v1512 = vsel %vm724, %v1446, %v1470
        %v1513 = vsel %vm724, %v1448, %v1472
        %v1514 = vsel %vm724, %v1450, %v1474
        %v1515 = vsel %vm733, %v1507, %v1484
        %v1516 = vsel %vm733, %v1508, %v1486
        %v1517 = vsel %vm733, %v1509, %v1488
        %v1518 = vsel %vm733, %v1510, %v1490
        %v1519 = vsel %vm733, %v1511, %v1492
        %v1520 = vsel %vm733, %v1512, %v1494
        %v1521 = vsel %vm733, %v1513, %v1496
        %v1522 = vsel %vm733, %v1514, %v1498
        %s1523 = scalar_lea.vmem [#allocation2], 48
        %1524 = vst [vmem:[%s1523] sm:$0xff] 0.0
        %1525 = vst.msk [vmem:[%s1523 + $0x8] sm:$0xff] %vm743, 0.0
        %v1526 = vcombine.low %v1515, %v1519
        %v1527 = vcombine.high %v1515, %v1519
        %v1529 = vunpack.c.l.s4 1983009808
        %v1530 = vunpack.c.0.s8 %v1529
        %v1531 = vlaneseq
        %v1532 = vshrl.u32 %v1531, 7
        %v1533 = vsub.s32 %v1530, %v1532
        %v1534 = vrot.slane %v1526, %v1533
        %v1536 = vunpack.c.l.s4 1983009808
        %v1537 = vunpack.c.0.s8 %v1536
        %v1538 = vlaneseq
        %v1539 = vshrl.u32 %v1538, 7
        %v1540 = vsub.s32 %v1537, %v1539
        %v1541 = vrot.slane %v1527, %v1540
        %v1542 = vcombine.low %v1517, %v1521
        %v1543 = vcombine.high %v1517, %v1521
        %v1545 = vunpack.c.l.s4 1983009808
        %v1546 = vunpack.c.0.s8 %v1545
        %v1547 = vlaneseq
        %v1548 = vshrl.u32 %v1547, 7
        %v1549 = vsub.s32 %v1546, %v1548
        %v1550 = vrot.slane %v1542, %v1549
        %v1552 = vunpack.c.l.s4 1983009808
        %v1553 = vunpack.c.0.s8 %v1552
        %v1554 = vlaneseq
        %v1555 = vshrl.u32 %v1554, 7
        %v1556 = vsub.s32 %v1553, %v1555
        %v1557 = vrot.slane %v1543, %v1556
        %v1558 = vcombine.low %v1534, %v1550
        %v1559 = vcombine.high %v1534, %v1550
        %v1561 = vunpack.c.l.s4 1934713408
        %v1562 = vunpack.c.0.s8 %v1561
        %v1563 = vlaneseq
        %v1564 = vshrl.u32 %v1563, 7
        %v1565 = vsub.s32 %v1562, %v1564
        %v1566 = vrot.slane %v1558, %v1565
        %v1568 = vunpack.c.l.s4 1934713408
        %v1569 = vunpack.c.0.s8 %v1568
        %v1570 = vlaneseq
        %v1571 = vshrl.u32 %v1570, 7
        %v1572 = vsub.s32 %v1569, %v1571
        %v1573 = vrot.slane %v1559, %v1572
        %v1574 = vcombine.low %v1541, %v1557
        %v1575 = vcombine.high %v1541, %v1557
        %v1577 = vunpack.c.l.s4 1934713408
        %v1578 = vunpack.c.0.s8 %v1577
        %v1579 = vlaneseq
        %v1580 = vshrl.u32 %v1579, 7
        %v1581 = vsub.s32 %v1578, %v1580
        %v1582 = vrot.slane %v1574, %v1581
        %v1584 = vunpack.c.l.s4 1934713408
        %v1585 = vunpack.c.0.s8 %v1584
        %v1586 = vlaneseq
        %v1587 = vshrl.u32 %v1586, 7
        %v1588 = vsub.s32 %v1585, %v1587
        %v1589 = vrot.slane %v1575, %v1588
        %v1590 = vcombine.high %v1566, 0.0
        %v1591 = vcombine.high %v1573, 0.0
        %v1592 = vcombine.high %v1582, 0.0
        %v1593 = vcombine.high %v1589, 0.0
        %v1594 = vcombine.low %v1516, %v1520
        %v1596 = vunpack.c.l.s4 1983009808
        %v1597 = vunpack.c.0.s8 %v1596
        %v1598 = vlaneseq
        %v1599 = vshrl.u32 %v1598, 7
        %v1600 = vsub.s32 %v1597, %v1599
        %v1601 = vrot.slane %v1594, %v1600
        %v1602 = vcombine.low %v1518, %v1522
        %v1604 = vunpack.c.l.s4 1983009808
        %v1605 = vunpack.c.0.s8 %v1604
        %v1606 = vlaneseq
        %v1607 = vshrl.u32 %v1606, 7
        %v1608 = vsub.s32 %v1605, %v1607
        %v1609 = vrot.slane %v1602, %v1608
        %v1610 = vcombine.low %v1601, %v1609
        %v1612 = vunpack.c.l.s4 1934713408
        %v1613 = vunpack.c.0.s8 %v1612
        %v1614 = vlaneseq
        %v1615 = vshrl.u32 %v1614, 7
        %v1616 = vsub.s32 %v1613, %v1615
        %v1617 = vrot.slane %v1610, %v1616
        %v1618 = vcombine.high %v1617, 0.0
        %1620 = vrot.lane.b32.xlu0 %v1590, 18
        %v1621 = vpop.permute.xlu0 %1620
        %1624 = vrot.lane.b32.xlu0 %v1573, 36
        %v1625 = vpop.permute.xlu0 %1624
        %1628 = vrot.lane.b32.xlu0 %v1591, 54
        %v1629 = vpop.permute.xlu0 %1628
        %1632 = vrot.lane.b32.xlu0 %v1582, 72
        %v1633 = vpop.permute.xlu0 %1632
        %1636 = vrot.lane.b32.xlu0 %v1592, 90
        %v1637 = vpop.permute.xlu0 %1636
        %1640 = vrot.lane.b32.xlu0 %v1589, 108
        %v1641 = vpop.permute.xlu0 %1640
        %1644 = vrot.lane.b32.xlu0 %v1593, 126
        %v1645 = vpop.permute.xlu0 %1644
        %1648 = vrot.lane.b32.xlu0 %v1617, 16
        %v1649 = vpop.permute.xlu0 %1648
        %1652 = vrot.lane.b32.xlu0 %v1618, 34
        %v1653 = vpop.permute.xlu0 %1652
        %v1655 = vsel %vm874, %v1566, %v1621
        %v1656 = vsel %vm876, %v1655, %v1625
        %v1657 = vsel %vm878, %v1656, %v1629
        %v1658 = vsel %vm880, %v1657, %v1633
        %v1659 = vsel %vm882, %v1658, %v1637
        %v1660 = vsel %vm884, %v1659, %v1641
        %v1661 = vsel %vm743, %v1660, %v1645
        %v1662 = vsel %vm887, %v1645, %v1649
        %v1663 = vsel %vm889, %v1662, %v1653
        %1666 = vrot.lane.b32.xlu0 %v1661, 37
        %v1667 = vpop.permute.xlu0 %1666
        %1668 = vrot.lane.b32.xlu0 %v1663, 37
        %v1669 = vpop.permute.xlu0 %1668
        %v1670 = vsel %vm897, %v1667, %v1669
        %1673 = vst.msk [vmem:[%s1523] sm:$0xf] %vm901, %v1667
        %1674 = vst.msk [vmem:[%s1523 + $0x8] sm:$0xf] %vm903, %v1670
        %s1675 = scalar_lea.vmem %s588, 48 [#allocation5]
        %v1676 = vld [vmem:[%s1675] sm:$0xff]
        %v1677 = vld [vmem:[%s1675 + $0x8] sm:$0x3]
        %v1678 = vld [vmem:[%s1675 + $0x50] sm:$0xff]
        %v1679 = vld [vmem:[%s1675 + $0x58] sm:$0x3]
        %v1680 = vld [vmem:[%s1675 + $0xa0] sm:$0xff]
        %v1681 = vld [vmem:[%s1675 + $0xa8] sm:$0x3]
        %v1682 = vld [vmem:[%s1675 + $0xf0] sm:$0xff]
        %v1683 = vld [vmem:[%s1675 + $0xf8] sm:$0x3]
        %1692 = vrot.lane.b32.xlu0 %v1676, 113
        %v1693 = vpop.permute.xlu0 %1692
        %1694 = vrot.lane.b32.xlu0 %v1677, 113
        %v1695 = vpop.permute.xlu0 %1694
        %1696 = vrot.lane.b32.xlu0 %v1678, 113
        %v1697 = vpop.permute.xlu0 %1696
        %1698 = vrot.lane.b32.xlu0 %v1679, 113
        %v1699 = vpop.permute.xlu0 %1698
        %1700 = vrot.lane.b32.xlu0 %v1680, 113
        %v1701 = vpop.permute.xlu0 %1700
        %1702 = vrot.lane.b32.xlu0 %v1681, 113
        %v1703 = vpop.permute.xlu0 %1702
        %1704 = vrot.lane.b32.xlu0 %v1682, 113
        %v1705 = vpop.permute.xlu0 %1704
        %1706 = vrot.lane.b32.xlu0 %v1683, 113
        %v1707 = vpop.permute.xlu0 %1706
        %1716 = vrot.lane.b32.xlu0 %v1676, 1
        %v1717 = vpop.permute.xlu0 %1716
        %1718 = vrot.lane.b32.xlu0 %v1677, 1
        %v1719 = vpop.permute.xlu0 %1718
        %1720 = vrot.lane.b32.xlu0 %v1678, 1
        %v1721 = vpop.permute.xlu0 %1720
        %1722 = vrot.lane.b32.xlu0 %v1679, 1
        %v1723 = vpop.permute.xlu0 %1722
        %1724 = vrot.lane.b32.xlu0 %v1680, 1
        %v1725 = vpop.permute.xlu0 %1724
        %1726 = vrot.lane.b32.xlu0 %v1681, 1
        %v1727 = vpop.permute.xlu0 %1726
        %1728 = vrot.lane.b32.xlu0 %v1682, 1
        %v1729 = vpop.permute.xlu0 %1728
        %1730 = vrot.lane.b32.xlu0 %v1683, 1
        %v1731 = vpop.permute.xlu0 %1730
        %1740 = vrot.lane.b32.xlu0 %v1676, 17
        %v1741 = vpop.permute.xlu0 %1740
        %1742 = vrot.lane.b32.xlu0 %v1677, 17
        %v1743 = vpop.permute.xlu0 %1742
        %1744 = vrot.lane.b32.xlu0 %v1678, 17
        %v1745 = vpop.permute.xlu0 %1744
        %1746 = vrot.lane.b32.xlu0 %v1679, 17
        %v1747 = vpop.permute.xlu0 %1746
        %1748 = vrot.lane.b32.xlu0 %v1680, 17
        %v1749 = vpop.permute.xlu0 %1748
        %1750 = vrot.lane.b32.xlu0 %v1681, 17
        %v1751 = vpop.permute.xlu0 %1750
        %1752 = vrot.lane.b32.xlu0 %v1682, 17
        %v1753 = vpop.permute.xlu0 %1752
        %1754 = vrot.lane.b32.xlu0 %v1683, 17
        %v1755 = vpop.permute.xlu0 %1754
        %v1764 = vsel %vm724, %v1693, %v1717
        %v1765 = vsel %vm724, %v1695, %v1719
        %v1766 = vsel %vm724, %v1697, %v1721
        %v1767 = vsel %vm724, %v1699, %v1723
        %v1768 = vsel %vm724, %v1701, %v1725
        %v1769 = vsel %vm724, %v1703, %v1727
        %v1770 = vsel %vm724, %v1705, %v1729
        %v1771 = vsel %vm724, %v1707, %v1731
        %v1772 = vsel %vm733, %v1764, %v1741
        %v1773 = vsel %vm733, %v1765, %v1743
        %v1774 = vsel %vm733, %v1766, %v1745
        %v1775 = vsel %vm733, %v1767, %v1747
        %v1776 = vsel %vm733, %v1768, %v1749
        %v1777 = vsel %vm733, %v1769, %v1751
        %v1778 = vsel %vm733, %v1770, %v1753
        %v1779 = vsel %vm733, %v1771, %v1755
        %s1780 = scalar_lea.vmem [#allocation2], 64
        %1781 = vst [vmem:[%s1780] sm:$0xff] 0.0
        %1782 = vst.msk [vmem:[%s1780 + $0x8] sm:$0xff] %vm743, 0.0
        %v1783 = vcombine.low %v1772, %v1776
        %v1784 = vcombine.high %v1772, %v1776
        %v1786 = vunpack.c.l.s4 1983009808
        %v1787 = vunpack.c.0.s8 %v1786
        %v1788 = vlaneseq
        %v1789 = vshrl.u32 %v1788, 7
        %v1790 = vsub.s32 %v1787, %v1789
        %v1791 = vrot.slane %v1783, %v1790
        %v1793 = vunpack.c.l.s4 1983009808
        %v1794 = vunpack.c.0.s8 %v1793
        %v1795 = vlaneseq
        %v1796 = vshrl.u32 %v1795, 7
        %v1797 = vsub.s32 %v1794, %v1796
        %v1798 = vrot.slane %v1784, %v1797
        %v1799 = vcombine.low %v1774, %v1778
        %v1800 = vcombine.high %v1774, %v1778
        %v1802 = vunpack.c.l.s4 1983009808
        %v1803 = vunpack.c.0.s8 %v1802
        %v1804 = vlaneseq
        %v1805 = vshrl.u32 %v1804, 7
        %v1806 = vsub.s32 %v1803, %v1805
        %v1807 = vrot.slane %v1799, %v1806
        %v1809 = vunpack.c.l.s4 1983009808
        %v1810 = vunpack.c.0.s8 %v1809
        %v1811 = vlaneseq
        %v1812 = vshrl.u32 %v1811, 7
        %v1813 = vsub.s32 %v1810, %v1812
        %v1814 = vrot.slane %v1800, %v1813
        %v1815 = vcombine.low %v1791, %v1807
        %v1816 = vcombine.high %v1791, %v1807
        %v1818 = vunpack.c.l.s4 1934713408
        %v1819 = vunpack.c.0.s8 %v1818
        %v1820 = vlaneseq
        %v1821 = vshrl.u32 %v1820, 7
        %v1822 = vsub.s32 %v1819, %v1821
        %v1823 = vrot.slane %v1815, %v1822
        %v1825 = vunpack.c.l.s4 1934713408
        %v1826 = vunpack.c.0.s8 %v1825
        %v1827 = vlaneseq
        %v1828 = vshrl.u32 %v1827, 7
        %v1829 = vsub.s32 %v1826, %v1828
        %v1830 = vrot.slane %v1816, %v1829
        %v1831 = vcombine.low %v1798, %v1814
        %v1832 = vcombine.high %v1798, %v1814
        %v1834 = vunpack.c.l.s4 1934713408
        %v1835 = vunpack.c.0.s8 %v1834
        %v1836 = vlaneseq
        %v1837 = vshrl.u32 %v1836, 7
        %v1838 = vsub.s32 %v1835, %v1837
        %v1839 = vrot.slane %v1831, %v1838
        %v1841 = vunpack.c.l.s4 1934713408
        %v1842 = vunpack.c.0.s8 %v1841
        %v1843 = vlaneseq
        %v1844 = vshrl.u32 %v1843, 7
        %v1845 = vsub.s32 %v1842, %v1844
        %v1846 = vrot.slane %v1832, %v1845
        %v1847 = vcombine.high %v1823, 0.0
        %v1848 = vcombine.high %v1830, 0.0
        %v1849 = vcombine.high %v1839, 0.0
        %v1850 = vcombine.high %v1846, 0.0
        %v1851 = vcombine.low %v1773, %v1777
        %v1853 = vunpack.c.l.s4 1983009808
        %v1854 = vunpack.c.0.s8 %v1853
        %v1855 = vlaneseq
        %v1856 = vshrl.u32 %v1855, 7
        %v1857 = vsub.s32 %v1854, %v1856
        %v1858 = vrot.slane %v1851, %v1857
        %v1859 = vcombine.low %v1775, %v1779
        %v1861 = vunpack.c.l.s4 1983009808
        %v1862 = vunpack.c.0.s8 %v1861
        %v1863 = vlaneseq
        %v1864 = vshrl.u32 %v1863, 7
        %v1865 = vsub.s32 %v1862, %v1864
        %v1866 = vrot.slane %v1859, %v1865
        %v1867 = vcombine.low %v1858, %v1866
        %v1869 = vunpack.c.l.s4 1934713408
        %v1870 = vunpack.c.0.s8 %v1869
        %v1871 = vlaneseq
        %v1872 = vshrl.u32 %v1871, 7
        %v1873 = vsub.s32 %v1870, %v1872
        %v1874 = vrot.slane %v1867, %v1873
        %v1875 = vcombine.high %v1874, 0.0
        %1877 = vrot.lane.b32.xlu0 %v1847, 18
        %v1878 = vpop.permute.xlu0 %1877
        %1881 = vrot.lane.b32.xlu0 %v1830, 36
        %v1882 = vpop.permute.xlu0 %1881
        %1885 = vrot.lane.b32.xlu0 %v1848, 54
        %v1886 = vpop.permute.xlu0 %1885
        %1889 = vrot.lane.b32.xlu0 %v1839, 72
        %v1890 = vpop.permute.xlu0 %1889
        %1893 = vrot.lane.b32.xlu0 %v1849, 90
        %v1894 = vpop.permute.xlu0 %1893
        %1897 = vrot.lane.b32.xlu0 %v1846, 108
        %v1898 = vpop.permute.xlu0 %1897
        %1901 = vrot.lane.b32.xlu0 %v1850, 126
        %v1902 = vpop.permute.xlu0 %1901
        %1905 = vrot.lane.b32.xlu0 %v1874, 16
        %v1906 = vpop.permute.xlu0 %1905
        %1909 = vrot.lane.b32.xlu0 %v1875, 34
        %v1910 = vpop.permute.xlu0 %1909
        %v1912 = vsel %vm874, %v1823, %v1878
        %v1913 = vsel %vm876, %v1912, %v1882
        %v1914 = vsel %vm878, %v1913, %v1886
        %v1915 = vsel %vm880, %v1914, %v1890
        %v1916 = vsel %vm882, %v1915, %v1894
        %v1917 = vsel %vm884, %v1916, %v1898
        %v1918 = vsel %vm743, %v1917, %v1902
        %v1919 = vsel %vm887, %v1902, %v1906
        %v1920 = vsel %vm889, %v1919, %v1910
        %1923 = vrot.lane.b32.xlu0 %v1918, 37
        %v1924 = vpop.permute.xlu0 %1923
        %1925 = vrot.lane.b32.xlu0 %v1920, 37
        %v1926 = vpop.permute.xlu0 %1925
        %v1927 = vsel %vm897, %v1924, %v1926
        %1930 = vst.msk [vmem:[%s1780] sm:$0xf] %vm901, %v1924
        %1931 = vst.msk [vmem:[%s1780 + $0x8] sm:$0xf] %vm903, %v1927
        %s1932 = scalar_lea.vmem %s588, 64 [#allocation5]
        %v1933 = vld [vmem:[%s1932] sm:$0xff]
        %v1934 = vld [vmem:[%s1932 + $0x8] sm:$0x3]
        %v1935 = vld [vmem:[%s1932 + $0x50] sm:$0xff]
        %v1936 = vld [vmem:[%s1932 + $0x58] sm:$0x3]
        %v1937 = vld [vmem:[%s1932 + $0xa0] sm:$0xff]
        %v1938 = vld [vmem:[%s1932 + $0xa8] sm:$0x3]
        %v1939 = vld [vmem:[%s1932 + $0xf0] sm:$0xff]
        %v1940 = vld [vmem:[%s1932 + $0xf8] sm:$0x3]
        %1949 = vrot.lane.b32.xlu0 %v1933, 113
        %v1950 = vpop.permute.xlu0 %1949
        %1951 = vrot.lane.b32.xlu0 %v1934, 113
        %v1952 = vpop.permute.xlu0 %1951
        %1953 = vrot.lane.b32.xlu0 %v1935, 113
        %v1954 = vpop.permute.xlu0 %1953
        %1955 = vrot.lane.b32.xlu0 %v1936, 113
        %v1956 = vpop.permute.xlu0 %1955
        %1957 = vrot.lane.b32.xlu0 %v1937, 113
        %v1958 = vpop.permute.xlu0 %1957
        %1959 = vrot.lane.b32.xlu0 %v1938, 113
        %v1960 = vpop.permute.xlu0 %1959
        %1961 = vrot.lane.b32.xlu0 %v1939, 113
        %v1962 = vpop.permute.xlu0 %1961
        %1963 = vrot.lane.b32.xlu0 %v1940, 113
        %v1964 = vpop.permute.xlu0 %1963
        %1973 = vrot.lane.b32.xlu0 %v1933, 1
        %v1974 = vpop.permute.xlu0 %1973
        %1975 = vrot.lane.b32.xlu0 %v1934, 1
        %v1976 = vpop.permute.xlu0 %1975
        %1977 = vrot.lane.b32.xlu0 %v1935, 1
        %v1978 = vpop.permute.xlu0 %1977
        %1979 = vrot.lane.b32.xlu0 %v1936, 1
        %v1980 = vpop.permute.xlu0 %1979
        %1981 = vrot.lane.b32.xlu0 %v1937, 1
        %v1982 = vpop.permute.xlu0 %1981
        %1983 = vrot.lane.b32.xlu0 %v1938, 1
        %v1984 = vpop.permute.xlu0 %1983
        %1985 = vrot.lane.b32.xlu0 %v1939, 1
        %v1986 = vpop.permute.xlu0 %1985
        %1987 = vrot.lane.b32.xlu0 %v1940, 1
        %v1988 = vpop.permute.xlu0 %1987
        %1997 = vrot.lane.b32.xlu0 %v1933, 17
        %v1998 = vpop.permute.xlu0 %1997
        %1999 = vrot.lane.b32.xlu0 %v1934, 17
        %v2000 = vpop.permute.xlu0 %1999
        %2001 = vrot.lane.b32.xlu0 %v1935, 17
        %v2002 = vpop.permute.xlu0 %2001
        %2003 = vrot.lane.b32.xlu0 %v1936, 17
        %v2004 = vpop.permute.xlu0 %2003
        %2005 = vrot.lane.b32.xlu0 %v1937, 17
        %v2006 = vpop.permute.xlu0 %2005
        %2007 = vrot.lane.b32.xlu0 %v1938, 17
        %v2008 = vpop.permute.xlu0 %2007
        %2009 = vrot.lane.b32.xlu0 %v1939, 17
        %v2010 = vpop.permute.xlu0 %2009
        %2011 = vrot.lane.b32.xlu0 %v1940, 17
        %v2012 = vpop.permute.xlu0 %2011
        %v2021 = vsel %vm724, %v1950, %v1974
        %v2022 = vsel %vm724, %v1952, %v1976
        %v2023 = vsel %vm724, %v1954, %v1978
        %v2024 = vsel %vm724, %v1956, %v1980
        %v2025 = vsel %vm724, %v1958, %v1982
        %v2026 = vsel %vm724, %v1960, %v1984
        %v2027 = vsel %vm724, %v1962, %v1986
        %v2028 = vsel %vm724, %v1964, %v1988
        %v2029 = vsel %vm733, %v2021, %v1998
        %v2030 = vsel %vm733, %v2022, %v2000
        %v2031 = vsel %vm733, %v2023, %v2002
        %v2032 = vsel %vm733, %v2024, %v2004
        %v2033 = vsel %vm733, %v2025, %v2006
        %v2034 = vsel %vm733, %v2026, %v2008
        %v2035 = vsel %vm733, %v2027, %v2010
        %v2036 = vsel %vm733, %v2028, %v2012
        %s2037 = scalar_lea.vmem [#allocation2], 80
        %2038 = vst [vmem:[%s2037] sm:$0xff] 0.0
        %2039 = vst.msk [vmem:[%s2037 + $0x8] sm:$0xff] %vm743, 0.0
        %v2040 = vcombine.low %v2029, %v2033
        %v2041 = vcombine.high %v2029, %v2033
        %v2043 = vunpack.c.l.s4 1983009808
        %v2044 = vunpack.c.0.s8 %v2043
        %v2045 = vlaneseq
        %v2046 = vshrl.u32 %v2045, 7
        %v2047 = vsub.s32 %v2044, %v2046
        %v2048 = vrot.slane %v2040, %v2047
        %v2050 = vunpack.c.l.s4 1983009808
        %v2051 = vunpack.c.0.s8 %v2050
        %v2052 = vlaneseq
        %v2053 = vshrl.u32 %v2052, 7
        %v2054 = vsub.s32 %v2051, %v2053
        %v2055 = vrot.slane %v2041, %v2054
        %v2056 = vcombine.low %v2031, %v2035
        %v2057 = vcombine.high %v2031, %v2035
        %v2059 = vunpack.c.l.s4 1983009808
        %v2060 = vunpack.c.0.s8 %v2059
        %v2061 = vlaneseq
        %v2062 = vshrl.u32 %v2061, 7
        %v2063 = vsub.s32 %v2060, %v2062
        %v2064 = vrot.slane %v2056, %v2063
        %v2066 = vunpack.c.l.s4 1983009808
        %v2067 = vunpack.c.0.s8 %v2066
        %v2068 = vlaneseq
        %v2069 = vshrl.u32 %v2068, 7
        %v2070 = vsub.s32 %v2067, %v2069
        %v2071 = vrot.slane %v2057, %v2070
        %v2072 = vcombine.low %v2048, %v2064
        %v2073 = vcombine.high %v2048, %v2064
        %v2075 = vunpack.c.l.s4 1934713408
        %v2076 = vunpack.c.0.s8 %v2075
        %v2077 = vlaneseq
        %v2078 = vshrl.u32 %v2077, 7
        %v2079 = vsub.s32 %v2076, %v2078
        %v2080 = vrot.slane %v2072, %v2079
        %v2082 = vunpack.c.l.s4 1934713408
        %v2083 = vunpack.c.0.s8 %v2082
        %v2084 = vlaneseq
        %v2085 = vshrl.u32 %v2084, 7
        %v2086 = vsub.s32 %v2083, %v2085
        %v2087 = vrot.slane %v2073, %v2086
        %v2088 = vcombine.low %v2055, %v2071
        %v2089 = vcombine.high %v2055, %v2071
        %v2091 = vunpack.c.l.s4 1934713408
        %v2092 = vunpack.c.0.s8 %v2091
        %v2093 = vlaneseq
        %v2094 = vshrl.u32 %v2093, 7
        %v2095 = vsub.s32 %v2092, %v2094
        %v2096 = vrot.slane %v2088, %v2095
        %v2098 = vunpack.c.l.s4 1934713408
        %v2099 = vunpack.c.0.s8 %v2098
        %v2100 = vlaneseq
        %v2101 = vshrl.u32 %v2100, 7
        %v2102 = vsub.s32 %v2099, %v2101
        %v2103 = vrot.slane %v2089, %v2102
        %v2104 = vcombine.high %v2080, 0.0
        %v2105 = vcombine.high %v2087, 0.0
        %v2106 = vcombine.high %v2096, 0.0
        %v2107 = vcombine.high %v2103, 0.0
        %v2108 = vcombine.low %v2030, %v2034
        %v2110 = vunpack.c.l.s4 1983009808
        %v2111 = vunpack.c.0.s8 %v2110
        %v2112 = vlaneseq
        %v2113 = vshrl.u32 %v2112, 7
        %v2114 = vsub.s32 %v2111, %v2113
        %v2115 = vrot.slane %v2108, %v2114
        %v2116 = vcombine.low %v2032, %v2036
        %v2118 = vunpack.c.l.s4 1983009808
        %v2119 = vunpack.c.0.s8 %v2118
        %v2120 = vlaneseq
        %v2121 = vshrl.u32 %v2120, 7
        %v2122 = vsub.s32 %v2119, %v2121
        %v2123 = vrot.slane %v2116, %v2122
        %v2124 = vcombine.low %v2115, %v2123
        %v2126 = vunpack.c.l.s4 1934713408
        %v2127 = vunpack.c.0.s8 %v2126
        %v2128 = vlaneseq
        %v2129 = vshrl.u32 %v2128, 7
        %v2130 = vsub.s32 %v2127, %v2129
        %v2131 = vrot.slane %v2124, %v2130
        %v2132 = vcombine.high %v2131, 0.0
        %2134 = vrot.lane.b32.xlu0 %v2104, 18
        %v2135 = vpop.permute.xlu0 %2134
        %2138 = vrot.lane.b32.xlu0 %v2087, 36
        %v2139 = vpop.permute.xlu0 %2138
        %2142 = vrot.lane.b32.xlu0 %v2105, 54
        %v2143 = vpop.permute.xlu0 %2142
        %2146 = vrot.lane.b32.xlu0 %v2096, 72
        %v2147 = vpop.permute.xlu0 %2146
        %2150 = vrot.lane.b32.xlu0 %v2106, 90
        %v2151 = vpop.permute.xlu0 %2150
        %2154 = vrot.lane.b32.xlu0 %v2103, 108
        %v2155 = vpop.permute.xlu0 %2154
        %2158 = vrot.lane.b32.xlu0 %v2107, 126
        %v2159 = vpop.permute.xlu0 %2158
        %2162 = vrot.lane.b32.xlu0 %v2131, 16
        %v2163 = vpop.permute.xlu0 %2162
        %2166 = vrot.lane.b32.xlu0 %v2132, 34
        %v2167 = vpop.permute.xlu0 %2166
        %v2169 = vsel %vm874, %v2080, %v2135
        %v2170 = vsel %vm876, %v2169, %v2139
        %v2171 = vsel %vm878, %v2170, %v2143
        %v2172 = vsel %vm880, %v2171, %v2147
        %v2173 = vsel %vm882, %v2172, %v2151
        %v2174 = vsel %vm884, %v2173, %v2155
        %v2175 = vsel %vm743, %v2174, %v2159
        %v2176 = vsel %vm887, %v2159, %v2163
        %v2177 = vsel %vm889, %v2176, %v2167
        %2180 = vrot.lane.b32.xlu0 %v2175, 37
        %v2181 = vpop.permute.xlu0 %2180
        %2182 = vrot.lane.b32.xlu0 %v2177, 37
        %v2183 = vpop.permute.xlu0 %2182
        %v2184 = vsel %vm897, %v2181, %v2183
        %2187 = vst.msk [vmem:[%s2037] sm:$0xf] %vm901, %v2181
        %2188 = vst.msk [vmem:[%s2037 + $0x8] sm:$0xf] %vm903, %v2184
        %v2189 = vld [vmem:[%s595] sm:$0xff]
        %v2190 = vld [vmem:[%s595 + $0x8] sm:$0x3]
        %v2191 = vld [vmem:[%s595 + $0x10] sm:$0xff]
        %v2192 = vld [vmem:[%s595 + $0x18] sm:$0x3]
        %v2193 = vld [vmem:[%s595 + $0x20] sm:$0xff]
        %v2194 = vld [vmem:[%s595 + $0x28] sm:$0x3]
        %v2195 = vld [vmem:[%s595 + $0x30] sm:$0xff]
        %v2196 = vld [vmem:[%s595 + $0x38] sm:$0x3]
        %2205 = vrot.lane.b32.xlu0 %v2189, 113
        %v2206 = vpop.permute.xlu0 %2205
        %2207 = vrot.lane.b32.xlu0 %v2190, 113
        %v2208 = vpop.permute.xlu0 %2207
        %2209 = vrot.lane.b32.xlu0 %v2191, 113
        %v2210 = vpop.permute.xlu0 %2209
        %2211 = vrot.lane.b32.xlu0 %v2192, 113
        %v2212 = vpop.permute.xlu0 %2211
        %2213 = vrot.lane.b32.xlu0 %v2193, 113
        %v2214 = vpop.permute.xlu0 %2213
        %2215 = vrot.lane.b32.xlu0 %v2194, 113
        %v2216 = vpop.permute.xlu0 %2215
        %2217 = vrot.lane.b32.xlu0 %v2195, 113
        %v2218 = vpop.permute.xlu0 %2217
        %2219 = vrot.lane.b32.xlu0 %v2196, 113
        %v2220 = vpop.permute.xlu0 %2219
        %2229 = vrot.lane.b32.xlu0 %v2189, 1
        %v2230 = vpop.permute.xlu0 %2229
        %2231 = vrot.lane.b32.xlu0 %v2190, 1
        %v2232 = vpop.permute.xlu0 %2231
        %2233 = vrot.lane.b32.xlu0 %v2191, 1
        %v2234 = vpop.permute.xlu0 %2233
        %2235 = vrot.lane.b32.xlu0 %v2192, 1
        %v2236 = vpop.permute.xlu0 %2235
        %2237 = vrot.lane.b32.xlu0 %v2193, 1
        %v2238 = vpop.permute.xlu0 %2237
        %2239 = vrot.lane.b32.xlu0 %v2194, 1
        %v2240 = vpop.permute.xlu0 %2239
        %2241 = vrot.lane.b32.xlu0 %v2195, 1
        %v2242 = vpop.permute.xlu0 %2241
        %2243 = vrot.lane.b32.xlu0 %v2196, 1
        %v2244 = vpop.permute.xlu0 %2243
        %2253 = vrot.lane.b32.xlu0 %v2189, 17
        %v2254 = vpop.permute.xlu0 %2253
        %2255 = vrot.lane.b32.xlu0 %v2190, 17
        %v2256 = vpop.permute.xlu0 %2255
        %2257 = vrot.lane.b32.xlu0 %v2191, 17
        %v2258 = vpop.permute.xlu0 %2257
        %2259 = vrot.lane.b32.xlu0 %v2192, 17
        %v2260 = vpop.permute.xlu0 %2259
        %2261 = vrot.lane.b32.xlu0 %v2193, 17
        %v2262 = vpop.permute.xlu0 %2261
        %2263 = vrot.lane.b32.xlu0 %v2194, 17
        %v2264 = vpop.permute.xlu0 %2263
        %2265 = vrot.lane.b32.xlu0 %v2195, 17
        %v2266 = vpop.permute.xlu0 %2265
        %2267 = vrot.lane.b32.xlu0 %v2196, 17
        %v2268 = vpop.permute.xlu0 %2267
        %v2277 = vsel %vm724, %v2206, %v2230
        %v2278 = vsel %vm724, %v2208, %v2232
        %v2279 = vsel %vm724, %v2210, %v2234
        %v2280 = vsel %vm724, %v2212, %v2236
        %v2281 = vsel %vm724, %v2214, %v2238
        %v2282 = vsel %vm724, %v2216, %v2240
        %v2283 = vsel %vm724, %v2218, %v2242
        %v2284 = vsel %vm724, %v2220, %v2244
        %v2285 = vsel %vm733, %v2277, %v2254
        %v2286 = vsel %vm733, %v2278, %v2256
        %v2287 = vsel %vm733, %v2279, %v2258
        %v2288 = vsel %vm733, %v2280, %v2260
        %v2289 = vsel %vm733, %v2281, %v2262
        %v2290 = vsel %vm733, %v2282, %v2264
        %v2291 = vsel %vm733, %v2283, %v2266
        %v2292 = vsel %vm733, %v2284, %v2268
        %s2293 = scalar_lea.vmem [#allocation2], 96
        %2294 = vst [vmem:[%s2293] sm:$0xff] 0.0
        %2295 = vst.msk [vmem:[%s2293 + $0x8] sm:$0xff] %vm743, 0.0
        %v2296 = vcombine.low %v2285, %v2289
        %v2297 = vcombine.high %v2285, %v2289
        %v2299 = vunpack.c.l.s4 1983009808
        %v2300 = vunpack.c.0.s8 %v2299
        %v2301 = vlaneseq
        %v2302 = vshrl.u32 %v2301, 7
        %v2303 = vsub.s32 %v2300, %v2302
        %v2304 = vrot.slane %v2296, %v2303
        %v2306 = vunpack.c.l.s4 1983009808
        %v2307 = vunpack.c.0.s8 %v2306
        %v2308 = vlaneseq
        %v2309 = vshrl.u32 %v2308, 7
        %v2310 = vsub.s32 %v2307, %v2309
        %v2311 = vrot.slane %v2297, %v2310
        %v2312 = vcombine.low %v2287, %v2291
        %v2313 = vcombine.high %v2287, %v2291
        %v2315 = vunpack.c.l.s4 1983009808
        %v2316 = vunpack.c.0.s8 %v2315
        %v2317 = vlaneseq
        %v2318 = vshrl.u32 %v2317, 7
        %v2319 = vsub.s32 %v2316, %v2318
        %v2320 = vrot.slane %v2312, %v2319
        %v2322 = vunpack.c.l.s4 1983009808
        %v2323 = vunpack.c.0.s8 %v2322
        %v2324 = vlaneseq
        %v2325 = vshrl.u32 %v2324, 7
        %v2326 = vsub.s32 %v2323, %v2325
        %v2327 = vrot.slane %v2313, %v2326
        %v2328 = vcombine.low %v2304, %v2320
        %v2329 = vcombine.high %v2304, %v2320
        %v2331 = vunpack.c.l.s4 1934713408
        %v2332 = vunpack.c.0.s8 %v2331
        %v2333 = vlaneseq
        %v2334 = vshrl.u32 %v2333, 7
        %v2335 = vsub.s32 %v2332, %v2334
        %v2336 = vrot.slane %v2328, %v2335
        %v2338 = vunpack.c.l.s4 1934713408
        %v2339 = vunpack.c.0.s8 %v2338
        %v2340 = vlaneseq
        %v2341 = vshrl.u32 %v2340, 7
        %v2342 = vsub.s32 %v2339, %v2341
        %v2343 = vrot.slane %v2329, %v2342
        %v2344 = vcombine.low %v2311, %v2327
        %v2345 = vcombine.high %v2311, %v2327
        %v2347 = vunpack.c.l.s4 1934713408
        %v2348 = vunpack.c.0.s8 %v2347
        %v2349 = vlaneseq
        %v2350 = vshrl.u32 %v2349, 7
        %v2351 = vsub.s32 %v2348, %v2350
        %v2352 = vrot.slane %v2344, %v2351
        %v2354 = vunpack.c.l.s4 1934713408
        %v2355 = vunpack.c.0.s8 %v2354
        %v2356 = vlaneseq
        %v2357 = vshrl.u32 %v2356, 7
        %v2358 = vsub.s32 %v2355, %v2357
        %v2359 = vrot.slane %v2345, %v2358
        %v2360 = vcombine.high %v2336, 0.0
        %v2361 = vcombine.high %v2343, 0.0
        %v2362 = vcombine.high %v2352, 0.0
        %v2363 = vcombine.high %v2359, 0.0
        %v2364 = vcombine.low %v2286, %v2290
        %v2366 = vunpack.c.l.s4 1983009808
        %v2367 = vunpack.c.0.s8 %v2366
        %v2368 = vlaneseq
        %v2369 = vshrl.u32 %v2368, 7
        %v2370 = vsub.s32 %v2367, %v2369
        %v2371 = vrot.slane %v2364, %v2370
        %v2372 = vcombine.low %v2288, %v2292
        %v2374 = vunpack.c.l.s4 1983009808
        %v2375 = vunpack.c.0.s8 %v2374
        %v2376 = vlaneseq
        %v2377 = vshrl.u32 %v2376, 7
        %v2378 = vsub.s32 %v2375, %v2377
        %v2379 = vrot.slane %v2372, %v2378
        %v2380 = vcombine.low %v2371, %v2379
        %v2382 = vunpack.c.l.s4 1934713408
        %v2383 = vunpack.c.0.s8 %v2382
        %v2384 = vlaneseq
        %v2385 = vshrl.u32 %v2384, 7
        %v2386 = vsub.s32 %v2383, %v2385
        %v2387 = vrot.slane %v2380, %v2386
        %v2388 = vcombine.high %v2387, 0.0
        %2390 = vrot.lane.b32.xlu0 %v2360, 18
        %v2391 = vpop.permute.xlu0 %2390
        %2394 = vrot.lane.b32.xlu0 %v2343, 36
        %v2395 = vpop.permute.xlu0 %2394
        %2398 = vrot.lane.b32.xlu0 %v2361, 54
        %v2399 = vpop.permute.xlu0 %2398
        %2402 = vrot.lane.b32.xlu0 %v2352, 72
        %v2403 = vpop.permute.xlu0 %2402
        %2406 = vrot.lane.b32.xlu0 %v2362, 90
        %v2407 = vpop.permute.xlu0 %2406
        %2410 = vrot.lane.b32.xlu0 %v2359, 108
        %v2411 = vpop.permute.xlu0 %2410
        %2414 = vrot.lane.b32.xlu0 %v2363, 126
        %v2415 = vpop.permute.xlu0 %2414
        %2418 = vrot.lane.b32.xlu0 %v2387, 16
        %v2419 = vpop.permute.xlu0 %2418
        %2422 = vrot.lane.b32.xlu0 %v2388, 34
        %v2423 = vpop.permute.xlu0 %2422
        %v2425 = vsel %vm874, %v2336, %v2391
        %v2426 = vsel %vm876, %v2425, %v2395
        %v2427 = vsel %vm878, %v2426, %v2399
        %v2428 = vsel %vm880, %v2427, %v2403
        %v2429 = vsel %vm882, %v2428, %v2407
        %v2430 = vsel %vm884, %v2429, %v2411
        %v2431 = vsel %vm743, %v2430, %v2415
        %v2432 = vsel %vm887, %v2415, %v2419
        %v2433 = vsel %vm889, %v2432, %v2423
        %2436 = vrot.lane.b32.xlu0 %v2431, 37
        %v2437 = vpop.permute.xlu0 %2436
        %2438 = vrot.lane.b32.xlu0 %v2433, 37
        %v2439 = vpop.permute.xlu0 %2438
        %v2440 = vsel %vm897, %v2437, %v2439
        %2443 = vst.msk [vmem:[%s2293] sm:$0xf] %vm901, %v2437
        %2444 = vst.msk [vmem:[%s2293 + $0x8] sm:$0xf] %vm903, %v2440
        %p2445 = scmp.eq.s32.totalorder %s21, 0
        // Predicated region
        $region155: #{tpu_custom_call.1} parent=141 // pred_check
          %p2446 = pneg %p2445
        $region156: #{tpu_custom_call.1} parent=141 // pred_check_branch
          %2448 = sbr.rel (%p2446) target = $region158
        $region157: #{tpu_custom_call.1} parent=141 // pred_region
          %2449 = vst.msk [vmem:[#allocation2] sm:$0xf] %vm901, 0.0
          %2450 = vst.msk [vmem:[#allocation2 + $0x8] sm:$0xf] %vm903, 0.0
        $region158: #{tpu_custom_call.1} parent=141 // pred_fallthru
          _
        %p2451 = scmp.eq.s32.totalorder %s21, 1
        // Predicated region
        $region159: #{tpu_custom_call.1} parent=141 // pred_check
          %p2452 = pneg %p2451
        $region160: #{tpu_custom_call.1} parent=141 // pred_check_branch
          %2454 = sbr.rel (%p2452) target = $region162
        $region161: #{tpu_custom_call.1} parent=141 // pred_region
          %2455 = vst.msk [vmem:[%s2293] sm:$0xf] %vm901, 0.0
          %2456 = vst.msk [vmem:[%s2293 + $0x8] sm:$0xf] %vm903, 0.0
        $region162: #{tpu_custom_call.1} parent=141 // pred_fallthru
          _
        %v2457 = vld [vmem:[#allocation2] sm:$0xff]
        %v2458 = vld [vmem:[#allocation2 + $0x8] sm:$0xff]
        %2459 = vst [vmem:[#allocation3] sm:$0xff] %v2457
        %vm2460 = vcmask 719872
        %2461 = vst.msk [vmem:[#allocation3 + $0x8] sm:$0xff] %vm2460, %v2458
        %v2462 = vld [vmem:[#allocation2] sm:$0xff]
        %v2463 = vld [vmem:[#allocation2 + $0x8] sm:$0xff]
        %2466 = vrot.lane.b32.xlu0 %v2462, 127
        %v2467 = vpop.permute.xlu0 %2466
        %2468 = vrot.lane.b32.xlu0 %v2463, 127
        %v2469 = vpop.permute.xlu0 %2468
        %vm2470 = vcmask 1039360
        %v2471 = vsel %vm2470, %v2467, %v2469
        %2474 = vst [vmem:[#allocation3 + $0x70] sm:$0xff] %v2471
        %2475 = vst.msk [vmem:[#allocation3 + $0x78] sm:$0xff] %vm2460, %v2469
        %v2476 = vld [vmem:[#allocation2] sm:$0xff]
        %v2477 = vld [vmem:[#allocation2 + $0x8] sm:$0xff]
        %2480 = vrot.lane.b32.xlu0 %v2476, 126
        %v2481 = vpop.permute.xlu0 %2480
        %2482 = vrot.lane.b32.xlu0 %v2477, 126
        %v2483 = vpop.permute.xlu0 %2482
        %v2484 = vsel %vm743, %v2481, %v2483
        %2487 = vst [vmem:[#allocation3 + $0xe0] sm:$0xff] %v2484
        %2488 = vst.msk [vmem:[#allocation3 + $0xe8] sm:$0xff] %vm2460, %v2483
        %v2489 = vld [vmem:[#allocation2] sm:$0xff]
        %v2490 = vld [vmem:[#allocation2 + $0x8] sm:$0xff]
        %2493 = vrot.lane.b32.xlu0 %v2489, 110
        %v2494 = vpop.permute.xlu0 %2493
        %2495 = vrot.lane.b32.xlu0 %v2490, 110
        %v2496 = vpop.permute.xlu0 %2495
        %vm2497 = vcmask 900096
        %v2498 = vsel %vm2497, %v2494, %v2496
        %2501 = vst [vmem:[#allocation3 + $0x150] sm:$0xff] %v2498
        %2502 = vst.msk [vmem:[#allocation3 + $0x158] sm:$0xff] %vm2460, %v2496
        %v2503 = vld [vmem:[#allocation2] sm:$0xff]
        %v2504 = vld [vmem:[#allocation2 + $0x8] sm:$0xff]
        %2507 = vrot.lane.b32.xlu0 %v2503, 109
        %v2508 = vpop.permute.xlu0 %2507
        %2509 = vrot.lane.b32.xlu0 %v2504, 109
        %v2510 = vpop.permute.xlu0 %2509
        %vm2511 = vcmask 891904
        %v2512 = vsel %vm2511, %v2508, %v2510
        %2515 = vst [vmem:[#allocation3 + $0x1c0] sm:$0xff] %v2512
        %2516 = vst.msk [vmem:[#allocation3 + $0x1c8] sm:$0xff] %vm2460, %v2510
        %v2517 = vld [vmem:[#allocation2] sm:$0xff]
        %v2518 = vld [vmem:[#allocation2 + $0x8] sm:$0xff]
        %2521 = vrot.lane.b32.xlu0 %v2517, 108
        %v2522 = vpop.permute.xlu0 %2521
        %2523 = vrot.lane.b32.xlu0 %v2518, 108
        %v2524 = vpop.permute.xlu0 %2523
        %v2525 = vsel %vm884, %v2522, %v2524
        %2528 = vst [vmem:[#allocation3 + $0x230] sm:$0xff] %v2525
        %2529 = vst.msk [vmem:[#allocation3 + $0x238] sm:$0xff] %vm2460, %v2524
        %v2530 = vld [vmem:[#allocation2] sm:$0xff]
        %v2531 = vld [vmem:[#allocation2 + $0x8] sm:$0xff]
        %2534 = vrot.lane.b32.xlu0 %v2530, 92
        %v2535 = vpop.permute.xlu0 %2534
        %2536 = vrot.lane.b32.xlu0 %v2531, 92
        %v2537 = vpop.permute.xlu0 %2536
        %vm2538 = vcmask 752640
        %v2539 = vsel %vm2538, %v2535, %v2537
        %2542 = vst [vmem:[#allocation3 + $0x2a0] sm:$0xff] %v2539
        %2543 = vst.msk [vmem:[#allocation3 + $0x2a8] sm:$0xff] %vm2460, %v2537
        %v2544 = vld [vmem:[#allocation2] sm:$0xff]
        %v2545 = vld [vmem:[#allocation2 + $0x8] sm:$0xff]
        %2548 = vrot.lane.b32.xlu0 %v2544, 91
        %v2549 = vpop.permute.xlu0 %2548
        %2550 = vrot.lane.b32.xlu0 %v2545, 91
        %v2551 = vpop.permute.xlu0 %2550
        %vm2552 = vcmask 744448
        %v2553 = vsel %vm2552, %v2549, %v2551
        %2556 = vst [vmem:[#allocation3 + $0x310] sm:$0xff] %v2553
        %2557 = vst.msk [vmem:[#allocation3 + $0x318] sm:$0xff] %vm2460, %v2551
        %v2558 = vld [vmem:[#allocation2] sm:$0xff]
        %v2559 = vld [vmem:[#allocation2 + $0x8] sm:$0xff]
        %2562 = vrot.lane.b32.xlu0 %v2558, 90
        %v2563 = vpop.permute.xlu0 %2562
        %2564 = vrot.lane.b32.xlu0 %v2559, 90
        %v2565 = vpop.permute.xlu0 %2564
        %v2566 = vsel %vm882, %v2563, %v2565
        %2569 = vst [vmem:[#allocation3 + $0x380] sm:$0xff] %v2566
        %2570 = vst.msk [vmem:[#allocation3 + $0x388] sm:$0xff] %vm2460, %v2565
        %v2571 = vld [vmem:[%s1009] sm:$0xff]
        %v2572 = vld [vmem:[%s1009 + $0x8] sm:$0xff]
        %2573 = vst [vmem:[#allocation3 + $0x10] sm:$0xff] %v2571
        %2574 = vst.msk [vmem:[#allocation3 + $0x18] sm:$0xff] %vm2460, %v2572
        %v2575 = vld [vmem:[%s1009] sm:$0xff]
        %v2576 = vld [vmem:[%s1009 + $0x8] sm:$0xff]
        %2579 = vrot.lane.b32.xlu0 %v2575, 127
        %v2580 = vpop.permute.xlu0 %2579
        %2581 = vrot.lane.b32.xlu0 %v2576, 127
        %v2582 = vpop.permute.xlu0 %2581
        %v2583 = vsel %vm2470, %v2580, %v2582
        %2586 = vst [vmem:[#allocation3 + $0x80] sm:$0xff] %v2583
        %2587 = vst.msk [vmem:[#allocation3 + $0x88] sm:$0xff] %vm2460, %v2582
        %v2588 = vld [vmem:[%s1009] sm:$0xff]
        %v2589 = vld [vmem:[%s1009 + $0x8] sm:$0xff]
        %2592 = vrot.lane.b32.xlu0 %v2588, 126
        %v2593 = vpop.permute.xlu0 %2592
        %2594 = vrot.lane.b32.xlu0 %v2589, 126
        %v2595 = vpop.permute.xlu0 %2594
        %v2596 = vsel %vm743, %v2593, %v2595
        %2599 = vst [vmem:[#allocation3 + $0xf0] sm:$0xff] %v2596
        %2600 = vst.msk [vmem:[#allocation3 + $0xf8] sm:$0xff] %vm2460, %v2595
        %v2601 = vld [vmem:[%s1009] sm:$0xff]
        %v2602 = vld [vmem:[%s1009 + $0x8] sm:$0xff]
        %2605 = vrot.lane.b32.xlu0 %v2601, 110
        %v2606 = vpop.permute.xlu0 %2605
        %2607 = vrot.lane.b32.xlu0 %v2602, 110
        %v2608 = vpop.permute.xlu0 %2607
        %v2609 = vsel %vm2497, %v2606, %v2608
        %2612 = vst [vmem:[#allocation3 + $0x160] sm:$0xff] %v2609
        %2613 = vst.msk [vmem:[#allocation3 + $0x168] sm:$0xff] %vm2460, %v2608
        %v2614 = vld [vmem:[%s1009] sm:$0xff]
        %v2615 = vld [vmem:[%s1009 + $0x8] sm:$0xff]
        %2618 = vrot.lane.b32.xlu0 %v2614, 109
        %v2619 = vpop.permute.xlu0 %2618
        %2620 = vrot.lane.b32.xlu0 %v2615, 109
        %v2621 = vpop.permute.xlu0 %2620
        %v2622 = vsel %vm2511, %v2619, %v2621
        %2625 = vst [vmem:[#allocation3 + $0x1d0] sm:$0xff] %v2622
        %2626 = vst.msk [vmem:[#allocation3 + $0x1d8] sm:$0xff] %vm2460, %v2621
        %v2627 = vld [vmem:[%s1009] sm:$0xff]
        %v2628 = vld [vmem:[%s1009 + $0x8] sm:$0xff]
        %2631 = vrot.lane.b32.xlu0 %v2627, 108
        %v2632 = vpop.permute.xlu0 %2631
        %2633 = vrot.lane.b32.xlu0 %v2628, 108
        %v2634 = vpop.permute.xlu0 %2633
        %v2635 = vsel %vm884, %v2632, %v2634
        %2638 = vst [vmem:[#allocation3 + $0x240] sm:$0xff] %v2635
        %2639 = vst.msk [vmem:[#allocation3 + $0x248] sm:$0xff] %vm2460, %v2634
        %v2640 = vld [vmem:[%s1009] sm:$0xff]
        %v2641 = vld [vmem:[%s1009 + $0x8] sm:$0xff]
        %2644 = vrot.lane.b32.xlu0 %v2640, 92
        %v2645 = vpop.permute.xlu0 %2644
        %2646 = vrot.lane.b32.xlu0 %v2641, 92
        %v2647 = vpop.permute.xlu0 %2646
        %v2648 = vsel %vm2538, %v2645, %v2647
        %2651 = vst [vmem:[#allocation3 + $0x2b0] sm:$0xff] %v2648
        %2652 = vst.msk [vmem:[#allocation3 + $0x2b8] sm:$0xff] %vm2460, %v2647
        %v2653 = vld [vmem:[%s1009] sm:$0xff]
        %v2654 = vld [vmem:[%s1009 + $0x8] sm:$0xff]
        %2657 = vrot.lane.b32.xlu0 %v2653, 91
        %v2658 = vpop.permute.xlu0 %2657
        %2659 = vrot.lane.b32.xlu0 %v2654, 91
        %v2660 = vpop.permute.xlu0 %2659
        %v2661 = vsel %vm2552, %v2658, %v2660
        %2664 = vst [vmem:[#allocation3 + $0x320] sm:$0xff] %v2661
        %2665 = vst.msk [vmem:[#allocation3 + $0x328] sm:$0xff] %vm2460, %v2660
        %v2666 = vld [vmem:[%s1009] sm:$0xff]
        %v2667 = vld [vmem:[%s1009 + $0x8] sm:$0xff]
        %2670 = vrot.lane.b32.xlu0 %v2666, 90
        %v2671 = vpop.permute.xlu0 %2670
        %2672 = vrot.lane.b32.xlu0 %v2667, 90
        %v2673 = vpop.permute.xlu0 %2672
        %v2674 = vsel %vm882, %v2671, %v2673
        %2677 = vst [vmem:[#allocation3 + $0x390] sm:$0xff] %v2674
        %2678 = vst.msk [vmem:[#allocation3 + $0x398] sm:$0xff] %vm2460, %v2673
        %v2679 = vld [vmem:[%s1266] sm:$0xff]
        %v2680 = vld [vmem:[%s1266 + $0x8] sm:$0xff]
        %2681 = vst [vmem:[#allocation3 + $0x20] sm:$0xff] %v2679
        %2682 = vst.msk [vmem:[#allocation3 + $0x28] sm:$0xff] %vm2460, %v2680
        %v2683 = vld [vmem:[%s1266] sm:$0xff]
        %v2684 = vld [vmem:[%s1266 + $0x8] sm:$0xff]
        %2687 = vrot.lane.b32.xlu0 %v2683, 127
        %v2688 = vpop.permute.xlu0 %2687
        %2689 = vrot.lane.b32.xlu0 %v2684, 127
        %v2690 = vpop.permute.xlu0 %2689
        %v2691 = vsel %vm2470, %v2688, %v2690
        %2694 = vst [vmem:[#allocation3 + $0x90] sm:$0xff] %v2691
        %2695 = vst.msk [vmem:[#allocation3 + $0x98] sm:$0xff] %vm2460, %v2690
        %v2696 = vld [vmem:[%s1266] sm:$0xff]
        %v2697 = vld [vmem:[%s1266 + $0x8] sm:$0xff]
        %2700 = vrot.lane.b32.xlu0 %v2696, 126
        %v2701 = vpop.permute.xlu0 %2700
        %2702 = vrot.lane.b32.xlu0 %v2697, 126
        %v2703 = vpop.permute.xlu0 %2702
        %v2704 = vsel %vm743, %v2701, %v2703
        %2707 = vst [vmem:[#allocation3 + $0x100] sm:$0xff] %v2704
        %2708 = vst.msk [vmem:[#allocation3 + $0x108] sm:$0xff] %vm2460, %v2703
        %v2709 = vld [vmem:[%s1266] sm:$0xff]
        %v2710 = vld [vmem:[%s1266 + $0x8] sm:$0xff]
        %2713 = vrot.lane.b32.xlu0 %v2709, 110
        %v2714 = vpop.permute.xlu0 %2713
        %2715 = vrot.lane.b32.xlu0 %v2710, 110
        %v2716 = vpop.permute.xlu0 %2715
        %v2717 = vsel %vm2497, %v2714, %v2716
        %2720 = vst [vmem:[#allocation3 + $0x170] sm:$0xff] %v2717
        %2721 = vst.msk [vmem:[#allocation3 + $0x178] sm:$0xff] %vm2460, %v2716
        %v2722 = vld [vmem:[%s1266] sm:$0xff]
        %v2723 = vld [vmem:[%s1266 + $0x8] sm:$0xff]
        %2726 = vrot.lane.b32.xlu0 %v2722, 109
        %v2727 = vpop.permute.xlu0 %2726
        %2728 = vrot.lane.b32.xlu0 %v2723, 109
        %v2729 = vpop.permute.xlu0 %2728
        %v2730 = vsel %vm2511, %v2727, %v2729
        %2733 = vst [vmem:[#allocation3 + $0x1e0] sm:$0xff] %v2730
        %2734 = vst.msk [vmem:[#allocation3 + $0x1e8] sm:$0xff] %vm2460, %v2729
        %v2735 = vld [vmem:[%s1266] sm:$0xff]
        %v2736 = vld [vmem:[%s1266 + $0x8] sm:$0xff]
        %2739 = vrot.lane.b32.xlu0 %v2735, 108
        %v2740 = vpop.permute.xlu0 %2739
        %2741 = vrot.lane.b32.xlu0 %v2736, 108
        %v2742 = vpop.permute.xlu0 %2741
        %v2743 = vsel %vm884, %v2740, %v2742
        %2746 = vst [vmem:[#allocation3 + $0x250] sm:$0xff] %v2743
        %2747 = vst.msk [vmem:[#allocation3 + $0x258] sm:$0xff] %vm2460, %v2742
        %v2748 = vld [vmem:[%s1266] sm:$0xff]
        %v2749 = vld [vmem:[%s1266 + $0x8] sm:$0xff]
        %2752 = vrot.lane.b32.xlu0 %v2748, 92
        %v2753 = vpop.permute.xlu0 %2752
        %2754 = vrot.lane.b32.xlu0 %v2749, 92
        %v2755 = vpop.permute.xlu0 %2754
        %v2756 = vsel %vm2538, %v2753, %v2755
        %2759 = vst [vmem:[#allocation3 + $0x2c0] sm:$0xff] %v2756
        %2760 = vst.msk [vmem:[#allocation3 + $0x2c8] sm:$0xff] %vm2460, %v2755
        %v2761 = vld [vmem:[%s1266] sm:$0xff]
        %v2762 = vld [vmem:[%s1266 + $0x8] sm:$0xff]
        %2765 = vrot.lane.b32.xlu0 %v2761, 91
        %v2766 = vpop.permute.xlu0 %2765
        %2767 = vrot.lane.b32.xlu0 %v2762, 91
        %v2768 = vpop.permute.xlu0 %2767
        %v2769 = vsel %vm2552, %v2766, %v2768
        %2772 = vst [vmem:[#allocation3 + $0x330] sm:$0xff] %v2769
        %2773 = vst.msk [vmem:[#allocation3 + $0x338] sm:$0xff] %vm2460, %v2768
        %v2774 = vld [vmem:[%s1266] sm:$0xff]
        %v2775 = vld [vmem:[%s1266 + $0x8] sm:$0xff]
        %2778 = vrot.lane.b32.xlu0 %v2774, 90
        %v2779 = vpop.permute.xlu0 %2778
        %2780 = vrot.lane.b32.xlu0 %v2775, 90
        %v2781 = vpop.permute.xlu0 %2780
        %v2782 = vsel %vm882, %v2779, %v2781
        %2785 = vst [vmem:[#allocation3 + $0x3a0] sm:$0xff] %v2782
        %2786 = vst.msk [vmem:[#allocation3 + $0x3a8] sm:$0xff] %vm2460, %v2781
        %v2787 = vld [vmem:[%s1523] sm:$0xff]
        %v2788 = vld [vmem:[%s1523 + $0x8] sm:$0xff]
        %2789 = vst [vmem:[#allocation3 + $0x30] sm:$0xff] %v2787
        %2790 = vst.msk [vmem:[#allocation3 + $0x38] sm:$0xff] %vm2460, %v2788
        %v2791 = vld [vmem:[%s1523] sm:$0xff]
        %v2792 = vld [vmem:[%s1523 + $0x8] sm:$0xff]
        %2795 = vrot.lane.b32.xlu0 %v2791, 127
        %v2796 = vpop.permute.xlu0 %2795
        %2797 = vrot.lane.b32.xlu0 %v2792, 127
        %v2798 = vpop.permute.xlu0 %2797
        %v2799 = vsel %vm2470, %v2796, %v2798
        %2802 = vst [vmem:[#allocation3 + $0xa0] sm:$0xff] %v2799
        %2803 = vst.msk [vmem:[#allocation3 + $0xa8] sm:$0xff] %vm2460, %v2798
        %v2804 = vld [vmem:[%s1523] sm:$0xff]
        %v2805 = vld [vmem:[%s1523 + $0x8] sm:$0xff]
        %2808 = vrot.lane.b32.xlu0 %v2804, 126
        %v2809 = vpop.permute.xlu0 %2808
        %2810 = vrot.lane.b32.xlu0 %v2805, 126
        %v2811 = vpop.permute.xlu0 %2810
        %v2812 = vsel %vm743, %v2809, %v2811
        %2815 = vst [vmem:[#allocation3 + $0x110] sm:$0xff] %v2812
        %2816 = vst.msk [vmem:[#allocation3 + $0x118] sm:$0xff] %vm2460, %v2811
        %v2817 = vld [vmem:[%s1523] sm:$0xff]
        %v2818 = vld [vmem:[%s1523 + $0x8] sm:$0xff]
        %2821 = vrot.lane.b32.xlu0 %v2817, 110
        %v2822 = vpop.permute.xlu0 %2821
        %2823 = vrot.lane.b32.xlu0 %v2818, 110
        %v2824 = vpop.permute.xlu0 %2823
        %v2825 = vsel %vm2497, %v2822, %v2824
        %2828 = vst [vmem:[#allocation3 + $0x180] sm:$0xff] %v2825
        %2829 = vst.msk [vmem:[#allocation3 + $0x188] sm:$0xff] %vm2460, %v2824
        %v2830 = vld [vmem:[%s1523] sm:$0xff]
        %v2831 = vld [vmem:[%s1523 + $0x8] sm:$0xff]
        %2834 = vrot.lane.b32.xlu0 %v2830, 109
        %v2835 = vpop.permute.xlu0 %2834
        %2836 = vrot.lane.b32.xlu0 %v2831, 109
        %v2837 = vpop.permute.xlu0 %2836
        %v2838 = vsel %vm2511, %v2835, %v2837
        %2841 = vst [vmem:[#allocation3 + $0x1f0] sm:$0xff] %v2838
        %2842 = vst.msk [vmem:[#allocation3 + $0x1f8] sm:$0xff] %vm2460, %v2837
        %v2843 = vld [vmem:[%s1523] sm:$0xff]
        %v2844 = vld [vmem:[%s1523 + $0x8] sm:$0xff]
        %2847 = vrot.lane.b32.xlu0 %v2843, 108
        %v2848 = vpop.permute.xlu0 %2847
        %2849 = vrot.lane.b32.xlu0 %v2844, 108
        %v2850 = vpop.permute.xlu0 %2849
        %v2851 = vsel %vm884, %v2848, %v2850
        %2854 = vst [vmem:[#allocation3 + $0x260] sm:$0xff] %v2851
        %2855 = vst.msk [vmem:[#allocation3 + $0x268] sm:$0xff] %vm2460, %v2850
        %v2856 = vld [vmem:[%s1523] sm:$0xff]
        %v2857 = vld [vmem:[%s1523 + $0x8] sm:$0xff]
        %2860 = vrot.lane.b32.xlu0 %v2856, 92
        %v2861 = vpop.permute.xlu0 %2860
        %2862 = vrot.lane.b32.xlu0 %v2857, 92
        %v2863 = vpop.permute.xlu0 %2862
        %v2864 = vsel %vm2538, %v2861, %v2863
        %2867 = vst [vmem:[#allocation3 + $0x2d0] sm:$0xff] %v2864
        %2868 = vst.msk [vmem:[#allocation3 + $0x2d8] sm:$0xff] %vm2460, %v2863
        %v2869 = vld [vmem:[%s1523] sm:$0xff]
        %v2870 = vld [vmem:[%s1523 + $0x8] sm:$0xff]
        %2873 = vrot.lane.b32.xlu0 %v2869, 91
        %v2874 = vpop.permute.xlu0 %2873
        %2875 = vrot.lane.b32.xlu0 %v2870, 91
        %v2876 = vpop.permute.xlu0 %2875
        %v2877 = vsel %vm2552, %v2874, %v2876
        %2880 = vst [vmem:[#allocation3 + $0x340] sm:$0xff] %v2877
        %2881 = vst.msk [vmem:[#allocation3 + $0x348] sm:$0xff] %vm2460, %v2876
        %v2882 = vld [vmem:[%s1523] sm:$0xff]
        %v2883 = vld [vmem:[%s1523 + $0x8] sm:$0xff]
        %2886 = vrot.lane.b32.xlu0 %v2882, 90
        %v2887 = vpop.permute.xlu0 %2886
        %2888 = vrot.lane.b32.xlu0 %v2883, 90
        %v2889 = vpop.permute.xlu0 %2888
        %v2890 = vsel %vm882, %v2887, %v2889
        %2893 = vst [vmem:[#allocation3 + $0x3b0] sm:$0xff] %v2890
        %2894 = vst.msk [vmem:[#allocation3 + $0x3b8] sm:$0xff] %vm2460, %v2889
        %v2895 = vld [vmem:[%s1780] sm:$0xff]
        %v2896 = vld [vmem:[%s1780 + $0x8] sm:$0xff]
        %2897 = vst [vmem:[#allocation3 + $0x40] sm:$0xff] %v2895
        %2898 = vst.msk [vmem:[#allocation3 + $0x48] sm:$0xff] %vm2460, %v2896
        %v2899 = vld [vmem:[%s1780] sm:$0xff]
        %v2900 = vld [vmem:[%s1780 + $0x8] sm:$0xff]
        %2903 = vrot.lane.b32.xlu0 %v2899, 127
        %v2904 = vpop.permute.xlu0 %2903
        %2905 = vrot.lane.b32.xlu0 %v2900, 127
        %v2906 = vpop.permute.xlu0 %2905
        %v2907 = vsel %vm2470, %v2904, %v2906
        %2910 = vst [vmem:[#allocation3 + $0xb0] sm:$0xff] %v2907
        %2911 = vst.msk [vmem:[#allocation3 + $0xb8] sm:$0xff] %vm2460, %v2906
        %v2912 = vld [vmem:[%s1780] sm:$0xff]
        %v2913 = vld [vmem:[%s1780 + $0x8] sm:$0xff]
        %2916 = vrot.lane.b32.xlu0 %v2912, 126
        %v2917 = vpop.permute.xlu0 %2916
        %2918 = vrot.lane.b32.xlu0 %v2913, 126
        %v2919 = vpop.permute.xlu0 %2918
        %v2920 = vsel %vm743, %v2917, %v2919
        %2923 = vst [vmem:[#allocation3 + $0x120] sm:$0xff] %v2920
        %2924 = vst.msk [vmem:[#allocation3 + $0x128] sm:$0xff] %vm2460, %v2919
        %v2925 = vld [vmem:[%s1780] sm:$0xff]
        %v2926 = vld [vmem:[%s1780 + $0x8] sm:$0xff]
        %2929 = vrot.lane.b32.xlu0 %v2925, 110
        %v2930 = vpop.permute.xlu0 %2929
        %2931 = vrot.lane.b32.xlu0 %v2926, 110
        %v2932 = vpop.permute.xlu0 %2931
        %v2933 = vsel %vm2497, %v2930, %v2932
        %2936 = vst [vmem:[#allocation3 + $0x190] sm:$0xff] %v2933
        %2937 = vst.msk [vmem:[#allocation3 + $0x198] sm:$0xff] %vm2460, %v2932
        %v2938 = vld [vmem:[%s1780] sm:$0xff]
        %v2939 = vld [vmem:[%s1780 + $0x8] sm:$0xff]
        %2942 = vrot.lane.b32.xlu0 %v2938, 109
        %v2943 = vpop.permute.xlu0 %2942
        %2944 = vrot.lane.b32.xlu0 %v2939, 109
        %v2945 = vpop.permute.xlu0 %2944
        %v2946 = vsel %vm2511, %v2943, %v2945
        %2949 = vst [vmem:[#allocation3 + $0x200] sm:$0xff] %v2946
        %2950 = vst.msk [vmem:[#allocation3 + $0x208] sm:$0xff] %vm2460, %v2945
        %v2951 = vld [vmem:[%s1780] sm:$0xff]
        %v2952 = vld [vmem:[%s1780 + $0x8] sm:$0xff]
        %2955 = vrot.lane.b32.xlu0 %v2951, 108
        %v2956 = vpop.permute.xlu0 %2955
        %2957 = vrot.lane.b32.xlu0 %v2952, 108
        %v2958 = vpop.permute.xlu0 %2957
        %v2959 = vsel %vm884, %v2956, %v2958
        %2962 = vst [vmem:[#allocation3 + $0x270] sm:$0xff] %v2959
        %2963 = vst.msk [vmem:[#allocation3 + $0x278] sm:$0xff] %vm2460, %v2958
        %v2964 = vld [vmem:[%s1780] sm:$0xff]
        %v2965 = vld [vmem:[%s1780 + $0x8] sm:$0xff]
        %2968 = vrot.lane.b32.xlu0 %v2964, 92
        %v2969 = vpop.permute.xlu0 %2968
        %2970 = vrot.lane.b32.xlu0 %v2965, 92
        %v2971 = vpop.permute.xlu0 %2970
        %v2972 = vsel %vm2538, %v2969, %v2971
        %2975 = vst [vmem:[#allocation3 + $0x2e0] sm:$0xff] %v2972
        %2976 = vst.msk [vmem:[#allocation3 + $0x2e8] sm:$0xff] %vm2460, %v2971
        %v2977 = vld [vmem:[%s1780] sm:$0xff]
        %v2978 = vld [vmem:[%s1780 + $0x8] sm:$0xff]
        %2981 = vrot.lane.b32.xlu0 %v2977, 91
        %v2982 = vpop.permute.xlu0 %2981
        %2983 = vrot.lane.b32.xlu0 %v2978, 91
        %v2984 = vpop.permute.xlu0 %2983
        %v2985 = vsel %vm2552, %v2982, %v2984
        %2988 = vst [vmem:[#allocation3 + $0x350] sm:$0xff] %v2985
        %2989 = vst.msk [vmem:[#allocation3 + $0x358] sm:$0xff] %vm2460, %v2984
        %v2990 = vld [vmem:[%s1780] sm:$0xff]
        %v2991 = vld [vmem:[%s1780 + $0x8] sm:$0xff]
        %2994 = vrot.lane.b32.xlu0 %v2990, 90
        %v2995 = vpop.permute.xlu0 %2994
        %2996 = vrot.lane.b32.xlu0 %v2991, 90
        %v2997 = vpop.permute.xlu0 %2996
        %v2998 = vsel %vm882, %v2995, %v2997
        %3001 = vst [vmem:[#allocation3 + $0x3c0] sm:$0xff] %v2998
        %3002 = vst.msk [vmem:[#allocation3 + $0x3c8] sm:$0xff] %vm2460, %v2997
        %v3003 = vld [vmem:[%s2037] sm:$0xff]
        %v3004 = vld [vmem:[%s2037 + $0x8] sm:$0xff]
        %3005 = vst [vmem:[#allocation3 + $0x50] sm:$0xff] %v3003
        %3006 = vst.msk [vmem:[#allocation3 + $0x58] sm:$0xff] %vm2460, %v3004
        %v3007 = vld [vmem:[%s2037] sm:$0xff]
        %v3008 = vld [vmem:[%s2037 + $0x8] sm:$0xff]
        %3011 = vrot.lane.b32.xlu0 %v3007, 127
        %v3012 = vpop.permute.xlu0 %3011
        %3013 = vrot.lane.b32.xlu0 %v3008, 127
        %v3014 = vpop.permute.xlu0 %3013
        %v3015 = vsel %vm2470, %v3012, %v3014
        %3018 = vst [vmem:[#allocation3 + $0xc0] sm:$0xff] %v3015
        %3019 = vst.msk [vmem:[#allocation3 + $0xc8] sm:$0xff] %vm2460, %v3014
        %v3020 = vld [vmem:[%s2037] sm:$0xff]
        %v3021 = vld [vmem:[%s2037 + $0x8] sm:$0xff]
        %3024 = vrot.lane.b32.xlu0 %v3020, 126
        %v3025 = vpop.permute.xlu0 %3024
        %3026 = vrot.lane.b32.xlu0 %v3021, 126
        %v3027 = vpop.permute.xlu0 %3026
        %v3028 = vsel %vm743, %v3025, %v3027
        %3031 = vst [vmem:[#allocation3 + $0x130] sm:$0xff] %v3028
        %3032 = vst.msk [vmem:[#allocation3 + $0x138] sm:$0xff] %vm2460, %v3027
        %v3033 = vld [vmem:[%s2037] sm:$0xff]
        %v3034 = vld [vmem:[%s2037 + $0x8] sm:$0xff]
        %3037 = vrot.lane.b32.xlu0 %v3033, 110
        %v3038 = vpop.permute.xlu0 %3037
        %3039 = vrot.lane.b32.xlu0 %v3034, 110
        %v3040 = vpop.permute.xlu0 %3039
        %v3041 = vsel %vm2497, %v3038, %v3040
        %3044 = vst [vmem:[#allocation3 + $0x1a0] sm:$0xff] %v3041
        %3045 = vst.msk [vmem:[#allocation3 + $0x1a8] sm:$0xff] %vm2460, %v3040
        %v3046 = vld [vmem:[%s2037] sm:$0xff]
        %v3047 = vld [vmem:[%s2037 + $0x8] sm:$0xff]
        %3050 = vrot.lane.b32.xlu0 %v3046, 109
        %v3051 = vpop.permute.xlu0 %3050
        %3052 = vrot.lane.b32.xlu0 %v3047, 109
        %v3053 = vpop.permute.xlu0 %3052
        %v3054 = vsel %vm2511, %v3051, %v3053
        %3057 = vst [vmem:[#allocation3 + $0x210] sm:$0xff] %v3054
        %3058 = vst.msk [vmem:[#allocation3 + $0x218] sm:$0xff] %vm2460, %v3053
        %v3059 = vld [vmem:[%s2037] sm:$0xff]
        %v3060 = vld [vmem:[%s2037 + $0x8] sm:$0xff]
        %3063 = vrot.lane.b32.xlu0 %v3059, 108
        %v3064 = vpop.permute.xlu0 %3063
        %3065 = vrot.lane.b32.xlu0 %v3060, 108
        %v3066 = vpop.permute.xlu0 %3065
        %v3067 = vsel %vm884, %v3064, %v3066
        %3070 = vst [vmem:[#allocation3 + $0x280] sm:$0xff] %v3067
        %3071 = vst.msk [vmem:[#allocation3 + $0x288] sm:$0xff] %vm2460, %v3066
        %v3072 = vld [vmem:[%s2037] sm:$0xff]
        %v3073 = vld [vmem:[%s2037 + $0x8] sm:$0xff]
        %3076 = vrot.lane.b32.xlu0 %v3072, 92
        %v3077 = vpop.permute.xlu0 %3076
        %3078 = vrot.lane.b32.xlu0 %v3073, 92
        %v3079 = vpop.permute.xlu0 %3078
        %v3080 = vsel %vm2538, %v3077, %v3079
        %3083 = vst [vmem:[#allocation3 + $0x2f0] sm:$0xff] %v3080
        %3084 = vst.msk [vmem:[#allocation3 + $0x2f8] sm:$0xff] %vm2460, %v3079
        %v3085 = vld [vmem:[%s2037] sm:$0xff]
        %v3086 = vld [vmem:[%s2037 + $0x8] sm:$0xff]
        %3089 = vrot.lane.b32.xlu0 %v3085, 91
        %v3090 = vpop.permute.xlu0 %3089
        %3091 = vrot.lane.b32.xlu0 %v3086, 91
        %v3092 = vpop.permute.xlu0 %3091
        %v3093 = vsel %vm2552, %v3090, %v3092
        %3096 = vst [vmem:[#allocation3 + $0x360] sm:$0xff] %v3093
        %3097 = vst.msk [vmem:[#allocation3 + $0x368] sm:$0xff] %vm2460, %v3092
        %v3098 = vld [vmem:[%s2037] sm:$0xff]
        %v3099 = vld [vmem:[%s2037 + $0x8] sm:$0xff]
        %3102 = vrot.lane.b32.xlu0 %v3098, 90
        %v3103 = vpop.permute.xlu0 %3102
        %3104 = vrot.lane.b32.xlu0 %v3099, 90
        %v3105 = vpop.permute.xlu0 %3104
        %v3106 = vsel %vm882, %v3103, %v3105
        %3109 = vst [vmem:[#allocation3 + $0x3d0] sm:$0xff] %v3106
        %3110 = vst.msk [vmem:[#allocation3 + $0x3d8] sm:$0xff] %vm2460, %v3105
        %v3111 = vld [vmem:[%s2293] sm:$0xff]
        %v3112 = vld [vmem:[%s2293 + $0x8] sm:$0xff]
        %3113 = vst [vmem:[#allocation3 + $0x60] sm:$0xff] %v3111
        %3114 = vst.msk [vmem:[#allocation3 + $0x68] sm:$0xff] %vm2460, %v3112
        %v3115 = vld [vmem:[%s2293] sm:$0xff]
        %v3116 = vld [vmem:[%s2293 + $0x8] sm:$0xff]
        %3119 = vrot.lane.b32.xlu0 %v3115, 127
        %v3120 = vpop.permute.xlu0 %3119
        %3121 = vrot.lane.b32.xlu0 %v3116, 127
        %v3122 = vpop.permute.xlu0 %3121
        %v3123 = vsel %vm2470, %v3120, %v3122
        %3126 = vst [vmem:[#allocation3 + $0xd0] sm:$0xff] %v3123
        %3127 = vst.msk [vmem:[#allocation3 + $0xd8] sm:$0xff] %vm2460, %v3122
        %v3128 = vld [vmem:[%s2293] sm:$0xff]
        %v3129 = vld [vmem:[%s2293 + $0x8] sm:$0xff]
        %3132 = vrot.lane.b32.xlu0 %v3128, 126
        %v3133 = vpop.permute.xlu0 %3132
        %3134 = vrot.lane.b32.xlu0 %v3129, 126
        %v3135 = vpop.permute.xlu0 %3134
        %v3136 = vsel %vm743, %v3133, %v3135
        %3139 = vst [vmem:[#allocation3 + $0x140] sm:$0xff] %v3136
        %3140 = vst.msk [vmem:[#allocation3 + $0x148] sm:$0xff] %vm2460, %v3135
        %v3141 = vld [vmem:[%s2293] sm:$0xff]
        %v3142 = vld [vmem:[%s2293 + $0x8] sm:$0xff]
        %3145 = vrot.lane.b32.xlu0 %v3141, 110
        %v3146 = vpop.permute.xlu0 %3145
        %3147 = vrot.lane.b32.xlu0 %v3142, 110
        %v3148 = vpop.permute.xlu0 %3147
        %v3149 = vsel %vm2497, %v3146, %v3148
        %3152 = vst [vmem:[#allocation3 + $0x1b0] sm:$0xff] %v3149
        %3153 = vst.msk [vmem:[#allocation3 + $0x1b8] sm:$0xff] %vm2460, %v3148
        %v3154 = vld [vmem:[%s2293] sm:$0xff]
        %v3155 = vld [vmem:[%s2293 + $0x8] sm:$0xff]
        %3158 = vrot.lane.b32.xlu0 %v3154, 109
        %v3159 = vpop.permute.xlu0 %3158
        %3160 = vrot.lane.b32.xlu0 %v3155, 109
        %v3161 = vpop.permute.xlu0 %3160
        %v3162 = vsel %vm2511, %v3159, %v3161
        %3165 = vst [vmem:[#allocation3 + $0x220] sm:$0xff] %v3162
        %3166 = vst.msk [vmem:[#allocation3 + $0x228] sm:$0xff] %vm2460, %v3161
        %v3167 = vld [vmem:[%s2293] sm:$0xff]
        %v3168 = vld [vmem:[%s2293 + $0x8] sm:$0xff]
        %3171 = vrot.lane.b32.xlu0 %v3167, 108
        %v3172 = vpop.permute.xlu0 %3171
        %3173 = vrot.lane.b32.xlu0 %v3168, 108
        %v3174 = vpop.permute.xlu0 %3173
        %v3175 = vsel %vm884, %v3172, %v3174
        %3178 = vst [vmem:[#allocation3 + $0x290] sm:$0xff] %v3175
        %3179 = vst.msk [vmem:[#allocation3 + $0x298] sm:$0xff] %vm2460, %v3174
        %v3180 = vld [vmem:[%s2293] sm:$0xff]
        %v3181 = vld [vmem:[%s2293 + $0x8] sm:$0xff]
        %3184 = vrot.lane.b32.xlu0 %v3180, 92
        %v3185 = vpop.permute.xlu0 %3184
        %3186 = vrot.lane.b32.xlu0 %v3181, 92
        %v3187 = vpop.permute.xlu0 %3186
        %v3188 = vsel %vm2538, %v3185, %v3187
        %3191 = vst [vmem:[#allocation3 + $0x300] sm:$0xff] %v3188
        %3192 = vst.msk [vmem:[#allocation3 + $0x308] sm:$0xff] %vm2460, %v3187
        %v3193 = vld [vmem:[%s2293] sm:$0xff]
        %v3194 = vld [vmem:[%s2293 + $0x8] sm:$0xff]
        %3197 = vrot.lane.b32.xlu0 %v3193, 91
        %v3198 = vpop.permute.xlu0 %3197
        %3199 = vrot.lane.b32.xlu0 %v3194, 91
        %v3200 = vpop.permute.xlu0 %3199
        %v3201 = vsel %vm2552, %v3198, %v3200
        %3204 = vst [vmem:[#allocation3 + $0x370] sm:$0xff] %v3201
        %3205 = vst.msk [vmem:[#allocation3 + $0x378] sm:$0xff] %vm2460, %v3200
        %v3206 = vld [vmem:[%s2293] sm:$0xff]
        %v3207 = vld [vmem:[%s2293 + $0x8] sm:$0xff]
        %3210 = vrot.lane.b32.xlu0 %v3206, 90
        %v3211 = vpop.permute.xlu0 %3210
        %3212 = vrot.lane.b32.xlu0 %v3207, 90
        %v3213 = vpop.permute.xlu0 %3212
        %v3214 = vsel %vm882, %v3211, %v3213
        %3217 = vst [vmem:[#allocation3 + $0x3e0] sm:$0xff] %v3214
        %3218 = vst.msk [vmem:[#allocation3 + $0x3e8] sm:$0xff] %vm2460, %v3213
        %v3219 = vld [vmem:[%s3] sm:$0xff]
        %v3220 = vld [vmem:[#allocation3] sm:$0xff]
        %v3221 = vld [vmem:[#allocation3 + $0x8] sm:$0xff]
        %v3222 = vld [vmem:[#allocation3 + $0x10] sm:$0xff]
        %v3223 = vld [vmem:[#allocation3 + $0x18] sm:$0xff]
        %v3224 = vld [vmem:[#allocation3 + $0x20] sm:$0xff]
        %v3225 = vld [vmem:[#allocation3 + $0x28] sm:$0xff]
        %v3226 = vld [vmem:[#allocation3 + $0x30] sm:$0xff]
        %v3227 = vld [vmem:[#allocation3 + $0x38] sm:$0xff]
        %v3228 = vld [vmem:[#allocation3 + $0x40] sm:$0xff]
        %v3229 = vld [vmem:[#allocation3 + $0x48] sm:$0xff]
        %v3230 = vld [vmem:[#allocation3 + $0x70] sm:$0xff]
        %v3231 = vld [vmem:[#allocation3 + $0x78] sm:$0xff]
        %v3232 = vld [vmem:[#allocation3 + $0x80] sm:$0xff]
        %v3233 = vld [vmem:[#allocation3 + $0x88] sm:$0xff]
        %v3234 = vld [vmem:[#allocation3 + $0x90] sm:$0xff]
        %v3235 = vld [vmem:[#allocation3 + $0x98] sm:$0xff]
        %v3236 = vld [vmem:[#allocation3 + $0xa0] sm:$0xff]
        %v3237 = vld [vmem:[#allocation3 + $0xa8] sm:$0xff]
        %v3238 = vld [vmem:[#allocation3 + $0xb0] sm:$0xff]
        %v3239 = vld [vmem:[#allocation3 + $0xb8] sm:$0xff]
        %v3240 = vld [vmem:[#allocation3 + $0xe0] sm:$0xff]
        %v3241 = vld [vmem:[#allocation3 + $0xe8] sm:$0xff]
        %v3242 = vld [vmem:[#allocation3 + $0xf0] sm:$0xff]
        %v3243 = vld [vmem:[#allocation3 + $0xf8] sm:$0xff]
        %v3244 = vld [vmem:[#allocation3 + $0x100] sm:$0xff]
        %v3245 = vld [vmem:[#allocation3 + $0x108] sm:$0xff]
        %v3246 = vld [vmem:[#allocation3 + $0x110] sm:$0xff]
        %v3247 = vld [vmem:[#allocation3 + $0x118] sm:$0xff]
        %v3248 = vld [vmem:[#allocation3 + $0x120] sm:$0xff]
        %v3249 = vld [vmem:[#allocation3 + $0x128] sm:$0xff]
        %v3250 = vld [vmem:[#allocation3 + $0x150] sm:$0xff]
        %v3251 = vld [vmem:[#allocation3 + $0x158] sm:$0xff]
        %v3252 = vld [vmem:[#allocation3 + $0x160] sm:$0xff]
        %v3253 = vld [vmem:[#allocation3 + $0x168] sm:$0xff]
        %v3254 = vld [vmem:[#allocation3 + $0x170] sm:$0xff]
        %v3255 = vld [vmem:[#allocation3 + $0x178] sm:$0xff]
        %v3256 = vld [vmem:[#allocation3 + $0x180] sm:$0xff]
        %v3257 = vld [vmem:[#allocation3 + $0x188] sm:$0xff]
        %v3258 = vld [vmem:[#allocation3 + $0x190] sm:$0xff]
        %v3259 = vld [vmem:[#allocation3 + $0x198] sm:$0xff]
        %v3260 = vld [vmem:[#allocation3 + $0x1c0] sm:$0xff]
        %v3261 = vld [vmem:[#allocation3 + $0x1c8] sm:$0xff]
        %v3262 = vld [vmem:[#allocation3 + $0x1d0] sm:$0xff]
        %v3263 = vld [vmem:[#allocation3 + $0x1d8] sm:$0xff]
        %v3264 = vld [vmem:[#allocation3 + $0x1e0] sm:$0xff]
        %v3265 = vld [vmem:[#allocation3 + $0x1e8] sm:$0xff]
        %v3266 = vld [vmem:[#allocation3 + $0x1f0] sm:$0xff]
        %v3267 = vld [vmem:[#allocation3 + $0x1f8] sm:$0xff]
        %v3268 = vld [vmem:[#allocation3 + $0x200] sm:$0xff]
        %v3269 = vld [vmem:[#allocation3 + $0x208] sm:$0xff]
        %v3270 = vld [vmem:[#allocation3 + $0x230] sm:$0xff]
        %v3271 = vld [vmem:[#allocation3 + $0x238] sm:$0xff]
        %v3272 = vld [vmem:[#allocation3 + $0x240] sm:$0xff]
        %v3273 = vld [vmem:[#allocation3 + $0x248] sm:$0xff]
        %v3274 = vld [vmem:[#allocation3 + $0x250] sm:$0xff]
        %v3275 = vld [vmem:[#allocation3 + $0x258] sm:$0xff]
        %v3276 = vld [vmem:[#allocation3 + $0x260] sm:$0xff]
        %v3277 = vld [vmem:[#allocation3 + $0x268] sm:$0xff]
        %v3278 = vld [vmem:[#allocation3 + $0x270] sm:$0xff]
        %v3279 = vld [vmem:[#allocation3 + $0x278] sm:$0xff]
        %v3280 = vld [vmem:[#allocation3 + $0x2a0] sm:$0xff]
        %v3281 = vld [vmem:[#allocation3 + $0x2a8] sm:$0xff]
        %v3282 = vld [vmem:[#allocation3 + $0x2b0] sm:$0xff]
        %v3283 = vld [vmem:[#allocation3 + $0x2b8] sm:$0xff]
        %v3284 = vld [vmem:[#allocation3 + $0x2c0] sm:$0xff]
        %v3285 = vld [vmem:[#allocation3 + $0x2c8] sm:$0xff]
        %v3286 = vld [vmem:[#allocation3 + $0x2d0] sm:$0xff]
        %v3287 = vld [vmem:[#allocation3 + $0x2d8] sm:$0xff]
        %v3288 = vld [vmem:[#allocation3 + $0x2e0] sm:$0xff]
        %v3289 = vld [vmem:[#allocation3 + $0x2e8] sm:$0xff]
        %v3290 = vld [vmem:[#allocation3 + $0x310] sm:$0xff]
        %v3291 = vld [vmem:[#allocation3 + $0x318] sm:$0xff]
        %v3292 = vld [vmem:[#allocation3 + $0x320] sm:$0xff]
        %v3293 = vld [vmem:[#allocation3 + $0x328] sm:$0xff]
        %v3294 = vld [vmem:[#allocation3 + $0x330] sm:$0xff]
        %v3295 = vld [vmem:[#allocation3 + $0x338] sm:$0xff]
        %v3296 = vld [vmem:[#allocation3 + $0x340] sm:$0xff]
        %v3297 = vld [vmem:[#allocation3 + $0x348] sm:$0xff]
        %v3298 = vld [vmem:[#allocation3 + $0x350] sm:$0xff]
        %v3299 = vld [vmem:[#allocation3 + $0x358] sm:$0xff]
        %v3300 = vld [vmem:[#allocation3 + $0x380] sm:$0xff]
        %v3301 = vld [vmem:[#allocation3 + $0x388] sm:$0xff]
        %v3302 = vld [vmem:[#allocation3 + $0x390] sm:$0xff]
        %v3303 = vld [vmem:[#allocation3 + $0x398] sm:$0xff]
        %v3304 = vld [vmem:[#allocation3 + $0x3a0] sm:$0xff]
        %v3305 = vld [vmem:[#allocation3 + $0x3a8] sm:$0xff]
        %v3306 = vld [vmem:[#allocation3 + $0x3b0] sm:$0xff]
        %v3307 = vld [vmem:[#allocation3 + $0x3b8] sm:$0xff]
        %v3308 = vld [vmem:[#allocation3 + $0x3c0] sm:$0xff]
        %v3309 = vld [vmem:[#allocation3 + $0x3c8] sm:$0xff]
        %s3310 = scalar_lea.vmem %s3, 8
        %v3311 = vld [vmem:[%s3310] sm:$0xff]
        %v3312 = vld [vmem:[#allocation3 + $0x50] sm:$0xff]
        %v3313 = vld [vmem:[#allocation3 + $0x58] sm:$0xff]
        %v3314 = vld [vmem:[#allocation3 + $0xc0] sm:$0xff]
        %v3315 = vld [vmem:[#allocation3 + $0xc8] sm:$0xff]
        %v3316 = vld [vmem:[#allocation3 + $0x130] sm:$0xff]
        %v3317 = vld [vmem:[#allocation3 + $0x138] sm:$0xff]
        %v3318 = vld [vmem:[#allocation3 + $0x1a0] sm:$0xff]
        %v3319 = vld [vmem:[#allocation3 + $0x1a8] sm:$0xff]
        %v3320 = vld [vmem:[#allocation3 + $0x210] sm:$0xff]
        %v3321 = vld [vmem:[#allocation3 + $0x218] sm:$0xff]
        %v3322 = vld [vmem:[#allocation3 + $0x280] sm:$0xff]
        %v3323 = vld [vmem:[#allocation3 + $0x288] sm:$0xff]
        %v3324 = vld [vmem:[#allocation3 + $0x2f0] sm:$0xff]
        %v3325 = vld [vmem:[#allocation3 + $0x2f8] sm:$0xff]
        %v3326 = vld [vmem:[#allocation3 + $0x360] sm:$0xff]
        %v3327 = vld [vmem:[#allocation3 + $0x368] sm:$0xff]
        %v3328 = vld [vmem:[#allocation3 + $0x3d0] sm:$0xff]
        %v3329 = vld [vmem:[#allocation3 + $0x3d8] sm:$0xff]
        %v3331 = vsel %vm880, %v3311, 0
        %3333 = vmatprep.subr.mxu0 %v3223
        %3334 = vmatpush1.msra.mxu0 %v3222
        %3335 = vmatprep.subr.mxu0 %v3233
        %3336 = vmatpush1.msra.mxu0 %v3232
        %3337 = vmatprep.subr.mxu0 %v3243
        %3338 = vmatpush1.msra.mxu0 %v3242
        %3339 = vmatprep.subr.mxu0 %v3253
        %3340 = vmatpush1.msra.mxu0 %v3252
        %3341 = vmatprep.subr.mxu0 %v3263
        %3342 = vmatpush1.msra.mxu0 %v3262
        %3343 = vmatprep.subr.mxu0 %v3273
        %3344 = vmatpush1.msra.mxu0 %v3272
        %3345 = vmatprep.subr.mxu0 %v3283
        %3346 = vmatpush1.msra.mxu0 %v3282
        %3347 = vmatprep.subr.mxu0 %v3293
        %3348 = vmatpush1.msra.mxu0 %v3292
        %3349 = vmatprep.subr.mxu0 %v3303
        %3350 = vmatpush1.msra.mxu0 %v3302
        %3351 = vmatprep.subr.mxu0 0.0
        %3352 = vmatpush1.msra.mxu0 0.0
        %3353 = vmatprep.subr.mxu0 0.0
        %3354 = vmatpush1.msra.mxu0 0.0
        %3355 = vmatprep.subr.mxu0 0.0
        %3356 = vmatpush1.msra.mxu0 0.0
        %3357 = vmatprep.subr.mxu0 0.0
        %3358 = vmatpush1.msra.mxu0 0.0
        %3359 = vmatprep.subr.mxu0 0.0
        %3360 = vmatpush1.msra.mxu0 0.0
        %3361 = vmatprep.subr.mxu0 0.0
        %3362 = vmatpush1.msra.mxu0 0.0
        %3363 = vmatprep.subr.mxu0 0.0
        %3364 = vmatpush1.msra.mxu0 0.0
        %3365 = vmatprep.subr.mxu0 0.0
        %3366 = vmatpush1.msra.mxu0 0.0
        %3367 = vmatprep.subr.mxu0 0.0
        %3368 = vmatpush1.msra.mxu0 0.0
        %3369 = vmatprep.subr.mxu0 0.0
        %3370 = vmatpush1.msra.mxu0 0.0
        %3371 = vmatprep.subr.mxu0 0.0
        %3372 = vmatpush1.msra.mxu0 0.0
        %3373 = vmatprep.subr.mxu0 0.0
        %3374 = vmatpush1.msra.mxu0 0.0
        %3375 = vmatprep.subr.mxu0 0.0
        %3376 = vmatpush1.msra.mxu0 0.0
        %3377 = vmatprep.subr.mxu0 0.0
        %3378 = vmatpush1.msra.mxu0 0.0
        %3379 = vmatprep.subr.mxu0 0.0
        %3380 = vmatpush1.msra.mxu0 0.0
        %3381 = vmatprep.subr.mxu0 0.0
        %3382 = vmatpush1.msra.mxu0 0.0
        %3383 = vmatprep.subr.mxu0 0.0
        %3384 = vmatpush1.msra.mxu0 0.0
        %3385 = vmatprep.subr.mxu0 0.0
        %3386 = vmatpush1.msra.mxu0 0.0
        %3387 = vmatprep.subr.mxu0 0.0
        %3388 = vmatpush1.msra.mxu0 0.0
        %3389 = vmatprep.subr.mxu0 0.0
        %3390 = vmatpush1.msra.mxu0 0.0
        %3391 = vmatprep.subr.mxu0 0.0
        %3392 = vmatpush1.msra.mxu0 0.0
        %3393 = vmatprep.subr.mxu0 0.0
        %3394 = vmatpush1.msra.mxu0 0.0
        %3395 = vmatprep.subr.mxu0 0.0
        %3396 = vmatpush1.msra.mxu0 0.0
        %3397 = vmatprep.mubr.f32.mxu0 0.0
        %3398 = vmatmul.mubr.f32.gmra.mrb[0].mxu0 %v3331
        %v3399 = vpop.f32.mrb[0].mxu0
        %v3400 = vadd.f32 0.0, %v3399
        %v3401 = vpop.f32.mrb[0].mxu0
        %v3402 = vadd.f32 0.0, %v3401
        %3403 = vdwg.mxu0
        %3404 = vmatprep.subr.mxu0 %v3225
        %3405 = vmatpush1.msra.mxu0 %v3224
        %3406 = vmatprep.subr.mxu0 %v3235
        %3407 = vmatpush1.msra.mxu0 %v3234
        %3408 = vmatprep.subr.mxu0 %v3245
        %3409 = vmatpush1.msra.mxu0 %v3244
        %3410 = vmatprep.subr.mxu0 %v3255
        %3411 = vmatpush1.msra.mxu0 %v3254
        %3412 = vmatprep.subr.mxu0 %v3265
        %3413 = vmatpush1.msra.mxu0 %v3264
        %3414 = vmatprep.subr.mxu0 %v3275
        %3415 = vmatpush1.msra.mxu0 %v3274
        %3416 = vmatprep.subr.mxu0 %v3285
        %3417 = vmatpush1.msra.mxu0 %v3284
        %3418 = vmatprep.subr.mxu0 %v3295
        %3419 = vmatpush1.msra.mxu0 %v3294
        %3420 = vmatprep.subr.mxu0 %v3305
        %3421 = vmatpush1.msra.mxu0 %v3304
        %3422 = vmatprep.subr.mxu0 0.0
        %3423 = vmatpush1.msra.mxu0 0.0
        %3424 = vmatprep.subr.mxu0 0.0
        %3425 = vmatpush1.msra.mxu0 0.0
        %3426 = vmatprep.subr.mxu0 0.0
        %3427 = vmatpush1.msra.mxu0 0.0
        %3428 = vmatprep.subr.mxu0 0.0
        %3429 = vmatpush1.msra.mxu0 0.0
        %3430 = vmatprep.subr.mxu0 0.0
        %3431 = vmatpush1.msra.mxu0 0.0
        %3432 = vmatprep.subr.mxu0 0.0
        %3433 = vmatpush1.msra.mxu0 0.0
        %3434 = vmatprep.subr.mxu0 0.0
        %3435 = vmatpush1.msra.mxu0 0.0
        %3436 = vmatprep.subr.mxu0 0.0
        %3437 = vmatpush1.msra.mxu0 0.0
        %3438 = vmatprep.subr.mxu0 0.0
        %3439 = vmatpush1.msra.mxu0 0.0
        %3440 = vmatprep.subr.mxu0 0.0
        %3441 = vmatpush1.msra.mxu0 0.0
        %3442 = vmatprep.subr.mxu0 0.0
        %3443 = vmatpush1.msra.mxu0 0.0
        %3444 = vmatprep.subr.mxu0 0.0
        %3445 = vmatpush1.msra.mxu0 0.0
        %3446 = vmatprep.subr.mxu0 0.0
        %3447 = vmatpush1.msra.mxu0 0.0
        %3448 = vmatprep.subr.mxu0 0.0
        %3449 = vmatpush1.msra.mxu0 0.0
        %3450 = vmatprep.subr.mxu0 0.0
        %3451 = vmatpush1.msra.mxu0 0.0
        %3452 = vmatprep.subr.mxu0 0.0
        %3453 = vmatpush1.msra.mxu0 0.0
        %3454 = vmatprep.subr.mxu0 0.0
        %3455 = vmatpush1.msra.mxu0 0.0
        %3456 = vmatprep.subr.mxu0 0.0
        %3457 = vmatpush1.msra.mxu0 0.0
        %3458 = vmatprep.subr.mxu0 0.0
        %3459 = vmatpush1.msra.mxu0 0.0
        %3460 = vmatprep.subr.mxu0 0.0
        %3461 = vmatpush1.msra.mxu0 0.0
        %3462 = vmatprep.subr.mxu0 0.0
        %3463 = vmatpush1.msra.mxu0 0.0
        %3464 = vmatprep.subr.mxu0 0.0
        %3465 = vmatpush1.msra.mxu0 0.0
        %3466 = vmatprep.subr.mxu0 0.0
        %3467 = vmatpush1.msra.mxu0 0.0
        %3468 = vmatprep.mubr.f32.mxu0 0.0
        %3469 = vmatmul.mubr.f32.gmra.mrb[0].mxu0 %v3331
        %v3470 = vpop.f32.mrb[0].mxu0
        %v3471 = vadd.f32 0.0, %v3470
        %v3472 = vpop.f32.mrb[0].mxu0
        %v3473 = vadd.f32 0.0, %v3472
        %3474 = vdwg.mxu0
        %3475 = vmatprep.subr.mxu0 %v3227
        %3476 = vmatpush1.msra.mxu0 %v3226
        %3477 = vmatprep.subr.mxu0 %v3237
        %3478 = vmatpush1.msra.mxu0 %v3236
        %3479 = vmatprep.subr.mxu0 %v3247
        %3480 = vmatpush1.msra.mxu0 %v3246
        %3481 = vmatprep.subr.mxu0 %v3257
        %3482 = vmatpush1.msra.mxu0 %v3256
        %3483 = vmatprep.subr.mxu0 %v3267
        %3484 = vmatpush1.msra.mxu0 %v3266
        %3485 = vmatprep.subr.mxu0 %v3277
        %3486 = vmatpush1.msra.mxu0 %v3276
        %3487 = vmatprep.subr.mxu0 %v3287
        %3488 = vmatpush1.msra.mxu0 %v3286
        %3489 = vmatprep.subr.mxu0 %v3297
        %3490 = vmatpush1.msra.mxu0 %v3296
        %3491 = vmatprep.subr.mxu0 %v3307
        %3492 = vmatpush1.msra.mxu0 %v3306
        %3493 = vmatprep.subr.mxu0 0.0
        %3494 = vmatpush1.msra.mxu0 0.0
        %3495 = vmatprep.subr.mxu0 0.0
        %3496 = vmatpush1.msra.mxu0 0.0
        %3497 = vmatprep.subr.mxu0 0.0
        %3498 = vmatpush1.msra.mxu0 0.0
        %3499 = vmatprep.subr.mxu0 0.0
        %3500 = vmatpush1.msra.mxu0 0.0
        %3501 = vmatprep.subr.mxu0 0.0
        %3502 = vmatpush1.msra.mxu0 0.0
        %3503 = vmatprep.subr.mxu0 0.0
        %3504 = vmatpush1.msra.mxu0 0.0
        %3505 = vmatprep.subr.mxu0 0.0
        %3506 = vmatpush1.msra.mxu0 0.0
        %3507 = vmatprep.subr.mxu0 0.0
        %3508 = vmatpush1.msra.mxu0 0.0
        %3509 = vmatprep.subr.mxu0 0.0
        %3510 = vmatpush1.msra.mxu0 0.0
        %3511 = vmatprep.subr.mxu0 0.0
        %3512 = vmatpush1.msra.mxu0 0.0
        %3513 = vmatprep.subr.mxu0 0.0
        %3514 = vmatpush1.msra.mxu0 0.0
        %3515 = vmatprep.subr.mxu0 0.0
        %3516 = vmatpush1.msra.mxu0 0.0
        %3517 = vmatprep.subr.mxu0 0.0
        %3518 = vmatpush1.msra.mxu0 0.0
        %3519 = vmatprep.subr.mxu0 0.0
        %3520 = vmatpush1.msra.mxu0 0.0
        %3521 = vmatprep.subr.mxu0 0.0
        %3522 = vmatpush1.msra.mxu0 0.0
        %3523 = vmatprep.subr.mxu0 0.0
        %3524 = vmatpush1.msra.mxu0 0.0
        %3525 = vmatprep.subr.mxu0 0.0
        %3526 = vmatpush1.msra.mxu0 0.0
        %3527 = vmatprep.subr.mxu0 0.0
        %3528 = vmatpush1.msra.mxu0 0.0
        %3529 = vmatprep.subr.mxu0 0.0
        %3530 = vmatpush1.msra.mxu0 0.0
        %3531 = vmatprep.subr.mxu0 0.0
        %3532 = vmatpush1.msra.mxu0 0.0
        %3533 = vmatprep.subr.mxu0 0.0
        %3534 = vmatpush1.msra.mxu0 0.0
        %3535 = vmatprep.subr.mxu0 0.0
        %3536 = vmatpush1.msra.mxu0 0.0
        %3537 = vmatprep.subr.mxu0 0.0
        %3538 = vmatpush1.msra.mxu0 0.0
        %3539 = vmatprep.mubr.f32.mxu0 0.0
        %3540 = vmatmul.mubr.f32.gmra.mrb[0].mxu0 %v3331
        %v3541 = vpop.f32.mrb[0].mxu0
        %v3542 = vadd.f32 0.0, %v3541
        %v3543 = vpop.f32.mrb[0].mxu0
        %v3544 = vadd.f32 0.0, %v3543
        %3545 = vdwg.mxu0
        %3546 = vmatprep.subr.mxu0 %v3229
        %3547 = vmatpush1.msra.mxu0 %v3228
        %3548 = vmatprep.subr.mxu0 %v3239
        %3549 = vmatpush1.msra.mxu0 %v3238
        %3550 = vmatprep.subr.mxu0 %v3249
        %3551 = vmatpush1.msra.mxu0 %v3248
        %3552 = vmatprep.subr.mxu0 %v3259
        %3553 = vmatpush1.msra.mxu0 %v3258
        %3554 = vmatprep.subr.mxu0 %v3269
        %3555 = vmatpush1.msra.mxu0 %v3268
        %3556 = vmatprep.subr.mxu0 %v3279
        %3557 = vmatpush1.msra.mxu0 %v3278
        %3558 = vmatprep.subr.mxu0 %v3289
        %3559 = vmatpush1.msra.mxu0 %v3288
        %3560 = vmatprep.subr.mxu0 %v3299
        %3561 = vmatpush1.msra.mxu0 %v3298
        %3562 = vmatprep.subr.mxu0 %v3309
        %3563 = vmatpush1.msra.mxu0 %v3308
        %3564 = vmatprep.subr.mxu0 0.0
        %3565 = vmatpush1.msra.mxu0 0.0
        %3566 = vmatprep.subr.mxu0 0.0
        %3567 = vmatpush1.msra.mxu0 0.0
        %3568 = vmatprep.subr.mxu0 0.0
        %3569 = vmatpush1.msra.mxu0 0.0
        %3570 = vmatprep.subr.mxu0 0.0
        %3571 = vmatpush1.msra.mxu0 0.0
        %3572 = vmatprep.subr.mxu0 0.0
        %3573 = vmatpush1.msra.mxu0 0.0
        %3574 = vmatprep.subr.mxu0 0.0
        %3575 = vmatpush1.msra.mxu0 0.0
        %3576 = vmatprep.subr.mxu0 0.0
        %3577 = vmatpush1.msra.mxu0 0.0
        %3578 = vmatprep.subr.mxu0 0.0
        %3579 = vmatpush1.msra.mxu0 0.0
        %3580 = vmatprep.subr.mxu0 0.0
        %3581 = vmatpush1.msra.mxu0 0.0
        %3582 = vmatprep.subr.mxu0 0.0
        %3583 = vmatpush1.msra.mxu0 0.0
        %3584 = vmatprep.subr.mxu0 0.0
        %3585 = vmatpush1.msra.mxu0 0.0
        %3586 = vmatprep.subr.mxu0 0.0
        %3587 = vmatpush1.msra.mxu0 0.0
        %3588 = vmatprep.subr.mxu0 0.0
        %3589 = vmatpush1.msra.mxu0 0.0
        %3590 = vmatprep.subr.mxu0 0.0
        %3591 = vmatpush1.msra.mxu0 0.0
        %3592 = vmatprep.subr.mxu0 0.0
        %3593 = vmatpush1.msra.mxu0 0.0
        %3594 = vmatprep.subr.mxu0 0.0
        %3595 = vmatpush1.msra.mxu0 0.0
        %3596 = vmatprep.subr.mxu0 0.0
        %3597 = vmatpush1.msra.mxu0 0.0
        %3598 = vmatprep.subr.mxu0 0.0
        %3599 = vmatpush1.msra.mxu0 0.0
        %3600 = vmatprep.subr.mxu0 0.0
        %3601 = vmatpush1.msra.mxu0 0.0
        %3602 = vmatprep.subr.mxu0 0.0
        %3603 = vmatpush1.msra.mxu0 0.0
        %3604 = vmatprep.subr.mxu0 0.0
        %3605 = vmatpush1.msra.mxu0 0.0
        %3606 = vmatprep.subr.mxu0 0.0
        %3607 = vmatpush1.msra.mxu0 0.0
        %3608 = vmatprep.subr.mxu0 0.0
        %3609 = vmatpush1.msra.mxu0 0.0
        %3610 = vmatprep.mubr.f32.mxu0 0.0
        %3611 = vmatmul.mubr.f32.gmra.mrb[0].mxu0 %v3331
        %v3612 = vpop.f32.mrb[0].mxu0
        %v3613 = vadd.f32 0.0, %v3612
        %v3614 = vpop.f32.mrb[0].mxu0
        %v3615 = vadd.f32 0.0, %v3614
        %3616 = vdwg.mxu0
        %3617 = vmatprep.subr.mxu0 %v3313
        %3618 = vmatpush1.msra.mxu0 %v3312
        %3619 = vmatprep.subr.mxu0 %v3315
        %3620 = vmatpush1.msra.mxu0 %v3314
        %3621 = vmatprep.subr.mxu0 %v3317
        %3622 = vmatpush1.msra.mxu0 %v3316
        %3623 = vmatprep.subr.mxu0 %v3319
        %3624 = vmatpush1.msra.mxu0 %v3318
        %3625 = vmatprep.subr.mxu0 %v3321
        %3626 = vmatpush1.msra.mxu0 %v3320
        %3627 = vmatprep.subr.mxu0 %v3323
        %3628 = vmatpush1.msra.mxu0 %v3322
        %3629 = vmatprep.subr.mxu0 %v3325
        %3630 = vmatpush1.msra.mxu0 %v3324
        %3631 = vmatprep.subr.mxu0 %v3327
        %3632 = vmatpush1.msra.mxu0 %v3326
        %3633 = vmatprep.subr.mxu0 %v3329
        %3634 = vmatpush1.msra.mxu0 %v3328
        %3635 = vmatprep.subr.mxu0 0.0
        %3636 = vmatpush1.msra.mxu0 0.0
        %3637 = vmatprep.subr.mxu0 0.0
        %3638 = vmatpush1.msra.mxu0 0.0
        %3639 = vmatprep.subr.mxu0 0.0
        %3640 = vmatpush1.msra.mxu0 0.0
        %3641 = vmatprep.subr.mxu0 0.0
        %3642 = vmatpush1.msra.mxu0 0.0
        %3643 = vmatprep.subr.mxu0 0.0
        %3644 = vmatpush1.msra.mxu0 0.0
        %3645 = vmatprep.subr.mxu0 0.0
        %3646 = vmatpush1.msra.mxu0 0.0
        %3647 = vmatprep.subr.mxu0 0.0
        %3648 = vmatpush1.msra.mxu0 0.0
        %3649 = vmatprep.subr.mxu0 0.0
        %3650 = vmatpush1.msra.mxu0 0.0
        %3651 = vmatprep.subr.mxu0 0.0
        %3652 = vmatpush1.msra.mxu0 0.0
        %3653 = vmatprep.subr.mxu0 0.0
        %3654 = vmatpush1.msra.mxu0 0.0
        %3655 = vmatprep.subr.mxu0 0.0
        %3656 = vmatpush1.msra.mxu0 0.0
        %3657 = vmatprep.subr.mxu0 0.0
        %3658 = vmatpush1.msra.mxu0 0.0
        %3659 = vmatprep.subr.mxu0 0.0
        %3660 = vmatpush1.msra.mxu0 0.0
        %3661 = vmatprep.subr.mxu0 0.0
        %3662 = vmatpush1.msra.mxu0 0.0
        %3663 = vmatprep.subr.mxu0 0.0
        %3664 = vmatpush1.msra.mxu0 0.0
        %3665 = vmatprep.subr.mxu0 0.0
        %3666 = vmatpush1.msra.mxu0 0.0
        %3667 = vmatprep.subr.mxu0 0.0
        %3668 = vmatpush1.msra.mxu0 0.0
        %3669 = vmatprep.subr.mxu0 0.0
        %3670 = vmatpush1.msra.mxu0 0.0
        %3671 = vmatprep.subr.mxu0 0.0
        %3672 = vmatpush1.msra.mxu0 0.0
        %3673 = vmatprep.subr.mxu0 0.0
        %3674 = vmatpush1.msra.mxu0 0.0
        %3675 = vmatprep.subr.mxu0 0.0
        %3676 = vmatpush1.msra.mxu0 0.0
        %3677 = vmatprep.subr.mxu0 0.0
        %3678 = vmatpush1.msra.mxu0 0.0
        %3679 = vmatprep.subr.mxu0 0.0
        %3680 = vmatpush1.msra.mxu0 0.0
        %3681 = vmatprep.mubr.f32.mxu0 0.0
        %3682 = vmatmul.mubr.f32.gmra.mrb[0].mxu0 %v3331
        %v3683 = vpop.f32.mrb[0].mxu0
        %v3684 = vadd.f32 0.0, %v3683
        %v3685 = vpop.f32.mrb[0].mxu0
        %v3686 = vadd.f32 0.0, %v3685
        %3687 = vdwg.mxu0
        %v3689 = vsel %vm880, %v3219, 0
        %3691 = vmatprep.subr.mxu0 %v3221
        %3692 = vmatpush1.msra.mxu0 %v3220
        %3693 = vmatprep.subr.mxu0 %v3231
        %3694 = vmatpush1.msra.mxu0 %v3230
        %3695 = vmatprep.subr.mxu0 %v3241
        %3696 = vmatpush1.msra.mxu0 %v3240
        %3697 = vmatprep.subr.mxu0 %v3251
        %3698 = vmatpush1.msra.mxu0 %v3250
        %3699 = vmatprep.subr.mxu0 %v3261
        %3700 = vmatpush1.msra.mxu0 %v3260
        %3701 = vmatprep.subr.mxu0 %v3271
        %3702 = vmatpush1.msra.mxu0 %v3270
        %3703 = vmatprep.subr.mxu0 %v3281
        %3704 = vmatpush1.msra.mxu0 %v3280
        %3705 = vmatprep.subr.mxu0 %v3291
        %3706 = vmatpush1.msra.mxu0 %v3290
        %3707 = vmatprep.subr.mxu0 %v3301
        %3708 = vmatpush1.msra.mxu0 %v3300
        %3709 = vmatprep.subr.mxu0 0.0
        %3710 = vmatpush1.msra.mxu0 0.0
        %3711 = vmatprep.subr.mxu0 0.0
        %3712 = vmatpush1.msra.mxu0 0.0
        %3713 = vmatprep.subr.mxu0 0.0
        %3714 = vmatpush1.msra.mxu0 0.0
        %3715 = vmatprep.subr.mxu0 0.0
        %3716 = vmatpush1.msra.mxu0 0.0
        %3717 = vmatprep.subr.mxu0 0.0
        %3718 = vmatpush1.msra.mxu0 0.0
        %3719 = vmatprep.subr.mxu0 0.0
        %3720 = vmatpush1.msra.mxu0 0.0
        %3721 = vmatprep.subr.mxu0 0.0
        %3722 = vmatpush1.msra.mxu0 0.0
        %3723 = vmatprep.subr.mxu0 0.0
        %3724 = vmatpush1.msra.mxu0 0.0
        %3725 = vmatprep.subr.mxu0 0.0
        %3726 = vmatpush1.msra.mxu0 0.0
        %3727 = vmatprep.subr.mxu0 0.0
        %3728 = vmatpush1.msra.mxu0 0.0
        %3729 = vmatprep.subr.mxu0 0.0
        %3730 = vmatpush1.msra.mxu0 0.0
        %3731 = vmatprep.subr.mxu0 0.0
        %3732 = vmatpush1.msra.mxu0 0.0
        %3733 = vmatprep.subr.mxu0 0.0
        %3734 = vmatpush1.msra.mxu0 0.0
        %3735 = vmatprep.subr.mxu0 0.0
        %3736 = vmatpush1.msra.mxu0 0.0
        %3737 = vmatprep.subr.mxu0 0.0
        %3738 = vmatpush1.msra.mxu0 0.0
        %3739 = vmatprep.subr.mxu0 0.0
        %3740 = vmatpush1.msra.mxu0 0.0
        %3741 = vmatprep.subr.mxu0 0.0
        %3742 = vmatpush1.msra.mxu0 0.0
        %3743 = vmatprep.subr.mxu0 0.0
        %3744 = vmatpush1.msra.mxu0 0.0
        %3745 = vmatprep.subr.mxu0 0.0
        %3746 = vmatpush1.msra.mxu0 0.0
        %3747 = vmatprep.subr.mxu0 0.0
        %3748 = vmatpush1.msra.mxu0 0.0
        %3749 = vmatprep.subr.mxu0 0.0
        %3750 = vmatpush1.msra.mxu0 0.0
        %3751 = vmatprep.subr.mxu0 0.0
        %3752 = vmatpush1.msra.mxu0 0.0
        %3753 = vmatprep.subr.mxu0 0.0
        %3754 = vmatpush1.msra.mxu0 0.0
        %3755 = vmatprep.mubr.f32.mxu0 0.0
        %3756 = vmatmul.mubr.f32.gmra.mrb[0].mxu0 %v3689
        %v3757 = vpop.f32.mrb[0].mxu0
        %v3758 = vadd.f32 %v3400, %v3757
        %v3759 = vpop.f32.mrb[0].mxu0
        %v3760 = vadd.f32 %v3402, %v3759
        %3761 = vdwg.mxu0
        %3762 = vmatprep.subr.mxu0 %v3223
        %3763 = vmatpush1.msra.mxu0 %v3222
        %3764 = vmatprep.subr.mxu0 %v3233
        %3765 = vmatpush1.msra.mxu0 %v3232
        %3766 = vmatprep.subr.mxu0 %v3243
        %3767 = vmatpush1.msra.mxu0 %v3242
        %3768 = vmatprep.subr.mxu0 %v3253
        %3769 = vmatpush1.msra.mxu0 %v3252
        %3770 = vmatprep.subr.mxu0 %v3263
        %3771 = vmatpush1.msra.mxu0 %v3262
        %3772 = vmatprep.subr.mxu0 %v3273
        %3773 = vmatpush1.msra.mxu0 %v3272
        %3774 = vmatprep.subr.mxu0 %v3283
        %3775 = vmatpush1.msra.mxu0 %v3282
        %3776 = vmatprep.subr.mxu0 %v3293
        %3777 = vmatpush1.msra.mxu0 %v3292
        %3778 = vmatprep.subr.mxu0 %v3303
        %3779 = vmatpush1.msra.mxu0 %v3302
        %3780 = vmatprep.subr.mxu0 0.0
        %3781 = vmatpush1.msra.mxu0 0.0
        %3782 = vmatprep.subr.mxu0 0.0
        %3783 = vmatpush1.msra.mxu0 0.0
        %3784 = vmatprep.subr.mxu0 0.0
        %3785 = vmatpush1.msra.mxu0 0.0
        %3786 = vmatprep.subr.mxu0 0.0
        %3787 = vmatpush1.msra.mxu0 0.0
        %3788 = vmatprep.subr.mxu0 0.0
        %3789 = vmatpush1.msra.mxu0 0.0
        %3790 = vmatprep.subr.mxu0 0.0
        %3791 = vmatpush1.msra.mxu0 0.0
        %3792 = vmatprep.subr.mxu0 0.0
        %3793 = vmatpush1.msra.mxu0 0.0
        %3794 = vmatprep.subr.mxu0 0.0
        %3795 = vmatpush1.msra.mxu0 0.0
        %3796 = vmatprep.subr.mxu0 0.0
        %3797 = vmatpush1.msra.mxu0 0.0
        %3798 = vmatprep.subr.mxu0 0.0
        %3799 = vmatpush1.msra.mxu0 0.0
        %3800 = vmatprep.subr.mxu0 0.0
        %3801 = vmatpush1.msra.mxu0 0.0
        %3802 = vmatprep.subr.mxu0 0.0
        %3803 = vmatpush1.msra.mxu0 0.0
        %3804 = vmatprep.subr.mxu0 0.0
        %3805 = vmatpush1.msra.mxu0 0.0
        %3806 = vmatprep.subr.mxu0 0.0
        %3807 = vmatpush1.msra.mxu0 0.0
        %3808 = vmatprep.subr.mxu0 0.0
        %3809 = vmatpush1.msra.mxu0 0.0
        %3810 = vmatprep.subr.mxu0 0.0
        %3811 = vmatpush1.msra.mxu0 0.0
        %3812 = vmatprep.subr.mxu0 0.0
        %3813 = vmatpush1.msra.mxu0 0.0
        %3814 = vmatprep.subr.mxu0 0.0
        %3815 = vmatpush1.msra.mxu0 0.0
        %3816 = vmatprep.subr.mxu0 0.0
        %3817 = vmatpush1.msra.mxu0 0.0
        %3818 = vmatprep.subr.mxu0 0.0
        %3819 = vmatpush1.msra.mxu0 0.0
        %3820 = vmatprep.subr.mxu0 0.0
        %3821 = vmatpush1.msra.mxu0 0.0
        %3822 = vmatprep.subr.mxu0 0.0
        %3823 = vmatpush1.msra.mxu0 0.0
        %3824 = vmatprep.subr.mxu0 0.0
        %3825 = vmatpush1.msra.mxu0 0.0
        %3826 = vmatprep.mubr.f32.mxu0 0.0
        %3827 = vmatmul.mubr.f32.gmra.mrb[0].mxu0 %v3689
        %v3828 = vpop.f32.mrb[0].mxu0
        %v3829 = vadd.f32 %v3471, %v3828
        %v3830 = vpop.f32.mrb[0].mxu0
        %v3831 = vadd.f32 %v3473, %v3830
        %3832 = vdwg.mxu0
        %3833 = vmatprep.subr.mxu0 %v3225
        %3834 = vmatpush1.msra.mxu0 %v3224
        %3835 = vmatprep.subr.mxu0 %v3235
        %3836 = vmatpush1.msra.mxu0 %v3234
        %3837 = vmatprep.subr.mxu0 %v3245
        %3838 = vmatpush1.msra.mxu0 %v3244
        %3839 = vmatprep.subr.mxu0 %v3255
        %3840 = vmatpush1.msra.mxu0 %v3254
        %3841 = vmatprep.subr.mxu0 %v3265
        %3842 = vmatpush1.msra.mxu0 %v3264
        %3843 = vmatprep.subr.mxu0 %v3275
        %3844 = vmatpush1.msra.mxu0 %v3274
        %3845 = vmatprep.subr.mxu0 %v3285
        %3846 = vmatpush1.msra.mxu0 %v3284
        %3847 = vmatprep.subr.mxu0 %v3295
        %3848 = vmatpush1.msra.mxu0 %v3294
        %3849 = vmatprep.subr.mxu0 %v3305
        %3850 = vmatpush1.msra.mxu0 %v3304
        %3851 = vmatprep.subr.mxu0 0.0
        %3852 = vmatpush1.msra.mxu0 0.0
        %3853 = vmatprep.subr.mxu0 0.0
        %3854 = vmatpush1.msra.mxu0 0.0
        %3855 = vmatprep.subr.mxu0 0.0
        %3856 = vmatpush1.msra.mxu0 0.0
        %3857 = vmatprep.subr.mxu0 0.0
        %3858 = vmatpush1.msra.mxu0 0.0
        %3859 = vmatprep.subr.mxu0 0.0
        %3860 = vmatpush1.msra.mxu0 0.0
        %3861 = vmatprep.subr.mxu0 0.0
        %3862 = vmatpush1.msra.mxu0 0.0
        %3863 = vmatprep.subr.mxu0 0.0
        %3864 = vmatpush1.msra.mxu0 0.0
        %3865 = vmatprep.subr.mxu0 0.0
        %3866 = vmatpush1.msra.mxu0 0.0
        %3867 = vmatprep.subr.mxu0 0.0
        %3868 = vmatpush1.msra.mxu0 0.0
        %3869 = vmatprep.subr.mxu0 0.0
        %3870 = vmatpush1.msra.mxu0 0.0
        %3871 = vmatprep.subr.mxu0 0.0
        %3872 = vmatpush1.msra.mxu0 0.0
        %3873 = vmatprep.subr.mxu0 0.0
        %3874 = vmatpush1.msra.mxu0 0.0
        %3875 = vmatprep.subr.mxu0 0.0
        %3876 = vmatpush1.msra.mxu0 0.0
        %3877 = vmatprep.subr.mxu0 0.0
        %3878 = vmatpush1.msra.mxu0 0.0
        %3879 = vmatprep.subr.mxu0 0.0
        %3880 = vmatpush1.msra.mxu0 0.0
        %3881 = vmatprep.subr.mxu0 0.0
        %3882 = vmatpush1.msra.mxu0 0.0
        %3883 = vmatprep.subr.mxu0 0.0
        %3884 = vmatpush1.msra.mxu0 0.0
        %3885 = vmatprep.subr.mxu0 0.0
        %3886 = vmatpush1.msra.mxu0 0.0
        %3887 = vmatprep.subr.mxu0 0.0
        %3888 = vmatpush1.msra.mxu0 0.0
        %3889 = vmatprep.subr.mxu0 0.0
        %3890 = vmatpush1.msra.mxu0 0.0
        %3891 = vmatprep.subr.mxu0 0.0
        %3892 = vmatpush1.msra.mxu0 0.0
        %3893 = vmatprep.subr.mxu0 0.0
        %3894 = vmatpush1.msra.mxu0 0.0
        %3895 = vmatprep.subr.mxu0 0.0
        %3896 = vmatpush1.msra.mxu0 0.0
        %3897 = vmatprep.mubr.f32.mxu0 0.0
        %3898 = vmatmul.mubr.f32.gmra.mrb[0].mxu0 %v3689
        %v3899 = vpop.f32.mrb[0].mxu0
        %v3900 = vadd.f32 %v3542, %v3899
        %v3901 = vpop.f32.mrb[0].mxu0
        %v3902 = vadd.f32 %v3544, %v3901
        %3903 = vdwg.mxu0
        %3904 = vmatprep.subr.mxu0 %v3227
        %3905 = vmatpush1.msra.mxu0 %v3226
        %3906 = vmatprep.subr.mxu0 %v3237
        %3907 = vmatpush1.msra.mxu0 %v3236
        %3908 = vmatprep.subr.mxu0 %v3247
        %3909 = vmatpush1.msra.mxu0 %v3246
        %3910 = vmatprep.subr.mxu0 %v3257
        %3911 = vmatpush1.msra.mxu0 %v3256
        %3912 = vmatprep.subr.mxu0 %v3267
        %3913 = vmatpush1.msra.mxu0 %v3266
        %3914 = vmatprep.subr.mxu0 %v3277
        %3915 = vmatpush1.msra.mxu0 %v3276
        %3916 = vmatprep.subr.mxu0 %v3287
        %3917 = vmatpush1.msra.mxu0 %v3286
        %3918 = vmatprep.subr.mxu0 %v3297
        %3919 = vmatpush1.msra.mxu0 %v3296
        %3920 = vmatprep.subr.mxu0 %v3307
        %3921 = vmatpush1.msra.mxu0 %v3306
        %3922 = vmatprep.subr.mxu0 0.0
        %3923 = vmatpush1.msra.mxu0 0.0
        %3924 = vmatprep.subr.mxu0 0.0
        %3925 = vmatpush1.msra.mxu0 0.0
        %3926 = vmatprep.subr.mxu0 0.0
        %3927 = vmatpush1.msra.mxu0 0.0
        %3928 = vmatprep.subr.mxu0 0.0
        %3929 = vmatpush1.msra.mxu0 0.0
        %3930 = vmatprep.subr.mxu0 0.0
        %3931 = vmatpush1.msra.mxu0 0.0
        %3932 = vmatprep.subr.mxu0 0.0
        %3933 = vmatpush1.msra.mxu0 0.0
        %3934 = vmatprep.subr.mxu0 0.0
        %3935 = vmatpush1.msra.mxu0 0.0
        %3936 = vmatprep.subr.mxu0 0.0
        %3937 = vmatpush1.msra.mxu0 0.0
        %3938 = vmatprep.subr.mxu0 0.0
        %3939 = vmatpush1.msra.mxu0 0.0
        %3940 = vmatprep.subr.mxu0 0.0
        %3941 = vmatpush1.msra.mxu0 0.0
        %3942 = vmatprep.subr.mxu0 0.0
        %3943 = vmatpush1.msra.mxu0 0.0
        %3944 = vmatprep.subr.mxu0 0.0
        %3945 = vmatpush1.msra.mxu0 0.0
        %3946 = vmatprep.subr.mxu0 0.0
        %3947 = vmatpush1.msra.mxu0 0.0
        %3948 = vmatprep.subr.mxu0 0.0
        %3949 = vmatpush1.msra.mxu0 0.0
        %3950 = vmatprep.subr.mxu0 0.0
        %3951 = vmatpush1.msra.mxu0 0.0
        %3952 = vmatprep.subr.mxu0 0.0
        %3953 = vmatpush1.msra.mxu0 0.0
        %3954 = vmatprep.subr.mxu0 0.0
        %3955 = vmatpush1.msra.mxu0 0.0
        %3956 = vmatprep.subr.mxu0 0.0
        %3957 = vmatpush1.msra.mxu0 0.0
        %3958 = vmatprep.subr.mxu0 0.0
        %3959 = vmatpush1.msra.mxu0 0.0
        %3960 = vmatprep.subr.mxu0 0.0
        %3961 = vmatpush1.msra.mxu0 0.0
        %3962 = vmatprep.subr.mxu0 0.0
        %3963 = vmatpush1.msra.mxu0 0.0
        %3964 = vmatprep.subr.mxu0 0.0
        %3965 = vmatpush1.msra.mxu0 0.0
        %3966 = vmatprep.subr.mxu0 0.0
        %3967 = vmatpush1.msra.mxu0 0.0
        %3968 = vmatprep.mubr.f32.mxu0 0.0
        %3969 = vmatmul.mubr.f32.gmra.mrb[0].mxu0 %v3689
        %v3970 = vpop.f32.mrb[0].mxu0
        %v3971 = vadd.f32 %v3613, %v3970
        %v3972 = vpop.f32.mrb[0].mxu0
        %v3973 = vadd.f32 %v3615, %v3972
        %3974 = vdwg.mxu0
        %3975 = vmatprep.subr.mxu0 %v3229
        %3976 = vmatpush1.msra.mxu0 %v3228
        %3977 = vmatprep.subr.mxu0 %v3239
        %3978 = vmatpush1.msra.mxu0 %v3238
        %3979 = vmatprep.subr.mxu0 %v3249
        %3980 = vmatpush1.msra.mxu0 %v3248
        %3981 = vmatprep.subr.mxu0 %v3259
        %3982 = vmatpush1.msra.mxu0 %v3258
        %3983 = vmatprep.subr.mxu0 %v3269
        %3984 = vmatpush1.msra.mxu0 %v3268
        %3985 = vmatprep.subr.mxu0 %v3279
        %3986 = vmatpush1.msra.mxu0 %v3278
        %3987 = vmatprep.subr.mxu0 %v3289
        %3988 = vmatpush1.msra.mxu0 %v3288
        %3989 = vmatprep.subr.mxu0 %v3299
        %3990 = vmatpush1.msra.mxu0 %v3298
        %3991 = vmatprep.subr.mxu0 %v3309
        %3992 = vmatpush1.msra.mxu0 %v3308
        %3993 = vmatprep.subr.mxu0 0.0
        %3994 = vmatpush1.msra.mxu0 0.0
        %3995 = vmatprep.subr.mxu0 0.0
        %3996 = vmatpush1.msra.mxu0 0.0
        %3997 = vmatprep.subr.mxu0 0.0
        %3998 = vmatpush1.msra.mxu0 0.0
        %3999 = vmatprep.subr.mxu0 0.0
        %4000 = vmatpush1.msra.mxu0 0.0
        %4001 = vmatprep.subr.mxu0 0.0
        %4002 = vmatpush1.msra.mxu0 0.0
        %4003 = vmatprep.subr.mxu0 0.0
        %4004 = vmatpush1.msra.mxu0 0.0
        %4005 = vmatprep.subr.mxu0 0.0
        %4006 = vmatpush1.msra.mxu0 0.0
        %4007 = vmatprep.subr.mxu0 0.0
        %4008 = vmatpush1.msra.mxu0 0.0
        %4009 = vmatprep.subr.mxu0 0.0
        %4010 = vmatpush1.msra.mxu0 0.0
        %4011 = vmatprep.subr.mxu0 0.0
        %4012 = vmatpush1.msra.mxu0 0.0
        %4013 = vmatprep.subr.mxu0 0.0
        %4014 = vmatpush1.msra.mxu0 0.0
        %4015 = vmatprep.subr.mxu0 0.0
        %4016 = vmatpush1.msra.mxu0 0.0
        %4017 = vmatprep.subr.mxu0 0.0
        %4018 = vmatpush1.msra.mxu0 0.0
        %4019 = vmatprep.subr.mxu0 0.0
        %4020 = vmatpush1.msra.mxu0 0.0
        %4021 = vmatprep.subr.mxu0 0.0
        %4022 = vmatpush1.msra.mxu0 0.0
        %4023 = vmatprep.subr.mxu0 0.0
        %4024 = vmatpush1.msra.mxu0 0.0
        %4025 = vmatprep.subr.mxu0 0.0
        %4026 = vmatpush1.msra.mxu0 0.0
        %4027 = vmatprep.subr.mxu0 0.0
        %4028 = vmatpush1.msra.mxu0 0.0
        %4029 = vmatprep.subr.mxu0 0.0
        %4030 = vmatpush1.msra.mxu0 0.0
        %4031 = vmatprep.subr.mxu0 0.0
        %4032 = vmatpush1.msra.mxu0 0.0
        %4033 = vmatprep.subr.mxu0 0.0
        %4034 = vmatpush1.msra.mxu0 0.0
        %4035 = vmatprep.subr.mxu0 0.0
        %4036 = vmatpush1.msra.mxu0 0.0
        %4037 = vmatprep.subr.mxu0 0.0
        %4038 = vmatpush1.msra.mxu0 0.0
        %4039 = vmatprep.mubr.f32.mxu0 0.0
        %4040 = vmatmul.mubr.f32.gmra.mrb[0].mxu0 %v3689
        %v4041 = vpop.f32.mrb[0].mxu0
        %v4042 = vadd.f32 %v3684, %v4041
        %v4043 = vpop.f32.mrb[0].mxu0
        %v4044 = vadd.f32 %v3686, %v4043
        %4045 = vdwg.mxu0
        %s4046 = scalar_lea.vmem %s3, 16
        %v4047 = vld [vmem:[%s4046] sm:$0xff]
        %v4048 = vld [vmem:[#allocation3 + $0x20] sm:$0xff]
        %v4049 = vld [vmem:[#allocation3 + $0x28] sm:$0xff]
        %v4050 = vld [vmem:[#allocation3 + $0x30] sm:$0xff]
        %v4051 = vld [vmem:[#allocation3 + $0x38] sm:$0xff]
        %v4052 = vld [vmem:[#allocation3 + $0x40] sm:$0xff]
        %v4053 = vld [vmem:[#allocation3 + $0x48] sm:$0xff]
        %v4054 = vld [vmem:[#allocation3 + $0x50] sm:$0xff]
        %v4055 = vld [vmem:[#allocation3 + $0x58] sm:$0xff]
        %v4056 = vld [vmem:[#allocation3 + $0x60] sm:$0xff]
        %v4057 = vld [vmem:[#allocation3 + $0x68] sm:$0xff]
        %v4058 = vld [vmem:[#allocation3 + $0x90] sm:$0xff]
        %v4059 = vld [vmem:[#allocation3 + $0x98] sm:$0xff]
        %v4060 = vld [vmem:[#allocation3 + $0xa0] sm:$0xff]
        %v4061 = vld [vmem:[#allocation3 + $0xa8] sm:$0xff]
        %v4062 = vld [vmem:[#allocation3 + $0xb0] sm:$0xff]
        %v4063 = vld [vmem:[#allocation3 + $0xb8] sm:$0xff]
        %v4064 = vld [vmem:[#allocation3 + $0xc0] sm:$0xff]
        %v4065 = vld [vmem:[#allocation3 + $0xc8] sm:$0xff]
        %v4066 = vld [vmem:[#allocation3 + $0xd0] sm:$0xff]
        %v4067 = vld [vmem:[#allocation3 + $0xd8] sm:$0xff]
        %v4068 = vld [vmem:[#allocation3 + $0x100] sm:$0xff]
        %v4069 = vld [vmem:[#allocation3 + $0x108] sm:$0xff]
        %v4070 = vld [vmem:[#allocation3 + $0x110] sm:$0xff]
        %v4071 = vld [vmem:[#allocation3 + $0x118] sm:$0xff]
        %v4072 = vld [vmem:[#allocation3 + $0x120] sm:$0xff]
        %v4073 = vld [vmem:[#allocation3 + $0x128] sm:$0xff]
        %v4074 = vld [vmem:[#allocation3 + $0x130] sm:$0xff]
        %v4075 = vld [vmem:[#allocation3 + $0x138] sm:$0xff]
        %v4076 = vld [vmem:[#allocation3 + $0x140] sm:$0xff]
        %v4077 = vld [vmem:[#allocation3 + $0x148] sm:$0xff]
        %v4078 = vld [vmem:[#allocation3 + $0x170] sm:$0xff]
        %v4079 = vld [vmem:[#allocation3 + $0x178] sm:$0xff]
        %v4080 = vld [vmem:[#allocation3 + $0x180] sm:$0xff]
        %v4081 = vld [vmem:[#allocation3 + $0x188] sm:$0xff]
        %v4082 = vld [vmem:[#allocation3 + $0x190] sm:$0xff]
        %v4083 = vld [vmem:[#allocation3 + $0x198] sm:$0xff]
        %v4084 = vld [vmem:[#allocation3 + $0x1a0] sm:$0xff]
        %v4085 = vld [vmem:[#allocation3 + $0x1a8] sm:$0xff]
        %v4086 = vld [vmem:[#allocation3 + $0x1b0] sm:$0xff]
        %v4087 = vld [vmem:[#allocation3 + $0x1b8] sm:$0xff]
        %v4088 = vld [vmem:[#allocation3 + $0x1e0] sm:$0xff]
        %v4089 = vld [vmem:[#allocation3 + $0x1e8] sm:$0xff]
        %v4090 = vld [vmem:[#allocation3 + $0x1f0] sm:$0xff]
        %v4091 = vld [vmem:[#allocation3 + $0x1f8] sm:$0xff]
        %v4092 = vld [vmem:[#allocation3 + $0x200] sm:$0xff]
        %v4093 = vld [vmem:[#allocation3 + $0x208] sm:$0xff]
        %v4094 = vld [vmem:[#allocation3 + $0x210] sm:$0xff]
        %v4095 = vld [vmem:[#allocation3 + $0x218] sm:$0xff]
        %v4096 = vld [vmem:[#allocation3 + $0x220] sm:$0xff]
        %v4097 = vld [vmem:[#allocation3 + $0x228] sm:$0xff]
        %v4098 = vld [vmem:[#allocation3 + $0x250] sm:$0xff]
        %v4099 = vld [vmem:[#allocation3 + $0x258] sm:$0xff]
        %v4100 = vld [vmem:[#allocation3 + $0x260] sm:$0xff]
        %v4101 = vld [vmem:[#allocation3 + $0x268] sm:$0xff]
        %v4102 = vld [vmem:[#allocation3 + $0x270] sm:$0xff]
        %v4103 = vld [vmem:[#allocation3 + $0x278] sm:$0xff]
        %v4104 = vld [vmem:[#allocation3 + $0x280] sm:$0xff]
        %v4105 = vld [vmem:[#allocation3 + $0x288] sm:$0xff]
        %v4106 = vld [vmem:[#allocation3 + $0x290] sm:$0xff]
        %v4107 = vld [vmem:[#allocation3 + $0x298] sm:$0xff]
        %v4108 = vld [vmem:[#allocation3 + $0x2c0] sm:$0xff]
        %v4109 = vld [vmem:[#allocation3 + $0x2c8] sm:$0xff]
        %v4110 = vld [vmem:[#allocation3 + $0x2d0] sm:$0xff]
        %v4111 = vld [vmem:[#allocation3 + $0x2d8] sm:$0xff]
        %v4112 = vld [vmem:[#allocation3 + $0x2e0] sm:$0xff]
        %v4113 = vld [vmem:[#allocation3 + $0x2e8] sm:$0xff]
        %v4114 = vld [vmem:[#allocation3 + $0x2f0] sm:$0xff]
        %v4115 = vld [vmem:[#allocation3 + $0x2f8] sm:$0xff]
        %v4116 = vld [vmem:[#allocation3 + $0x300] sm:$0xff]
        %v4117 = vld [vmem:[#allocation3 + $0x308] sm:$0xff]
        %v4118 = vld [vmem:[#allocation3 + $0x330] sm:$0xff]
        %v4119 = vld [vmem:[#allocation3 + $0x338] sm:$0xff]
        %v4120 = vld [vmem:[#allocation3 + $0x340] sm:$0xff]
        %v4121 = vld [vmem:[#allocation3 + $0x348] sm:$0xff]
        %v4122 = vld [vmem:[#allocation3 + $0x350] sm:$0xff]
        %v4123 = vld [vmem:[#allocation3 + $0x358] sm:$0xff]
        %v4124 = vld [vmem:[#allocation3 + $0x360] sm:$0xff]
        %v4125 = vld [vmem:[#allocation3 + $0x368] sm:$0xff]
        %v4126 = vld [vmem:[#allocation3 + $0x370] sm:$0xff]
        %v4127 = vld [vmem:[#allocation3 + $0x378] sm:$0xff]
        %v4128 = vld [vmem:[#allocation3 + $0x3a0] sm:$0xff]
        %v4129 = vld [vmem:[#allocation3 + $0x3a8] sm:$0xff]
        %v4130 = vld [vmem:[#allocation3 + $0x3b0] sm:$0xff]
        %v4131 = vld [vmem:[#allocation3 + $0x3b8] sm:$0xff]
        %v4132 = vld [vmem:[#allocation3 + $0x3c0] sm:$0xff]
        %v4133 = vld [vmem:[#allocation3 + $0x3c8] sm:$0xff]
        %v4134 = vld [vmem:[#allocation3 + $0x3d0] sm:$0xff]
        %v4135 = vld [vmem:[#allocation3 + $0x3d8] sm:$0xff]
        %v4136 = vld [vmem:[#allocation3 + $0x3e0] sm:$0xff]
        %v4137 = vld [vmem:[#allocation3 + $0x3e8] sm:$0xff]
        %v4139 = vsel %vm880, %v4047, 0
        %4141 = vmatprep.subr.mxu0 %v4049
        %4142 = vmatpush1.msra.mxu0 %v4048
        %4143 = vmatprep.subr.mxu0 %v4059
        %4144 = vmatpush1.msra.mxu0 %v4058
        %4145 = vmatprep.subr.mxu0 %v4069
        %4146 = vmatpush1.msra.mxu0 %v4068
        %4147 = vmatprep.subr.mxu0 %v4079
        %4148 = vmatpush1.msra.mxu0 %v4078
        %4149 = vmatprep.subr.mxu0 %v4089
        %4150 = vmatpush1.msra.mxu0 %v4088
        %4151 = vmatprep.subr.mxu0 %v4099
        %4152 = vmatpush1.msra.mxu0 %v4098
        %4153 = vmatprep.subr.mxu0 %v4109
        %4154 = vmatpush1.msra.mxu0 %v4108
        %4155 = vmatprep.subr.mxu0 %v4119
        %4156 = vmatpush1.msra.mxu0 %v4118
        %4157 = vmatprep.subr.mxu0 %v4129
        %4158 = vmatpush1.msra.mxu0 %v4128
        %4159 = vmatprep.subr.mxu0 0.0
        %4160 = vmatpush1.msra.mxu0 0.0
        %4161 = vmatprep.subr.mxu0 0.0
        %4162 = vmatpush1.msra.mxu0 0.0
        %4163 = vmatprep.subr.mxu0 0.0
        %4164 = vmatpush1.msra.mxu0 0.0
        %4165 = vmatprep.subr.mxu0 0.0
        %4166 = vmatpush1.msra.mxu0 0.0
        %4167 = vmatprep.subr.mxu0 0.0
        %4168 = vmatpush1.msra.mxu0 0.0
        %4169 = vmatprep.subr.mxu0 0.0
        %4170 = vmatpush1.msra.mxu0 0.0
        %4171 = vmatprep.subr.mxu0 0.0
        %4172 = vmatpush1.msra.mxu0 0.0
        %4173 = vmatprep.subr.mxu0 0.0
        %4174 = vmatpush1.msra.mxu0 0.0
        %4175 = vmatprep.subr.mxu0 0.0
        %4176 = vmatpush1.msra.mxu0 0.0
        %4177 = vmatprep.subr.mxu0 0.0
        %4178 = vmatpush1.msra.mxu0 0.0
        %4179 = vmatprep.subr.mxu0 0.0
        %4180 = vmatpush1.msra.mxu0 0.0
        %4181 = vmatprep.subr.mxu0 0.0
        %4182 = vmatpush1.msra.mxu0 0.0
        %4183 = vmatprep.subr.mxu0 0.0
        %4184 = vmatpush1.msra.mxu0 0.0
        %4185 = vmatprep.subr.mxu0 0.0
        %4186 = vmatpush1.msra.mxu0 0.0
        %4187 = vmatprep.subr.mxu0 0.0
        %4188 = vmatpush1.msra.mxu0 0.0
        %4189 = vmatprep.subr.mxu0 0.0
        %4190 = vmatpush1.msra.mxu0 0.0
        %4191 = vmatprep.subr.mxu0 0.0
        %4192 = vmatpush1.msra.mxu0 0.0
        %4193 = vmatprep.subr.mxu0 0.0
        %4194 = vmatpush1.msra.mxu0 0.0
        %4195 = vmatprep.subr.mxu0 0.0
        %4196 = vmatpush1.msra.mxu0 0.0
        %4197 = vmatprep.subr.mxu0 0.0
        %4198 = vmatpush1.msra.mxu0 0.0
        %4199 = vmatprep.subr.mxu0 0.0
        %4200 = vmatpush1.msra.mxu0 0.0
        %4201 = vmatprep.subr.mxu0 0.0
        %4202 = vmatpush1.msra.mxu0 0.0
        %4203 = vmatprep.subr.mxu0 0.0
        %4204 = vmatpush1.msra.mxu0 0.0
        %4205 = vmatprep.mubr.f32.mxu0 0.0
        %4206 = vmatmul.mubr.f32.gmra.mrb[0].mxu0 %v4139
        %v4207 = vpop.f32.mrb[0].mxu0
        %v4208 = vadd.f32 0.0, %v4207
        %v4209 = vpop.f32.mrb[0].mxu0
        %v4210 = vadd.f32 0.0, %v4209
        %4211 = vdwg.mxu0
        %4212 = vmatprep.subr.mxu0 %v4051
        %4213 = vmatpush1.msra.mxu0 %v4050
        %4214 = vmatprep.subr.mxu0 %v4061
        %4215 = vmatpush1.msra.mxu0 %v4060
        %4216 = vmatprep.subr.mxu0 %v4071
        %4217 = vmatpush1.msra.mxu0 %v4070
        %4218 = vmatprep.subr.mxu0 %v4081
        %4219 = vmatpush1.msra.mxu0 %v4080
        %4220 = vmatprep.subr.mxu0 %v4091
        %4221 = vmatpush1.msra.mxu0 %v4090
        %4222 = vmatprep.subr.mxu0 %v4101
        %4223 = vmatpush1.msra.mxu0 %v4100
        %4224 = vmatprep.subr.mxu0 %v4111
        %4225 = vmatpush1.msra.mxu0 %v4110
        %4226 = vmatprep.subr.mxu0 %v4121
        %4227 = vmatpush1.msra.mxu0 %v4120
        %4228 = vmatprep.subr.mxu0 %v4131
        %4229 = vmatpush1.msra.mxu0 %v4130
        %4230 = vmatprep.subr.mxu0 0.0
        %4231 = vmatpush1.msra.mxu0 0.0
        %4232 = vmatprep.subr.mxu0 0.0
        %4233 = vmatpush1.msra.mxu0 0.0
        %4234 = vmatprep.subr.mxu0 0.0
        %4235 = vmatpush1.msra.mxu0 0.0
        %4236 = vmatprep.subr.mxu0 0.0
        %4237 = vmatpush1.msra.mxu0 0.0
        %4238 = vmatprep.subr.mxu0 0.0
        %4239 = vmatpush1.msra.mxu0 0.0
        %4240 = vmatprep.subr.mxu0 0.0
        %4241 = vmatpush1.msra.mxu0 0.0
        %4242 = vmatprep.subr.mxu0 0.0
        %4243 = vmatpush1.msra.mxu0 0.0
        %4244 = vmatprep.subr.mxu0 0.0
        %4245 = vmatpush1.msra.mxu0 0.0
        %4246 = vmatprep.subr.mxu0 0.0
        %4247 = vmatpush1.msra.mxu0 0.0
        %4248 = vmatprep.subr.mxu0 0.0
        %4249 = vmatpush1.msra.mxu0 0.0
        %4250 = vmatprep.subr.mxu0 0.0
        %4251 = vmatpush1.msra.mxu0 0.0
        %4252 = vmatprep.subr.mxu0 0.0
        %4253 = vmatpush1.msra.mxu0 0.0
        %4254 = vmatprep.subr.mxu0 0.0
        %4255 = vmatpush1.msra.mxu0 0.0
        %4256 = vmatprep.subr.mxu0 0.0
        %4257 = vmatpush1.msra.mxu0 0.0
        %4258 = vmatprep.subr.mxu0 0.0
        %4259 = vmatpush1.msra.mxu0 0.0
        %4260 = vmatprep.subr.mxu0 0.0
        %4261 = vmatpush1.msra.mxu0 0.0
        %4262 = vmatprep.subr.mxu0 0.0
        %4263 = vmatpush1.msra.mxu0 0.0
        %4264 = vmatprep.subr.mxu0 0.0
        %4265 = vmatpush1.msra.mxu0 0.0
        %4266 = vmatprep.subr.mxu0 0.0
        %4267 = vmatpush1.msra.mxu0 0.0
        %4268 = vmatprep.subr.mxu0 0.0
        %4269 = vmatpush1.msra.mxu0 0.0
        %4270 = vmatprep.subr.mxu0 0.0
        %4271 = vmatpush1.msra.mxu0 0.0
        %4272 = vmatprep.subr.mxu0 0.0
        %4273 = vmatpush1.msra.mxu0 0.0
        %4274 = vmatprep.subr.mxu0 0.0
        %4275 = vmatpush1.msra.mxu0 0.0
        %4276 = vmatprep.mubr.f32.mxu0 0.0
        %4277 = vmatmul.mubr.f32.gmra.mrb[0].mxu0 %v4139
        %v4278 = vpop.f32.mrb[0].mxu0
        %v4279 = vadd.f32 0.0, %v4278
        %v4280 = vpop.f32.mrb[0].mxu0
        %v4281 = vadd.f32 0.0, %v4280
        %4282 = vdwg.mxu0
        %4283 = vmatprep.subr.mxu0 %v4053
        %4284 = vmatpush1.msra.mxu0 %v4052
        %4285 = vmatprep.subr.mxu0 %v4063
        %4286 = vmatpush1.msra.mxu0 %v4062
        %4287 = vmatprep.subr.mxu0 %v4073
        %4288 = vmatpush1.msra.mxu0 %v4072
        %4289 = vmatprep.subr.mxu0 %v4083
        %4290 = vmatpush1.msra.mxu0 %v4082
        %4291 = vmatprep.subr.mxu0 %v4093
        %4292 = vmatpush1.msra.mxu0 %v4092
        %4293 = vmatprep.subr.mxu0 %v4103
        %4294 = vmatpush1.msra.mxu0 %v4102
        %4295 = vmatprep.subr.mxu0 %v4113
        %4296 = vmatpush1.msra.mxu0 %v4112
        %4297 = vmatprep.subr.mxu0 %v4123
        %4298 = vmatpush1.msra.mxu0 %v4122
        %4299 = vmatprep.subr.mxu0 %v4133
        %4300 = vmatpush1.msra.mxu0 %v4132
        %4301 = vmatprep.subr.mxu0 0.0
        %4302 = vmatpush1.msra.mxu0 0.0
        %4303 = vmatprep.subr.mxu0 0.0
        %4304 = vmatpush1.msra.mxu0 0.0
        %4305 = vmatprep.subr.mxu0 0.0
        %4306 = vmatpush1.msra.mxu0 0.0
        %4307 = vmatprep.subr.mxu0 0.0
        %4308 = vmatpush1.msra.mxu0 0.0
        %4309 = vmatprep.subr.mxu0 0.0
        %4310 = vmatpush1.msra.mxu0 0.0
        %4311 = vmatprep.subr.mxu0 0.0
        %4312 = vmatpush1.msra.mxu0 0.0
        %4313 = vmatprep.subr.mxu0 0.0
        %4314 = vmatpush1.msra.mxu0 0.0
        %4315 = vmatprep.subr.mxu0 0.0
        %4316 = vmatpush1.msra.mxu0 0.0
        %4317 = vmatprep.subr.mxu0 0.0
        %4318 = vmatpush1.msra.mxu0 0.0
        %4319 = vmatprep.subr.mxu0 0.0
        %4320 = vmatpush1.msra.mxu0 0.0
        %4321 = vmatprep.subr.mxu0 0.0
        %4322 = vmatpush1.msra.mxu0 0.0
        %4323 = vmatprep.subr.mxu0 0.0
        %4324 = vmatpush1.msra.mxu0 0.0
        %4325 = vmatprep.subr.mxu0 0.0
        %4326 = vmatpush1.msra.mxu0 0.0
        %4327 = vmatprep.subr.mxu0 0.0
        %4328 = vmatpush1.msra.mxu0 0.0
        %4329 = vmatprep.subr.mxu0 0.0
        %4330 = vmatpush1.msra.mxu0 0.0
        %4331 = vmatprep.subr.mxu0 0.0
        %4332 = vmatpush1.msra.mxu0 0.0
        %4333 = vmatprep.subr.mxu0 0.0
        %4334 = vmatpush1.msra.mxu0 0.0
        %4335 = vmatprep.subr.mxu0 0.0
        %4336 = vmatpush1.msra.mxu0 0.0
        %4337 = vmatprep.subr.mxu0 0.0
        %4338 = vmatpush1.msra.mxu0 0.0
        %4339 = vmatprep.subr.mxu0 0.0
        %4340 = vmatpush1.msra.mxu0 0.0
        %4341 = vmatprep.subr.mxu0 0.0
        %4342 = vmatpush1.msra.mxu0 0.0
        %4343 = vmatprep.subr.mxu0 0.0
        %4344 = vmatpush1.msra.mxu0 0.0
        %4345 = vmatprep.subr.mxu0 0.0
        %4346 = vmatpush1.msra.mxu0 0.0
        %4347 = vmatprep.mubr.f32.mxu0 0.0
        %4348 = vmatmul.mubr.f32.gmra.mrb[0].mxu0 %v4139
        %v4349 = vpop.f32.mrb[0].mxu0
        %v4350 = vadd.f32 0.0, %v4349
        %v4351 = vpop.f32.mrb[0].mxu0
        %v4352 = vadd.f32 0.0, %v4351
        %4353 = vdwg.mxu0
        %4354 = vmatprep.subr.mxu0 %v4055
        %4355 = vmatpush1.msra.mxu0 %v4054
        %4356 = vmatprep.subr.mxu0 %v4065
        %4357 = vmatpush1.msra.mxu0 %v4064
        %4358 = vmatprep.subr.mxu0 %v4075
        %4359 = vmatpush1.msra.mxu0 %v4074
        %4360 = vmatprep.subr.mxu0 %v4085
        %4361 = vmatpush1.msra.mxu0 %v4084
        %4362 = vmatprep.subr.mxu0 %v4095
        %4363 = vmatpush1.msra.mxu0 %v4094
        %4364 = vmatprep.subr.mxu0 %v4105
        %4365 = vmatpush1.msra.mxu0 %v4104
        %4366 = vmatprep.subr.mxu0 %v4115
        %4367 = vmatpush1.msra.mxu0 %v4114
        %4368 = vmatprep.subr.mxu0 %v4125
        %4369 = vmatpush1.msra.mxu0 %v4124
        %4370 = vmatprep.subr.mxu0 %v4135
        %4371 = vmatpush1.msra.mxu0 %v4134
        %4372 = vmatprep.subr.mxu0 0.0
        %4373 = vmatpush1.msra.mxu0 0.0
        %4374 = vmatprep.subr.mxu0 0.0
        %4375 = vmatpush1.msra.mxu0 0.0
        %4376 = vmatprep.subr.mxu0 0.0
        %4377 = vmatpush1.msra.mxu0 0.0
        %4378 = vmatprep.subr.mxu0 0.0
        %4379 = vmatpush1.msra.mxu0 0.0
        %4380 = vmatprep.subr.mxu0 0.0
        %4381 = vmatpush1.msra.mxu0 0.0
        %4382 = vmatprep.subr.mxu0 0.0
        %4383 = vmatpush1.msra.mxu0 0.0
        %4384 = vmatprep.subr.mxu0 0.0
        %4385 = vmatpush1.msra.mxu0 0.0
        %4386 = vmatprep.subr.mxu0 0.0
        %4387 = vmatpush1.msra.mxu0 0.0
        %4388 = vmatprep.subr.mxu0 0.0
        %4389 = vmatpush1.msra.mxu0 0.0
        %4390 = vmatprep.subr.mxu0 0.0
        %4391 = vmatpush1.msra.mxu0 0.0
        %4392 = vmatprep.subr.mxu0 0.0
        %4393 = vmatpush1.msra.mxu0 0.0
        %4394 = vmatprep.subr.mxu0 0.0
        %4395 = vmatpush1.msra.mxu0 0.0
        %4396 = vmatprep.subr.mxu0 0.0
        %4397 = vmatpush1.msra.mxu0 0.0
        %4398 = vmatprep.subr.mxu0 0.0
        %4399 = vmatpush1.msra.mxu0 0.0
        %4400 = vmatprep.subr.mxu0 0.0
        %4401 = vmatpush1.msra.mxu0 0.0
        %4402 = vmatprep.subr.mxu0 0.0
        %4403 = vmatpush1.msra.mxu0 0.0
        %4404 = vmatprep.subr.mxu0 0.0
        %4405 = vmatpush1.msra.mxu0 0.0
        %4406 = vmatprep.subr.mxu0 0.0
        %4407 = vmatpush1.msra.mxu0 0.0
        %4408 = vmatprep.subr.mxu0 0.0
        %4409 = vmatpush1.msra.mxu0 0.0
        %4410 = vmatprep.subr.mxu0 0.0
        %4411 = vmatpush1.msra.mxu0 0.0
        %4412 = vmatprep.subr.mxu0 0.0
        %4413 = vmatpush1.msra.mxu0 0.0
        %4414 = vmatprep.subr.mxu0 0.0
        %4415 = vmatpush1.msra.mxu0 0.0
        %4416 = vmatprep.subr.mxu0 0.0
        %4417 = vmatpush1.msra.mxu0 0.0
        %4418 = vmatprep.mubr.f32.mxu0 0.0
        %4419 = vmatmul.mubr.f32.gmra.mrb[0].mxu0 %v4139
        %v4420 = vpop.f32.mrb[0].mxu0
        %v4421 = vadd.f32 0.0, %v4420
        %v4422 = vpop.f32.mrb[0].mxu0
        %v4423 = vadd.f32 0.0, %v4422
        %4424 = vdwg.mxu0
        %4425 = vmatprep.subr.mxu0 %v4057
        %4426 = vmatpush1.msra.mxu0 %v4056
        %4427 = vmatprep.subr.mxu0 %v4067
        %4428 = vmatpush1.msra.mxu0 %v4066
        %4429 = vmatprep.subr.mxu0 %v4077
        %4430 = vmatpush1.msra.mxu0 %v4076
        %4431 = vmatprep.subr.mxu0 %v4087
        %4432 = vmatpush1.msra.mxu0 %v4086
        %4433 = vmatprep.subr.mxu0 %v4097
        %4434 = vmatpush1.msra.mxu0 %v4096
        %4435 = vmatprep.subr.mxu0 %v4107
        %4436 = vmatpush1.msra.mxu0 %v4106
        %4437 = vmatprep.subr.mxu0 %v4117
        %4438 = vmatpush1.msra.mxu0 %v4116
        %4439 = vmatprep.subr.mxu0 %v4127
        %4440 = vmatpush1.msra.mxu0 %v4126
        %4441 = vmatprep.subr.mxu0 %v4137
        %4442 = vmatpush1.msra.mxu0 %v4136
        %4443 = vmatprep.subr.mxu0 0.0
        %4444 = vmatpush1.msra.mxu0 0.0
        %4445 = vmatprep.subr.mxu0 0.0
        %4446 = vmatpush1.msra.mxu0 0.0
        %4447 = vmatprep.subr.mxu0 0.0
        %4448 = vmatpush1.msra.mxu0 0.0
        %4449 = vmatprep.subr.mxu0 0.0
        %4450 = vmatpush1.msra.mxu0 0.0
        %4451 = vmatprep.subr.mxu0 0.0
        %4452 = vmatpush1.msra.mxu0 0.0
        %4453 = vmatprep.subr.mxu0 0.0
        %4454 = vmatpush1.msra.mxu0 0.0
        %4455 = vmatprep.subr.mxu0 0.0
        %4456 = vmatpush1.msra.mxu0 0.0
        %4457 = vmatprep.subr.mxu0 0.0
        %4458 = vmatpush1.msra.mxu0 0.0
        %4459 = vmatprep.subr.mxu0 0.0
        %4460 = vmatpush1.msra.mxu0 0.0
        %4461 = vmatprep.subr.mxu0 0.0
        %4462 = vmatpush1.msra.mxu0 0.0
        %4463 = vmatprep.subr.mxu0 0.0
        %4464 = vmatpush1.msra.mxu0 0.0
        %4465 = vmatprep.subr.mxu0 0.0
        %4466 = vmatpush1.msra.mxu0 0.0
        %4467 = vmatprep.subr.mxu0 0.0
        %4468 = vmatpush1.msra.mxu0 0.0
        %4469 = vmatprep.subr.mxu0 0.0
        %4470 = vmatpush1.msra.mxu0 0.0
        %4471 = vmatprep.subr.mxu0 0.0
        %4472 = vmatpush1.msra.mxu0 0.0
        %4473 = vmatprep.subr.mxu0 0.0
        %4474 = vmatpush1.msra.mxu0 0.0
        %4475 = vmatprep.subr.mxu0 0.0
        %4476 = vmatpush1.msra.mxu0 0.0
        %4477 = vmatprep.subr.mxu0 0.0
        %4478 = vmatpush1.msra.mxu0 0.0
        %4479 = vmatprep.subr.mxu0 0.0
        %4480 = vmatpush1.msra.mxu0 0.0
        %4481 = vmatprep.subr.mxu0 0.0
        %4482 = vmatpush1.msra.mxu0 0.0
        %4483 = vmatprep.subr.mxu0 0.0
        %4484 = vmatpush1.msra.mxu0 0.0
        %4485 = vmatprep.subr.mxu0 0.0
        %4486 = vmatpush1.msra.mxu0 0.0
        %4487 = vmatprep.subr.mxu0 0.0
        %4488 = vmatpush1.msra.mxu0 0.0
        %4489 = vmatprep.mubr.f32.mxu0 0.0
        %4490 = vmatmul.mubr.f32.gmra.mrb[0].mxu0 %v4139
        %v4491 = vpop.f32.mrb[0].mxu0
        %v4492 = vadd.f32 0.0, %v4491
        %v4493 = vpop.f32.mrb[0].mxu0
        %v4494 = vadd.f32 0.0, %v4493
        %4495 = vdwg.mxu0
        %v4496 = vadd.f32 %v3758, %v4208
        %v4497 = vadd.f32 %v3760, %v4210
        %v4498 = vadd.f32 %v3829, %v4279
        %v4499 = vadd.f32 %v3831, %v4281
        %v4500 = vadd.f32 %v3900, %v4350
        %v4501 = vadd.f32 %v3902, %v4352
        %v4502 = vadd.f32 %v3971, %v4421
        %v4503 = vadd.f32 %v3973, %v4423
        %v4504 = vadd.f32 %v4042, %v4492
        %v4505 = vadd.f32 %v4044, %v4494
        %v4506 = vld [vmem:[%s4] sm:$0xff]
        %4508 = vset.pattern.permute.xlu0 0
        %4509 = vperm.xlu0 %4508, %v4506
        %v4510 = vpop.permute.xlu0 %4509
        %v4512 = vadd.f32 %v4496, %v4510
        %v4513 = vadd.f32 %v4497, %v4510
        %v4514 = vadd.f32 %v4498, %v4510
        %v4515 = vadd.f32 %v4499, %v4510
        %v4516 = vadd.f32 %v4500, %v4510
        %v4517 = vadd.f32 %v4501, %v4510
        %v4518 = vadd.f32 %v4502, %v4510
        %v4519 = vadd.f32 %v4503, %v4510
        %v4520 = vadd.f32 %v4504, %v4510
        %v4521 = vadd.f32 %v4505, %v4510
        %v4522 = vmax.f32 %v4512, 0.0
        %v4523 = vmax.f32 %v4513, 0.0
        %v4524 = vmax.f32 %v4514, 0.0
        %v4525 = vmax.f32 %v4515, 0.0
        %v4526 = vmax.f32 %v4516, 0.0
        %v4527 = vmax.f32 %v4517, 0.0
        %v4528 = vmax.f32 %v4518, 0.0
        %v4529 = vmax.f32 %v4519, 0.0
        %v4530 = vmax.f32 %v4520, 0.0
        %v4531 = vmax.f32 %v4521, 0.0
        %v4532 = vcombine.low %v4522, %v4526
        %v4533 = vcombine.high %v4522, %v4526
        %v4535 = vunpack.c.l.s4 1983009808
        %v4536 = vunpack.c.0.s8 %v4535
        %v4537 = vlaneseq
        %v4538 = vshrl.u32 %v4537, 7
        %v4539 = vsub.s32 %v4536, %v4538
        %v4540 = vrot.slane %v4532, %v4539
        %v4542 = vunpack.c.l.s4 1983009808
        %v4543 = vunpack.c.0.s8 %v4542
        %v4544 = vlaneseq
        %v4545 = vshrl.u32 %v4544, 7
        %v4546 = vsub.s32 %v4543, %v4545
        %v4547 = vrot.slane %v4533, %v4546
        %v4548 = vcombine.low %v4524, %v4528
        %v4549 = vcombine.high %v4524, %v4528
        %v4551 = vunpack.c.l.s4 1983009808
        %v4552 = vunpack.c.0.s8 %v4551
        %v4553 = vlaneseq
        %v4554 = vshrl.u32 %v4553, 7
        %v4555 = vsub.s32 %v4552, %v4554
        %v4556 = vrot.slane %v4548, %v4555
        %v4558 = vunpack.c.l.s4 1983009808
        %v4559 = vunpack.c.0.s8 %v4558
        %v4560 = vlaneseq
        %v4561 = vshrl.u32 %v4560, 7
        %v4562 = vsub.s32 %v4559, %v4561
        %v4563 = vrot.slane %v4549, %v4562
        %v4564 = vcombine.high %v4530, 0.0
        %v4566 = vunpack.c.l.s4 1983009808
        %v4567 = vunpack.c.0.s8 %v4566
        %v4568 = vlaneseq
        %v4569 = vshrl.u32 %v4568, 7
        %v4570 = vsub.s32 %v4567, %v4569
        %v4571 = vrot.slane %v4530, %v4570
        %v4573 = vunpack.c.l.s4 1983009808
        %v4574 = vunpack.c.0.s8 %v4573
        %v4575 = vlaneseq
        %v4576 = vshrl.u32 %v4575, 7
        %v4577 = vsub.s32 %v4574, %v4576
        %v4578 = vrot.slane %v4564, %v4577
        %v4579 = vcombine.low %v4540, %v4556
        %v4580 = vcombine.high %v4540, %v4556
        %v4582 = vunpack.c.l.s4 1934713408
        %v4583 = vunpack.c.0.s8 %v4582
        %v4584 = vlaneseq
        %v4585 = vshrl.u32 %v4584, 7
        %v4586 = vsub.s32 %v4583, %v4585
        %v4587 = vrot.slane %v4579, %v4586
        %v4589 = vunpack.c.l.s4 1934713408
        %v4590 = vunpack.c.0.s8 %v4589
        %v4591 = vlaneseq
        %v4592 = vshrl.u32 %v4591, 7
        %v4593 = vsub.s32 %v4590, %v4592
        %v4594 = vrot.slane %v4580, %v4593
        %v4595 = vcombine.low %v4547, %v4563
        %v4596 = vcombine.high %v4547, %v4563
        %v4598 = vunpack.c.l.s4 1934713408
        %v4599 = vunpack.c.0.s8 %v4598
        %v4600 = vlaneseq
        %v4601 = vshrl.u32 %v4600, 7
        %v4602 = vsub.s32 %v4599, %v4601
        %v4603 = vrot.slane %v4595, %v4602
        %v4605 = vunpack.c.l.s4 1934713408
        %v4606 = vunpack.c.0.s8 %v4605
        %v4607 = vlaneseq
        %v4608 = vshrl.u32 %v4607, 7
        %v4609 = vsub.s32 %v4606, %v4608
        %v4610 = vrot.slane %v4596, %v4609
        %v4611 = vcombine.high %v4571, 0.0
        %v4613 = vunpack.c.l.s4 1934713408
        %v4614 = vunpack.c.0.s8 %v4613
        %v4615 = vlaneseq
        %v4616 = vshrl.u32 %v4615, 7
        %v4617 = vsub.s32 %v4614, %v4616
        %v4618 = vrot.slane %v4571, %v4617
        %v4620 = vunpack.c.l.s4 1934713408
        %v4621 = vunpack.c.0.s8 %v4620
        %v4622 = vlaneseq
        %v4623 = vshrl.u32 %v4622, 7
        %v4624 = vsub.s32 %v4621, %v4623
        %v4625 = vrot.slane %v4611, %v4624
        %v4626 = vcombine.high %v4578, 0.0
        %v4628 = vunpack.c.l.s4 1934713408
        %v4629 = vunpack.c.0.s8 %v4628
        %v4630 = vlaneseq
        %v4631 = vshrl.u32 %v4630, 7
        %v4632 = vsub.s32 %v4629, %v4631
        %v4633 = vrot.slane %v4578, %v4632
        %v4635 = vunpack.c.l.s4 1934713408
        %v4636 = vunpack.c.0.s8 %v4635
        %v4637 = vlaneseq
        %v4638 = vshrl.u32 %v4637, 7
        %v4639 = vsub.s32 %v4636, %v4638
        %v4640 = vrot.slane %v4626, %v4639
        %v4641 = vcombine.low %v4587, %v4618
        %v4642 = vcombine.high %v4587, %v4618
        %v4643 = vcombine.low %v4594, %v4625
        %v4644 = vcombine.high %v4594, %v4625
        %v4645 = vcombine.low %v4603, %v4633
        %v4646 = vcombine.high %v4603, %v4633
        %v4647 = vcombine.low %v4610, %v4640
        %v4648 = vcombine.high %v4610, %v4640
        %v4649 = vcombine.low %v4523, %v4527
        %v4650 = vcombine.high %v4523, %v4527
        %v4652 = vunpack.c.l.s4 1983009808
        %v4653 = vunpack.c.0.s8 %v4652
        %v4654 = vlaneseq
        %v4655 = vshrl.u32 %v4654, 7
        %v4656 = vsub.s32 %v4653, %v4655
        %v4657 = vrot.slane %v4649, %v4656
        %v4659 = vunpack.c.l.s4 1983009808
        %v4660 = vunpack.c.0.s8 %v4659
        %v4661 = vlaneseq
        %v4662 = vshrl.u32 %v4661, 7
        %v4663 = vsub.s32 %v4660, %v4662
        %v4664 = vrot.slane %v4650, %v4663
        %v4665 = vcombine.low %v4525, %v4529
        %v4666 = vcombine.high %v4525, %v4529
        %v4668 = vunpack.c.l.s4 1983009808
        %v4669 = vunpack.c.0.s8 %v4668
        %v4670 = vlaneseq
        %v4671 = vshrl.u32 %v4670, 7
        %v4672 = vsub.s32 %v4669, %v4671
        %v4673 = vrot.slane %v4665, %v4672
        %v4675 = vunpack.c.l.s4 1983009808
        %v4676 = vunpack.c.0.s8 %v4675
        %v4677 = vlaneseq
        %v4678 = vshrl.u32 %v4677, 7
        %v4679 = vsub.s32 %v4676, %v4678
        %v4680 = vrot.slane %v4666, %v4679
        %v4681 = vcombine.high %v4531, 0.0
        %v4683 = vunpack.c.l.s4 1983009808
        %v4684 = vunpack.c.0.s8 %v4683
        %v4685 = vlaneseq
        %v4686 = vshrl.u32 %v4685, 7
        %v4687 = vsub.s32 %v4684, %v4686
        %v4688 = vrot.slane %v4531, %v4687
        %v4690 = vunpack.c.l.s4 1983009808
        %v4691 = vunpack.c.0.s8 %v4690
        %v4692 = vlaneseq
        %v4693 = vshrl.u32 %v4692, 7
        %v4694 = vsub.s32 %v4691, %v4693
        %v4695 = vrot.slane %v4681, %v4694
        %v4696 = vcombine.low %v4657, %v4673
        %v4697 = vcombine.high %v4657, %v4673
        %v4699 = vunpack.c.l.s4 1934713408
        %v4700 = vunpack.c.0.s8 %v4699
        %v4701 = vlaneseq
        %v4702 = vshrl.u32 %v4701, 7
        %v4703 = vsub.s32 %v4700, %v4702
        %v4704 = vrot.slane %v4696, %v4703
        %v4706 = vunpack.c.l.s4 1934713408
        %v4707 = vunpack.c.0.s8 %v4706
        %v4708 = vlaneseq
        %v4709 = vshrl.u32 %v4708, 7
        %v4710 = vsub.s32 %v4707, %v4709
        %v4711 = vrot.slane %v4697, %v4710
        %v4712 = vcombine.low %v4664, %v4680
        %v4713 = vcombine.high %v4664, %v4680
        %v4715 = vunpack.c.l.s4 1934713408
        %v4716 = vunpack.c.0.s8 %v4715
        %v4717 = vlaneseq
        %v4718 = vshrl.u32 %v4717, 7
        %v4719 = vsub.s32 %v4716, %v4718
        %v4720 = vrot.slane %v4712, %v4719
        %v4722 = vunpack.c.l.s4 1934713408
        %v4723 = vunpack.c.0.s8 %v4722
        %v4724 = vlaneseq
        %v4725 = vshrl.u32 %v4724, 7
        %v4726 = vsub.s32 %v4723, %v4725
        %v4727 = vrot.slane %v4713, %v4726
        %v4728 = vcombine.high %v4688, 0.0
        %v4730 = vunpack.c.l.s4 1934713408
        %v4731 = vunpack.c.0.s8 %v4730
        %v4732 = vlaneseq
        %v4733 = vshrl.u32 %v4732, 7
        %v4734 = vsub.s32 %v4731, %v4733
        %v4735 = vrot.slane %v4688, %v4734
        %v4737 = vunpack.c.l.s4 1934713408
        %v4738 = vunpack.c.0.s8 %v4737
        %v4739 = vlaneseq
        %v4740 = vshrl.u32 %v4739, 7
        %v4741 = vsub.s32 %v4738, %v4740
        %v4742 = vrot.slane %v4728, %v4741
        %v4743 = vcombine.high %v4695, 0.0
        %v4745 = vunpack.c.l.s4 1934713408
        %v4746 = vunpack.c.0.s8 %v4745
        %v4747 = vlaneseq
        %v4748 = vshrl.u32 %v4747, 7
        %v4749 = vsub.s32 %v4746, %v4748
        %v4750 = vrot.slane %v4695, %v4749
        %v4752 = vunpack.c.l.s4 1934713408
        %v4753 = vunpack.c.0.s8 %v4752
        %v4754 = vlaneseq
        %v4755 = vshrl.u32 %v4754, 7
        %v4756 = vsub.s32 %v4753, %v4755
        %v4757 = vrot.slane %v4743, %v4756
        %v4758 = vcombine.low %v4704, %v4735
        %v4759 = vcombine.high %v4704, %v4735
        %v4760 = vcombine.low %v4711, %v4742
        %v4761 = vcombine.high %v4711, %v4742
        %v4762 = vcombine.low %v4720, %v4750
        %v4763 = vcombine.high %v4720, %v4750
        %v4764 = vcombine.low %v4727, %v4757
        %v4765 = vcombine.high %v4727, %v4757
        %4774 = vrot.lane.b32.xlu0 %v4641, 110
        %v4775 = vpop.permute.xlu0 %4774
        %4776 = vrot.lane.b32.xlu0 %v4642, 110
        %v4777 = vpop.permute.xlu0 %4776
        %4778 = vrot.lane.b32.xlu0 %v4643, 110
        %v4779 = vpop.permute.xlu0 %4778
        %4780 = vrot.lane.b32.xlu0 %v4644, 110
        %v4781 = vpop.permute.xlu0 %4780
        %4782 = vrot.lane.b32.xlu0 %v4645, 110
        %v4783 = vpop.permute.xlu0 %4782
        %4784 = vrot.lane.b32.xlu0 %v4646, 110
        %v4785 = vpop.permute.xlu0 %4784
        %4786 = vrot.lane.b32.xlu0 %v4647, 110
        %v4787 = vpop.permute.xlu0 %4786
        %4788 = vrot.lane.b32.xlu0 %v4648, 110
        %v4789 = vpop.permute.xlu0 %4788
        %4798 = vrot.lane.b32.xlu0 %v4641, 92
        %v4799 = vpop.permute.xlu0 %4798
        %4800 = vrot.lane.b32.xlu0 %v4642, 92
        %v4801 = vpop.permute.xlu0 %4800
        %4802 = vrot.lane.b32.xlu0 %v4643, 92
        %v4803 = vpop.permute.xlu0 %4802
        %4804 = vrot.lane.b32.xlu0 %v4644, 92
        %v4805 = vpop.permute.xlu0 %4804
        %4806 = vrot.lane.b32.xlu0 %v4645, 92
        %v4807 = vpop.permute.xlu0 %4806
        %4808 = vrot.lane.b32.xlu0 %v4646, 92
        %v4809 = vpop.permute.xlu0 %4808
        %4810 = vrot.lane.b32.xlu0 %v4647, 92
        %v4811 = vpop.permute.xlu0 %4810
        %4812 = vrot.lane.b32.xlu0 %v4648, 92
        %v4813 = vpop.permute.xlu0 %4812
        %4822 = vrot.lane.b32.xlu0 %v4641, 74
        %v4823 = vpop.permute.xlu0 %4822
        %4824 = vrot.lane.b32.xlu0 %v4642, 74
        %v4825 = vpop.permute.xlu0 %4824
        %4826 = vrot.lane.b32.xlu0 %v4643, 74
        %v4827 = vpop.permute.xlu0 %4826
        %4828 = vrot.lane.b32.xlu0 %v4644, 74
        %v4829 = vpop.permute.xlu0 %4828
        %4830 = vrot.lane.b32.xlu0 %v4645, 74
        %v4831 = vpop.permute.xlu0 %4830
        %4832 = vrot.lane.b32.xlu0 %v4646, 74
        %v4833 = vpop.permute.xlu0 %4832
        %4834 = vrot.lane.b32.xlu0 %v4647, 74
        %v4835 = vpop.permute.xlu0 %4834
        %4836 = vrot.lane.b32.xlu0 %v4648, 74
        %v4837 = vpop.permute.xlu0 %4836
        %4846 = vrot.lane.b32.xlu0 %v4641, 56
        %v4847 = vpop.permute.xlu0 %4846
        %4848 = vrot.lane.b32.xlu0 %v4642, 56
        %v4849 = vpop.permute.xlu0 %4848
        %4850 = vrot.lane.b32.xlu0 %v4643, 56
        %v4851 = vpop.permute.xlu0 %4850
        %4852 = vrot.lane.b32.xlu0 %v4644, 56
        %v4853 = vpop.permute.xlu0 %4852
        %4854 = vrot.lane.b32.xlu0 %v4645, 56
        %v4855 = vpop.permute.xlu0 %4854
        %4856 = vrot.lane.b32.xlu0 %v4646, 56
        %v4857 = vpop.permute.xlu0 %4856
        %4858 = vrot.lane.b32.xlu0 %v4647, 56
        %v4859 = vpop.permute.xlu0 %4858
        %4860 = vrot.lane.b32.xlu0 %v4648, 56
        %v4861 = vpop.permute.xlu0 %4860
        %4870 = vrot.lane.b32.xlu0 %v4641, 38
        %v4871 = vpop.permute.xlu0 %4870
        %4872 = vrot.lane.b32.xlu0 %v4642, 38
        %v4873 = vpop.permute.xlu0 %4872
        %4874 = vrot.lane.b32.xlu0 %v4643, 38
        %v4875 = vpop.permute.xlu0 %4874
        %4876 = vrot.lane.b32.xlu0 %v4644, 38
        %v4877 = vpop.permute.xlu0 %4876
        %4878 = vrot.lane.b32.xlu0 %v4645, 38
        %v4879 = vpop.permute.xlu0 %4878
        %4880 = vrot.lane.b32.xlu0 %v4646, 38
        %v4881 = vpop.permute.xlu0 %4880
        %4882 = vrot.lane.b32.xlu0 %v4647, 38
        %v4883 = vpop.permute.xlu0 %4882
        %4884 = vrot.lane.b32.xlu0 %v4648, 38
        %v4885 = vpop.permute.xlu0 %4884
        %4894 = vrot.lane.b32.xlu0 %v4641, 20
        %v4895 = vpop.permute.xlu0 %4894
        %4896 = vrot.lane.b32.xlu0 %v4642, 20
        %v4897 = vpop.permute.xlu0 %4896
        %4898 = vrot.lane.b32.xlu0 %v4643, 20
        %v4899 = vpop.permute.xlu0 %4898
        %4900 = vrot.lane.b32.xlu0 %v4644, 20
        %v4901 = vpop.permute.xlu0 %4900
        %4902 = vrot.lane.b32.xlu0 %v4645, 20
        %v4903 = vpop.permute.xlu0 %4902
        %4904 = vrot.lane.b32.xlu0 %v4646, 20
        %v4905 = vpop.permute.xlu0 %4904
        %4906 = vrot.lane.b32.xlu0 %v4647, 20
        %v4907 = vpop.permute.xlu0 %4906
        %4908 = vrot.lane.b32.xlu0 %v4648, 20
        %v4909 = vpop.permute.xlu0 %4908
        %4926 = vrot.lane.b32.xlu0 %v4641, 2
        %v4927 = vpop.permute.xlu0 %4926
        %4928 = vrot.lane.b32.xlu0 %v4758, 2
        %v4929 = vpop.permute.xlu0 %4928
        %4930 = vrot.lane.b32.xlu0 %v4642, 2
        %v4931 = vpop.permute.xlu0 %4930
        %4932 = vrot.lane.b32.xlu0 %v4759, 2
        %v4933 = vpop.permute.xlu0 %4932
        %4934 = vrot.lane.b32.xlu0 %v4643, 2
        %v4935 = vpop.permute.xlu0 %4934
        %4936 = vrot.lane.b32.xlu0 %v4760, 2
        %v4937 = vpop.permute.xlu0 %4936
        %4938 = vrot.lane.b32.xlu0 %v4644, 2
        %v4939 = vpop.permute.xlu0 %4938
        %4940 = vrot.lane.b32.xlu0 %v4761, 2
        %v4941 = vpop.permute.xlu0 %4940
        %4942 = vrot.lane.b32.xlu0 %v4645, 2
        %v4943 = vpop.permute.xlu0 %4942
        %4944 = vrot.lane.b32.xlu0 %v4762, 2
        %v4945 = vpop.permute.xlu0 %4944
        %4946 = vrot.lane.b32.xlu0 %v4646, 2
        %v4947 = vpop.permute.xlu0 %4946
        %4948 = vrot.lane.b32.xlu0 %v4763, 2
        %v4949 = vpop.permute.xlu0 %4948
        %4950 = vrot.lane.b32.xlu0 %v4647, 2
        %v4951 = vpop.permute.xlu0 %4950
        %4952 = vrot.lane.b32.xlu0 %v4764, 2
        %v4953 = vpop.permute.xlu0 %4952
        %4954 = vrot.lane.b32.xlu0 %v4648, 2
        %v4955 = vpop.permute.xlu0 %4954
        %4956 = vrot.lane.b32.xlu0 %v4765, 2
        %v4957 = vpop.permute.xlu0 %4956
        %vm4958 = vcmask 15360
        %v4959 = vsel %vm4958, %v4927, %v4929
        %v4960 = vsel %vm4958, %v4931, %v4933
        %v4961 = vsel %vm4958, %v4935, %v4937
        %v4962 = vsel %vm4958, %v4939, %v4941
        %v4963 = vsel %vm4958, %v4943, %v4945
        %v4964 = vsel %vm4958, %v4947, %v4949
        %v4965 = vsel %vm4958, %v4951, %v4953
        %v4966 = vsel %vm4958, %v4955, %v4957
        %4975 = vrot.lane.b32.xlu0 %v4758, 112
        %v4976 = vpop.permute.xlu0 %4975
        %4977 = vrot.lane.b32.xlu0 %v4759, 112
        %v4978 = vpop.permute.xlu0 %4977
        %4979 = vrot.lane.b32.xlu0 %v4760, 112
        %v4980 = vpop.permute.xlu0 %4979
        %4981 = vrot.lane.b32.xlu0 %v4761, 112
        %v4982 = vpop.permute.xlu0 %4981
        %4983 = vrot.lane.b32.xlu0 %v4762, 112
        %v4984 = vpop.permute.xlu0 %4983
        %4985 = vrot.lane.b32.xlu0 %v4763, 112
        %v4986 = vpop.permute.xlu0 %4985
        %4987 = vrot.lane.b32.xlu0 %v4764, 112
        %v4988 = vpop.permute.xlu0 %4987
        %4989 = vrot.lane.b32.xlu0 %v4765, 112
        %v4990 = vpop.permute.xlu0 %4989
        %4999 = vrot.lane.b32.xlu0 %v4758, 94
        %v5000 = vpop.permute.xlu0 %4999
        %5001 = vrot.lane.b32.xlu0 %v4759, 94
        %v5002 = vpop.permute.xlu0 %5001
        %5003 = vrot.lane.b32.xlu0 %v4760, 94
        %v5004 = vpop.permute.xlu0 %5003
        %5005 = vrot.lane.b32.xlu0 %v4761, 94
        %v5006 = vpop.permute.xlu0 %5005
        %5007 = vrot.lane.b32.xlu0 %v4762, 94
        %v5008 = vpop.permute.xlu0 %5007
        %5009 = vrot.lane.b32.xlu0 %v4763, 94
        %v5010 = vpop.permute.xlu0 %5009
        %5011 = vrot.lane.b32.xlu0 %v4764, 94
        %v5012 = vpop.permute.xlu0 %5011
        %5013 = vrot.lane.b32.xlu0 %v4765, 94
        %v5014 = vpop.permute.xlu0 %5013
        %5023 = vrot.lane.b32.xlu0 %v4758, 76
        %v5024 = vpop.permute.xlu0 %5023
        %5025 = vrot.lane.b32.xlu0 %v4759, 76
        %v5026 = vpop.permute.xlu0 %5025
        %5027 = vrot.lane.b32.xlu0 %v4760, 76
        %v5028 = vpop.permute.xlu0 %5027
        %5029 = vrot.lane.b32.xlu0 %v4761, 76
        %v5030 = vpop.permute.xlu0 %5029
        %5031 = vrot.lane.b32.xlu0 %v4762, 76
        %v5032 = vpop.permute.xlu0 %5031
        %5033 = vrot.lane.b32.xlu0 %v4763, 76
        %v5034 = vpop.permute.xlu0 %5033
        %5035 = vrot.lane.b32.xlu0 %v4764, 76
        %v5036 = vpop.permute.xlu0 %5035
        %5037 = vrot.lane.b32.xlu0 %v4765, 76
        %v5038 = vpop.permute.xlu0 %5037
        %5047 = vrot.lane.b32.xlu0 %v4758, 58
        %v5048 = vpop.permute.xlu0 %5047
        %5049 = vrot.lane.b32.xlu0 %v4759, 58
        %v5050 = vpop.permute.xlu0 %5049
        %5051 = vrot.lane.b32.xlu0 %v4760, 58
        %v5052 = vpop.permute.xlu0 %5051
        %5053 = vrot.lane.b32.xlu0 %v4761, 58
        %v5054 = vpop.permute.xlu0 %5053
        %5055 = vrot.lane.b32.xlu0 %v4762, 58
        %v5056 = vpop.permute.xlu0 %5055
        %5057 = vrot.lane.b32.xlu0 %v4763, 58
        %v5058 = vpop.permute.xlu0 %5057
        %5059 = vrot.lane.b32.xlu0 %v4764, 58
        %v5060 = vpop.permute.xlu0 %5059
        %5061 = vrot.lane.b32.xlu0 %v4765, 58
        %v5062 = vpop.permute.xlu0 %5061
        %v5071 = vcombine.low %v4641, %v4799
        %v5072 = vcombine.high %v4641, %v4799
        %v5074 = vunpack.c.l.s4 1983009808
        %v5075 = vunpack.c.0.s8 %v5074
        %v5076 = vlaneseq
        %v5077 = vshrl.u32 %v5076, 7
        %v5078 = vsub.s32 %v5075, %v5077
        %v5079 = vrot.slane %v5071, %v5078
        %v5081 = vunpack.c.l.s4 1983009808
        %v5082 = vunpack.c.0.s8 %v5081
        %v5083 = vlaneseq
        %v5084 = vshrl.u32 %v5083, 7
        %v5085 = vsub.s32 %v5082, %v5084
        %v5086 = vrot.slane %v5072, %v5085
        %v5087 = vcombine.low %v4775, %v4823
        %v5088 = vcombine.high %v4775, %v4823
        %v5090 = vunpack.c.l.s4 1983009808
        %v5091 = vunpack.c.0.s8 %v5090
        %v5092 = vlaneseq
        %v5093 = vshrl.u32 %v5092, 7
        %v5094 = vsub.s32 %v5091, %v5093
        %v5095 = vrot.slane %v5087, %v5094
        %v5097 = vunpack.c.l.s4 1983009808
        %v5098 = vunpack.c.0.s8 %v5097
        %v5099 = vlaneseq
        %v5100 = vshrl.u32 %v5099, 7
        %v5101 = vsub.s32 %v5098, %v5100
        %v5102 = vrot.slane %v5088, %v5101
        %v5103 = vcombine.low %v4847, %v4895
        %v5104 = vcombine.high %v4847, %v4895
        %v5106 = vunpack.c.l.s4 1983009808
        %v5107 = vunpack.c.0.s8 %v5106
        %v5108 = vlaneseq
        %v5109 = vshrl.u32 %v5108, 7
        %v5110 = vsub.s32 %v5107, %v5109
        %v5111 = vrot.slane %v5103, %v5110
        %v5113 = vunpack.c.l.s4 1983009808
        %v5114 = vunpack.c.0.s8 %v5113
        %v5115 = vlaneseq
        %v5116 = vshrl.u32 %v5115, 7
        %v5117 = vsub.s32 %v5114, %v5116
        %v5118 = vrot.slane %v5104, %v5117
        %v5119 = vcombine.low %v4871, %v4959
        %v5120 = vcombine.high %v4871, %v4959
        %v5122 = vunpack.c.l.s4 1983009808
        %v5123 = vunpack.c.0.s8 %v5122
        %v5124 = vlaneseq
        %v5125 = vshrl.u32 %v5124, 7
        %v5126 = vsub.s32 %v5123, %v5125
        %v5127 = vrot.slane %v5119, %v5126
        %v5129 = vunpack.c.l.s4 1983009808
        %v5130 = vunpack.c.0.s8 %v5129
        %v5131 = vlaneseq
        %v5132 = vshrl.u32 %v5131, 7
        %v5133 = vsub.s32 %v5130, %v5132
        %v5134 = vrot.slane %v5120, %v5133
        %v5135 = vcombine.low %v5079, %v5095
        %v5136 = vcombine.high %v5079, %v5095
        %v5138 = vunpack.c.l.s4 1934713408
        %v5139 = vunpack.c.0.s8 %v5138
        %v5140 = vlaneseq
        %v5141 = vshrl.u32 %v5140, 7
        %v5142 = vsub.s32 %v5139, %v5141
        %v5143 = vrot.slane %v5135, %v5142
        %v5145 = vunpack.c.l.s4 1934713408
        %v5146 = vunpack.c.0.s8 %v5145
        %v5147 = vlaneseq
        %v5148 = vshrl.u32 %v5147, 7
        %v5149 = vsub.s32 %v5146, %v5148
        %v5150 = vrot.slane %v5136, %v5149
        %v5151 = vcombine.low %v5086, %v5102
        %v5153 = vunpack.c.l.s4 1934713408
        %v5154 = vunpack.c.0.s8 %v5153
        %v5155 = vlaneseq
        %v5156 = vshrl.u32 %v5155, 7
        %v5157 = vsub.s32 %v5154, %v5156
        %v5158 = vrot.slane %v5151, %v5157
        %v5159 = vcombine.low %v5111, %v5127
        %v5160 = vcombine.high %v5111, %v5127
        %v5162 = vunpack.c.l.s4 1934713408
        %v5163 = vunpack.c.0.s8 %v5162
        %v5164 = vlaneseq
        %v5165 = vshrl.u32 %v5164, 7
        %v5166 = vsub.s32 %v5163, %v5165
        %v5167 = vrot.slane %v5159, %v5166
        %v5169 = vunpack.c.l.s4 1934713408
        %v5170 = vunpack.c.0.s8 %v5169
        %v5171 = vlaneseq
        %v5172 = vshrl.u32 %v5171, 7
        %v5173 = vsub.s32 %v5170, %v5172
        %v5174 = vrot.slane %v5160, %v5173
        %v5175 = vcombine.low %v5118, %v5134
        %v5177 = vunpack.c.l.s4 1934713408
        %v5178 = vunpack.c.0.s8 %v5177
        %v5179 = vlaneseq
        %v5180 = vshrl.u32 %v5179, 7
        %v5181 = vsub.s32 %v5178, %v5180
        %v5182 = vrot.slane %v5175, %v5181
        %v5183 = vcombine.low %v5143, %v5167
        %v5184 = vcombine.high %v5143, %v5167
        %v5185 = vcombine.low %v5150, %v5174
        %v5186 = vcombine.high %v5150, %v5174
        %v5187 = vcombine.low %v5158, %v5182
        %v5188 = vcombine.low %v4976, %v5024
        %v5189 = vcombine.high %v4976, %v5024
        %v5191 = vunpack.c.l.s4 1983009808
        %v5192 = vunpack.c.0.s8 %v5191
        %v5193 = vlaneseq
        %v5194 = vshrl.u32 %v5193, 7
        %v5195 = vsub.s32 %v5192, %v5194
        %v5196 = vrot.slane %v5188, %v5195
        %v5198 = vunpack.c.l.s4 1983009808
        %v5199 = vunpack.c.0.s8 %v5198
        %v5200 = vlaneseq
        %v5201 = vshrl.u32 %v5200, 7
        %v5202 = vsub.s32 %v5199, %v5201
        %v5203 = vrot.slane %v5189, %v5202
        %v5204 = vcombine.low %v5000, %v5048
        %v5205 = vcombine.high %v5000, %v5048
        %v5207 = vunpack.c.l.s4 1983009808
        %v5208 = vunpack.c.0.s8 %v5207
        %v5209 = vlaneseq
        %v5210 = vshrl.u32 %v5209, 7
        %v5211 = vsub.s32 %v5208, %v5210
        %v5212 = vrot.slane %v5204, %v5211
        %v5214 = vunpack.c.l.s4 1983009808
        %v5215 = vunpack.c.0.s8 %v5214
        %v5216 = vlaneseq
        %v5217 = vshrl.u32 %v5216, 7
        %v5218 = vsub.s32 %v5215, %v5217
        %v5219 = vrot.slane %v5205, %v5218
        %v5220 = vcombine.low %v5196, %v5212
        %v5221 = vcombine.high %v5196, %v5212
        %v5223 = vunpack.c.l.s4 1934713408
        %v5224 = vunpack.c.0.s8 %v5223
        %v5225 = vlaneseq
        %v5226 = vshrl.u32 %v5225, 7
        %v5227 = vsub.s32 %v5224, %v5226
        %v5228 = vrot.slane %v5220, %v5227
        %v5230 = vunpack.c.l.s4 1934713408
        %v5231 = vunpack.c.0.s8 %v5230
        %v5232 = vlaneseq
        %v5233 = vshrl.u32 %v5232, 7
        %v5234 = vsub.s32 %v5231, %v5233
        %v5235 = vrot.slane %v5221, %v5234
        %v5236 = vcombine.low %v5203, %v5219
        %v5237 = vcombine.high %v5228, 0.0
        %v5238 = vcombine.high %v5235, 0.0
        %v5240 = vunpack.c.l.s4 1934713408
        %v5241 = vunpack.c.0.s8 %v5240
        %v5242 = vlaneseq
        %v5243 = vshrl.u32 %v5242, 7
        %v5244 = vsub.s32 %v5241, %v5243
        %v5245 = vrot.slane %v5236, %v5244
        %v5246 = vcombine.low %v4642, %v4801
        %v5247 = vcombine.high %v4642, %v4801
        %v5249 = vunpack.c.l.s4 1983009808
        %v5250 = vunpack.c.0.s8 %v5249
        %v5251 = vlaneseq
        %v5252 = vshrl.u32 %v5251, 7
        %v5253 = vsub.s32 %v5250, %v5252
        %v5254 = vrot.slane %v5246, %v5253
        %v5256 = vunpack.c.l.s4 1983009808
        %v5257 = vunpack.c.0.s8 %v5256
        %v5258 = vlaneseq
        %v5259 = vshrl.u32 %v5258, 7
        %v5260 = vsub.s32 %v5257, %v5259
        %v5261 = vrot.slane %v5247, %v5260
        %v5262 = vcombine.low %v4777, %v4825
        %v5263 = vcombine.high %v4777, %v4825
        %v5265 = vunpack.c.l.s4 1983009808
        %v5266 = vunpack.c.0.s8 %v5265
        %v5267 = vlaneseq
        %v5268 = vshrl.u32 %v5267, 7
        %v5269 = vsub.s32 %v5266, %v5268
        %v5270 = vrot.slane %v5262, %v5269
        %v5272 = vunpack.c.l.s4 1983009808
        %v5273 = vunpack.c.0.s8 %v5272
        %v5274 = vlaneseq
        %v5275 = vshrl.u32 %v5274, 7
        %v5276 = vsub.s32 %v5273, %v5275
        %v5277 = vrot.slane %v5263, %v5276
        %v5278 = vcombine.low %v4849, %v4897
        %v5279 = vcombine.high %v4849, %v4897
        %v5281 = vunpack.c.l.s4 1983009808
        %v5282 = vunpack.c.0.s8 %v5281
        %v5283 = vlaneseq
        %v5284 = vshrl.u32 %v5283, 7
        %v5285 = vsub.s32 %v5282, %v5284
        %v5286 = vrot.slane %v5278, %v5285
        %v5288 = vunpack.c.l.s4 1983009808
        %v5289 = vunpack.c.0.s8 %v5288
        %v5290 = vlaneseq
        %v5291 = vshrl.u32 %v5290, 7
        %v5292 = vsub.s32 %v5289, %v5291
        %v5293 = vrot.slane %v5279, %v5292
        %v5294 = vcombine.low %v4873, %v4960
        %v5295 = vcombine.high %v4873, %v4960
        %v5297 = vunpack.c.l.s4 1983009808
        %v5298 = vunpack.c.0.s8 %v5297
        %v5299 = vlaneseq
        %v5300 = vshrl.u32 %v5299, 7
        %v5301 = vsub.s32 %v5298, %v5300
        %v5302 = vrot.slane %v5294, %v5301
        %v5304 = vunpack.c.l.s4 1983009808
        %v5305 = vunpack.c.0.s8 %v5304
        %v5306 = vlaneseq
        %v5307 = vshrl.u32 %v5306, 7
        %v5308 = vsub.s32 %v5305, %v5307
        %v5309 = vrot.slane %v5295, %v5308
        %v5310 = vcombine.low %v5254, %v5270
        %v5311 = vcombine.high %v5254, %v5270
        %v5313 = vunpack.c.l.s4 1934713408
        %v5314 = vunpack.c.0.s8 %v5313
        %v5315 = vlaneseq
        %v5316 = vshrl.u32 %v5315, 7
        %v5317 = vsub.s32 %v5314, %v5316
        %v5318 = vrot.slane %v5310, %v5317
        %v5320 = vunpack.c.l.s4 1934713408
        %v5321 = vunpack.c.0.s8 %v5320
        %v5322 = vlaneseq
        %v5323 = vshrl.u32 %v5322, 7
        %v5324 = vsub.s32 %v5321, %v5323
        %v5325 = vrot.slane %v5311, %v5324
        %v5326 = vcombine.low %v5261, %v5277
        %v5328 = vunpack.c.l.s4 1934713408
        %v5329 = vunpack.c.0.s8 %v5328
        %v5330 = vlaneseq
        %v5331 = vshrl.u32 %v5330, 7
        %v5332 = vsub.s32 %v5329, %v5331
        %v5333 = vrot.slane %v5326, %v5332
        %v5334 = vcombine.low %v5286, %v5302
        %v5335 = vcombine.high %v5286, %v5302
        %v5337 = vunpack.c.l.s4 1934713408
        %v5338 = vunpack.c.0.s8 %v5337
        %v5339 = vlaneseq
        %v5340 = vshrl.u32 %v5339, 7
        %v5341 = vsub.s32 %v5338, %v5340
        %v5342 = vrot.slane %v5334, %v5341
        %v5344 = vunpack.c.l.s4 1934713408
        %v5345 = vunpack.c.0.s8 %v5344
        %v5346 = vlaneseq
        %v5347 = vshrl.u32 %v5346, 7
        %v5348 = vsub.s32 %v5345, %v5347
        %v5349 = vrot.slane %v5335, %v5348
        %v5350 = vcombine.low %v5293, %v5309
        %v5352 = vunpack.c.l.s4 1934713408
        %v5353 = vunpack.c.0.s8 %v5352
        %v5354 = vlaneseq
        %v5355 = vshrl.u32 %v5354, 7
        %v5356 = vsub.s32 %v5353, %v5355
        %v5357 = vrot.slane %v5350, %v5356
        %v5358 = vcombine.low %v5318, %v5342
        %v5359 = vcombine.high %v5318, %v5342
        %v5360 = vcombine.low %v5325, %v5349
        %v5361 = vcombine.high %v5325, %v5349
        %v5362 = vcombine.low %v5333, %v5357
        %v5363 = vcombine.low %v4978, %v5026
        %v5364 = vcombine.high %v4978, %v5026
        %v5366 = vunpack.c.l.s4 1983009808
        %v5367 = vunpack.c.0.s8 %v5366
        %v5368 = vlaneseq
        %v5369 = vshrl.u32 %v5368, 7
        %v5370 = vsub.s32 %v5367, %v5369
        %v5371 = vrot.slane %v5363, %v5370
        %v5373 = vunpack.c.l.s4 1983009808
        %v5374 = vunpack.c.0.s8 %v5373
        %v5375 = vlaneseq
        %v5376 = vshrl.u32 %v5375, 7
        %v5377 = vsub.s32 %v5374, %v5376
        %v5378 = vrot.slane %v5364, %v5377
        %v5379 = vcombine.low %v5002, %v5050
        %v5380 = vcombine.high %v5002, %v5050
        %v5382 = vunpack.c.l.s4 1983009808
        %v5383 = vunpack.c.0.s8 %v5382
        %v5384 = vlaneseq
        %v5385 = vshrl.u32 %v5384, 7
        %v5386 = vsub.s32 %v5383, %v5385
        %v5387 = vrot.slane %v5379, %v5386
        %v5389 = vunpack.c.l.s4 1983009808
        %v5390 = vunpack.c.0.s8 %v5389
        %v5391 = vlaneseq
        %v5392 = vshrl.u32 %v5391, 7
        %v5393 = vsub.s32 %v5390, %v5392
        %v5394 = vrot.slane %v5380, %v5393
        %v5395 = vcombine.low %v5371, %v5387
        %v5396 = vcombine.high %v5371, %v5387
        %v5398 = vunpack.c.l.s4 1934713408
        %v5399 = vunpack.c.0.s8 %v5398
        %v5400 = vlaneseq
        %v5401 = vshrl.u32 %v5400, 7
        %v5402 = vsub.s32 %v5399, %v5401
        %v5403 = vrot.slane %v5395, %v5402
        %v5405 = vunpack.c.l.s4 1934713408
        %v5406 = vunpack.c.0.s8 %v5405
        %v5407 = vlaneseq
        %v5408 = vshrl.u32 %v5407, 7
        %v5409 = vsub.s32 %v5406, %v5408
        %v5410 = vrot.slane %v5396, %v5409
        %v5411 = vcombine.low %v5378, %v5394
        %v5412 = vcombine.high %v5403, 0.0
        %v5413 = vcombine.high %v5410, 0.0
        %v5415 = vunpack.c.l.s4 1934713408
        %v5416 = vunpack.c.0.s8 %v5415
        %v5417 = vlaneseq
        %v5418 = vshrl.u32 %v5417, 7
        %v5419 = vsub.s32 %v5416, %v5418
        %v5420 = vrot.slane %v5411, %v5419
        %v5421 = vcombine.low %v4643, %v4803
        %v5422 = vcombine.high %v4643, %v4803
        %v5424 = vunpack.c.l.s4 1983009808
        %v5425 = vunpack.c.0.s8 %v5424
        %v5426 = vlaneseq
        %v5427 = vshrl.u32 %v5426, 7
        %v5428 = vsub.s32 %v5425, %v5427
        %v5429 = vrot.slane %v5421, %v5428
        %v5431 = vunpack.c.l.s4 1983009808
        %v5432 = vunpack.c.0.s8 %v5431
        %v5433 = vlaneseq
        %v5434 = vshrl.u32 %v5433, 7
        %v5435 = vsub.s32 %v5432, %v5434
        %v5436 = vrot.slane %v5422, %v5435
        %v5437 = vcombine.low %v4779, %v4827
        %v5438 = vcombine.high %v4779, %v4827
        %v5440 = vunpack.c.l.s4 1983009808
        %v5441 = vunpack.c.0.s8 %v5440
        %v5442 = vlaneseq
        %v5443 = vshrl.u32 %v5442, 7
        %v5444 = vsub.s32 %v5441, %v5443
        %v5445 = vrot.slane %v5437, %v5444
        %v5447 = vunpack.c.l.s4 1983009808
        %v5448 = vunpack.c.0.s8 %v5447
        %v5449 = vlaneseq
        %v5450 = vshrl.u32 %v5449, 7
        %v5451 = vsub.s32 %v5448, %v5450
        %v5452 = vrot.slane %v5438, %v5451
        %v5453 = vcombine.low %v4851, %v4899
        %v5454 = vcombine.high %v4851, %v4899
        %v5456 = vunpack.c.l.s4 1983009808
        %v5457 = vunpack.c.0.s8 %v5456
        %v5458 = vlaneseq
        %v5459 = vshrl.u32 %v5458, 7
        %v5460 = vsub.s32 %v5457, %v5459
        %v5461 = vrot.slane %v5453, %v5460
        %v5463 = vunpack.c.l.s4 1983009808
        %v5464 = vunpack.c.0.s8 %v5463
        %v5465 = vlaneseq
        %v5466 = vshrl.u32 %v5465, 7
        %v5467 = vsub.s32 %v5464, %v5466
        %v5468 = vrot.slane %v5454, %v5467
        %v5469 = vcombine.low %v4875, %v4961
        %v5470 = vcombine.high %v4875, %v4961
        %v5472 = vunpack.c.l.s4 1983009808
        %v5473 = vunpack.c.0.s8 %v5472
        %v5474 = vlaneseq
        %v5475 = vshrl.u32 %v5474, 7
        %v5476 = vsub.s32 %v5473, %v5475
        %v5477 = vrot.slane %v5469, %v5476
        %v5479 = vunpack.c.l.s4 1983009808
        %v5480 = vunpack.c.0.s8 %v5479
        %v5481 = vlaneseq
        %v5482 = vshrl.u32 %v5481, 7
        %v5483 = vsub.s32 %v5480, %v5482
        %v5484 = vrot.slane %v5470, %v5483
        %v5485 = vcombine.low %v5429, %v5445
        %v5486 = vcombine.high %v5429, %v5445
        %v5488 = vunpack.c.l.s4 1934713408
        %v5489 = vunpack.c.0.s8 %v5488
        %v5490 = vlaneseq
        %v5491 = vshrl.u32 %v5490, 7
        %v5492 = vsub.s32 %v5489, %v5491
        %v5493 = vrot.slane %v5485, %v5492
        %v5495 = vunpack.c.l.s4 1934713408
        %v5496 = vunpack.c.0.s8 %v5495
        %v5497 = vlaneseq
        %v5498 = vshrl.u32 %v5497, 7
        %v5499 = vsub.s32 %v5496, %v5498
        %v5500 = vrot.slane %v5486, %v5499
        %v5501 = vcombine.low %v5436, %v5452
        %v5503 = vunpack.c.l.s4 1934713408
        %v5504 = vunpack.c.0.s8 %v5503
        %v5505 = vlaneseq
        %v5506 = vshrl.u32 %v5505, 7
        %v5507 = vsub.s32 %v5504, %v5506
        %v5508 = vrot.slane %v5501, %v5507
        %v5509 = vcombine.low %v5461, %v5477
        %v5510 = vcombine.high %v5461, %v5477
        %v5512 = vunpack.c.l.s4 1934713408
        %v5513 = vunpack.c.0.s8 %v5512
        %v5514 = vlaneseq
        %v5515 = vshrl.u32 %v5514, 7
        %v5516 = vsub.s32 %v5513, %v5515
        %v5517 = vrot.slane %v5509, %v5516
        %v5519 = vunpack.c.l.s4 1934713408
        %v5520 = vunpack.c.0.s8 %v5519
        %v5521 = vlaneseq
        %v5522 = vshrl.u32 %v5521, 7
        %v5523 = vsub.s32 %v5520, %v5522
        %v5524 = vrot.slane %v5510, %v5523
        %v5525 = vcombine.low %v5468, %v5484
        %v5527 = vunpack.c.l.s4 1934713408
        %v5528 = vunpack.c.0.s8 %v5527
        %v5529 = vlaneseq
        %v5530 = vshrl.u32 %v5529, 7
        %v5531 = vsub.s32 %v5528, %v5530
        %v5532 = vrot.slane %v5525, %v5531
        %v5533 = vcombine.low %v5493, %v5517
        %v5534 = vcombine.high %v5493, %v5517
        %v5535 = vcombine.low %v5500, %v5524
        %v5536 = vcombine.high %v5500, %v5524
        %v5537 = vcombine.low %v5508, %v5532
        %v5538 = vcombine.low %v4980, %v5028
        %v5539 = vcombine.high %v4980, %v5028
        %v5541 = vunpack.c.l.s4 1983009808
        %v5542 = vunpack.c.0.s8 %v5541
        %v5543 = vlaneseq
        %v5544 = vshrl.u32 %v5543, 7
        %v5545 = vsub.s32 %v5542, %v5544
        %v5546 = vrot.slane %v5538, %v5545
        %v5548 = vunpack.c.l.s4 1983009808
        %v5549 = vunpack.c.0.s8 %v5548
        %v5550 = vlaneseq
        %v5551 = vshrl.u32 %v5550, 7
        %v5552 = vsub.s32 %v5549, %v5551
        %v5553 = vrot.slane %v5539, %v5552
        %v5554 = vcombine.low %v5004, %v5052
        %v5555 = vcombine.high %v5004, %v5052
        %v5557 = vunpack.c.l.s4 1983009808
        %v5558 = vunpack.c.0.s8 %v5557
        %v5559 = vlaneseq
        %v5560 = vshrl.u32 %v5559, 7
        %v5561 = vsub.s32 %v5558, %v5560
        %v5562 = vrot.slane %v5554, %v5561
        %v5564 = vunpack.c.l.s4 1983009808
        %v5565 = vunpack.c.0.s8 %v5564
        %v5566 = vlaneseq
        %v5567 = vshrl.u32 %v5566, 7
        %v5568 = vsub.s32 %v5565, %v5567
        %v5569 = vrot.slane %v5555, %v5568
        %v5570 = vcombine.low %v5546, %v5562
        %v5571 = vcombine.high %v5546, %v5562
        %v5573 = vunpack.c.l.s4 1934713408
        %v5574 = vunpack.c.0.s8 %v5573
        %v5575 = vlaneseq
        %v5576 = vshrl.u32 %v5575, 7
        %v5577 = vsub.s32 %v5574, %v5576
        %v5578 = vrot.slane %v5570, %v5577
        %v5580 = vunpack.c.l.s4 1934713408
        %v5581 = vunpack.c.0.s8 %v5580
        %v5582 = vlaneseq
        %v5583 = vshrl.u32 %v5582, 7
        %v5584 = vsub.s32 %v5581, %v5583
        %v5585 = vrot.slane %v5571, %v5584
        %v5586 = vcombine.low %v5553, %v5569
        %v5587 = vcombine.high %v5578, 0.0
        %v5588 = vcombine.high %v5585, 0.0
        %v5590 = vunpack.c.l.s4 1934713408
        %v5591 = vunpack.c.0.s8 %v5590
        %v5592 = vlaneseq
        %v5593 = vshrl.u32 %v5592, 7
        %v5594 = vsub.s32 %v5591, %v5593
        %v5595 = vrot.slane %v5586, %v5594
        %v5596 = vcombine.low %v4644, %v4805
        %v5597 = vcombine.high %v4644, %v4805
        %v5599 = vunpack.c.l.s4 1983009808
        %v5600 = vunpack.c.0.s8 %v5599
        %v5601 = vlaneseq
        %v5602 = vshrl.u32 %v5601, 7
        %v5603 = vsub.s32 %v5600, %v5602
        %v5604 = vrot.slane %v5596, %v5603
        %v5606 = vunpack.c.l.s4 1983009808
        %v5607 = vunpack.c.0.s8 %v5606
        %v5608 = vlaneseq
        %v5609 = vshrl.u32 %v5608, 7
        %v5610 = vsub.s32 %v5607, %v5609
        %v5611 = vrot.slane %v5597, %v5610
        %v5612 = vcombine.low %v4781, %v4829
        %v5613 = vcombine.high %v4781, %v4829
        %v5615 = vunpack.c.l.s4 1983009808
        %v5616 = vunpack.c.0.s8 %v5615
        %v5617 = vlaneseq
        %v5618 = vshrl.u32 %v5617, 7
        %v5619 = vsub.s32 %v5616, %v5618
        %v5620 = vrot.slane %v5612, %v5619
        %v5622 = vunpack.c.l.s4 1983009808
        %v5623 = vunpack.c.0.s8 %v5622
        %v5624 = vlaneseq
        %v5625 = vshrl.u32 %v5624, 7
        %v5626 = vsub.s32 %v5623, %v5625
        %v5627 = vrot.slane %v5613, %v5626
        %v5628 = vcombine.low %v4853, %v4901
        %v5629 = vcombine.high %v4853, %v4901
        %v5631 = vunpack.c.l.s4 1983009808
        %v5632 = vunpack.c.0.s8 %v5631
        %v5633 = vlaneseq
        %v5634 = vshrl.u32 %v5633, 7
        %v5635 = vsub.s32 %v5632, %v5634
        %v5636 = vrot.slane %v5628, %v5635
        %v5638 = vunpack.c.l.s4 1983009808
        %v5639 = vunpack.c.0.s8 %v5638
        %v5640 = vlaneseq
        %v5641 = vshrl.u32 %v5640, 7
        %v5642 = vsub.s32 %v5639, %v5641
        %v5643 = vrot.slane %v5629, %v5642
        %v5644 = vcombine.low %v4877, %v4962
        %v5645 = vcombine.high %v4877, %v4962
        %v5647 = vunpack.c.l.s4 1983009808
        %v5648 = vunpack.c.0.s8 %v5647
        %v5649 = vlaneseq
        %v5650 = vshrl.u32 %v5649, 7
        %v5651 = vsub.s32 %v5648, %v5650
        %v5652 = vrot.slane %v5644, %v5651
        %v5654 = vunpack.c.l.s4 1983009808
        %v5655 = vunpack.c.0.s8 %v5654
        %v5656 = vlaneseq
        %v5657 = vshrl.u32 %v5656, 7
        %v5658 = vsub.s32 %v5655, %v5657
        %v5659 = vrot.slane %v5645, %v5658
        %v5660 = vcombine.low %v5604, %v5620
        %v5661 = vcombine.high %v5604, %v5620
        %v5663 = vunpack.c.l.s4 1934713408
        %v5664 = vunpack.c.0.s8 %v5663
        %v5665 = vlaneseq
        %v5666 = vshrl.u32 %v5665, 7
        %v5667 = vsub.s32 %v5664, %v5666
        %v5668 = vrot.slane %v5660, %v5667
        %v5670 = vunpack.c.l.s4 1934713408
        %v5671 = vunpack.c.0.s8 %v5670
        %v5672 = vlaneseq
        %v5673 = vshrl.u32 %v5672, 7
        %v5674 = vsub.s32 %v5671, %v5673
        %v5675 = vrot.slane %v5661, %v5674
        %v5676 = vcombine.low %v5611, %v5627
        %v5678 = vunpack.c.l.s4 1934713408
        %v5679 = vunpack.c.0.s8 %v5678
        %v5680 = vlaneseq
        %v5681 = vshrl.u32 %v5680, 7
        %v5682 = vsub.s32 %v5679, %v5681
        %v5683 = vrot.slane %v5676, %v5682
        %v5684 = vcombine.low %v5636, %v5652
        %v5685 = vcombine.high %v5636, %v5652
        %v5687 = vunpack.c.l.s4 1934713408
        %v5688 = vunpack.c.0.s8 %v5687
        %v5689 = vlaneseq
        %v5690 = vshrl.u32 %v5689, 7
        %v5691 = vsub.s32 %v5688, %v5690
        %v5692 = vrot.slane %v5684, %v5691
        %v5694 = vunpack.c.l.s4 1934713408
        %v5695 = vunpack.c.0.s8 %v5694
        %v5696 = vlaneseq
        %v5697 = vshrl.u32 %v5696, 7
        %v5698 = vsub.s32 %v5695, %v5697
        %v5699 = vrot.slane %v5685, %v5698
        %v5700 = vcombine.low %v5643, %v5659
        %v5702 = vunpack.c.l.s4 1934713408
        %v5703 = vunpack.c.0.s8 %v5702
        %v5704 = vlaneseq
        %v5705 = vshrl.u32 %v5704, 7
        %v5706 = vsub.s32 %v5703, %v5705
        %v5707 = vrot.slane %v5700, %v5706
        %v5708 = vcombine.low %v5668, %v5692
        %v5709 = vcombine.high %v5668, %v5692
        %v5710 = vcombine.low %v5675, %v5699
        %v5711 = vcombine.high %v5675, %v5699
        %v5712 = vcombine.low %v5683, %v5707
        %v5713 = vcombine.low %v4982, %v5030
        %v5714 = vcombine.high %v4982, %v5030
        %v5716 = vunpack.c.l.s4 1983009808
        %v5717 = vunpack.c.0.s8 %v5716
        %v5718 = vlaneseq
        %v5719 = vshrl.u32 %v5718, 7
        %v5720 = vsub.s32 %v5717, %v5719
        %v5721 = vrot.slane %v5713, %v5720
        %v5723 = vunpack.c.l.s4 1983009808
        %v5724 = vunpack.c.0.s8 %v5723
        %v5725 = vlaneseq
        %v5726 = vshrl.u32 %v5725, 7
        %v5727 = vsub.s32 %v5724, %v5726
        %v5728 = vrot.slane %v5714, %v5727
        %v5729 = vcombine.low %v5006, %v5054
        %v5730 = vcombine.high %v5006, %v5054
        %v5732 = vunpack.c.l.s4 1983009808
        %v5733 = vunpack.c.0.s8 %v5732
        %v5734 = vlaneseq
        %v5735 = vshrl.u32 %v5734, 7
        %v5736 = vsub.s32 %v5733, %v5735
        %v5737 = vrot.slane %v5729, %v5736
        %v5739 = vunpack.c.l.s4 1983009808
        %v5740 = vunpack.c.0.s8 %v5739
        %v5741 = vlaneseq
        %v5742 = vshrl.u32 %v5741, 7
        %v5743 = vsub.s32 %v5740, %v5742
        %v5744 = vrot.slane %v5730, %v5743
        %v5745 = vcombine.low %v5721, %v5737
        %v5746 = vcombine.high %v5721, %v5737
        %v5748 = vunpack.c.l.s4 1934713408
        %v5749 = vunpack.c.0.s8 %v5748
        %v5750 = vlaneseq
        %v5751 = vshrl.u32 %v5750, 7
        %v5752 = vsub.s32 %v5749, %v5751
        %v5753 = vrot.slane %v5745, %v5752
        %v5755 = vunpack.c.l.s4 1934713408
        %v5756 = vunpack.c.0.s8 %v5755
        %v5757 = vlaneseq
        %v5758 = vshrl.u32 %v5757, 7
        %v5759 = vsub.s32 %v5756, %v5758
        %v5760 = vrot.slane %v5746, %v5759
        %v5761 = vcombine.low %v5728, %v5744
        %v5762 = vcombine.high %v5753, 0.0
        %v5763 = vcombine.high %v5760, 0.0
        %v5765 = vunpack.c.l.s4 1934713408
        %v5766 = vunpack.c.0.s8 %v5765
        %v5767 = vlaneseq
        %v5768 = vshrl.u32 %v5767, 7
        %v5769 = vsub.s32 %v5766, %v5768
        %v5770 = vrot.slane %v5761, %v5769
        %v5771 = vcombine.low %v4645, %v4807
        %v5772 = vcombine.high %v4645, %v4807
        %v5774 = vunpack.c.l.s4 1983009808
        %v5775 = vunpack.c.0.s8 %v5774
        %v5776 = vlaneseq
        %v5777 = vshrl.u32 %v5776, 7
        %v5778 = vsub.s32 %v5775, %v5777
        %v5779 = vrot.slane %v5771, %v5778
        %v5781 = vunpack.c.l.s4 1983009808
        %v5782 = vunpack.c.0.s8 %v5781
        %v5783 = vlaneseq
        %v5784 = vshrl.u32 %v5783, 7
        %v5785 = vsub.s32 %v5782, %v5784
        %v5786 = vrot.slane %v5772, %v5785
        %v5787 = vcombine.low %v4783, %v4831
        %v5788 = vcombine.high %v4783, %v4831
        %v5790 = vunpack.c.l.s4 1983009808
        %v5791 = vunpack.c.0.s8 %v5790
        %v5792 = vlaneseq
        %v5793 = vshrl.u32 %v5792, 7
        %v5794 = vsub.s32 %v5791, %v5793
        %v5795 = vrot.slane %v5787, %v5794
        %v5797 = vunpack.c.l.s4 1983009808
        %v5798 = vunpack.c.0.s8 %v5797
        %v5799 = vlaneseq
        %v5800 = vshrl.u32 %v5799, 7
        %v5801 = vsub.s32 %v5798, %v5800
        %v5802 = vrot.slane %v5788, %v5801
        %v5803 = vcombine.low %v4855, %v4903
        %v5804 = vcombine.high %v4855, %v4903
        %v5806 = vunpack.c.l.s4 1983009808
        %v5807 = vunpack.c.0.s8 %v5806
        %v5808 = vlaneseq
        %v5809 = vshrl.u32 %v5808, 7
        %v5810 = vsub.s32 %v5807, %v5809
        %v5811 = vrot.slane %v5803, %v5810
        %v5813 = vunpack.c.l.s4 1983009808
        %v5814 = vunpack.c.0.s8 %v5813
        %v5815 = vlaneseq
        %v5816 = vshrl.u32 %v5815, 7
        %v5817 = vsub.s32 %v5814, %v5816
        %v5818 = vrot.slane %v5804, %v5817
        %v5819 = vcombine.low %v4879, %v4963
        %v5820 = vcombine.high %v4879, %v4963
        %v5822 = vunpack.c.l.s4 1983009808
        %v5823 = vunpack.c.0.s8 %v5822
        %v5824 = vlaneseq
        %v5825 = vshrl.u32 %v5824, 7
        %v5826 = vsub.s32 %v5823, %v5825
        %v5827 = vrot.slane %v5819, %v5826
        %v5829 = vunpack.c.l.s4 1983009808
        %v5830 = vunpack.c.0.s8 %v5829
        %v5831 = vlaneseq
        %v5832 = vshrl.u32 %v5831, 7
        %v5833 = vsub.s32 %v5830, %v5832
        %v5834 = vrot.slane %v5820, %v5833
        %v5835 = vcombine.low %v5779, %v5795
        %v5836 = vcombine.high %v5779, %v5795
        %v5838 = vunpack.c.l.s4 1934713408
        %v5839 = vunpack.c.0.s8 %v5838
        %v5840 = vlaneseq
        %v5841 = vshrl.u32 %v5840, 7
        %v5842 = vsub.s32 %v5839, %v5841
        %v5843 = vrot.slane %v5835, %v5842
        %v5845 = vunpack.c.l.s4 1934713408
        %v5846 = vunpack.c.0.s8 %v5845
        %v5847 = vlaneseq
        %v5848 = vshrl.u32 %v5847, 7
        %v5849 = vsub.s32 %v5846, %v5848
        %v5850 = vrot.slane %v5836, %v5849
        %v5851 = vcombine.low %v5786, %v5802
        %v5853 = vunpack.c.l.s4 1934713408
        %v5854 = vunpack.c.0.s8 %v5853
        %v5855 = vlaneseq
        %v5856 = vshrl.u32 %v5855, 7
        %v5857 = vsub.s32 %v5854, %v5856
        %v5858 = vrot.slane %v5851, %v5857
        %v5859 = vcombine.low %v5811, %v5827
        %v5860 = vcombine.high %v5811, %v5827
        %v5862 = vunpack.c.l.s4 1934713408
        %v5863 = vunpack.c.0.s8 %v5862
        %v5864 = vlaneseq
        %v5865 = vshrl.u32 %v5864, 7
        %v5866 = vsub.s32 %v5863, %v5865
        %v5867 = vrot.slane %v5859, %v5866
        %v5869 = vunpack.c.l.s4 1934713408
        %v5870 = vunpack.c.0.s8 %v5869
        %v5871 = vlaneseq
        %v5872 = vshrl.u32 %v5871, 7
        %v5873 = vsub.s32 %v5870, %v5872
        %v5874 = vrot.slane %v5860, %v5873
        %v5875 = vcombine.low %v5818, %v5834
        %v5877 = vunpack.c.l.s4 1934713408
        %v5878 = vunpack.c.0.s8 %v5877
        %v5879 = vlaneseq
        %v5880 = vshrl.u32 %v5879, 7
        %v5881 = vsub.s32 %v5878, %v5880
        %v5882 = vrot.slane %v5875, %v5881
        %v5883 = vcombine.low %v5843, %v5867
        %v5884 = vcombine.high %v5843, %v5867
        %v5885 = vcombine.low %v5850, %v5874
        %v5886 = vcombine.high %v5850, %v5874
        %v5887 = vcombine.low %v5858, %v5882
        %v5888 = vcombine.low %v4984, %v5032
        %v5889 = vcombine.high %v4984, %v5032
        %v5891 = vunpack.c.l.s4 1983009808
        %v5892 = vunpack.c.0.s8 %v5891
        %v5893 = vlaneseq
        %v5894 = vshrl.u32 %v5893, 7
        %v5895 = vsub.s32 %v5892, %v5894
        %v5896 = vrot.slane %v5888, %v5895
        %v5898 = vunpack.c.l.s4 1983009808
        %v5899 = vunpack.c.0.s8 %v5898
        %v5900 = vlaneseq
        %v5901 = vshrl.u32 %v5900, 7
        %v5902 = vsub.s32 %v5899, %v5901
        %v5903 = vrot.slane %v5889, %v5902
        %v5904 = vcombine.low %v5008, %v5056
        %v5905 = vcombine.high %v5008, %v5056
        %v5907 = vunpack.c.l.s4 1983009808
        %v5908 = vunpack.c.0.s8 %v5907
        %v5909 = vlaneseq
        %v5910 = vshrl.u32 %v5909, 7
        %v5911 = vsub.s32 %v5908, %v5910
        %v5912 = vrot.slane %v5904, %v5911
        %v5914 = vunpack.c.l.s4 1983009808
        %v5915 = vunpack.c.0.s8 %v5914
        %v5916 = vlaneseq
        %v5917 = vshrl.u32 %v5916, 7
        %v5918 = vsub.s32 %v5915, %v5917
        %v5919 = vrot.slane %v5905, %v5918
        %v5920 = vcombine.low %v5896, %v5912
        %v5921 = vcombine.high %v5896, %v5912
        %v5923 = vunpack.c.l.s4 1934713408
        %v5924 = vunpack.c.0.s8 %v5923
        %v5925 = vlaneseq
        %v5926 = vshrl.u32 %v5925, 7
        %v5927 = vsub.s32 %v5924, %v5926
        %v5928 = vrot.slane %v5920, %v5927
        %v5930 = vunpack.c.l.s4 1934713408
        %v5931 = vunpack.c.0.s8 %v5930
        %v5932 = vlaneseq
        %v5933 = vshrl.u32 %v5932, 7
        %v5934 = vsub.s32 %v5931, %v5933
        %v5935 = vrot.slane %v5921, %v5934
        %v5936 = vcombine.low %v5903, %v5919
        %v5937 = vcombine.high %v5928, 0.0
        %v5938 = vcombine.high %v5935, 0.0
        %v5940 = vunpack.c.l.s4 1934713408
        %v5941 = vunpack.c.0.s8 %v5940
        %v5942 = vlaneseq
        %v5943 = vshrl.u32 %v5942, 7
        %v5944 = vsub.s32 %v5941, %v5943
        %v5945 = vrot.slane %v5936, %v5944
        %v5946 = vcombine.low %v4646, %v4809
        %v5947 = vcombine.high %v4646, %v4809
        %v5949 = vunpack.c.l.s4 1983009808
        %v5950 = vunpack.c.0.s8 %v5949
        %v5951 = vlaneseq
        %v5952 = vshrl.u32 %v5951, 7
        %v5953 = vsub.s32 %v5950, %v5952
        %v5954 = vrot.slane %v5946, %v5953
        %v5956 = vunpack.c.l.s4 1983009808
        %v5957 = vunpack.c.0.s8 %v5956
        %v5958 = vlaneseq
        %v5959 = vshrl.u32 %v5958, 7
        %v5960 = vsub.s32 %v5957, %v5959
        %v5961 = vrot.slane %v5947, %v5960
        %v5962 = vcombine.low %v4785, %v4833
        %v5963 = vcombine.high %v4785, %v4833
        %v5965 = vunpack.c.l.s4 1983009808
        %v5966 = vunpack.c.0.s8 %v5965
        %v5967 = vlaneseq
        %v5968 = vshrl.u32 %v5967, 7
        %v5969 = vsub.s32 %v5966, %v5968
        %v5970 = vrot.slane %v5962, %v5969
        %v5972 = vunpack.c.l.s4 1983009808
        %v5973 = vunpack.c.0.s8 %v5972
        %v5974 = vlaneseq
        %v5975 = vshrl.u32 %v5974, 7
        %v5976 = vsub.s32 %v5973, %v5975
        %v5977 = vrot.slane %v5963, %v5976
        %v5978 = vcombine.low %v4857, %v4905
        %v5979 = vcombine.high %v4857, %v4905
        %v5981 = vunpack.c.l.s4 1983009808
        %v5982 = vunpack.c.0.s8 %v5981
        %v5983 = vlaneseq
        %v5984 = vshrl.u32 %v5983, 7
        %v5985 = vsub.s32 %v5982, %v5984
        %v5986 = vrot.slane %v5978, %v5985
        %v5988 = vunpack.c.l.s4 1983009808
        %v5989 = vunpack.c.0.s8 %v5988
        %v5990 = vlaneseq
        %v5991 = vshrl.u32 %v5990, 7
        %v5992 = vsub.s32 %v5989, %v5991
        %v5993 = vrot.slane %v5979, %v5992
        %v5994 = vcombine.low %v4881, %v4964
        %v5995 = vcombine.high %v4881, %v4964
        %v5997 = vunpack.c.l.s4 1983009808
        %v5998 = vunpack.c.0.s8 %v5997
        %v5999 = vlaneseq
        %v6000 = vshrl.u32 %v5999, 7
        %v6001 = vsub.s32 %v5998, %v6000
        %v6002 = vrot.slane %v5994, %v6001
        %v6004 = vunpack.c.l.s4 1983009808
        %v6005 = vunpack.c.0.s8 %v6004
        %v6006 = vlaneseq
        %v6007 = vshrl.u32 %v6006, 7
        %v6008 = vsub.s32 %v6005, %v6007
        %v6009 = vrot.slane %v5995, %v6008
        %v6010 = vcombine.low %v5954, %v5970
        %v6011 = vcombine.high %v5954, %v5970
        %v6013 = vunpack.c.l.s4 1934713408
        %v6014 = vunpack.c.0.s8 %v6013
        %v6015 = vlaneseq
        %v6016 = vshrl.u32 %v6015, 7
        %v6017 = vsub.s32 %v6014, %v6016
        %v6018 = vrot.slane %v6010, %v6017
        %v6020 = vunpack.c.l.s4 1934713408
        %v6021 = vunpack.c.0.s8 %v6020
        %v6022 = vlaneseq
        %v6023 = vshrl.u32 %v6022, 7
        %v6024 = vsub.s32 %v6021, %v6023
        %v6025 = vrot.slane %v6011, %v6024
        %v6026 = vcombine.low %v5961, %v5977
        %v6028 = vunpack.c.l.s4 1934713408
        %v6029 = vunpack.c.0.s8 %v6028
        %v6030 = vlaneseq
        %v6031 = vshrl.u32 %v6030, 7
        %v6032 = vsub.s32 %v6029, %v6031
        %v6033 = vrot.slane %v6026, %v6032
        %v6034 = vcombine.low %v5986, %v6002
        %v6035 = vcombine.high %v5986, %v6002
        %v6037 = vunpack.c.l.s4 1934713408
        %v6038 = vunpack.c.0.s8 %v6037
        %v6039 = vlaneseq
        %v6040 = vshrl.u32 %v6039, 7
        %v6041 = vsub.s32 %v6038, %v6040
        %v6042 = vrot.slane %v6034, %v6041
        %v6044 = vunpack.c.l.s4 1934713408
        %v6045 = vunpack.c.0.s8 %v6044
        %v6046 = vlaneseq
        %v6047 = vshrl.u32 %v6046, 7
        %v6048 = vsub.s32 %v6045, %v6047
        %v6049 = vrot.slane %v6035, %v6048
        %v6050 = vcombine.low %v5993, %v6009
        %v6052 = vunpack.c.l.s4 1934713408
        %v6053 = vunpack.c.0.s8 %v6052
        %v6054 = vlaneseq
        %v6055 = vshrl.u32 %v6054, 7
        %v6056 = vsub.s32 %v6053, %v6055
        %v6057 = vrot.slane %v6050, %v6056
        %v6058 = vcombine.low %v6018, %v6042
        %v6059 = vcombine.high %v6018, %v6042
        %v6060 = vcombine.low %v6025, %v6049
        %v6061 = vcombine.high %v6025, %v6049
        %v6062 = vcombine.low %v6033, %v6057
        %v6063 = vcombine.low %v4986, %v5034
        %v6064 = vcombine.high %v4986, %v5034
        %v6066 = vunpack.c.l.s4 1983009808
        %v6067 = vunpack.c.0.s8 %v6066
        %v6068 = vlaneseq
        %v6069 = vshrl.u32 %v6068, 7
        %v6070 = vsub.s32 %v6067, %v6069
        %v6071 = vrot.slane %v6063, %v6070
        %v6073 = vunpack.c.l.s4 1983009808
        %v6074 = vunpack.c.0.s8 %v6073
        %v6075 = vlaneseq
        %v6076 = vshrl.u32 %v6075, 7
        %v6077 = vsub.s32 %v6074, %v6076
        %v6078 = vrot.slane %v6064, %v6077
        %v6079 = vcombine.low %v5010, %v5058
        %v6080 = vcombine.high %v5010, %v5058
        %v6082 = vunpack.c.l.s4 1983009808
        %v6083 = vunpack.c.0.s8 %v6082
        %v6084 = vlaneseq
        %v6085 = vshrl.u32 %v6084, 7
        %v6086 = vsub.s32 %v6083, %v6085
        %v6087 = vrot.slane %v6079, %v6086
        %v6089 = vunpack.c.l.s4 1983009808
        %v6090 = vunpack.c.0.s8 %v6089
        %v6091 = vlaneseq
        %v6092 = vshrl.u32 %v6091, 7
        %v6093 = vsub.s32 %v6090, %v6092
        %v6094 = vrot.slane %v6080, %v6093
        %v6095 = vcombine.low %v6071, %v6087
        %v6096 = vcombine.high %v6071, %v6087
        %v6098 = vunpack.c.l.s4 1934713408
        %v6099 = vunpack.c.0.s8 %v6098
        %v6100 = vlaneseq
        %v6101 = vshrl.u32 %v6100, 7
        %v6102 = vsub.s32 %v6099, %v6101
        %v6103 = vrot.slane %v6095, %v6102
        %v6105 = vunpack.c.l.s4 1934713408
        %v6106 = vunpack.c.0.s8 %v6105
        %v6107 = vlaneseq
        %v6108 = vshrl.u32 %v6107, 7
        %v6109 = vsub.s32 %v6106, %v6108
        %v6110 = vrot.slane %v6096, %v6109
        %v6111 = vcombine.low %v6078, %v6094
        %v6112 = vcombine.high %v6103, 0.0
        %v6113 = vcombine.high %v6110, 0.0
        %v6115 = vunpack.c.l.s4 1934713408
        %v6116 = vunpack.c.0.s8 %v6115
        %v6117 = vlaneseq
        %v6118 = vshrl.u32 %v6117, 7
        %v6119 = vsub.s32 %v6116, %v6118
        %v6120 = vrot.slane %v6111, %v6119
        %v6121 = vcombine.low %v4647, %v4811
        %v6122 = vcombine.high %v4647, %v4811
        %v6124 = vunpack.c.l.s4 1983009808
        %v6125 = vunpack.c.0.s8 %v6124
        %v6126 = vlaneseq
        %v6127 = vshrl.u32 %v6126, 7
        %v6128 = vsub.s32 %v6125, %v6127
        %v6129 = vrot.slane %v6121, %v6128
        %v6131 = vunpack.c.l.s4 1983009808
        %v6132 = vunpack.c.0.s8 %v6131
        %v6133 = vlaneseq
        %v6134 = vshrl.u32 %v6133, 7
        %v6135 = vsub.s32 %v6132, %v6134
        %v6136 = vrot.slane %v6122, %v6135
        %v6137 = vcombine.low %v4787, %v4835
        %v6138 = vcombine.high %v4787, %v4835
        %v6140 = vunpack.c.l.s4 1983009808
        %v6141 = vunpack.c.0.s8 %v6140
        %v6142 = vlaneseq
        %v6143 = vshrl.u32 %v6142, 7
        %v6144 = vsub.s32 %v6141, %v6143
        %v6145 = vrot.slane %v6137, %v6144
        %v6147 = vunpack.c.l.s4 1983009808
        %v6148 = vunpack.c.0.s8 %v6147
        %v6149 = vlaneseq
        %v6150 = vshrl.u32 %v6149, 7
        %v6151 = vsub.s32 %v6148, %v6150
        %v6152 = vrot.slane %v6138, %v6151
        %v6153 = vcombine.low %v4859, %v4907
        %v6154 = vcombine.high %v4859, %v4907
        %v6156 = vunpack.c.l.s4 1983009808
        %v6157 = vunpack.c.0.s8 %v6156
        %v6158 = vlaneseq
        %v6159 = vshrl.u32 %v6158, 7
        %v6160 = vsub.s32 %v6157, %v6159
        %v6161 = vrot.slane %v6153, %v6160
        %v6163 = vunpack.c.l.s4 1983009808
        %v6164 = vunpack.c.0.s8 %v6163
        %v6165 = vlaneseq
        %v6166 = vshrl.u32 %v6165, 7
        %v6167 = vsub.s32 %v6164, %v6166
        %v6168 = vrot.slane %v6154, %v6167
        %v6169 = vcombine.low %v4883, %v4965
        %v6170 = vcombine.high %v4883, %v4965
        %v6172 = vunpack.c.l.s4 1983009808
        %v6173 = vunpack.c.0.s8 %v6172
        %v6174 = vlaneseq
        %v6175 = vshrl.u32 %v6174, 7
        %v6176 = vsub.s32 %v6173, %v6175
        %v6177 = vrot.slane %v6169, %v6176
        %v6179 = vunpack.c.l.s4 1983009808
        %v6180 = vunpack.c.0.s8 %v6179
        %v6181 = vlaneseq
        %v6182 = vshrl.u32 %v6181, 7
        %v6183 = vsub.s32 %v6180, %v6182
        %v6184 = vrot.slane %v6170, %v6183
        %v6185 = vcombine.low %v6129, %v6145
        %v6186 = vcombine.high %v6129, %v6145
        %v6188 = vunpack.c.l.s4 1934713408
        %v6189 = vunpack.c.0.s8 %v6188
        %v6190 = vlaneseq
        %v6191 = vshrl.u32 %v6190, 7
        %v6192 = vsub.s32 %v6189, %v6191
        %v6193 = vrot.slane %v6185, %v6192
        %v6195 = vunpack.c.l.s4 1934713408
        %v6196 = vunpack.c.0.s8 %v6195
        %v6197 = vlaneseq
        %v6198 = vshrl.u32 %v6197, 7
        %v6199 = vsub.s32 %v6196, %v6198
        %v6200 = vrot.slane %v6186, %v6199
        %v6201 = vcombine.low %v6136, %v6152
        %v6203 = vunpack.c.l.s4 1934713408
        %v6204 = vunpack.c.0.s8 %v6203
        %v6205 = vlaneseq
        %v6206 = vshrl.u32 %v6205, 7
        %v6207 = vsub.s32 %v6204, %v6206
        %v6208 = vrot.slane %v6201, %v6207
        %v6209 = vcombine.low %v6161, %v6177
        %v6210 = vcombine.high %v6161, %v6177
        %v6212 = vunpack.c.l.s4 1934713408
        %v6213 = vunpack.c.0.s8 %v6212
        %v6214 = vlaneseq
        %v6215 = vshrl.u32 %v6214, 7
        %v6216 = vsub.s32 %v6213, %v6215
        %v6217 = vrot.slane %v6209, %v6216
        %v6219 = vunpack.c.l.s4 1934713408
        %v6220 = vunpack.c.0.s8 %v6219
        %v6221 = vlaneseq
        %v6222 = vshrl.u32 %v6221, 7
        %v6223 = vsub.s32 %v6220, %v6222
        %v6224 = vrot.slane %v6210, %v6223
        %v6225 = vcombine.low %v6168, %v6184
        %v6227 = vunpack.c.l.s4 1934713408
        %v6228 = vunpack.c.0.s8 %v6227
        %v6229 = vlaneseq
        %v6230 = vshrl.u32 %v6229, 7
        %v6231 = vsub.s32 %v6228, %v6230
        %v6232 = vrot.slane %v6225, %v6231
        %v6233 = vcombine.low %v6193, %v6217
        %v6234 = vcombine.high %v6193, %v6217
        %v6235 = vcombine.low %v6200, %v6224
        %v6236 = vcombine.high %v6200, %v6224
        %v6237 = vcombine.low %v6208, %v6232
        %v6238 = vcombine.low %v4988, %v5036
        %v6239 = vcombine.high %v4988, %v5036
        %v6241 = vunpack.c.l.s4 1983009808
        %v6242 = vunpack.c.0.s8 %v6241
        %v6243 = vlaneseq
        %v6244 = vshrl.u32 %v6243, 7
        %v6245 = vsub.s32 %v6242, %v6244
        %v6246 = vrot.slane %v6238, %v6245
        %v6248 = vunpack.c.l.s4 1983009808
        %v6249 = vunpack.c.0.s8 %v6248
        %v6250 = vlaneseq
        %v6251 = vshrl.u32 %v6250, 7
        %v6252 = vsub.s32 %v6249, %v6251
        %v6253 = vrot.slane %v6239, %v6252
        %v6254 = vcombine.low %v5012, %v5060
        %v6255 = vcombine.high %v5012, %v5060
        %v6257 = vunpack.c.l.s4 1983009808
        %v6258 = vunpack.c.0.s8 %v6257
        %v6259 = vlaneseq
        %v6260 = vshrl.u32 %v6259, 7
        %v6261 = vsub.s32 %v6258, %v6260
        %v6262 = vrot.slane %v6254, %v6261
        %v6264 = vunpack.c.l.s4 1983009808
        %v6265 = vunpack.c.0.s8 %v6264
        %v6266 = vlaneseq
        %v6267 = vshrl.u32 %v6266, 7
        %v6268 = vsub.s32 %v6265, %v6267
        %v6269 = vrot.slane %v6255, %v6268
        %v6270 = vcombine.low %v6246, %v6262
        %v6271 = vcombine.high %v6246, %v6262
        %v6273 = vunpack.c.l.s4 1934713408
        %v6274 = vunpack.c.0.s8 %v6273
        %v6275 = vlaneseq
        %v6276 = vshrl.u32 %v6275, 7
        %v6277 = vsub.s32 %v6274, %v6276
        %v6278 = vrot.slane %v6270, %v6277
        %v6280 = vunpack.c.l.s4 1934713408
        %v6281 = vunpack.c.0.s8 %v6280
        %v6282 = vlaneseq
        %v6283 = vshrl.u32 %v6282, 7
        %v6284 = vsub.s32 %v6281, %v6283
        %v6285 = vrot.slane %v6271, %v6284
        %v6286 = vcombine.low %v6253, %v6269
        %v6287 = vcombine.high %v6278, 0.0
        %v6288 = vcombine.high %v6285, 0.0
        %v6290 = vunpack.c.l.s4 1934713408
        %v6291 = vunpack.c.0.s8 %v6290
        %v6292 = vlaneseq
        %v6293 = vshrl.u32 %v6292, 7
        %v6294 = vsub.s32 %v6291, %v6293
        %v6295 = vrot.slane %v6286, %v6294
        %v6296 = vcombine.low %v4648, %v4813
        %v6297 = vcombine.high %v4648, %v4813
        %v6299 = vunpack.c.l.s4 1983009808
        %v6300 = vunpack.c.0.s8 %v6299
        %v6301 = vlaneseq
        %v6302 = vshrl.u32 %v6301, 7
        %v6303 = vsub.s32 %v6300, %v6302
        %v6304 = vrot.slane %v6296, %v6303
        %v6306 = vunpack.c.l.s4 1983009808
        %v6307 = vunpack.c.0.s8 %v6306
        %v6308 = vlaneseq
        %v6309 = vshrl.u32 %v6308, 7
        %v6310 = vsub.s32 %v6307, %v6309
        %v6311 = vrot.slane %v6297, %v6310
        %v6312 = vcombine.low %v4789, %v4837
        %v6313 = vcombine.high %v4789, %v4837
        %v6315 = vunpack.c.l.s4 1983009808
        %v6316 = vunpack.c.0.s8 %v6315
        %v6317 = vlaneseq
        %v6318 = vshrl.u32 %v6317, 7
        %v6319 = vsub.s32 %v6316, %v6318
        %v6320 = vrot.slane %v6312, %v6319
        %v6322 = vunpack.c.l.s4 1983009808
        %v6323 = vunpack.c.0.s8 %v6322
        %v6324 = vlaneseq
        %v6325 = vshrl.u32 %v6324, 7
        %v6326 = vsub.s32 %v6323, %v6325
        %v6327 = vrot.slane %v6313, %v6326
        %v6328 = vcombine.low %v4861, %v4909
        %v6329 = vcombine.high %v4861, %v4909
        %v6331 = vunpack.c.l.s4 1983009808
        %v6332 = vunpack.c.0.s8 %v6331
        %v6333 = vlaneseq
        %v6334 = vshrl.u32 %v6333, 7
        %v6335 = vsub.s32 %v6332, %v6334
        %v6336 = vrot.slane %v6328, %v6335
        %v6338 = vunpack.c.l.s4 1983009808
        %v6339 = vunpack.c.0.s8 %v6338
        %v6340 = vlaneseq
        %v6341 = vshrl.u32 %v6340, 7
        %v6342 = vsub.s32 %v6339, %v6341
        %v6343 = vrot.slane %v6329, %v6342
        %v6344 = vcombine.low %v4885, %v4966
        %v6345 = vcombine.high %v4885, %v4966
        %v6347 = vunpack.c.l.s4 1983009808
        %v6348 = vunpack.c.0.s8 %v6347
        %v6349 = vlaneseq
        %v6350 = vshrl.u32 %v6349, 7
        %v6351 = vsub.s32 %v6348, %v6350
        %v6352 = vrot.slane %v6344, %v6351
        %v6354 = vunpack.c.l.s4 1983009808
        %v6355 = vunpack.c.0.s8 %v6354
        %v6356 = vlaneseq
        %v6357 = vshrl.u32 %v6356, 7
        %v6358 = vsub.s32 %v6355, %v6357
        %v6359 = vrot.slane %v6345, %v6358
        %v6360 = vcombine.low %v6304, %v6320
        %v6361 = vcombine.high %v6304, %v6320
        %v6363 = vunpack.c.l.s4 1934713408
        %v6364 = vunpack.c.0.s8 %v6363
        %v6365 = vlaneseq
        %v6366 = vshrl.u32 %v6365, 7
        %v6367 = vsub.s32 %v6364, %v6366
        %v6368 = vrot.slane %v6360, %v6367
        %v6370 = vunpack.c.l.s4 1934713408
        %v6371 = vunpack.c.0.s8 %v6370
        %v6372 = vlaneseq
        %v6373 = vshrl.u32 %v6372, 7
        %v6374 = vsub.s32 %v6371, %v6373
        %v6375 = vrot.slane %v6361, %v6374
        %v6376 = vcombine.low %v6311, %v6327
        %v6378 = vunpack.c.l.s4 1934713408
        %v6379 = vunpack.c.0.s8 %v6378
        %v6380 = vlaneseq
        %v6381 = vshrl.u32 %v6380, 7
        %v6382 = vsub.s32 %v6379, %v6381
        %v6383 = vrot.slane %v6376, %v6382
        %v6384 = vcombine.low %v6336, %v6352
        %v6385 = vcombine.high %v6336, %v6352
        %v6387 = vunpack.c.l.s4 1934713408
        %v6388 = vunpack.c.0.s8 %v6387
        %v6389 = vlaneseq
        %v6390 = vshrl.u32 %v6389, 7
        %v6391 = vsub.s32 %v6388, %v6390
        %v6392 = vrot.slane %v6384, %v6391
        %v6394 = vunpack.c.l.s4 1934713408
        %v6395 = vunpack.c.0.s8 %v6394
        %v6396 = vlaneseq
        %v6397 = vshrl.u32 %v6396, 7
        %v6398 = vsub.s32 %v6395, %v6397
        %v6399 = vrot.slane %v6385, %v6398
        %v6400 = vcombine.low %v6343, %v6359
        %v6402 = vunpack.c.l.s4 1934713408
        %v6403 = vunpack.c.0.s8 %v6402
        %v6404 = vlaneseq
        %v6405 = vshrl.u32 %v6404, 7
        %v6406 = vsub.s32 %v6403, %v6405
        %v6407 = vrot.slane %v6400, %v6406
        %v6408 = vcombine.low %v6368, %v6392
        %v6409 = vcombine.high %v6368, %v6392
        %v6410 = vcombine.low %v6375, %v6399
        %v6411 = vcombine.high %v6375, %v6399
        %v6412 = vcombine.low %v6383, %v6407
        %v6413 = vcombine.low %v4990, %v5038
        %v6414 = vcombine.high %v4990, %v5038
        %v6416 = vunpack.c.l.s4 1983009808
        %v6417 = vunpack.c.0.s8 %v6416
        %v6418 = vlaneseq
        %v6419 = vshrl.u32 %v6418, 7
        %v6420 = vsub.s32 %v6417, %v6419
        %v6421 = vrot.slane %v6413, %v6420
        %v6423 = vunpack.c.l.s4 1983009808
        %v6424 = vunpack.c.0.s8 %v6423
        %v6425 = vlaneseq
        %v6426 = vshrl.u32 %v6425, 7
        %v6427 = vsub.s32 %v6424, %v6426
        %v6428 = vrot.slane %v6414, %v6427
        %v6429 = vcombine.low %v5014, %v5062
        %v6430 = vcombine.high %v5014, %v5062
        %v6432 = vunpack.c.l.s4 1983009808
        %v6433 = vunpack.c.0.s8 %v6432
        %v6434 = vlaneseq
        %v6435 = vshrl.u32 %v6434, 7
        %v6436 = vsub.s32 %v6433, %v6435
        %v6437 = vrot.slane %v6429, %v6436
        %v6439 = vunpack.c.l.s4 1983009808
        %v6440 = vunpack.c.0.s8 %v6439
        %v6441 = vlaneseq
        %v6442 = vshrl.u32 %v6441, 7
        %v6443 = vsub.s32 %v6440, %v6442
        %v6444 = vrot.slane %v6430, %v6443
        %v6445 = vcombine.low %v6421, %v6437
        %v6446 = vcombine.high %v6421, %v6437
        %v6448 = vunpack.c.l.s4 1934713408
        %v6449 = vunpack.c.0.s8 %v6448
        %v6450 = vlaneseq
        %v6451 = vshrl.u32 %v6450, 7
        %v6452 = vsub.s32 %v6449, %v6451
        %v6453 = vrot.slane %v6445, %v6452
        %v6455 = vunpack.c.l.s4 1934713408
        %v6456 = vunpack.c.0.s8 %v6455
        %v6457 = vlaneseq
        %v6458 = vshrl.u32 %v6457, 7
        %v6459 = vsub.s32 %v6456, %v6458
        %v6460 = vrot.slane %v6446, %v6459
        %v6461 = vcombine.low %v6428, %v6444
        %v6462 = vcombine.high %v6453, 0.0
        %v6463 = vcombine.high %v6460, 0.0
        %v6465 = vunpack.c.l.s4 1934713408
        %v6466 = vunpack.c.0.s8 %v6465
        %v6467 = vlaneseq
        %v6468 = vshrl.u32 %v6467, 7
        %v6469 = vsub.s32 %v6466, %v6468
        %v6470 = vrot.slane %v6461, %v6469
        %vm6551 = vcmask 1046528
        %v6552 = vrot.slane %v5183, 1
        %v6553 = vrot.slane %v5228, 1
        %v6554 = vsel %vm6551, %v6552, %v6553
        %v6555 = vrot.slane %v5184, 1
        %v6556 = vrot.slane %v5237, 1
        %v6557 = vsel %vm6551, %v6555, %v6556
        %v6558 = vrot.slane %v5185, 1
        %v6559 = vrot.slane %v5235, 1
        %v6560 = vsel %vm6551, %v6558, %v6559
        %v6561 = vrot.slane %v5186, 1
        %v6562 = vrot.slane %v5238, 1
        %v6563 = vsel %vm6551, %v6561, %v6562
        %v6564 = vrot.slane %v5187, 1
        %v6565 = vrot.slane %v5245, 1
        %v6566 = vsel %vm6551, %v6564, %v6565
        %v6567 = vrot.slane %v5358, 1
        %v6568 = vrot.slane %v5403, 1
        %v6569 = vsel %vm6551, %v6567, %v6568
        %v6570 = vrot.slane %v5359, 1
        %v6571 = vrot.slane %v5412, 1
        %v6572 = vsel %vm6551, %v6570, %v6571
        %v6573 = vrot.slane %v5360, 1
        %v6574 = vrot.slane %v5410, 1
        %v6575 = vsel %vm6551, %v6573, %v6574
        %v6576 = vrot.slane %v5361, 1
        %v6577 = vrot.slane %v5413, 1
        %v6578 = vsel %vm6551, %v6576, %v6577
        %v6579 = vrot.slane %v5362, 1
        %v6580 = vrot.slane %v5420, 1
        %v6581 = vsel %vm6551, %v6579, %v6580
        %v6582 = vrot.slane %v5533, 1
        %v6583 = vrot.slane %v5578, 1
        %v6584 = vsel %vm6551, %v6582, %v6583
        %v6585 = vrot.slane %v5534, 1
        %v6586 = vrot.slane %v5587, 1
        %v6587 = vsel %vm6551, %v6585, %v6586
        %v6588 = vrot.slane %v5535, 1
        %v6589 = vrot.slane %v5585, 1
        %v6590 = vsel %vm6551, %v6588, %v6589
        %v6591 = vrot.slane %v5536, 1
        %v6592 = vrot.slane %v5588, 1
        %v6593 = vsel %vm6551, %v6591, %v6592
        %v6594 = vrot.slane %v5537, 1
        %v6595 = vrot.slane %v5595, 1
        %v6596 = vsel %vm6551, %v6594, %v6595
        %v6597 = vrot.slane %v5708, 1
        %v6598 = vrot.slane %v5753, 1
        %v6599 = vsel %vm6551, %v6597, %v6598
        %v6600 = vrot.slane %v5709, 1
        %v6601 = vrot.slane %v5762, 1
        %v6602 = vsel %vm6551, %v6600, %v6601
        %v6603 = vrot.slane %v5710, 1
        %v6604 = vrot.slane %v5760, 1
        %v6605 = vsel %vm6551, %v6603, %v6604
        %v6606 = vrot.slane %v5711, 1
        %v6607 = vrot.slane %v5763, 1
        %v6608 = vsel %vm6551, %v6606, %v6607
        %v6609 = vrot.slane %v5712, 1
        %v6610 = vrot.slane %v5770, 1
        %v6611 = vsel %vm6551, %v6609, %v6610
        %v6612 = vrot.slane %v5883, 1
        %v6613 = vrot.slane %v5928, 1
        %v6614 = vsel %vm6551, %v6612, %v6613
        %v6615 = vrot.slane %v5884, 1
        %v6616 = vrot.slane %v5937, 1
        %v6617 = vsel %vm6551, %v6615, %v6616
        %v6618 = vrot.slane %v5885, 1
        %v6619 = vrot.slane %v5935, 1
        %v6620 = vsel %vm6551, %v6618, %v6619
        %v6621 = vrot.slane %v5886, 1
        %v6622 = vrot.slane %v5938, 1
        %v6623 = vsel %vm6551, %v6621, %v6622
        %v6624 = vrot.slane %v5887, 1
        %v6625 = vrot.slane %v5945, 1
        %v6626 = vsel %vm6551, %v6624, %v6625
        %v6627 = vrot.slane %v6058, 1
        %v6628 = vrot.slane %v6103, 1
        %v6629 = vsel %vm6551, %v6627, %v6628
        %v6630 = vrot.slane %v6059, 1
        %v6631 = vrot.slane %v6112, 1
        %v6632 = vsel %vm6551, %v6630, %v6631
        %v6633 = vrot.slane %v6060, 1
        %v6634 = vrot.slane %v6110, 1
        %v6635 = vsel %vm6551, %v6633, %v6634
        %v6636 = vrot.slane %v6061, 1
        %v6637 = vrot.slane %v6113, 1
        %v6638 = vsel %vm6551, %v6636, %v6637
        %v6639 = vrot.slane %v6062, 1
        %v6640 = vrot.slane %v6120, 1
        %v6641 = vsel %vm6551, %v6639, %v6640
        %v6642 = vrot.slane %v6233, 1
        %v6643 = vrot.slane %v6278, 1
        %v6644 = vsel %vm6551, %v6642, %v6643
        %v6645 = vrot.slane %v6234, 1
        %v6646 = vrot.slane %v6287, 1
        %v6647 = vsel %vm6551, %v6645, %v6646
        %v6648 = vrot.slane %v6235, 1
        %v6649 = vrot.slane %v6285, 1
        %v6650 = vsel %vm6551, %v6648, %v6649
        %v6651 = vrot.slane %v6236, 1
        %v6652 = vrot.slane %v6288, 1
        %v6653 = vsel %vm6551, %v6651, %v6652
        %v6654 = vrot.slane %v6237, 1
        %v6655 = vrot.slane %v6295, 1
        %v6656 = vsel %vm6551, %v6654, %v6655
        %v6657 = vrot.slane %v6408, 1
        %v6658 = vrot.slane %v6453, 1
        %v6659 = vsel %vm6551, %v6657, %v6658
        %v6660 = vrot.slane %v6409, 1
        %v6661 = vrot.slane %v6462, 1
        %v6662 = vsel %vm6551, %v6660, %v6661
        %v6663 = vrot.slane %v6410, 1
        %v6664 = vrot.slane %v6460, 1
        %v6665 = vsel %vm6551, %v6663, %v6664
        %v6666 = vrot.slane %v6411, 1
        %v6667 = vrot.slane %v6463, 1
        %v6668 = vsel %vm6551, %v6666, %v6667
        %v6669 = vrot.slane %v6412, 1
        %v6670 = vrot.slane %v6470, 1
        %v6671 = vsel %vm6551, %v6669, %v6670
        %6672 = vrot.lane.b32.xlu0 %v6554, 127
        %v6673 = vpop.permute.xlu0 %6672
        %6674 = vrot.lane.b32.xlu0 %v6553, 127
        %v6675 = vpop.permute.xlu0 %6674
        %6676 = vrot.lane.b32.xlu0 %v6557, 127
        %v6677 = vpop.permute.xlu0 %6676
        %6678 = vrot.lane.b32.xlu0 %v6556, 127
        %v6679 = vpop.permute.xlu0 %6678
        %6680 = vrot.lane.b32.xlu0 %v6560, 127
        %v6681 = vpop.permute.xlu0 %6680
        %6682 = vrot.lane.b32.xlu0 %v6559, 127
        %v6683 = vpop.permute.xlu0 %6682
        %6684 = vrot.lane.b32.xlu0 %v6563, 127
        %v6685 = vpop.permute.xlu0 %6684
        %6686 = vrot.lane.b32.xlu0 %v6562, 127
        %v6687 = vpop.permute.xlu0 %6686
        %6688 = vrot.lane.b32.xlu0 %v6566, 127
        %v6689 = vpop.permute.xlu0 %6688
        %6690 = vrot.lane.b32.xlu0 %v6565, 127
        %v6691 = vpop.permute.xlu0 %6690
        %6692 = vrot.lane.b32.xlu0 %v6569, 127
        %v6693 = vpop.permute.xlu0 %6692
        %6694 = vrot.lane.b32.xlu0 %v6568, 127
        %v6695 = vpop.permute.xlu0 %6694
        %6696 = vrot.lane.b32.xlu0 %v6572, 127
        %v6697 = vpop.permute.xlu0 %6696
        %6698 = vrot.lane.b32.xlu0 %v6571, 127
        %v6699 = vpop.permute.xlu0 %6698
        %6700 = vrot.lane.b32.xlu0 %v6575, 127
        %v6701 = vpop.permute.xlu0 %6700
        %6702 = vrot.lane.b32.xlu0 %v6574, 127
        %v6703 = vpop.permute.xlu0 %6702
        %6704 = vrot.lane.b32.xlu0 %v6578, 127
        %v6705 = vpop.permute.xlu0 %6704
        %6706 = vrot.lane.b32.xlu0 %v6577, 127
        %v6707 = vpop.permute.xlu0 %6706
        %6708 = vrot.lane.b32.xlu0 %v6581, 127
        %v6709 = vpop.permute.xlu0 %6708
        %6710 = vrot.lane.b32.xlu0 %v6580, 127
        %v6711 = vpop.permute.xlu0 %6710
        %6712 = vrot.lane.b32.xlu0 %v6584, 127
        %v6713 = vpop.permute.xlu0 %6712
        %6714 = vrot.lane.b32.xlu0 %v6583, 127
        %v6715 = vpop.permute.xlu0 %6714
        %6716 = vrot.lane.b32.xlu0 %v6587, 127
        %v6717 = vpop.permute.xlu0 %6716
        %6718 = vrot.lane.b32.xlu0 %v6586, 127
        %v6719 = vpop.permute.xlu0 %6718
        %6720 = vrot.lane.b32.xlu0 %v6590, 127
        %v6721 = vpop.permute.xlu0 %6720
        %6722 = vrot.lane.b32.xlu0 %v6589, 127
        %v6723 = vpop.permute.xlu0 %6722
        %6724 = vrot.lane.b32.xlu0 %v6593, 127
        %v6725 = vpop.permute.xlu0 %6724
        %6726 = vrot.lane.b32.xlu0 %v6592, 127
        %v6727 = vpop.permute.xlu0 %6726
        %6728 = vrot.lane.b32.xlu0 %v6596, 127
        %v6729 = vpop.permute.xlu0 %6728
        %6730 = vrot.lane.b32.xlu0 %v6595, 127
        %v6731 = vpop.permute.xlu0 %6730
        %6732 = vrot.lane.b32.xlu0 %v6599, 127
        %v6733 = vpop.permute.xlu0 %6732
        %6734 = vrot.lane.b32.xlu0 %v6598, 127
        %v6735 = vpop.permute.xlu0 %6734
        %6736 = vrot.lane.b32.xlu0 %v6602, 127
        %v6737 = vpop.permute.xlu0 %6736
        %6738 = vrot.lane.b32.xlu0 %v6601, 127
        %v6739 = vpop.permute.xlu0 %6738
        %6740 = vrot.lane.b32.xlu0 %v6605, 127
        %v6741 = vpop.permute.xlu0 %6740
        %6742 = vrot.lane.b32.xlu0 %v6604, 127
        %v6743 = vpop.permute.xlu0 %6742
        %6744 = vrot.lane.b32.xlu0 %v6608, 127
        %v6745 = vpop.permute.xlu0 %6744
        %6746 = vrot.lane.b32.xlu0 %v6607, 127
        %v6747 = vpop.permute.xlu0 %6746
        %6748 = vrot.lane.b32.xlu0 %v6611, 127
        %v6749 = vpop.permute.xlu0 %6748
        %6750 = vrot.lane.b32.xlu0 %v6610, 127
        %v6751 = vpop.permute.xlu0 %6750
        %6752 = vrot.lane.b32.xlu0 %v6614, 127
        %v6753 = vpop.permute.xlu0 %6752
        %6754 = vrot.lane.b32.xlu0 %v6613, 127
        %v6755 = vpop.permute.xlu0 %6754
        %6756 = vrot.lane.b32.xlu0 %v6617, 127
        %v6757 = vpop.permute.xlu0 %6756
        %6758 = vrot.lane.b32.xlu0 %v6616, 127
        %v6759 = vpop.permute.xlu0 %6758
        %6760 = vrot.lane.b32.xlu0 %v6620, 127
        %v6761 = vpop.permute.xlu0 %6760
        %6762 = vrot.lane.b32.xlu0 %v6619, 127
        %v6763 = vpop.permute.xlu0 %6762
        %6764 = vrot.lane.b32.xlu0 %v6623, 127
        %v6765 = vpop.permute.xlu0 %6764
        %6766 = vrot.lane.b32.xlu0 %v6622, 127
        %v6767 = vpop.permute.xlu0 %6766
        %6768 = vrot.lane.b32.xlu0 %v6626, 127
        %v6769 = vpop.permute.xlu0 %6768
        %6770 = vrot.lane.b32.xlu0 %v6625, 127
        %v6771 = vpop.permute.xlu0 %6770
        %6772 = vrot.lane.b32.xlu0 %v6629, 127
        %v6773 = vpop.permute.xlu0 %6772
        %6774 = vrot.lane.b32.xlu0 %v6628, 127
        %v6775 = vpop.permute.xlu0 %6774
        %6776 = vrot.lane.b32.xlu0 %v6632, 127
        %v6777 = vpop.permute.xlu0 %6776
        %6778 = vrot.lane.b32.xlu0 %v6631, 127
        %v6779 = vpop.permute.xlu0 %6778
        %6780 = vrot.lane.b32.xlu0 %v6635, 127
        %v6781 = vpop.permute.xlu0 %6780
        %6782 = vrot.lane.b32.xlu0 %v6634, 127
        %v6783 = vpop.permute.xlu0 %6782
        %6784 = vrot.lane.b32.xlu0 %v6638, 127
        %v6785 = vpop.permute.xlu0 %6784
        %6786 = vrot.lane.b32.xlu0 %v6637, 127
        %v6787 = vpop.permute.xlu0 %6786
        %6788 = vrot.lane.b32.xlu0 %v6641, 127
        %v6789 = vpop.permute.xlu0 %6788
        %6790 = vrot.lane.b32.xlu0 %v6640, 127
        %v6791 = vpop.permute.xlu0 %6790
        %6792 = vrot.lane.b32.xlu0 %v6644, 127
        %v6793 = vpop.permute.xlu0 %6792
        %6794 = vrot.lane.b32.xlu0 %v6643, 127
        %v6795 = vpop.permute.xlu0 %6794
        %6796 = vrot.lane.b32.xlu0 %v6647, 127
        %v6797 = vpop.permute.xlu0 %6796
        %6798 = vrot.lane.b32.xlu0 %v6646, 127
        %v6799 = vpop.permute.xlu0 %6798
        %6800 = vrot.lane.b32.xlu0 %v6650, 127
        %v6801 = vpop.permute.xlu0 %6800
        %6802 = vrot.lane.b32.xlu0 %v6649, 127
        %v6803 = vpop.permute.xlu0 %6802
        %6804 = vrot.lane.b32.xlu0 %v6653, 127
        %v6805 = vpop.permute.xlu0 %6804
        %6806 = vrot.lane.b32.xlu0 %v6652, 127
        %v6807 = vpop.permute.xlu0 %6806
        %6808 = vrot.lane.b32.xlu0 %v6656, 127
        %v6809 = vpop.permute.xlu0 %6808
        %6810 = vrot.lane.b32.xlu0 %v6655, 127
        %v6811 = vpop.permute.xlu0 %6810
        %6812 = vrot.lane.b32.xlu0 %v6659, 127
        %v6813 = vpop.permute.xlu0 %6812
        %6814 = vrot.lane.b32.xlu0 %v6658, 127
        %v6815 = vpop.permute.xlu0 %6814
        %6816 = vrot.lane.b32.xlu0 %v6662, 127
        %v6817 = vpop.permute.xlu0 %6816
        %6818 = vrot.lane.b32.xlu0 %v6661, 127
        %v6819 = vpop.permute.xlu0 %6818
        %6820 = vrot.lane.b32.xlu0 %v6665, 127
        %v6821 = vpop.permute.xlu0 %6820
        %6822 = vrot.lane.b32.xlu0 %v6664, 127
        %v6823 = vpop.permute.xlu0 %6822
        %6824 = vrot.lane.b32.xlu0 %v6668, 127
        %v6825 = vpop.permute.xlu0 %6824
        %6826 = vrot.lane.b32.xlu0 %v6667, 127
        %v6827 = vpop.permute.xlu0 %6826
        %6828 = vrot.lane.b32.xlu0 %v6671, 127
        %v6829 = vpop.permute.xlu0 %6828
        %6830 = vrot.lane.b32.xlu0 %v6670, 127
        %v6831 = vpop.permute.xlu0 %6830
        %v6904 = vcombine.low %v6673, %v6681
        %v6905 = vcombine.high %v6673, %v6681
        %v6907 = vunpack.c.l.s4 1983009808
        %v6908 = vunpack.c.0.s8 %v6907
        %v6909 = vlaneseq
        %v6910 = vshrl.u32 %v6909, 7
        %v6911 = vsub.s32 %v6908, %v6910
        %v6912 = vrot.slane %v6904, %v6911
        %v6914 = vunpack.c.l.s4 1983009808
        %v6915 = vunpack.c.0.s8 %v6914
        %v6916 = vlaneseq
        %v6917 = vshrl.u32 %v6916, 7
        %v6918 = vsub.s32 %v6915, %v6917
        %v6919 = vrot.slane %v6905, %v6918
        %v6920 = vcombine.low %v6677, %v6685
        %v6921 = vcombine.high %v6677, %v6685
        %v6923 = vunpack.c.l.s4 1983009808
        %v6924 = vunpack.c.0.s8 %v6923
        %v6925 = vlaneseq
        %v6926 = vshrl.u32 %v6925, 7
        %v6927 = vsub.s32 %v6924, %v6926
        %v6928 = vrot.slane %v6920, %v6927
        %v6930 = vunpack.c.l.s4 1983009808
        %v6931 = vunpack.c.0.s8 %v6930
        %v6932 = vlaneseq
        %v6933 = vshrl.u32 %v6932, 7
        %v6934 = vsub.s32 %v6931, %v6933
        %v6935 = vrot.slane %v6921, %v6934
        %v6936 = vcombine.high %v6689, 0.0
        %v6938 = vunpack.c.l.s4 1983009808
        %v6939 = vunpack.c.0.s8 %v6938
        %v6940 = vlaneseq
        %v6941 = vshrl.u32 %v6940, 7
        %v6942 = vsub.s32 %v6939, %v6941
        %v6943 = vrot.slane %v6689, %v6942
        %v6945 = vunpack.c.l.s4 1983009808
        %v6946 = vunpack.c.0.s8 %v6945
        %v6947 = vlaneseq
        %v6948 = vshrl.u32 %v6947, 7
        %v6949 = vsub.s32 %v6946, %v6948
        %v6950 = vrot.slane %v6936, %v6949
        %v6951 = vcombine.low %v6912, %v6928
        %v6952 = vcombine.high %v6912, %v6928
        %v6954 = vunpack.c.l.s4 1934713408
        %v6955 = vunpack.c.0.s8 %v6954
        %v6956 = vlaneseq
        %v6957 = vshrl.u32 %v6956, 7
        %v6958 = vsub.s32 %v6955, %v6957
        %v6959 = vrot.slane %v6951, %v6958
        %v6961 = vunpack.c.l.s4 1934713408
        %v6962 = vunpack.c.0.s8 %v6961
        %v6963 = vlaneseq
        %v6964 = vshrl.u32 %v6963, 7
        %v6965 = vsub.s32 %v6962, %v6964
        %v6966 = vrot.slane %v6952, %v6965
        %v6967 = vcombine.low %v6919, %v6935
        %v6968 = vcombine.high %v6919, %v6935
        %v6970 = vunpack.c.l.s4 1934713408
        %v6971 = vunpack.c.0.s8 %v6970
        %v6972 = vlaneseq
        %v6973 = vshrl.u32 %v6972, 7
        %v6974 = vsub.s32 %v6971, %v6973
        %v6975 = vrot.slane %v6967, %v6974
        %v6977 = vunpack.c.l.s4 1934713408
        %v6978 = vunpack.c.0.s8 %v6977
        %v6979 = vlaneseq
        %v6980 = vshrl.u32 %v6979, 7
        %v6981 = vsub.s32 %v6978, %v6980
        %v6982 = vrot.slane %v6968, %v6981
        %v6983 = vcombine.high %v6943, 0.0
        %v6985 = vunpack.c.l.s4 1934713408
        %v6986 = vunpack.c.0.s8 %v6985
        %v6987 = vlaneseq
        %v6988 = vshrl.u32 %v6987, 7
        %v6989 = vsub.s32 %v6986, %v6988
        %v6990 = vrot.slane %v6943, %v6989
        %v6992 = vunpack.c.l.s4 1934713408
        %v6993 = vunpack.c.0.s8 %v6992
        %v6994 = vlaneseq
        %v6995 = vshrl.u32 %v6994, 7
        %v6996 = vsub.s32 %v6993, %v6995
        %v6997 = vrot.slane %v6983, %v6996
        %v6998 = vcombine.high %v6950, 0.0
        %v7000 = vunpack.c.l.s4 1934713408
        %v7001 = vunpack.c.0.s8 %v7000
        %v7002 = vlaneseq
        %v7003 = vshrl.u32 %v7002, 7
        %v7004 = vsub.s32 %v7001, %v7003
        %v7005 = vrot.slane %v6950, %v7004
        %v7007 = vunpack.c.l.s4 1934713408
        %v7008 = vunpack.c.0.s8 %v7007
        %v7009 = vlaneseq
        %v7010 = vshrl.u32 %v7009, 7
        %v7011 = vsub.s32 %v7008, %v7010
        %v7012 = vrot.slane %v6998, %v7011
        %v7013 = vcombine.low %v6959, %v6990
        %v7014 = vcombine.high %v6959, %v6990
        %v7015 = vcombine.low %v6966, %v6997
        %v7016 = vcombine.high %v6966, %v6997
        %v7017 = vcombine.low %v6975, %v7005
        %v7018 = vcombine.high %v6975, %v7005
        %v7019 = vcombine.low %v6982, %v7012
        %v7020 = vcombine.high %v6982, %v7012
        %v7021 = vcombine.low %v6675, %v6683
        %v7023 = vunpack.c.l.s4 1983009808
        %v7024 = vunpack.c.0.s8 %v7023
        %v7025 = vlaneseq
        %v7026 = vshrl.u32 %v7025, 7
        %v7027 = vsub.s32 %v7024, %v7026
        %v7028 = vrot.slane %v7021, %v7027
        %v7029 = vcombine.low %v6679, %v6687
        %v7031 = vunpack.c.l.s4 1983009808
        %v7032 = vunpack.c.0.s8 %v7031
        %v7033 = vlaneseq
        %v7034 = vshrl.u32 %v7033, 7
        %v7035 = vsub.s32 %v7032, %v7034
        %v7036 = vrot.slane %v7029, %v7035
        %v7037 = vcombine.low %v7028, %v7036
        %v7039 = vunpack.c.l.s4 1934713408
        %v7040 = vunpack.c.0.s8 %v7039
        %v7041 = vlaneseq
        %v7042 = vshrl.u32 %v7041, 7
        %v7043 = vsub.s32 %v7040, %v7042
        %v7044 = vrot.slane %v7037, %v7043
        %v7047 = vunpack.c.l.s4 1934713408
        %v7048 = vunpack.c.0.s8 %v7047
        %v7049 = vlaneseq
        %v7050 = vshrl.u32 %v7049, 7
        %v7051 = vsub.s32 %v7048, %v7050
        %v7052 = vrot.slane %v6691, %v7051
        %v7053 = vcombine.low %v7044, %v7052
        %v7054 = vcombine.high %v7044, %v7052
        %v7055 = vcombine.low %v6693, %v6701
        %v7056 = vcombine.high %v6693, %v6701
        %v7058 = vunpack.c.l.s4 1983009808
        %v7059 = vunpack.c.0.s8 %v7058
        %v7060 = vlaneseq
        %v7061 = vshrl.u32 %v7060, 7
        %v7062 = vsub.s32 %v7059, %v7061
        %v7063 = vrot.slane %v7055, %v7062
        %v7065 = vunpack.c.l.s4 1983009808
        %v7066 = vunpack.c.0.s8 %v7065
        %v7067 = vlaneseq
        %v7068 = vshrl.u32 %v7067, 7
        %v7069 = vsub.s32 %v7066, %v7068
        %v7070 = vrot.slane %v7056, %v7069
        %v7071 = vcombine.low %v6697, %v6705
        %v7072 = vcombine.high %v6697, %v6705
        %v7074 = vunpack.c.l.s4 1983009808
        %v7075 = vunpack.c.0.s8 %v7074
        %v7076 = vlaneseq
        %v7077 = vshrl.u32 %v7076, 7
        %v7078 = vsub.s32 %v7075, %v7077
        %v7079 = vrot.slane %v7071, %v7078
        %v7081 = vunpack.c.l.s4 1983009808
        %v7082 = vunpack.c.0.s8 %v7081
        %v7083 = vlaneseq
        %v7084 = vshrl.u32 %v7083, 7
        %v7085 = vsub.s32 %v7082, %v7084
        %v7086 = vrot.slane %v7072, %v7085
        %v7087 = vcombine.high %v6709, 0.0
        %v7089 = vunpack.c.l.s4 1983009808
        %v7090 = vunpack.c.0.s8 %v7089
        %v7091 = vlaneseq
        %v7092 = vshrl.u32 %v7091, 7
        %v7093 = vsub.s32 %v7090, %v7092
        %v7094 = vrot.slane %v6709, %v7093
        %v7096 = vunpack.c.l.s4 1983009808
        %v7097 = vunpack.c.0.s8 %v7096
        %v7098 = vlaneseq
        %v7099 = vshrl.u32 %v7098, 7
        %v7100 = vsub.s32 %v7097, %v7099
        %v7101 = vrot.slane %v7087, %v7100
        %v7102 = vcombine.low %v7063, %v7079
        %v7103 = vcombine.high %v7063, %v7079
        %v7105 = vunpack.c.l.s4 1934713408
        %v7106 = vunpack.c.0.s8 %v7105
        %v7107 = vlaneseq
        %v7108 = vshrl.u32 %v7107, 7
        %v7109 = vsub.s32 %v7106, %v7108
        %v7110 = vrot.slane %v7102, %v7109
        %v7112 = vunpack.c.l.s4 1934713408
        %v7113 = vunpack.c.0.s8 %v7112
        %v7114 = vlaneseq
        %v7115 = vshrl.u32 %v7114, 7
        %v7116 = vsub.s32 %v7113, %v7115
        %v7117 = vrot.slane %v7103, %v7116
        %v7118 = vcombine.low %v7070, %v7086
        %v7119 = vcombine.high %v7070, %v7086
        %v7121 = vunpack.c.l.s4 1934713408
        %v7122 = vunpack.c.0.s8 %v7121
        %v7123 = vlaneseq
        %v7124 = vshrl.u32 %v7123, 7
        %v7125 = vsub.s32 %v7122, %v7124
        %v7126 = vrot.slane %v7118, %v7125
        %v7128 = vunpack.c.l.s4 1934713408
        %v7129 = vunpack.c.0.s8 %v7128
        %v7130 = vlaneseq
        %v7131 = vshrl.u32 %v7130, 7
        %v7132 = vsub.s32 %v7129, %v7131
        %v7133 = vrot.slane %v7119, %v7132
        %v7134 = vcombine.high %v7094, 0.0
        %v7136 = vunpack.c.l.s4 1934713408
        %v7137 = vunpack.c.0.s8 %v7136
        %v7138 = vlaneseq
        %v7139 = vshrl.u32 %v7138, 7
        %v7140 = vsub.s32 %v7137, %v7139
        %v7141 = vrot.slane %v7094, %v7140
        %v7143 = vunpack.c.l.s4 1934713408
        %v7144 = vunpack.c.0.s8 %v7143
        %v7145 = vlaneseq
        %v7146 = vshrl.u32 %v7145, 7
        %v7147 = vsub.s32 %v7144, %v7146
        %v7148 = vrot.slane %v7134, %v7147
        %v7149 = vcombine.high %v7101, 0.0
        %v7151 = vunpack.c.l.s4 1934713408
        %v7152 = vunpack.c.0.s8 %v7151
        %v7153 = vlaneseq
        %v7154 = vshrl.u32 %v7153, 7
        %v7155 = vsub.s32 %v7152, %v7154
        %v7156 = vrot.slane %v7101, %v7155
        %v7158 = vunpack.c.l.s4 1934713408
        %v7159 = vunpack.c.0.s8 %v7158
        %v7160 = vlaneseq
        %v7161 = vshrl.u32 %v7160, 7
        %v7162 = vsub.s32 %v7159, %v7161
        %v7163 = vrot.slane %v7149, %v7162
        %v7164 = vcombine.low %v7110, %v7141
        %v7165 = vcombine.high %v7110, %v7141
        %v7166 = vcombine.low %v7117, %v7148
        %v7167 = vcombine.high %v7117, %v7148
        %v7168 = vcombine.low %v7126, %v7156
        %v7169 = vcombine.high %v7126, %v7156
        %v7170 = vcombine.low %v7133, %v7163
        %v7171 = vcombine.high %v7133, %v7163
        %v7172 = vcombine.low %v6695, %v6703
        %v7174 = vunpack.c.l.s4 1983009808
        %v7175 = vunpack.c.0.s8 %v7174
        %v7176 = vlaneseq
        %v7177 = vshrl.u32 %v7176, 7
        %v7178 = vsub.s32 %v7175, %v7177
        %v7179 = vrot.slane %v7172, %v7178
        %v7180 = vcombine.low %v6699, %v6707
        %v7182 = vunpack.c.l.s4 1983009808
        %v7183 = vunpack.c.0.s8 %v7182
        %v7184 = vlaneseq
        %v7185 = vshrl.u32 %v7184, 7
        %v7186 = vsub.s32 %v7183, %v7185
        %v7187 = vrot.slane %v7180, %v7186
        %v7188 = vcombine.low %v7179, %v7187
        %v7190 = vunpack.c.l.s4 1934713408
        %v7191 = vunpack.c.0.s8 %v7190
        %v7192 = vlaneseq
        %v7193 = vshrl.u32 %v7192, 7
        %v7194 = vsub.s32 %v7191, %v7193
        %v7195 = vrot.slane %v7188, %v7194
        %v7198 = vunpack.c.l.s4 1934713408
        %v7199 = vunpack.c.0.s8 %v7198
        %v7200 = vlaneseq
        %v7201 = vshrl.u32 %v7200, 7
        %v7202 = vsub.s32 %v7199, %v7201
        %v7203 = vrot.slane %v6711, %v7202
        %v7204 = vcombine.low %v7195, %v7203
        %v7205 = vcombine.high %v7195, %v7203
        %v7206 = vcombine.low %v6713, %v6721
        %v7207 = vcombine.high %v6713, %v6721
        %v7209 = vunpack.c.l.s4 1983009808
        %v7210 = vunpack.c.0.s8 %v7209
        %v7211 = vlaneseq
        %v7212 = vshrl.u32 %v7211, 7
        %v7213 = vsub.s32 %v7210, %v7212
        %v7214 = vrot.slane %v7206, %v7213
        %v7216 = vunpack.c.l.s4 1983009808
        %v7217 = vunpack.c.0.s8 %v7216
        %v7218 = vlaneseq
        %v7219 = vshrl.u32 %v7218, 7
        %v7220 = vsub.s32 %v7217, %v7219
        %v7221 = vrot.slane %v7207, %v7220
        %v7222 = vcombine.low %v6717, %v6725
        %v7223 = vcombine.high %v6717, %v6725
        %v7225 = vunpack.c.l.s4 1983009808
        %v7226 = vunpack.c.0.s8 %v7225
        %v7227 = vlaneseq
        %v7228 = vshrl.u32 %v7227, 7
        %v7229 = vsub.s32 %v7226, %v7228
        %v7230 = vrot.slane %v7222, %v7229
        %v7232 = vunpack.c.l.s4 1983009808
        %v7233 = vunpack.c.0.s8 %v7232
        %v7234 = vlaneseq
        %v7235 = vshrl.u32 %v7234, 7
        %v7236 = vsub.s32 %v7233, %v7235
        %v7237 = vrot.slane %v7223, %v7236
        %v7238 = vcombine.high %v6729, 0.0
        %v7240 = vunpack.c.l.s4 1983009808
        %v7241 = vunpack.c.0.s8 %v7240
        %v7242 = vlaneseq
        %v7243 = vshrl.u32 %v7242, 7
        %v7244 = vsub.s32 %v7241, %v7243
        %v7245 = vrot.slane %v6729, %v7244
        %v7247 = vunpack.c.l.s4 1983009808
        %v7248 = vunpack.c.0.s8 %v7247
        %v7249 = vlaneseq
        %v7250 = vshrl.u32 %v7249, 7
        %v7251 = vsub.s32 %v7248, %v7250
        %v7252 = vrot.slane %v7238, %v7251
        %v7253 = vcombine.low %v7214, %v7230
        %v7254 = vcombine.high %v7214, %v7230
        %v7256 = vunpack.c.l.s4 1934713408
        %v7257 = vunpack.c.0.s8 %v7256
        %v7258 = vlaneseq
        %v7259 = vshrl.u32 %v7258, 7
        %v7260 = vsub.s32 %v7257, %v7259
        %v7261 = vrot.slane %v7253, %v7260
        %v7263 = vunpack.c.l.s4 1934713408
        %v7264 = vunpack.c.0.s8 %v7263
        %v7265 = vlaneseq
        %v7266 = vshrl.u32 %v7265, 7
        %v7267 = vsub.s32 %v7264, %v7266
        %v7268 = vrot.slane %v7254, %v7267
        %v7269 = vcombine.low %v7221, %v7237
        %v7270 = vcombine.high %v7221, %v7237
        %v7272 = vunpack.c.l.s4 1934713408
        %v7273 = vunpack.c.0.s8 %v7272
        %v7274 = vlaneseq
        %v7275 = vshrl.u32 %v7274, 7
        %v7276 = vsub.s32 %v7273, %v7275
        %v7277 = vrot.slane %v7269, %v7276
        %v7279 = vunpack.c.l.s4 1934713408
        %v7280 = vunpack.c.0.s8 %v7279
        %v7281 = vlaneseq
        %v7282 = vshrl.u32 %v7281, 7
        %v7283 = vsub.s32 %v7280, %v7282
        %v7284 = vrot.slane %v7270, %v7283
        %v7285 = vcombine.high %v7245, 0.0
        %v7287 = vunpack.c.l.s4 1934713408
        %v7288 = vunpack.c.0.s8 %v7287
        %v7289 = vlaneseq
        %v7290 = vshrl.u32 %v7289, 7
        %v7291 = vsub.s32 %v7288, %v7290
        %v7292 = vrot.slane %v7245, %v7291
        %v7294 = vunpack.c.l.s4 1934713408
        %v7295 = vunpack.c.0.s8 %v7294
        %v7296 = vlaneseq
        %v7297 = vshrl.u32 %v7296, 7
        %v7298 = vsub.s32 %v7295, %v7297
        %v7299 = vrot.slane %v7285, %v7298
        %v7300 = vcombine.high %v7252, 0.0
        %v7302 = vunpack.c.l.s4 1934713408
        %v7303 = vunpack.c.0.s8 %v7302
        %v7304 = vlaneseq
        %v7305 = vshrl.u32 %v7304, 7
        %v7306 = vsub.s32 %v7303, %v7305
        %v7307 = vrot.slane %v7252, %v7306
        %v7309 = vunpack.c.l.s4 1934713408
        %v7310 = vunpack.c.0.s8 %v7309
        %v7311 = vlaneseq
        %v7312 = vshrl.u32 %v7311, 7
        %v7313 = vsub.s32 %v7310, %v7312
        %v7314 = vrot.slane %v7300, %v7313
        %v7315 = vcombine.low %v7261, %v7292
        %v7316 = vcombine.high %v7261, %v7292
        %v7317 = vcombine.low %v7268, %v7299
        %v7318 = vcombine.high %v7268, %v7299
        %v7319 = vcombine.low %v7277, %v7307
        %v7320 = vcombine.high %v7277, %v7307
        %v7321 = vcombine.low %v7284, %v7314
        %v7322 = vcombine.high %v7284, %v7314
        %v7323 = vcombine.low %v6715, %v6723
        %v7325 = vunpack.c.l.s4 1983009808
        %v7326 = vunpack.c.0.s8 %v7325
        %v7327 = vlaneseq
        %v7328 = vshrl.u32 %v7327, 7
        %v7329 = vsub.s32 %v7326, %v7328
        %v7330 = vrot.slane %v7323, %v7329
        %v7331 = vcombine.low %v6719, %v6727
        %v7333 = vunpack.c.l.s4 1983009808
        %v7334 = vunpack.c.0.s8 %v7333
        %v7335 = vlaneseq
        %v7336 = vshrl.u32 %v7335, 7
        %v7337 = vsub.s32 %v7334, %v7336
        %v7338 = vrot.slane %v7331, %v7337
        %v7339 = vcombine.low %v7330, %v7338
        %v7341 = vunpack.c.l.s4 1934713408
        %v7342 = vunpack.c.0.s8 %v7341
        %v7343 = vlaneseq
        %v7344 = vshrl.u32 %v7343, 7
        %v7345 = vsub.s32 %v7342, %v7344
        %v7346 = vrot.slane %v7339, %v7345
        %v7349 = vunpack.c.l.s4 1934713408
        %v7350 = vunpack.c.0.s8 %v7349
        %v7351 = vlaneseq
        %v7352 = vshrl.u32 %v7351, 7
        %v7353 = vsub.s32 %v7350, %v7352
        %v7354 = vrot.slane %v6731, %v7353
        %v7355 = vcombine.low %v7346, %v7354
        %v7356 = vcombine.high %v7346, %v7354
        %v7357 = vcombine.low %v6733, %v6741
        %v7358 = vcombine.high %v6733, %v6741
        %v7360 = vunpack.c.l.s4 1983009808
        %v7361 = vunpack.c.0.s8 %v7360
        %v7362 = vlaneseq
        %v7363 = vshrl.u32 %v7362, 7
        %v7364 = vsub.s32 %v7361, %v7363
        %v7365 = vrot.slane %v7357, %v7364
        %v7367 = vunpack.c.l.s4 1983009808
        %v7368 = vunpack.c.0.s8 %v7367
        %v7369 = vlaneseq
        %v7370 = vshrl.u32 %v7369, 7
        %v7371 = vsub.s32 %v7368, %v7370
        %v7372 = vrot.slane %v7358, %v7371
        %v7373 = vcombine.low %v6737, %v6745
        %v7374 = vcombine.high %v6737, %v6745
        %v7376 = vunpack.c.l.s4 1983009808
        %v7377 = vunpack.c.0.s8 %v7376
        %v7378 = vlaneseq
        %v7379 = vshrl.u32 %v7378, 7
        %v7380 = vsub.s32 %v7377, %v7379
        %v7381 = vrot.slane %v7373, %v7380
        %v7383 = vunpack.c.l.s4 1983009808
        %v7384 = vunpack.c.0.s8 %v7383
        %v7385 = vlaneseq
        %v7386 = vshrl.u32 %v7385, 7
        %v7387 = vsub.s32 %v7384, %v7386
        %v7388 = vrot.slane %v7374, %v7387
        %v7389 = vcombine.high %v6749, 0.0
        %v7391 = vunpack.c.l.s4 1983009808
        %v7392 = vunpack.c.0.s8 %v7391
        %v7393 = vlaneseq
        %v7394 = vshrl.u32 %v7393, 7
        %v7395 = vsub.s32 %v7392, %v7394
        %v7396 = vrot.slane %v6749, %v7395
        %v7398 = vunpack.c.l.s4 1983009808
        %v7399 = vunpack.c.0.s8 %v7398
        %v7400 = vlaneseq
        %v7401 = vshrl.u32 %v7400, 7
        %v7402 = vsub.s32 %v7399, %v7401
        %v7403 = vrot.slane %v7389, %v7402
        %v7404 = vcombine.low %v7365, %v7381
        %v7405 = vcombine.high %v7365, %v7381
        %v7407 = vunpack.c.l.s4 1934713408
        %v7408 = vunpack.c.0.s8 %v7407
        %v7409 = vlaneseq
        %v7410 = vshrl.u32 %v7409, 7
        %v7411 = vsub.s32 %v7408, %v7410
        %v7412 = vrot.slane %v7404, %v7411
        %v7414 = vunpack.c.l.s4 1934713408
        %v7415 = vunpack.c.0.s8 %v7414
        %v7416 = vlaneseq
        %v7417 = vshrl.u32 %v7416, 7
        %v7418 = vsub.s32 %v7415, %v7417
        %v7419 = vrot.slane %v7405, %v7418
        %v7420 = vcombine.low %v7372, %v7388
        %v7421 = vcombine.high %v7372, %v7388
        %v7423 = vunpack.c.l.s4 1934713408
        %v7424 = vunpack.c.0.s8 %v7423
        %v7425 = vlaneseq
        %v7426 = vshrl.u32 %v7425, 7
        %v7427 = vsub.s32 %v7424, %v7426
        %v7428 = vrot.slane %v7420, %v7427
        %v7430 = vunpack.c.l.s4 1934713408
        %v7431 = vunpack.c.0.s8 %v7430
        %v7432 = vlaneseq
        %v7433 = vshrl.u32 %v7432, 7
        %v7434 = vsub.s32 %v7431, %v7433
        %v7435 = vrot.slane %v7421, %v7434
        %v7436 = vcombine.high %v7396, 0.0
        %v7438 = vunpack.c.l.s4 1934713408
        %v7439 = vunpack.c.0.s8 %v7438
        %v7440 = vlaneseq
        %v7441 = vshrl.u32 %v7440, 7
        %v7442 = vsub.s32 %v7439, %v7441
        %v7443 = vrot.slane %v7396, %v7442
        %v7445 = vunpack.c.l.s4 1934713408
        %v7446 = vunpack.c.0.s8 %v7445
        %v7447 = vlaneseq
        %v7448 = vshrl.u32 %v7447, 7
        %v7449 = vsub.s32 %v7446, %v7448
        %v7450 = vrot.slane %v7436, %v7449
        %v7451 = vcombine.high %v7403, 0.0
        %v7453 = vunpack.c.l.s4 1934713408
        %v7454 = vunpack.c.0.s8 %v7453
        %v7455 = vlaneseq
        %v7456 = vshrl.u32 %v7455, 7
        %v7457 = vsub.s32 %v7454, %v7456
        %v7458 = vrot.slane %v7403, %v7457
        %v7460 = vunpack.c.l.s4 1934713408
        %v7461 = vunpack.c.0.s8 %v7460
        %v7462 = vlaneseq
        %v7463 = vshrl.u32 %v7462, 7
        %v7464 = vsub.s32 %v7461, %v7463
        %v7465 = vrot.slane %v7451, %v7464
        %v7466 = vcombine.low %v7412, %v7443
        %v7467 = vcombine.high %v7412, %v7443
        %v7468 = vcombine.low %v7419, %v7450
        %v7469 = vcombine.high %v7419, %v7450
        %v7470 = vcombine.low %v7428, %v7458
        %v7471 = vcombine.high %v7428, %v7458
        %v7472 = vcombine.low %v7435, %v7465
        %v7473 = vcombine.high %v7435, %v7465
        %v7474 = vcombine.low %v6735, %v6743
        %v7476 = vunpack.c.l.s4 1983009808
        %v7477 = vunpack.c.0.s8 %v7476
        %v7478 = vlaneseq
        %v7479 = vshrl.u32 %v7478, 7
        %v7480 = vsub.s32 %v7477, %v7479
        %v7481 = vrot.slane %v7474, %v7480
        %v7482 = vcombine.low %v6739, %v6747
        %v7484 = vunpack.c.l.s4 1983009808
        %v7485 = vunpack.c.0.s8 %v7484
        %v7486 = vlaneseq
        %v7487 = vshrl.u32 %v7486, 7
        %v7488 = vsub.s32 %v7485, %v7487
        %v7489 = vrot.slane %v7482, %v7488
        %v7490 = vcombine.low %v7481, %v7489
        %v7492 = vunpack.c.l.s4 1934713408
        %v7493 = vunpack.c.0.s8 %v7492
        %v7494 = vlaneseq
        %v7495 = vshrl.u32 %v7494, 7
        %v7496 = vsub.s32 %v7493, %v7495
        %v7497 = vrot.slane %v7490, %v7496
        %v7500 = vunpack.c.l.s4 1934713408
        %v7501 = vunpack.c.0.s8 %v7500
        %v7502 = vlaneseq
        %v7503 = vshrl.u32 %v7502, 7
        %v7504 = vsub.s32 %v7501, %v7503
        %v7505 = vrot.slane %v6751, %v7504
        %v7506 = vcombine.low %v7497, %v7505
        %v7507 = vcombine.high %v7497, %v7505
        %v7508 = vcombine.low %v6753, %v6761
        %v7509 = vcombine.high %v6753, %v6761
        %v7511 = vunpack.c.l.s4 1983009808
        %v7512 = vunpack.c.0.s8 %v7511
        %v7513 = vlaneseq
        %v7514 = vshrl.u32 %v7513, 7
        %v7515 = vsub.s32 %v7512, %v7514
        %v7516 = vrot.slane %v7508, %v7515
        %v7518 = vunpack.c.l.s4 1983009808
        %v7519 = vunpack.c.0.s8 %v7518
        %v7520 = vlaneseq
        %v7521 = vshrl.u32 %v7520, 7
        %v7522 = vsub.s32 %v7519, %v7521
        %v7523 = vrot.slane %v7509, %v7522
        %v7524 = vcombine.low %v6757, %v6765
        %v7525 = vcombine.high %v6757, %v6765
        %v7527 = vunpack.c.l.s4 1983009808
        %v7528 = vunpack.c.0.s8 %v7527
        %v7529 = vlaneseq
        %v7530 = vshrl.u32 %v7529, 7
        %v7531 = vsub.s32 %v7528, %v7530
        %v7532 = vrot.slane %v7524, %v7531
        %v7534 = vunpack.c.l.s4 1983009808
        %v7535 = vunpack.c.0.s8 %v7534
        %v7536 = vlaneseq
        %v7537 = vshrl.u32 %v7536, 7
        %v7538 = vsub.s32 %v7535, %v7537
        %v7539 = vrot.slane %v7525, %v7538
        %v7540 = vcombine.high %v6769, 0.0
        %v7542 = vunpack.c.l.s4 1983009808
        %v7543 = vunpack.c.0.s8 %v7542
        %v7544 = vlaneseq
        %v7545 = vshrl.u32 %v7544, 7
        %v7546 = vsub.s32 %v7543, %v7545
        %v7547 = vrot.slane %v6769, %v7546
        %v7549 = vunpack.c.l.s4 1983009808
        %v7550 = vunpack.c.0.s8 %v7549
        %v7551 = vlaneseq
        %v7552 = vshrl.u32 %v7551, 7
        %v7553 = vsub.s32 %v7550, %v7552
        %v7554 = vrot.slane %v7540, %v7553
        %v7555 = vcombine.low %v7516, %v7532
        %v7556 = vcombine.high %v7516, %v7532
        %v7558 = vunpack.c.l.s4 1934713408
        %v7559 = vunpack.c.0.s8 %v7558
        %v7560 = vlaneseq
        %v7561 = vshrl.u32 %v7560, 7
        %v7562 = vsub.s32 %v7559, %v7561
        %v7563 = vrot.slane %v7555, %v7562
        %v7565 = vunpack.c.l.s4 1934713408
        %v7566 = vunpack.c.0.s8 %v7565
        %v7567 = vlaneseq
        %v7568 = vshrl.u32 %v7567, 7
        %v7569 = vsub.s32 %v7566, %v7568
        %v7570 = vrot.slane %v7556, %v7569
        %v7571 = vcombine.low %v7523, %v7539
        %v7572 = vcombine.high %v7523, %v7539
        %v7574 = vunpack.c.l.s4 1934713408
        %v7575 = vunpack.c.0.s8 %v7574
        %v7576 = vlaneseq
        %v7577 = vshrl.u32 %v7576, 7
        %v7578 = vsub.s32 %v7575, %v7577
        %v7579 = vrot.slane %v7571, %v7578
        %v7581 = vunpack.c.l.s4 1934713408
        %v7582 = vunpack.c.0.s8 %v7581
        %v7583 = vlaneseq
        %v7584 = vshrl.u32 %v7583, 7
        %v7585 = vsub.s32 %v7582, %v7584
        %v7586 = vrot.slane %v7572, %v7585
        %v7587 = vcombine.high %v7547, 0.0
        %v7589 = vunpack.c.l.s4 1934713408
        %v7590 = vunpack.c.0.s8 %v7589
        %v7591 = vlaneseq
        %v7592 = vshrl.u32 %v7591, 7
        %v7593 = vsub.s32 %v7590, %v7592
        %v7594 = vrot.slane %v7547, %v7593
        %v7596 = vunpack.c.l.s4 1934713408
        %v7597 = vunpack.c.0.s8 %v7596
        %v7598 = vlaneseq
        %v7599 = vshrl.u32 %v7598, 7
        %v7600 = vsub.s32 %v7597, %v7599
        %v7601 = vrot.slane %v7587, %v7600
        %v7602 = vcombine.high %v7554, 0.0
        %v7604 = vunpack.c.l.s4 1934713408
        %v7605 = vunpack.c.0.s8 %v7604
        %v7606 = vlaneseq
        %v7607 = vshrl.u32 %v7606, 7
        %v7608 = vsub.s32 %v7605, %v7607
        %v7609 = vrot.slane %v7554, %v7608
        %v7611 = vunpack.c.l.s4 1934713408
        %v7612 = vunpack.c.0.s8 %v7611
        %v7613 = vlaneseq
        %v7614 = vshrl.u32 %v7613, 7
        %v7615 = vsub.s32 %v7612, %v7614
        %v7616 = vrot.slane %v7602, %v7615
        %v7617 = vcombine.low %v7563, %v7594
        %v7618 = vcombine.high %v7563, %v7594
        %v7619 = vcombine.low %v7570, %v7601
        %v7620 = vcombine.high %v7570, %v7601
        %v7621 = vcombine.low %v7579, %v7609
        %v7622 = vcombine.high %v7579, %v7609
        %v7623 = vcombine.low %v7586, %v7616
        %v7624 = vcombine.high %v7586, %v7616
        %v7625 = vcombine.low %v6755, %v6763
        %v7627 = vunpack.c.l.s4 1983009808
        %v7628 = vunpack.c.0.s8 %v7627
        %v7629 = vlaneseq
        %v7630 = vshrl.u32 %v7629, 7
        %v7631 = vsub.s32 %v7628, %v7630
        %v7632 = vrot.slane %v7625, %v7631
        %v7633 = vcombine.low %v6759, %v6767
        %v7635 = vunpack.c.l.s4 1983009808
        %v7636 = vunpack.c.0.s8 %v7635
        %v7637 = vlaneseq
        %v7638 = vshrl.u32 %v7637, 7
        %v7639 = vsub.s32 %v7636, %v7638
        %v7640 = vrot.slane %v7633, %v7639
        %v7641 = vcombine.low %v7632, %v7640
        %v7643 = vunpack.c.l.s4 1934713408
        %v7644 = vunpack.c.0.s8 %v7643
        %v7645 = vlaneseq
        %v7646 = vshrl.u32 %v7645, 7
        %v7647 = vsub.s32 %v7644, %v7646
        %v7648 = vrot.slane %v7641, %v7647
        %v7651 = vunpack.c.l.s4 1934713408
        %v7652 = vunpack.c.0.s8 %v7651
        %v7653 = vlaneseq
        %v7654 = vshrl.u32 %v7653, 7
        %v7655 = vsub.s32 %v7652, %v7654
        %v7656 = vrot.slane %v6771, %v7655
        %v7657 = vcombine.low %v7648, %v7656
        %v7658 = vcombine.high %v7648, %v7656
        %v7659 = vcombine.low %v6773, %v6781
        %v7660 = vcombine.high %v6773, %v6781
        %v7662 = vunpack.c.l.s4 1983009808
        %v7663 = vunpack.c.0.s8 %v7662
        %v7664 = vlaneseq
        %v7665 = vshrl.u32 %v7664, 7
        %v7666 = vsub.s32 %v7663, %v7665
        %v7667 = vrot.slane %v7659, %v7666
        %v7669 = vunpack.c.l.s4 1983009808
        %v7670 = vunpack.c.0.s8 %v7669
        %v7671 = vlaneseq
        %v7672 = vshrl.u32 %v7671, 7
        %v7673 = vsub.s32 %v7670, %v7672
        %v7674 = vrot.slane %v7660, %v7673
        %v7675 = vcombine.low %v6777, %v6785
        %v7676 = vcombine.high %v6777, %v6785
        %v7678 = vunpack.c.l.s4 1983009808
        %v7679 = vunpack.c.0.s8 %v7678
        %v7680 = vlaneseq
        %v7681 = vshrl.u32 %v7680, 7
        %v7682 = vsub.s32 %v7679, %v7681
        %v7683 = vrot.slane %v7675, %v7682
        %v7685 = vunpack.c.l.s4 1983009808
        %v7686 = vunpack.c.0.s8 %v7685
        %v7687 = vlaneseq
        %v7688 = vshrl.u32 %v7687, 7
        %v7689 = vsub.s32 %v7686, %v7688
        %v7690 = vrot.slane %v7676, %v7689
        %v7691 = vcombine.high %v6789, 0.0
        %v7693 = vunpack.c.l.s4 1983009808
        %v7694 = vunpack.c.0.s8 %v7693
        %v7695 = vlaneseq
        %v7696 = vshrl.u32 %v7695, 7
        %v7697 = vsub.s32 %v7694, %v7696
        %v7698 = vrot.slane %v6789, %v7697
        %v7700 = vunpack.c.l.s4 1983009808
        %v7701 = vunpack.c.0.s8 %v7700
        %v7702 = vlaneseq
        %v7703 = vshrl.u32 %v7702, 7
        %v7704 = vsub.s32 %v7701, %v7703
        %v7705 = vrot.slane %v7691, %v7704
        %v7706 = vcombine.low %v7667, %v7683
        %v7707 = vcombine.high %v7667, %v7683
        %v7709 = vunpack.c.l.s4 1934713408
        %v7710 = vunpack.c.0.s8 %v7709
        %v7711 = vlaneseq
        %v7712 = vshrl.u32 %v7711, 7
        %v7713 = vsub.s32 %v7710, %v7712
        %v7714 = vrot.slane %v7706, %v7713
        %v7716 = vunpack.c.l.s4 1934713408
        %v7717 = vunpack.c.0.s8 %v7716
        %v7718 = vlaneseq
        %v7719 = vshrl.u32 %v7718, 7
        %v7720 = vsub.s32 %v7717, %v7719
        %v7721 = vrot.slane %v7707, %v7720
        %v7722 = vcombine.low %v7674, %v7690
        %v7723 = vcombine.high %v7674, %v7690
        %v7725 = vunpack.c.l.s4 1934713408
        %v7726 = vunpack.c.0.s8 %v7725
        %v7727 = vlaneseq
        %v7728 = vshrl.u32 %v7727, 7
        %v7729 = vsub.s32 %v7726, %v7728
        %v7730 = vrot.slane %v7722, %v7729
        %v7732 = vunpack.c.l.s4 1934713408
        %v7733 = vunpack.c.0.s8 %v7732
        %v7734 = vlaneseq
        %v7735 = vshrl.u32 %v7734, 7
        %v7736 = vsub.s32 %v7733, %v7735
        %v7737 = vrot.slane %v7723, %v7736
        %v7738 = vcombine.high %v7698, 0.0
        %v7740 = vunpack.c.l.s4 1934713408
        %v7741 = vunpack.c.0.s8 %v7740
        %v7742 = vlaneseq
        %v7743 = vshrl.u32 %v7742, 7
        %v7744 = vsub.s32 %v7741, %v7743
        %v7745 = vrot.slane %v7698, %v7744
        %v7747 = vunpack.c.l.s4 1934713408
        %v7748 = vunpack.c.0.s8 %v7747
        %v7749 = vlaneseq
        %v7750 = vshrl.u32 %v7749, 7
        %v7751 = vsub.s32 %v7748, %v7750
        %v7752 = vrot.slane %v7738, %v7751
        %v7753 = vcombine.high %v7705, 0.0
        %v7755 = vunpack.c.l.s4 1934713408
        %v7756 = vunpack.c.0.s8 %v7755
        %v7757 = vlaneseq
        %v7758 = vshrl.u32 %v7757, 7
        %v7759 = vsub.s32 %v7756, %v7758
        %v7760 = vrot.slane %v7705, %v7759
        %v7762 = vunpack.c.l.s4 1934713408
        %v7763 = vunpack.c.0.s8 %v7762
        %v7764 = vlaneseq
        %v7765 = vshrl.u32 %v7764, 7
        %v7766 = vsub.s32 %v7763, %v7765
        %v7767 = vrot.slane %v7753, %v7766
        %v7768 = vcombine.low %v7714, %v7745
        %v7769 = vcombine.high %v7714, %v7745
        %v7770 = vcombine.low %v7721, %v7752
        %v7771 = vcombine.high %v7721, %v7752
        %v7772 = vcombine.low %v7730, %v7760
        %v7773 = vcombine.high %v7730, %v7760
        %v7774 = vcombine.low %v7737, %v7767
        %v7775 = vcombine.high %v7737, %v7767
        %v7776 = vcombine.low %v6775, %v6783
        %v7778 = vunpack.c.l.s4 1983009808
        %v7779 = vunpack.c.0.s8 %v7778
        %v7780 = vlaneseq
        %v7781 = vshrl.u32 %v7780, 7
        %v7782 = vsub.s32 %v7779, %v7781
        %v7783 = vrot.slane %v7776, %v7782
        %v7784 = vcombine.low %v6779, %v6787
        %v7786 = vunpack.c.l.s4 1983009808
        %v7787 = vunpack.c.0.s8 %v7786
        %v7788 = vlaneseq
        %v7789 = vshrl.u32 %v7788, 7
        %v7790 = vsub.s32 %v7787, %v7789
        %v7791 = vrot.slane %v7784, %v7790
        %v7792 = vcombine.low %v7783, %v7791
        %v7794 = vunpack.c.l.s4 1934713408
        %v7795 = vunpack.c.0.s8 %v7794
        %v7796 = vlaneseq
        %v7797 = vshrl.u32 %v7796, 7
        %v7798 = vsub.s32 %v7795, %v7797
        %v7799 = vrot.slane %v7792, %v7798
        %v7802 = vunpack.c.l.s4 1934713408
        %v7803 = vunpack.c.0.s8 %v7802
        %v7804 = vlaneseq
        %v7805 = vshrl.u32 %v7804, 7
        %v7806 = vsub.s32 %v7803, %v7805
        %v7807 = vrot.slane %v6791, %v7806
        %v7808 = vcombine.low %v7799, %v7807
        %v7809 = vcombine.high %v7799, %v7807
        %v7810 = vcombine.low %v6793, %v6801
        %v7811 = vcombine.high %v6793, %v6801
        %v7813 = vunpack.c.l.s4 1983009808
        %v7814 = vunpack.c.0.s8 %v7813
        %v7815 = vlaneseq
        %v7816 = vshrl.u32 %v7815, 7
        %v7817 = vsub.s32 %v7814, %v7816
        %v7818 = vrot.slane %v7810, %v7817
        %v7820 = vunpack.c.l.s4 1983009808
        %v7821 = vunpack.c.0.s8 %v7820
        %v7822 = vlaneseq
        %v7823 = vshrl.u32 %v7822, 7
        %v7824 = vsub.s32 %v7821, %v7823
        %v7825 = vrot.slane %v7811, %v7824
        %v7826 = vcombine.low %v6797, %v6805
        %v7827 = vcombine.high %v6797, %v6805
        %v7829 = vunpack.c.l.s4 1983009808
        %v7830 = vunpack.c.0.s8 %v7829
        %v7831 = vlaneseq
        %v7832 = vshrl.u32 %v7831, 7
        %v7833 = vsub.s32 %v7830, %v7832
        %v7834 = vrot.slane %v7826, %v7833
        %v7836 = vunpack.c.l.s4 1983009808
        %v7837 = vunpack.c.0.s8 %v7836
        %v7838 = vlaneseq
        %v7839 = vshrl.u32 %v7838, 7
        %v7840 = vsub.s32 %v7837, %v7839
        %v7841 = vrot.slane %v7827, %v7840
        %v7842 = vcombine.high %v6809, 0.0
        %v7844 = vunpack.c.l.s4 1983009808
        %v7845 = vunpack.c.0.s8 %v7844
        %v7846 = vlaneseq
        %v7847 = vshrl.u32 %v7846, 7
        %v7848 = vsub.s32 %v7845, %v7847
        %v7849 = vrot.slane %v6809, %v7848
        %v7851 = vunpack.c.l.s4 1983009808
        %v7852 = vunpack.c.0.s8 %v7851
        %v7853 = vlaneseq
        %v7854 = vshrl.u32 %v7853, 7
        %v7855 = vsub.s32 %v7852, %v7854
        %v7856 = vrot.slane %v7842, %v7855
        %v7857 = vcombine.low %v7818, %v7834
        %v7858 = vcombine.high %v7818, %v7834
        %v7860 = vunpack.c.l.s4 1934713408
        %v7861 = vunpack.c.0.s8 %v7860
        %v7862 = vlaneseq
        %v7863 = vshrl.u32 %v7862, 7
        %v7864 = vsub.s32 %v7861, %v7863
        %v7865 = vrot.slane %v7857, %v7864
        %v7867 = vunpack.c.l.s4 1934713408
        %v7868 = vunpack.c.0.s8 %v7867
        %v7869 = vlaneseq
        %v7870 = vshrl.u32 %v7869, 7
        %v7871 = vsub.s32 %v7868, %v7870
        %v7872 = vrot.slane %v7858, %v7871
        %v7873 = vcombine.low %v7825, %v7841
        %v7874 = vcombine.high %v7825, %v7841
        %v7876 = vunpack.c.l.s4 1934713408
        %v7877 = vunpack.c.0.s8 %v7876
        %v7878 = vlaneseq
        %v7879 = vshrl.u32 %v7878, 7
        %v7880 = vsub.s32 %v7877, %v7879
        %v7881 = vrot.slane %v7873, %v7880
        %v7883 = vunpack.c.l.s4 1934713408
        %v7884 = vunpack.c.0.s8 %v7883
        %v7885 = vlaneseq
        %v7886 = vshrl.u32 %v7885, 7
        %v7887 = vsub.s32 %v7884, %v7886
        %v7888 = vrot.slane %v7874, %v7887
        %v7889 = vcombine.high %v7849, 0.0
        %v7891 = vunpack.c.l.s4 1934713408
        %v7892 = vunpack.c.0.s8 %v7891
        %v7893 = vlaneseq
        %v7894 = vshrl.u32 %v7893, 7
        %v7895 = vsub.s32 %v7892, %v7894
        %v7896 = vrot.slane %v7849, %v7895
        %v7898 = vunpack.c.l.s4 1934713408
        %v7899 = vunpack.c.0.s8 %v7898
        %v7900 = vlaneseq
        %v7901 = vshrl.u32 %v7900, 7
        %v7902 = vsub.s32 %v7899, %v7901
        %v7903 = vrot.slane %v7889, %v7902
        %v7904 = vcombine.high %v7856, 0.0
        %v7906 = vunpack.c.l.s4 1934713408
        %v7907 = vunpack.c.0.s8 %v7906
        %v7908 = vlaneseq
        %v7909 = vshrl.u32 %v7908, 7
        %v7910 = vsub.s32 %v7907, %v7909
        %v7911 = vrot.slane %v7856, %v7910
        %v7913 = vunpack.c.l.s4 1934713408
        %v7914 = vunpack.c.0.s8 %v7913
        %v7915 = vlaneseq
        %v7916 = vshrl.u32 %v7915, 7
        %v7917 = vsub.s32 %v7914, %v7916
        %v7918 = vrot.slane %v7904, %v7917
        %v7919 = vcombine.low %v7865, %v7896
        %v7920 = vcombine.high %v7865, %v7896
        %v7921 = vcombine.low %v7872, %v7903
        %v7922 = vcombine.high %v7872, %v7903
        %v7923 = vcombine.low %v7881, %v7911
        %v7924 = vcombine.high %v7881, %v7911
        %v7925 = vcombine.low %v7888, %v7918
        %v7926 = vcombine.high %v7888, %v7918
        %v7927 = vcombine.low %v6795, %v6803
        %v7929 = vunpack.c.l.s4 1983009808
        %v7930 = vunpack.c.0.s8 %v7929
        %v7931 = vlaneseq
        %v7932 = vshrl.u32 %v7931, 7
        %v7933 = vsub.s32 %v7930, %v7932
        %v7934 = vrot.slane %v7927, %v7933
        %v7935 = vcombine.low %v6799, %v6807
        %v7937 = vunpack.c.l.s4 1983009808
        %v7938 = vunpack.c.0.s8 %v7937
        %v7939 = vlaneseq
        %v7940 = vshrl.u32 %v7939, 7
        %v7941 = vsub.s32 %v7938, %v7940
        %v7942 = vrot.slane %v7935, %v7941
        %v7943 = vcombine.low %v7934, %v7942
        %v7945 = vunpack.c.l.s4 1934713408
        %v7946 = vunpack.c.0.s8 %v7945
        %v7947 = vlaneseq
        %v7948 = vshrl.u32 %v7947, 7
        %v7949 = vsub.s32 %v7946, %v7948
        %v7950 = vrot.slane %v7943, %v7949
        %v7953 = vunpack.c.l.s4 1934713408
        %v7954 = vunpack.c.0.s8 %v7953
        %v7955 = vlaneseq
        %v7956 = vshrl.u32 %v7955, 7
        %v7957 = vsub.s32 %v7954, %v7956
        %v7958 = vrot.slane %v6811, %v7957
        %v7959 = vcombine.low %v7950, %v7958
        %v7960 = vcombine.high %v7950, %v7958
        %v7961 = vcombine.low %v6813, %v6821
        %v7962 = vcombine.high %v6813, %v6821
        %v7964 = vunpack.c.l.s4 1983009808
        %v7965 = vunpack.c.0.s8 %v7964
        %v7966 = vlaneseq
        %v7967 = vshrl.u32 %v7966, 7
        %v7968 = vsub.s32 %v7965, %v7967
        %v7969 = vrot.slane %v7961, %v7968
        %v7971 = vunpack.c.l.s4 1983009808
        %v7972 = vunpack.c.0.s8 %v7971
        %v7973 = vlaneseq
        %v7974 = vshrl.u32 %v7973, 7
        %v7975 = vsub.s32 %v7972, %v7974
        %v7976 = vrot.slane %v7962, %v7975
        %v7977 = vcombine.low %v6817, %v6825
        %v7978 = vcombine.high %v6817, %v6825
        %v7980 = vunpack.c.l.s4 1983009808
        %v7981 = vunpack.c.0.s8 %v7980
        %v7982 = vlaneseq
        %v7983 = vshrl.u32 %v7982, 7
        %v7984 = vsub.s32 %v7981, %v7983
        %v7985 = vrot.slane %v7977, %v7984
        %v7987 = vunpack.c.l.s4 1983009808
        %v7988 = vunpack.c.0.s8 %v7987
        %v7989 = vlaneseq
        %v7990 = vshrl.u32 %v7989, 7
        %v7991 = vsub.s32 %v7988, %v7990
        %v7992 = vrot.slane %v7978, %v7991
        %v7993 = vcombine.high %v6829, 0.0
        %v7995 = vunpack.c.l.s4 1983009808
        %v7996 = vunpack.c.0.s8 %v7995
        %v7997 = vlaneseq
        %v7998 = vshrl.u32 %v7997, 7
        %v7999 = vsub.s32 %v7996, %v7998
        %v8000 = vrot.slane %v6829, %v7999
        %v8002 = vunpack.c.l.s4 1983009808
        %v8003 = vunpack.c.0.s8 %v8002
        %v8004 = vlaneseq
        %v8005 = vshrl.u32 %v8004, 7
        %v8006 = vsub.s32 %v8003, %v8005
        %v8007 = vrot.slane %v7993, %v8006
        %v8008 = vcombine.low %v7969, %v7985
        %v8009 = vcombine.high %v7969, %v7985
        %v8011 = vunpack.c.l.s4 1934713408
        %v8012 = vunpack.c.0.s8 %v8011
        %v8013 = vlaneseq
        %v8014 = vshrl.u32 %v8013, 7
        %v8015 = vsub.s32 %v8012, %v8014
        %v8016 = vrot.slane %v8008, %v8015
        %v8018 = vunpack.c.l.s4 1934713408
        %v8019 = vunpack.c.0.s8 %v8018
        %v8020 = vlaneseq
        %v8021 = vshrl.u32 %v8020, 7
        %v8022 = vsub.s32 %v8019, %v8021
        %v8023 = vrot.slane %v8009, %v8022
        %v8024 = vcombine.low %v7976, %v7992
        %v8025 = vcombine.high %v7976, %v7992
        %v8027 = vunpack.c.l.s4 1934713408
        %v8028 = vunpack.c.0.s8 %v8027
        %v8029 = vlaneseq
        %v8030 = vshrl.u32 %v8029, 7
        %v8031 = vsub.s32 %v8028, %v8030
        %v8032 = vrot.slane %v8024, %v8031
        %v8034 = vunpack.c.l.s4 1934713408
        %v8035 = vunpack.c.0.s8 %v8034
        %v8036 = vlaneseq
        %v8037 = vshrl.u32 %v8036, 7
        %v8038 = vsub.s32 %v8035, %v8037
        %v8039 = vrot.slane %v8025, %v8038
        %v8040 = vcombine.high %v8000, 0.0
        %v8042 = vunpack.c.l.s4 1934713408
        %v8043 = vunpack.c.0.s8 %v8042
        %v8044 = vlaneseq
        %v8045 = vshrl.u32 %v8044, 7
        %v8046 = vsub.s32 %v8043, %v8045
        %v8047 = vrot.slane %v8000, %v8046
        %v8049 = vunpack.c.l.s4 1934713408
        %v8050 = vunpack.c.0.s8 %v8049
        %v8051 = vlaneseq
        %v8052 = vshrl.u32 %v8051, 7
        %v8053 = vsub.s32 %v8050, %v8052
        %v8054 = vrot.slane %v8040, %v8053
        %v8055 = vcombine.high %v8007, 0.0
        %v8057 = vunpack.c.l.s4 1934713408
        %v8058 = vunpack.c.0.s8 %v8057
        %v8059 = vlaneseq
        %v8060 = vshrl.u32 %v8059, 7
        %v8061 = vsub.s32 %v8058, %v8060
        %v8062 = vrot.slane %v8007, %v8061
        %v8064 = vunpack.c.l.s4 1934713408
        %v8065 = vunpack.c.0.s8 %v8064
        %v8066 = vlaneseq
        %v8067 = vshrl.u32 %v8066, 7
        %v8068 = vsub.s32 %v8065, %v8067
        %v8069 = vrot.slane %v8055, %v8068
        %v8070 = vcombine.low %v8016, %v8047
        %v8071 = vcombine.high %v8016, %v8047
        %v8072 = vcombine.low %v8023, %v8054
        %v8073 = vcombine.high %v8023, %v8054
        %v8074 = vcombine.low %v8032, %v8062
        %v8075 = vcombine.high %v8032, %v8062
        %v8076 = vcombine.low %v8039, %v8069
        %v8077 = vcombine.high %v8039, %v8069
        %v8078 = vcombine.low %v6815, %v6823
        %v8080 = vunpack.c.l.s4 1983009808
        %v8081 = vunpack.c.0.s8 %v8080
        %v8082 = vlaneseq
        %v8083 = vshrl.u32 %v8082, 7
        %v8084 = vsub.s32 %v8081, %v8083
        %v8085 = vrot.slane %v8078, %v8084
        %v8086 = vcombine.low %v6819, %v6827
        %v8088 = vunpack.c.l.s4 1983009808
        %v8089 = vunpack.c.0.s8 %v8088
        %v8090 = vlaneseq
        %v8091 = vshrl.u32 %v8090, 7
        %v8092 = vsub.s32 %v8089, %v8091
        %v8093 = vrot.slane %v8086, %v8092
        %v8094 = vcombine.low %v8085, %v8093
        %v8096 = vunpack.c.l.s4 1934713408
        %v8097 = vunpack.c.0.s8 %v8096
        %v8098 = vlaneseq
        %v8099 = vshrl.u32 %v8098, 7
        %v8100 = vsub.s32 %v8097, %v8099
        %v8101 = vrot.slane %v8094, %v8100
        %v8104 = vunpack.c.l.s4 1934713408
        %v8105 = vunpack.c.0.s8 %v8104
        %v8106 = vlaneseq
        %v8107 = vshrl.u32 %v8106, 7
        %v8108 = vsub.s32 %v8105, %v8107
        %v8109 = vrot.slane %v6831, %v8108
        %v8110 = vcombine.low %v8101, %v8109
        %v8111 = vcombine.high %v8101, %v8109
        %8120 = vrot.lane.b32.xlu0 %v7014, 16
        %v8121 = vpop.permute.xlu0 %8120
        %8122 = vrot.lane.b32.xlu0 %v7165, 16
        %v8123 = vpop.permute.xlu0 %8122
        %8124 = vrot.lane.b32.xlu0 %v7316, 16
        %v8125 = vpop.permute.xlu0 %8124
        %8126 = vrot.lane.b32.xlu0 %v7467, 16
        %v8127 = vpop.permute.xlu0 %8126
        %8128 = vrot.lane.b32.xlu0 %v7618, 16
        %v8129 = vpop.permute.xlu0 %8128
        %8130 = vrot.lane.b32.xlu0 %v7769, 16
        %v8131 = vpop.permute.xlu0 %8130
        %8132 = vrot.lane.b32.xlu0 %v7920, 16
        %v8133 = vpop.permute.xlu0 %8132
        %8134 = vrot.lane.b32.xlu0 %v8071, 16
        %v8135 = vpop.permute.xlu0 %8134
        %8152 = vrot.lane.b32.xlu0 %v7015, 32
        %v8153 = vpop.permute.xlu0 %8152
        %8154 = vrot.lane.b32.xlu0 %v7166, 32
        %v8155 = vpop.permute.xlu0 %8154
        %8156 = vrot.lane.b32.xlu0 %v7317, 32
        %v8157 = vpop.permute.xlu0 %8156
        %8158 = vrot.lane.b32.xlu0 %v7468, 32
        %v8159 = vpop.permute.xlu0 %8158
        %8160 = vrot.lane.b32.xlu0 %v7619, 32
        %v8161 = vpop.permute.xlu0 %8160
        %8162 = vrot.lane.b32.xlu0 %v7770, 32
        %v8163 = vpop.permute.xlu0 %8162
        %8164 = vrot.lane.b32.xlu0 %v7921, 32
        %v8165 = vpop.permute.xlu0 %8164
        %8166 = vrot.lane.b32.xlu0 %v8072, 32
        %v8167 = vpop.permute.xlu0 %8166
        %8184 = vrot.lane.b32.xlu0 %v7016, 48
        %v8185 = vpop.permute.xlu0 %8184
        %8186 = vrot.lane.b32.xlu0 %v7167, 48
        %v8187 = vpop.permute.xlu0 %8186
        %8188 = vrot.lane.b32.xlu0 %v7318, 48
        %v8189 = vpop.permute.xlu0 %8188
        %8190 = vrot.lane.b32.xlu0 %v7469, 48
        %v8191 = vpop.permute.xlu0 %8190
        %8192 = vrot.lane.b32.xlu0 %v7620, 48
        %v8193 = vpop.permute.xlu0 %8192
        %8194 = vrot.lane.b32.xlu0 %v7771, 48
        %v8195 = vpop.permute.xlu0 %8194
        %8196 = vrot.lane.b32.xlu0 %v7922, 48
        %v8197 = vpop.permute.xlu0 %8196
        %8198 = vrot.lane.b32.xlu0 %v8073, 48
        %v8199 = vpop.permute.xlu0 %8198
        %8216 = vrot.lane.b32.xlu0 %v7017, 64
        %v8217 = vpop.permute.xlu0 %8216
        %8218 = vrot.lane.b32.xlu0 %v7168, 64
        %v8219 = vpop.permute.xlu0 %8218
        %8220 = vrot.lane.b32.xlu0 %v7319, 64
        %v8221 = vpop.permute.xlu0 %8220
        %8222 = vrot.lane.b32.xlu0 %v7470, 64
        %v8223 = vpop.permute.xlu0 %8222
        %8224 = vrot.lane.b32.xlu0 %v7621, 64
        %v8225 = vpop.permute.xlu0 %8224
        %8226 = vrot.lane.b32.xlu0 %v7772, 64
        %v8227 = vpop.permute.xlu0 %8226
        %8228 = vrot.lane.b32.xlu0 %v7923, 64
        %v8229 = vpop.permute.xlu0 %8228
        %8230 = vrot.lane.b32.xlu0 %v8074, 64
        %v8231 = vpop.permute.xlu0 %8230
        %8248 = vrot.lane.b32.xlu0 %v7018, 80
        %v8249 = vpop.permute.xlu0 %8248
        %8250 = vrot.lane.b32.xlu0 %v7169, 80
        %v8251 = vpop.permute.xlu0 %8250
        %8252 = vrot.lane.b32.xlu0 %v7320, 80
        %v8253 = vpop.permute.xlu0 %8252
        %8254 = vrot.lane.b32.xlu0 %v7471, 80
        %v8255 = vpop.permute.xlu0 %8254
        %8256 = vrot.lane.b32.xlu0 %v7622, 80
        %v8257 = vpop.permute.xlu0 %8256
        %8258 = vrot.lane.b32.xlu0 %v7773, 80
        %v8259 = vpop.permute.xlu0 %8258
        %8260 = vrot.lane.b32.xlu0 %v7924, 80
        %v8261 = vpop.permute.xlu0 %8260
        %8262 = vrot.lane.b32.xlu0 %v8075, 80
        %v8263 = vpop.permute.xlu0 %8262
        %8280 = vrot.lane.b32.xlu0 %v7019, 96
        %v8281 = vpop.permute.xlu0 %8280
        %8282 = vrot.lane.b32.xlu0 %v7170, 96
        %v8283 = vpop.permute.xlu0 %8282
        %8284 = vrot.lane.b32.xlu0 %v7321, 96
        %v8285 = vpop.permute.xlu0 %8284
        %8286 = vrot.lane.b32.xlu0 %v7472, 96
        %v8287 = vpop.permute.xlu0 %8286
        %8288 = vrot.lane.b32.xlu0 %v7623, 96
        %v8289 = vpop.permute.xlu0 %8288
        %8290 = vrot.lane.b32.xlu0 %v7774, 96
        %v8291 = vpop.permute.xlu0 %8290
        %8292 = vrot.lane.b32.xlu0 %v7925, 96
        %v8293 = vpop.permute.xlu0 %8292
        %8294 = vrot.lane.b32.xlu0 %v8076, 96
        %v8295 = vpop.permute.xlu0 %8294
        %8312 = vrot.lane.b32.xlu0 %v7020, 112
        %v8313 = vpop.permute.xlu0 %8312
        %8314 = vrot.lane.b32.xlu0 %v7171, 112
        %v8315 = vpop.permute.xlu0 %8314
        %8316 = vrot.lane.b32.xlu0 %v7322, 112
        %v8317 = vpop.permute.xlu0 %8316
        %8318 = vrot.lane.b32.xlu0 %v7473, 112
        %v8319 = vpop.permute.xlu0 %8318
        %8320 = vrot.lane.b32.xlu0 %v7624, 112
        %v8321 = vpop.permute.xlu0 %8320
        %8322 = vrot.lane.b32.xlu0 %v7775, 112
        %v8323 = vpop.permute.xlu0 %8322
        %8324 = vrot.lane.b32.xlu0 %v7926, 112
        %v8325 = vpop.permute.xlu0 %8324
        %8326 = vrot.lane.b32.xlu0 %v8077, 112
        %v8327 = vpop.permute.xlu0 %8326
        %8344 = vrot.lane.b32.xlu0 %v7054, 16
        %v8345 = vpop.permute.xlu0 %8344
        %8346 = vrot.lane.b32.xlu0 %v7205, 16
        %v8347 = vpop.permute.xlu0 %8346
        %8348 = vrot.lane.b32.xlu0 %v7356, 16
        %v8349 = vpop.permute.xlu0 %8348
        %8350 = vrot.lane.b32.xlu0 %v7507, 16
        %v8351 = vpop.permute.xlu0 %8350
        %8352 = vrot.lane.b32.xlu0 %v7658, 16
        %v8353 = vpop.permute.xlu0 %8352
        %8354 = vrot.lane.b32.xlu0 %v7809, 16
        %v8355 = vpop.permute.xlu0 %8354
        %8356 = vrot.lane.b32.xlu0 %v7960, 16
        %v8357 = vpop.permute.xlu0 %8356
        %8358 = vrot.lane.b32.xlu0 %v8111, 16
        %v8359 = vpop.permute.xlu0 %8358
        %v8368 = vsel %vm887, %v7013, %v8121
        %v8369 = vsel %vm887, %v7164, %v8123
        %v8370 = vsel %vm887, %v7315, %v8125
        %v8371 = vsel %vm887, %v7466, %v8127
        %v8372 = vsel %vm887, %v7617, %v8129
        %v8373 = vsel %vm887, %v7768, %v8131
        %v8374 = vsel %vm887, %v7919, %v8133
        %v8375 = vsel %vm887, %v8070, %v8135
        %vm8376 = vcmask 261120
        %v8377 = vsel %vm8376, %v8368, %v8153
        %v8378 = vsel %vm8376, %v8369, %v8155
        %v8379 = vsel %vm8376, %v8370, %v8157
        %v8380 = vsel %vm8376, %v8371, %v8159
        %v8381 = vsel %vm8376, %v8372, %v8161
        %v8382 = vsel %vm8376, %v8373, %v8163
        %v8383 = vsel %vm8376, %v8374, %v8165
        %v8384 = vsel %vm8376, %v8375, %v8167
        %vm8385 = vcmask 392192
        %v8386 = vsel %vm8385, %v8377, %v8185
        %v8387 = vsel %vm8385, %v8378, %v8187
        %v8388 = vsel %vm8385, %v8379, %v8189
        %v8389 = vsel %vm8385, %v8380, %v8191
        %v8390 = vsel %vm8385, %v8381, %v8193
        %v8391 = vsel %vm8385, %v8382, %v8195
        %v8392 = vsel %vm8385, %v8383, %v8197
        %v8393 = vsel %vm8385, %v8384, %v8199
        %vm8394 = vcmask 523264
        %v8395 = vsel %vm8394, %v8386, %v8217
        %v8396 = vsel %vm8394, %v8387, %v8219
        %v8397 = vsel %vm8394, %v8388, %v8221
        %v8398 = vsel %vm8394, %v8389, %v8223
        %v8399 = vsel %vm8394, %v8390, %v8225
        %v8400 = vsel %vm8394, %v8391, %v8227
        %v8401 = vsel %vm8394, %v8392, %v8229
        %v8402 = vsel %vm8394, %v8393, %v8231
        %vm8403 = vcmask 654336
        %v8404 = vsel %vm8403, %v8395, %v8249
        %v8405 = vsel %vm8403, %v8396, %v8251
        %v8406 = vsel %vm8403, %v8397, %v8253
        %v8407 = vsel %vm8403, %v8398, %v8255
        %v8408 = vsel %vm8403, %v8399, %v8257
        %v8409 = vsel %vm8403, %v8400, %v8259
        %v8410 = vsel %vm8403, %v8401, %v8261
        %v8411 = vsel %vm8403, %v8402, %v8263
        %vm8412 = vcmask 785408
        %v8413 = vsel %vm8412, %v8404, %v8281
        %v8414 = vsel %vm8412, %v8405, %v8283
        %v8415 = vsel %vm8412, %v8406, %v8285
        %v8416 = vsel %vm8412, %v8407, %v8287
        %v8417 = vsel %vm8412, %v8408, %v8289
        %v8418 = vsel %vm8412, %v8409, %v8291
        %v8419 = vsel %vm8412, %v8410, %v8293
        %v8420 = vsel %vm8412, %v8411, %v8295
        %vm8421 = vcmask 916480
        %v8422 = vsel %vm8421, %v8413, %v8313
        %v8423 = vsel %vm8421, %v8414, %v8315
        %v8424 = vsel %vm8421, %v8415, %v8317
        %v8425 = vsel %vm8421, %v8416, %v8319
        %v8426 = vsel %vm8421, %v8417, %v8321
        %v8427 = vsel %vm8421, %v8418, %v8323
        %v8428 = vsel %vm8421, %v8419, %v8325
        %v8429 = vsel %vm8421, %v8420, %v8327
        %v8430 = vsel %vm887, %v7053, %v8345
        %v8431 = vsel %vm887, %v7204, %v8347
        %v8432 = vsel %vm887, %v7355, %v8349
        %v8433 = vsel %vm887, %v7506, %v8351
        %v8434 = vsel %vm887, %v7657, %v8353
        %v8435 = vsel %vm887, %v7808, %v8355
        %v8436 = vsel %vm887, %v7959, %v8357
        %v8437 = vsel %vm887, %v8110, %v8359
        %8438 = vst [vmem:[%s626] sm:$0x1f] %v8422
        %vm8439 = vcmask 258048
        %8440 = vst.msk [vmem:[%s626 + $0x8] sm:$0x1f] %vm8439, %v8430
        %8441 = vst [vmem:[%s626 + $0x10] sm:$0x1f] %v8423
        %8442 = vst.msk [vmem:[%s626 + $0x18] sm:$0x1f] %vm8439, %v8431
        %8443 = vst [vmem:[%s626 + $0x20] sm:$0x1f] %v8424
        %8444 = vst.msk [vmem:[%s626 + $0x28] sm:$0x1f] %vm8439, %v8432
        %8445 = vst [vmem:[%s626 + $0x30] sm:$0x1f] %v8425
        %8446 = vst.msk [vmem:[%s626 + $0x38] sm:$0x1f] %vm8439, %v8433
        %8447 = vst [vmem:[%s626 + $0x40] sm:$0x1f] %v8426
        %8448 = vst.msk [vmem:[%s626 + $0x48] sm:$0x1f] %vm8439, %v8434
        %8449 = vst [vmem:[%s626 + $0x50] sm:$0x1f] %v8427
        %8450 = vst.msk [vmem:[%s626 + $0x58] sm:$0x1f] %vm8439, %v8435
        %8451 = vst [vmem:[%s626 + $0x60] sm:$0x1f] %v8428
        %8452 = vst.msk [vmem:[%s626 + $0x68] sm:$0x1f] %vm8439, %v8436
        %8453 = vst [vmem:[%s626 + $0x70] sm:$0x1f] %v8429
        %8454 = vst.msk [vmem:[%s626 + $0x78] sm:$0x1f] %vm8439, %v8437
        %s8455 = sand.u32 %s180, 1
        %s8456 = sand.u32 %s180, 1
        %s8457 = smul.addr %s8456, 128
        %s8458 = scalar_lea.vmem [#allocation7], %s8457
        // Predicated region
        $region163: #{tpu_custom_call.1} parent=141 // pred_check
          %p8459 = pneg %p190
        $region164: #{tpu_custom_call.1} parent=141 // pred_check_branch
          %8461 = sbr.rel (%p8459) target = $region166
        $region165: #{tpu_custom_call.1} parent=141 // pred_region
          %s8462 = smul.addr %s21, 2
          %s8463 = smul.addr %s20, 32
          %s8464 = sadd.s32 %s8462, %s8463
          %s8465 = smul.addr %s8464, 8
          %s8466 = scalar_lea.vmem %s5, %s8465
          // Predicated region
          $region167: #{tpu_custom_call.1} parent=165 // pred_check
            _
          $region168: #{tpu_custom_call.1} parent=165 // pred_check_branch
            %8468 = sbr.rel (0) target = $region170
          $region169: #{tpu_custom_call.1} parent=165 // pred_region
            // Predicated region
            $region171: #{tpu_custom_call.1} parent=169 // pred_check
              _
            $region172: #{tpu_custom_call.1} parent=169 // pred_check_branch
              %8470 = sbr.rel (0) target = $region174
            $region173: #{tpu_custom_call.1} parent=169 // pred_region
              loop: start=0, step=1, limit=1
              $region175: #{tpu_custom_call.1} parent=173 // loop_pre_header
                _
              $region176: #{tpu_custom_call.1} parent=173 // loop_header
                %s8472 = sphi 0, %s8476
                %p8473 = scmp.ge.s32.totalorder %s8472, 1
                %s8477 = sphi %s8458, %s8458
                %s8478 = sphi %s8466, %s8466
              $region177: #{tpu_custom_call.1} parent=173 // loop_header_branch
                %8475 = sbr.rel (%p8473) target = $region181
              $region178: #{tpu_custom_call.1} parent=173 // loop_body
                %v8479 = vld [vmem:[%s8477] sm:$0xff]
                %8480 = vst [vmem:[%s8478] sm:$0xff] %v8479
                %v8481 = vld [vmem:[%s8477 + $0x8] sm:$0xff]
                %8482 = vst [vmem:[%s8478 + $0x8] sm:$0xff] %v8481
                %v8483 = vld [vmem:[%s8477 + $0x10] sm:$0xff]
                %8484 = vst [vmem:[%s8478 + $0x20] sm:$0xff] %v8483
                %v8485 = vld [vmem:[%s8477 + $0x18] sm:$0xff]
                %8486 = vst [vmem:[%s8478 + $0x28] sm:$0xff] %v8485
                %v8487 = vld [vmem:[%s8477 + $0x20] sm:$0xff]
                %8488 = vst [vmem:[%s8478 + $0x40] sm:$0xff] %v8487
                %v8489 = vld [vmem:[%s8477 + $0x28] sm:$0xff]
                %8490 = vst [vmem:[%s8478 + $0x48] sm:$0xff] %v8489
                %v8491 = vld [vmem:[%s8477 + $0x30] sm:$0xff]
                %8492 = vst [vmem:[%s8478 + $0x60] sm:$0xff] %v8491
                %v8493 = vld [vmem:[%s8477 + $0x38] sm:$0xff]
                %8494 = vst [vmem:[%s8478 + $0x68] sm:$0xff] %v8493
                %v8495 = vld [vmem:[%s8477 + $0x40] sm:$0xff]
                %8496 = vst [vmem:[%s8478 + $0x80] sm:$0xff] %v8495
                %v8497 = vld [vmem:[%s8477 + $0x48] sm:$0xff]
                %8498 = vst [vmem:[%s8478 + $0x88] sm:$0xff] %v8497
                %v8499 = vld [vmem:[%s8477 + $0x50] sm:$0xff]
                %8500 = vst [vmem:[%s8478 + $0xa0] sm:$0xff] %v8499
                %v8501 = vld [vmem:[%s8477 + $0x58] sm:$0xff]
                %8502 = vst [vmem:[%s8478 + $0xa8] sm:$0xff] %v8501
                %v8503 = vld [vmem:[%s8477 + $0x60] sm:$0xff]
                %8504 = vst [vmem:[%s8478 + $0xc0] sm:$0xff] %v8503
                %v8505 = vld [vmem:[%s8477 + $0x68] sm:$0xff]
                %8506 = vst [vmem:[%s8478 + $0xc8] sm:$0xff] %v8505
                %v8507 = vld [vmem:[%s8477 + $0x70] sm:$0xff]
                %8508 = vst [vmem:[%s8478 + $0xe0] sm:$0xff] %v8507
                %v8509 = vld [vmem:[%s8477 + $0x78] sm:$0xff]
                %8510 = vst [vmem:[%s8478 + $0xe8] sm:$0xff] %v8509
              $region179: #{tpu_custom_call.1} parent=173 // loop_footer
                %s8476 = sadd.s32 1, %s8472
              $region180: #{tpu_custom_call.1} parent=173 // loop_footer_branch
                %8471 = sbr.rel target = $region176
              $region181: #{tpu_custom_call.1} parent=173 // loop_exit
                _
            $region174: #{tpu_custom_call.1} parent=169 // pred_fallthru
              _
            // Predicated region
            $region182: #{tpu_custom_call.1} parent=169 // pred_check
              _
            $region183: #{tpu_custom_call.1} parent=169 // pred_check_branch
              %8512 = sbr.rel target = $region185
            $region184: #{tpu_custom_call.1} parent=169 // pred_region
              _
            $region185: #{tpu_custom_call.1} parent=169 // pred_fallthru
              _
          $region170: #{tpu_custom_call.1} parent=165 // pred_fallthru
            _
          %8513 = vnop
        $region166: #{tpu_custom_call.1} parent=141 // pred_fallthru
          _
      $region142: #{tpu_custom_call.1} parent=5 // pred_fallthru
        _
      %p8514 = scmp.le.s32.totalorder 2, %s11
      // Predicated region
      $region186: #{tpu_custom_call.1} parent=5 // pred_check
        %p8515 = pneg %p8514
      $region187: #{tpu_custom_call.1} parent=5 // pred_check_branch
        %8517 = sbr.rel (%p8515) target = $region189
      $region188: #{tpu_custom_call.1} parent=5 // pred_region
        %s8518 = ssub.s32 %s11, 2
        // Predicated region
        $region190: #{tpu_custom_call.1} parent=188 // pred_check
          %p8519 = pneg %p196
        $region191: #{tpu_custom_call.1} parent=188 // pred_check_branch
          %8521 = sbr.rel (%p8519) target = $region193
        $region192: #{tpu_custom_call.1} parent=188 // pred_region
          %s8522 = sand.u32 %s181, 1
          %s8523 = sand.u32 %s181, 1
          %s8524 = smul.addr %s8523, 128
          %s8525 = scalar_lea.vmem [#allocation7], %s8524
        $region193: #{tpu_custom_call.1} parent=188 // pred_fallthru
          _
      $region189: #{tpu_custom_call.1} parent=5 // pred_fallthru
        _
    $region6: #{tpu_custom_call.1} parent=1 // loop_footer
      %s15 = sadd.s32 1, %s11
    $region7: #{tpu_custom_call.1} parent=1 // loop_footer_branch
      %10 = sbr.rel target = $region3
    $region8: #{tpu_custom_call.1} parent=1 // loop_exit
      _

</llo_original>
